<compile_context>
chip_gen: v5e
topology: v5e:2x2
jax: 0.10.0
libtpu: 0.0.40
codegen_flags: <defaults>
</compile_context>

<pallas_src>
import jax
import jax.numpy as jnp
import numpy as np
from jax import lax
from jax.experimental import pallas as pl
from jax.experimental.pallas import tpu as pltpu

_EPS = 1e-5
_LANES = 128
_W_OFF = 8  # sublane-tile-aligned column offset of conv2's padded input in scratch


def _round_up(x, m):
    return (x + m - 1) // m * m


def _vmem_limit_bytes(est_bytes):
    """Generation-aware scoped-VMEM limit: >= footprint, <= 3/4 of capacity."""
    try:
        cap = int(pltpu.get_tpu_info().vmem_capacity_bytes)
    except Exception:
        cap = 64 * 1024 * 1024  # conservative (v7x per-core VMEM)
    want = max(32 * 1024 * 1024, 2 * int(est_bytes))
    return int(min(want, (cap * 3) // 4))


# ----------------------------------------------------------------------------
# Fused residual-block kernel
# ----------------------------------------------------------------------------
def _make_resblock_kernel(N, Ho, Wo, stride, ci_p, co_p, has_projection):
    npix = N * Ho * Wo
    inv_n = 1.0 / npix

    def _bn_scale_bias(y, g, b):
        # One-pass batch statistics -> per-channel (scale, bias), all f32.
        mu = jnp.sum(y, axis=0, keepdims=True) * inv_n
        var = jnp.sum(y * y, axis=0, keepdims=True) * inv_n - mu * mu
        var = jnp.maximum(var, 0.0)  # guard E[x^2]-mu^2 cancellation
        scale = g * lax.rsqrt(var + _EPS)
        return scale, b - mu * scale

    def _conv3x3(tap_fn, w_mat, c_in):
        # 3x3 conv as 3 matmuls of 3-tap groups (K = 3*c_in, multiple of 128).
        acc = None
        for ky in range(3):
            cols = [tap_fn(ky, kx) for kx in range(3)]      # each (npix, c_in) bf16
            patch = jnp.concatenate(cols, axis=-1)          # (npix, 3*c_in) bf16
            w_slice = w_mat[ky * 3 * c_in:(ky + 1) * 3 * c_in, :]
            part = jnp.dot(patch, w_slice, preferred_element_type=jnp.float32)
            acc = part if acc is None else acc + part
        return acc                                          # (npix, co_p) f32

    def _slice_grid(src, off, c):
        # (N, H+2, W+2, c) -> (N, Ho, Wo, c), stride-decimated, starting at `off`.
        return lax.slice(
            src, (0, off, off, 0),
            (N, off + (Ho - 1) * stride + 1, off + (Wo - 1) * stride + 1, c),
            (1, stride, stride, 1))

    def kernel(*refs):
        if has_projection:
            (x_ref, w1_ref, w2_ref, ws_ref,
             g1_ref, b1_ref, g2_ref, b2_ref, gs_ref, bs_ref,
             o_ref, a1p_ref) = refs
        else:
            (x_ref, w1_ref, w2_ref,
             g1_ref, b1_ref, g2_ref, b2_ref,
             o_ref, a1p_ref) = refs

        xp = x_ref[...]                        # (N, H+2, W+2, ci_p) f32
        xb = xp.astype(jnp.bfloat16)           # single f32->bf16 pass for conv paths

        # ---- conv1 (3x3, stride) + BN1 + ReLU --------------------------------
        def tap1(ky, kx):
            t = lax.slice(
                xb, (0, ky, kx, 0),
                (N, ky + (Ho - 1) * stride + 1, kx + (Wo - 1) * stride + 1, ci_p),
                (1, stride, stride, 1))
            return t.reshape(npix, ci_p)

        y1 = _conv3x3(tap1, w1_ref[...], ci_p)
        s1, t1 = _bn_scale_bias(y1, g1_ref[...], b1_ref[...])
        a1 = jnp.maximum(y1 * s1 + t1, 0.0).astype(jnp.bfloat16)   # bf16 once

        # Stash a1 into a zero-filled scratch at an aligned window; the zero
        # ring is exactly conv2's padding.
        a1p_ref[...] = jnp.zeros(a1p_ref.shape, a1p_ref.dtype)
        a1p_ref[:, 1:Ho + 1, _W_OFF:_W_OFF + Wo, :] = a1.reshape(N, Ho, Wo, co_p)

        # ---- conv2 (3x3, stride 1) + BN2 --------------------------------------
        def tap2(ky, kx):
            w0 = _W_OFF - 1 + kx
            t = a1p_ref[:, ky:ky + Ho, w0:w0 + Wo, :]
            return t.reshape(npix, co_p)

        y2 = _conv3x3(tap2, w2_ref[...], co_p)
        s2, t2 = _bn_scale_bias(y2, g2_ref[...], b2_ref[...])

        # ---- shortcut ----------------------------------------------------------
        if has_projection:
            xs = _slice_grid(xb, 1, ci_p).reshape(npix, ci_p)       # bf16 MXU path
            ysc = jnp.dot(xs, ws_ref[...], preferred_element_type=jnp.float32)
            ss, ts = _bn_scale_bias(ysc, gs_ref[...], bs_ref[...])
            sc = ysc * ss + ts
        else:
            sc = _slice_grid(xp, 1, ci_p).reshape(npix, ci_p)       # identity, f32

        # ---- residual add + final ReLU; lane-dense (npix, 128k) f32 store -----
        o_ref[...] = jnp.maximum(y2 * s2 + t2 + sc, 0.0)

    return kernel


# ----------------------------------------------------------------------------
# ResidualBlock wrapper
# ----------------------------------------------------------------------------
class ResidualBlockPallas:
    def __init__(self, in_channels, out_channels, stride=1, key=None):
        self.in_channels = in_channels
        self.out_channels = out_channels
        self.stride = stride
        self.has_projection = (stride != 1) or (in_channels != out_channels)

        key = jax.random.PRNGKey(0) if key is None else key
        k1, k2, k3, k4, k5, k6, k7 = jax.random.split(key, 7)

        # Parameters in PyTorch layout (also used by the pure-JAX reference).
        self.w1 = 0.1 * jax.random.normal(k1, (out_channels, in_channels, 3, 3), jnp.float32)
        self.w2 = 0.1 * jax.random.normal(k2, (out_channels, out_channels, 3, 3), jnp.float32)
        self.g1 = 1.0 + 0.1 * jax.random.normal(k3, (out_channels,), jnp.float32)
        self.b1 = 0.1 * jax.random.normal(k4, (out_channels,), jnp.float32)
        self.g2 = 1.0 + 0.1 * jax.random.normal(k5, (out_channels,), jnp.float32)
        self.b2 = 0.1 * jax.random.normal(k6, (out_channels,), jnp.float32)
        if self.has_projection:
            ka, kb, kc = jax.random.split(k7, 3)
            self.ws = 0.1 * jax.random.normal(ka, (out_channels, in_channels, 1, 1), jnp.float32)
            self.gs = 1.0 + 0.1 * jax.random.normal(kb, (out_channels,), jnp.float32)
            self.bs = 0.1 * jax.random.normal(kc, (out_channels,), jnp.float32)

        # Kernel-layout parameters, prepared once (lane-padded to 128, bf16 weights).
        self.ci_p = _round_up(in_channels, _LANES)
        self.co_p = _round_up(out_channels, _LANES)
        self._w1m = self._conv3x3_mat(self.w1, self.ci_p, self.co_p)
        self._w2m = self._conv3x3_mat(self.w2, self.co_p, self.co_p)
        self._g1 = self._pad_vec(self.g1)
        self._b1 = self._pad_vec(self.b1)
        self._g2 = self._pad_vec(self.g2)
        self._b2 = self._pad_vec(self.b2)
        if self.has_projection:
            wsm = jnp.transpose(self.ws[:, :, 0, 0])                 # (Cin, Cout)
            wsm = jnp.pad(wsm, ((0, self.ci_p - in_channels),
                                (0, self.co_p - out_channels)))
            self._wsm = wsm.astype(jnp.bfloat16)
            self._gs = self._pad_vec(self.gs)
            self._bs = self._pad_vec(self.bs)

    def _conv3x3_mat(self, w, cin_p, cout_p):
        cout, cin = w.shape[0], w.shape[1]
        wt = jnp.transpose(w, (2, 3, 1, 0))                          # (3,3,Cin,Cout)
        wt = jnp.pad(wt, ((0, 0), (0, 0), (0, cin_p - cin), (0, cout_p - cout)))
        return wt.reshape(9 * cin_p, cout_p).astype(jnp.bfloat16)

    def _pad_vec(self, v):
        return jnp.pad(v, (0, self.co_p - self.out_channels)).reshape(1, self.co_p)

    def __call__(self, x_nchw):
        N, Cin, H, W = x_nchw.shape
        s = self.stride
        Ho = (H - 1) // s + 1
        Wo = (W - 1) // s + 1
        npix = N * Ho * Wo

        # NCHW -> NHWC, one pad (spatial by 1 for conv1, channels to 128 lanes).
        x = jnp.transpose(x_nchw.astype(jnp.float32), (0, 2, 3, 1))
        x = jnp.pad(x, ((0, 0), (1, 1), (1, 1), (0, self.ci_p - Cin)))

        if self.has_projection:
            args = (x, self._w1m, self._w2m, self._wsm,
                    self._g1, self._b1, self._g2, self._b2, self._gs, self._bs)
        else:
            args = (x, self._w1m, self._w2m,
                    self._g1, self._b1, self._g2, self._b2)

        # ---- cost / VMEM accounting -------------------------------------------
        flops = (2 * npix * 9 * self.ci_p * self.co_p
                 + 2 * npix * 9 * self.co_p * self.co_p
                 + (2 * npix * self.ci_p * self.co_p if self.has_projection else 0))
        bytes_accessed = (sum(int(np.prod(a.shape)) * a.dtype.itemsize for a in args)
                          + npix * self.co_p * 4)
        x_bytes = int(np.prod(x.shape)) * 4
        scratch_bytes = N * (Ho + 2) * (_W_OFF + Wo + 2) * self.co_p * 2
        patch_bytes = npix * 3 * max(self.ci_p, self.co_p) * 2 * 2
        interm_bytes = 6 * npix * self.co_p * 4
        w_bytes = (9 * self.ci_p + 9 * self.co_p + self.ci_p) * self.co_p * 2
        footprint = (x_bytes + x_bytes // 2 + scratch_bytes + patch_bytes
                     + interm_bytes + w_bytes + npix * self.co_p * 4)

        kernel = _make_resblock_kernel(N, Ho, Wo, s, self.ci_p, self.co_p,
                                       self.has_projection)
        vmem = pl.BlockSpec(memory_space=pltpu.MemorySpace.VMEM)
        out = pl.pallas_call(
            kernel,
            out_shape=jax.ShapeDtypeStruct((npix, self.co_p), jnp.float32),
            in_specs=[vmem] * len(args),
            out_specs=vmem,
            scratch_shapes=[
                pltpu.VMEM((N, Ho + 2, _W_OFF + Wo + 2, self.co_p), jnp.bfloat16)],
            compiler_params=pltpu.CompilerParams(
                vmem_limit_bytes=_vmem_limit_bytes(footprint)),
            cost_estimate=pl.CostEstimate(
                flops=int(flops),
                transcendentals=(3 if self.has_projection else 2) * self.co_p,
                bytes_accessed=int(bytes_accessed)),
        )(*args)

        out = out.reshape(N, Ho, Wo, self.co_p)[..., :self.out_channels]
        return jnp.transpose(out, (0, 3, 1, 2))                      # NHWC -> NCHW


# ----------------------------------------------------------------------------
# pure-JAX reference (mirrors the kernel's bf16 matmul inputs / f32 accumulate)
# ----------------------------------------------------------------------------
def _ref_forward(block, x_nchw):
    def conv(x, w, s, pad):
        return lax.conv_general_dilated(
            x.astype(jnp.bfloat16), w.astype(jnp.bfloat16), (s, s),
            [(pad, pad), (pad, pad)],
            dimension_numbers=("NCHW", "OIHW", "NCHW"),
            preferred_element_type=jnp.float32)

    def bn(y, g, b):
        mean = jnp.mean(y, axis=(0, 2, 3), keepdims=True)
        var = jnp.mean((y - mean) ** 2, axis=(0, 2, 3), keepdims=True)
        return ((y - mean) * lax.rsqrt(var + _EPS) * g.reshape(1, -1, 1, 1)
                + b.reshape(1, -1, 1, 1))

    out = jax.nn.relu(bn(conv(x_nchw, block.w1, block.stride, 1), block.g1, block.b1))
    out = bn(conv(out, block.w2, 1, 1), block.g2, block.b2)
    if block.has_projection:
        sc = bn(conv(x_nchw, block.ws, block.stride, 0), block.gs, block.bs)
    else:
        sc = x_nchw
    return jax.nn.relu(out + sc)


if __name__ == "__main__":
    key = jax.random.PRNGKey(0)
    kx1, kp1, kx2, kp2 = jax.random.split(key, 4)

    # ---- projection shortcut (in_channels != out_channels), stride 1 --------
    N, Cin, H, W = 2, 4, 16, 16
    Cout, stride = 8, 1
    x = jax.random.normal(kx1, (N, Cin, H, W), jnp.float32)
    block = ResidualBlockPallas(Cin, Cout, stride=stride, key=kp1)
    out = jax.block_until_ready(block(x))
    ref = jax.block_until_ready(_ref_forward(block, x))
    # 5e-3 tolerance: bf16 matmul inputs + one-pass BN vs two-pass reference.
    np.testing.assert_allclose(np.asarray(out), np.asarray(ref), rtol=5e-3, atol=5e-3)
    assert out.shape == (N, Cout, (H - 1) // stride + 1, (W - 1) // stride + 1)

    # ---- identity shortcut (in_channels == out_channels), stride 1 ----------
    x2 = jax.random.normal(kx2, (N, 8, H, W), jnp.float32)
    block2 = ResidualBlockPallas(8, 8, stride=1, key=kp2)
    out2 = jax.block_until_ready(block2(x2))
    ref2 = jax.block_until_ready(_ref_forward(block2, x2))
    np.testing.assert_allclose(np.asarray(out2), np.asarray(ref2), rtol=5e-3, atol=5e-3)

    print("KERNEL_OK")
</pallas_src>

<mosaic_0001>
module attributes {stable_mosaic.version = 11 : i64} {
  func.func @kernel(%arg0: memref<2x18x18x128xf32, #tpu.memory_space<vmem>>, %arg1: memref<1152x128xbf16, #tpu.memory_space<vmem>>, %arg2: memref<1152x128xbf16, #tpu.memory_space<vmem>>, %arg3: memref<128x128xbf16, #tpu.memory_space<vmem>>, %arg4: memref<1x128xf32, #tpu.memory_space<vmem>>, %arg5: memref<1x128xf32, #tpu.memory_space<vmem>>, %arg6: memref<1x128xf32, #tpu.memory_space<vmem>>, %arg7: memref<1x128xf32, #tpu.memory_space<vmem>>, %arg8: memref<1x128xf32, #tpu.memory_space<vmem>>, %arg9: memref<1x128xf32, #tpu.memory_space<vmem>>, %arg10: memref<512x128xf32, #tpu.memory_space<vmem>>, %arg11: memref<2x18x26x128xbf16, #tpu.memory_space<vmem>>) attributes {dimension_semantics = [], scalar_prefetch = 0 : i64, scratch_operands = 1 : i64, tpu.core_type = #tpu.core_type<tc>} {
    %c0 = arith.constant 0 : index
    %c0_0 = arith.constant 0 : index
    %c0_1 = arith.constant 0 : index
    %c0_2 = arith.constant 0 : index
    %0 = vector.load %arg0[%c0, %c0_0, %c0_1, %c0_2] : memref<2x18x18x128xf32, #tpu.memory_space<vmem>>, vector<2x18x18x128xf32>
    %1 = arith.truncf %0 : vector<2x18x18x128xf32> to vector<2x18x18x128xbf16>
    %c0_3 = arith.constant 0 : index
    %c0_4 = arith.constant 0 : index
    %2 = vector.load %arg1[%c0_3, %c0_4] : memref<1152x128xbf16, #tpu.memory_space<vmem>>, vector<1152x128xbf16>
    %3 = vector.extract_strided_slice %1 {offsets = [0, 0, 0, 0], sizes = [2, 16, 16, 128], strides = [1, 1, 1, 1]} : vector<2x18x18x128xbf16> to vector<2x16x16x128xbf16>
    %4 = vector.shape_cast %3 : vector<2x16x16x128xbf16> to vector<512x128xbf16>
    %5 = vector.extract_strided_slice %1 {offsets = [0, 0, 1, 0], sizes = [2, 16, 16, 128], strides = [1, 1, 1, 1]} : vector<2x18x18x128xbf16> to vector<2x16x16x128xbf16>
    %6 = vector.shape_cast %5 : vector<2x16x16x128xbf16> to vector<512x128xbf16>
    %7 = vector.extract_strided_slice %1 {offsets = [0, 0, 2, 0], sizes = [2, 16, 16, 128], strides = [1, 1, 1, 1]} : vector<2x18x18x128xbf16> to vector<2x16x16x128xbf16>
    %8 = vector.shape_cast %7 : vector<2x16x16x128xbf16> to vector<512x128xbf16>
    %9 = tpu.concatenate %4, %6, %8 in 1 : vector<512x128xbf16>, vector<512x128xbf16>, vector<512x128xbf16> -> vector<512x384xbf16>
    %10 = vector.extract_strided_slice %2 {offsets = [0, 0], sizes = [384, 128], strides = [1, 1]} : vector<1152x128xbf16> to vector<384x128xbf16>
    %cst = arith.constant dense<0.000000e+00> : vector<512x128xf32>
    %11 = tpu.matmul %9, %10, %cst {dimension_numbers = #tpu.dot_dimension_numbers<[1], [0], [0], [1], [0, 0, 1, 1], [], []>} : vector<512x384xbf16>, vector<384x128xbf16>, vector<512x128xf32> -> vector<512x128xf32>
    %12 = vector.extract_strided_slice %1 {offsets = [0, 1, 0, 0], sizes = [2, 16, 16, 128], strides = [1, 1, 1, 1]} : vector<2x18x18x128xbf16> to vector<2x16x16x128xbf16>
    %13 = vector.shape_cast %12 : vector<2x16x16x128xbf16> to vector<512x128xbf16>
    %14 = vector.extract_strided_slice %1 {offsets = [0, 1, 1, 0], sizes = [2, 16, 16, 128], strides = [1, 1, 1, 1]} : vector<2x18x18x128xbf16> to vector<2x16x16x128xbf16>
    %15 = vector.shape_cast %14 : vector<2x16x16x128xbf16> to vector<512x128xbf16>
    %16 = vector.extract_strided_slice %1 {offsets = [0, 1, 2, 0], sizes = [2, 16, 16, 128], strides = [1, 1, 1, 1]} : vector<2x18x18x128xbf16> to vector<2x16x16x128xbf16>
    %17 = vector.shape_cast %16 : vector<2x16x16x128xbf16> to vector<512x128xbf16>
    %18 = tpu.concatenate %13, %15, %17 in 1 : vector<512x128xbf16>, vector<512x128xbf16>, vector<512x128xbf16> -> vector<512x384xbf16>
    %19 = vector.extract_strided_slice %2 {offsets = [384, 0], sizes = [384, 128], strides = [1, 1]} : vector<1152x128xbf16> to vector<384x128xbf16>
    %cst_5 = arith.constant dense<0.000000e+00> : vector<512x128xf32>
    %20 = tpu.matmul %18, %19, %cst_5 {dimension_numbers = #tpu.dot_dimension_numbers<[1], [0], [0], [1], [0, 0, 1, 1], [], []>} : vector<512x384xbf16>, vector<384x128xbf16>, vector<512x128xf32> -> vector<512x128xf32>
    %21 = arith.addf %11, %20 : vector<512x128xf32>
    %22 = vector.extract_strided_slice %1 {offsets = [0, 2, 0, 0], sizes = [2, 16, 16, 128], strides = [1, 1, 1, 1]} : vector<2x18x18x128xbf16> to vector<2x16x16x128xbf16>
    %23 = vector.shape_cast %22 : vector<2x16x16x128xbf16> to vector<512x128xbf16>
    %24 = vector.extract_strided_slice %1 {offsets = [0, 2, 1, 0], sizes = [2, 16, 16, 128], strides = [1, 1, 1, 1]} : vector<2x18x18x128xbf16> to vector<2x16x16x128xbf16>
    %25 = vector.shape_cast %24 : vector<2x16x16x128xbf16> to vector<512x128xbf16>
    %26 = vector.extract_strided_slice %1 {offsets = [0, 2, 2, 0], sizes = [2, 16, 16, 128], strides = [1, 1, 1, 1]} : vector<2x18x18x128xbf16> to vector<2x16x16x128xbf16>
    %27 = vector.shape_cast %26 : vector<2x16x16x128xbf16> to vector<512x128xbf16>
    %28 = tpu.concatenate %23, %25, %27 in 1 : vector<512x128xbf16>, vector<512x128xbf16>, vector<512x128xbf16> -> vector<512x384xbf16>
    %29 = vector.extract_strided_slice %2 {offsets = [768, 0], sizes = [384, 128], strides = [1, 1]} : vector<1152x128xbf16> to vector<384x128xbf16>
    %cst_6 = arith.constant dense<0.000000e+00> : vector<512x128xf32>
    %30 = tpu.matmul %28, %29, %cst_6 {dimension_numbers = #tpu.dot_dimension_numbers<[1], [0], [0], [1], [0, 0, 1, 1], [], []>} : vector<512x384xbf16>, vector<384x128xbf16>, vector<512x128xf32> -> vector<512x128xf32>
    %31 = arith.addf %21, %30 : vector<512x128xf32>
    %c0_7 = arith.constant 0 : index
    %c0_8 = arith.constant 0 : index
    %32 = vector.load %arg4[%c0_7, %c0_8] : memref<1x128xf32, #tpu.memory_space<vmem>>, vector<1x128xf32>
    %c0_9 = arith.constant 0 : index
    %c0_10 = arith.constant 0 : index
    %33 = vector.load %arg5[%c0_9, %c0_10] : memref<1x128xf32, #tpu.memory_space<vmem>>, vector<1x128xf32>
    %cst_11 = arith.constant dense<0.000000e+00> : vector<128xf32>
    %34 = vector.multi_reduction <add>, %31, %cst_11 [0] : vector<512x128xf32> to vector<128xf32>
    %35 = vector.shape_cast %34 : vector<128xf32> to vector<1x128xf32>
    %cst_12 = arith.constant 0.001953125 : f32
    %36 = vector.broadcast %cst_12 : f32 to vector<1x128xf32>
    %37 = arith.mulf %35, %36 : vector<1x128xf32>
    %38 = arith.mulf %31, %31 : vector<512x128xf32>
    %cst_13 = arith.constant dense<0.000000e+00> : vector<128xf32>
    %39 = vector.multi_reduction <add>, %38, %cst_13 [0] : vector<512x128xf32> to vector<128xf32>
    %40 = vector.shape_cast %39 : vector<128xf32> to vector<1x128xf32>
    %cst_14 = arith.constant 0.001953125 : f32
    %41 = vector.broadcast %cst_14 : f32 to vector<1x128xf32>
    %42 = arith.mulf %40, %41 : vector<1x128xf32>
    %43 = arith.mulf %37, %37 : vector<1x128xf32>
    %44 = arith.subf %42, %43 : vector<1x128xf32>
    %cst_15 = arith.constant 0.000000e+00 : f32
    %45 = vector.broadcast %cst_15 : f32 to vector<1x128xf32>
    %46 = arith.maximumf %44, %45 : vector<1x128xf32>
    %cst_16 = arith.constant 9.99999974E-6 : f32
    %47 = vector.broadcast %cst_16 : f32 to vector<1x128xf32>
    %48 = arith.addf %46, %47 : vector<1x128xf32>
    %49 = math.rsqrt %48 : vector<1x128xf32>
    %50 = arith.mulf %32, %49 : vector<1x128xf32>
    %51 = arith.mulf %37, %50 : vector<1x128xf32>
    %52 = arith.subf %33, %51 : vector<1x128xf32>
    %53 = vector.broadcast %50 : vector<1x128xf32> to vector<512x128xf32>
    %54 = arith.mulf %31, %53 : vector<512x128xf32>
    %55 = vector.broadcast %52 : vector<1x128xf32> to vector<512x128xf32>
    %56 = arith.addf %54, %55 : vector<512x128xf32>
    %cst_17 = arith.constant 0.000000e+00 : f32
    %57 = vector.broadcast %cst_17 : f32 to vector<512x128xf32>
    %58 = arith.maximumf %56, %57 : vector<512x128xf32>
    %59 = arith.truncf %58 : vector<512x128xf32> to vector<512x128xbf16>
    %cst_18 = arith.constant 0.000000e+00 : bf16
    %60 = vector.broadcast %cst_18 : bf16 to vector<2x18x26x128xbf16>
    %c0_19 = arith.constant 0 : index
    %c0_20 = arith.constant 0 : index
    %c0_21 = arith.constant 0 : index
    %c0_22 = arith.constant 0 : index
    %61 = vector.load %arg11[%c0_19, %c0_20, %c0_21, %c0_22] : memref<2x18x26x128xbf16, #tpu.memory_space<vmem>>, vector<2x18x26x128xbf16>
    tpu.vector_store %arg11[%c0_19, %c0_20, %c0_21, %c0_22], %60 {strides = array<i32>} : memref<2x18x26x128xbf16, #tpu.memory_space<vmem>>, vector<2x18x26x128xbf16>,
    %62 = vector.shape_cast %59 : vector<512x128xbf16> to vector<2x16x16x128xbf16>
    %c0_23 = arith.constant 0 : index
    %c1 = arith.constant 1 : index
    %c8 = arith.constant 8 : index
    %c0_24 = arith.constant 0 : index
    %63 = vector.load %arg11[%c0_23, %c1, %c8, %c0_24] : memref<2x18x26x128xbf16, #tpu.memory_space<vmem>>, vector<2x16x16x128xbf16>
    tpu.vector_store %arg11[%c0_23, %c1, %c8, %c0_24], %62 {strides = array<i32>} : memref<2x18x26x128xbf16, #tpu.memory_space<vmem>>, vector<2x16x16x128xbf16>,
    %c0_25 = arith.constant 0 : index
    %c0_26 = arith.constant 0 : index
    %64 = vector.load %arg2[%c0_25, %c0_26] : memref<1152x128xbf16, #tpu.memory_space<vmem>>, vector<1152x128xbf16>
    %c0_27 = arith.constant 0 : index
    %c0_28 = arith.constant 0 : index
    %c7 = arith.constant 7 : index
    %c0_29 = arith.constant 0 : index
    %65 = vector.load %arg11[%c0_27, %c0_28, %c7, %c0_29] : memref<2x18x26x128xbf16, #tpu.memory_space<vmem>>, vector<2x16x16x128xbf16>
    %66 = vector.shape_cast %65 : vector<2x16x16x128xbf16> to vector<512x128xbf16>
    %c0_30 = arith.constant 0 : index
    %c0_31 = arith.constant 0 : index
    %c8_32 = arith.constant 8 : index
    %c0_33 = arith.constant 0 : index
    %67 = vector.load %arg11[%c0_30, %c0_31, %c8_32, %c0_33] : memref<2x18x26x128xbf16, #tpu.memory_space<vmem>>, vector<2x16x16x128xbf16>
    %68 = vector.shape_cast %67 : vector<2x16x16x128xbf16> to vector<512x128xbf16>
    %c0_34 = arith.constant 0 : index
    %c0_35 = arith.constant 0 : index
    %c9 = arith.constant 9 : index
    %c0_36 = arith.constant 0 : index
    %69 = vector.load %arg11[%c0_34, %c0_35, %c9, %c0_36] : memref<2x18x26x128xbf16, #tpu.memory_space<vmem>>, vector<2x16x16x128xbf16>
    %70 = vector.shape_cast %69 : vector<2x16x16x128xbf16> to vector<512x128xbf16>
    %71 = tpu.concatenate %66, %68, %70 in 1 : vector<512x128xbf16>, vector<512x128xbf16>, vector<512x128xbf16> -> vector<512x384xbf16>
    %72 = vector.extract_strided_slice %64 {offsets = [0, 0], sizes = [384, 128], strides = [1, 1]} : vector<1152x128xbf16> to vector<384x128xbf16>
    %cst_37 = arith.constant dense<0.000000e+00> : vector<512x128xf32>
    %73 = tpu.matmul %71, %72, %cst_37 {dimension_numbers = #tpu.dot_dimension_numbers<[1], [0], [0], [1], [0, 0, 1, 1], [], []>} : vector<512x384xbf16>, vector<384x128xbf16>, vector<512x128xf32> -> vector<512x128xf32>
    %c0_38 = arith.constant 0 : index
    %c1_39 = arith.constant 1 : index
    %c7_40 = arith.constant 7 : index
    %c0_41 = arith.constant 0 : index
    %74 = vector.load %arg11[%c0_38, %c1_39, %c7_40, %c0_41] : memref<2x18x26x128xbf16, #tpu.memory_space<vmem>>, vector<2x16x16x128xbf16>
    %75 = vector.shape_cast %74 : vector<2x16x16x128xbf16> to vector<512x128xbf16>
    %c0_42 = arith.constant 0 : index
    %c1_43 = arith.constant 1 : index
    %c8_44 = arith.constant 8 : index
    %c0_45 = arith.constant 0 : index
    %76 = vector.load %arg11[%c0_42, %c1_43, %c8_44, %c0_45] : memref<2x18x26x128xbf16, #tpu.memory_space<vmem>>, vector<2x16x16x128xbf16>
    %77 = vector.shape_cast %76 : vector<2x16x16x128xbf16> to vector<512x128xbf16>
    %c0_46 = arith.constant 0 : index
    %c1_47 = arith.constant 1 : index
    %c9_48 = arith.constant 9 : index
    %c0_49 = arith.constant 0 : index
    %78 = vector.load %arg11[%c0_46, %c1_47, %c9_48, %c0_49] : memref<2x18x26x128xbf16, #tpu.memory_space<vmem>>, vector<2x16x16x128xbf16>
    %79 = vector.shape_cast %78 : vector<2x16x16x128xbf16> to vector<512x128xbf16>
    %80 = tpu.concatenate %75, %77, %79 in 1 : vector<512x128xbf16>, vector<512x128xbf16>, vector<512x128xbf16> -> vector<512x384xbf16>
    %81 = vector.extract_strided_slice %64 {offsets = [384, 0], sizes = [384, 128], strides = [1, 1]} : vector<1152x128xbf16> to vector<384x128xbf16>
    %cst_50 = arith.constant dense<0.000000e+00> : vector<512x128xf32>
    %82 = tpu.matmul %80, %81, %cst_50 {dimension_numbers = #tpu.dot_dimension_numbers<[1], [0], [0], [1], [0, 0, 1, 1], [], []>} : vector<512x384xbf16>, vector<384x128xbf16>, vector<512x128xf32> -> vector<512x128xf32>
    %83 = arith.addf %73, %82 : vector<512x128xf32>
    %c0_51 = arith.constant 0 : index
    %c2 = arith.constant 2 : index
    %c7_52 = arith.constant 7 : index
    %c0_53 = arith.constant 0 : index
    %84 = vector.load %arg11[%c0_51, %c2, %c7_52, %c0_53] : memref<2x18x26x128xbf16, #tpu.memory_space<vmem>>, vector<2x16x16x128xbf16>
    %85 = vector.shape_cast %84 : vector<2x16x16x128xbf16> to vector<512x128xbf16>
    %c0_54 = arith.constant 0 : index
    %c2_55 = arith.constant 2 : index
    %c8_56 = arith.constant 8 : index
    %c0_57 = arith.constant 0 : index
    %86 = vector.load %arg11[%c0_54, %c2_55, %c8_56, %c0_57] : memref<2x18x26x128xbf16, #tpu.memory_space<vmem>>, vector<2x16x16x128xbf16>
    %87 = vector.shape_cast %86 : vector<2x16x16x128xbf16> to vector<512x128xbf16>
    %c0_58 = arith.constant 0 : index
    %c2_59 = arith.constant 2 : index
    %c9_60 = arith.constant 9 : index
    %c0_61 = arith.constant 0 : index
    %88 = vector.load %arg11[%c0_58, %c2_59, %c9_60, %c0_61] : memref<2x18x26x128xbf16, #tpu.memory_space<vmem>>, vector<2x16x16x128xbf16>
    %89 = vector.shape_cast %88 : vector<2x16x16x128xbf16> to vector<512x128xbf16>
    %90 = tpu.concatenate %85, %87, %89 in 1 : vector<512x128xbf16>, vector<512x128xbf16>, vector<512x128xbf16> -> vector<512x384xbf16>
    %91 = vector.extract_strided_slice %64 {offsets = [768, 0], sizes = [384, 128], strides = [1, 1]} : vector<1152x128xbf16> to vector<384x128xbf16>
    %cst_62 = arith.constant dense<0.000000e+00> : vector<512x128xf32>
    %92 = tpu.matmul %90, %91, %cst_62 {dimension_numbers = #tpu.dot_dimension_numbers<[1], [0], [0], [1], [0, 0, 1, 1], [], []>} : vector<512x384xbf16>, vector<384x128xbf16>, vector<512x128xf32> -> vector<512x128xf32>
    %93 = arith.addf %83, %92 : vector<512x128xf32>
    %c0_63 = arith.constant 0 : index
    %c0_64 = arith.constant 0 : index
    %94 = vector.load %arg6[%c0_63, %c0_64] : memref<1x128xf32, #tpu.memory_space<vmem>>, vector<1x128xf32>
    %c0_65 = arith.constant 0 : index
    %c0_66 = arith.constant 0 : index
    %95 = vector.load %arg7[%c0_65, %c0_66] : memref<1x128xf32, #tpu.memory_space<vmem>>, vector<1x128xf32>
    %cst_67 = arith.constant dense<0.000000e+00> : vector<128xf32>
    %96 = vector.multi_reduction <add>, %93, %cst_67 [0] : vector<512x128xf32> to vector<128xf32>
    %97 = vector.shape_cast %96 : vector<128xf32> to vector<1x128xf32>
    %cst_68 = arith.constant 0.001953125 : f32
    %98 = vector.broadcast %cst_68 : f32 to vector<1x128xf32>
    %99 = arith.mulf %97, %98 : vector<1x128xf32>
    %100 = arith.mulf %93, %93 : vector<512x128xf32>
    %cst_69 = arith.constant dense<0.000000e+00> : vector<128xf32>
    %101 = vector.multi_reduction <add>, %100, %cst_69 [0] : vector<512x128xf32> to vector<128xf32>
    %102 = vector.shape_cast %101 : vector<128xf32> to vector<1x128xf32>
    %cst_70 = arith.constant 0.001953125 : f32
    %103 = vector.broadcast %cst_70 : f32 to vector<1x128xf32>
    %104 = arith.mulf %102, %103 : vector<1x128xf32>
    %105 = arith.mulf %99, %99 : vector<1x128xf32>
    %106 = arith.subf %104, %105 : vector<1x128xf32>
    %cst_71 = arith.constant 0.000000e+00 : f32
    %107 = vector.broadcast %cst_71 : f32 to vector<1x128xf32>
    %108 = arith.maximumf %106, %107 : vector<1x128xf32>
    %cst_72 = arith.constant 9.99999974E-6 : f32
    %109 = vector.broadcast %cst_72 : f32 to vector<1x128xf32>
    %110 = arith.addf %108, %109 : vector<1x128xf32>
    %111 = math.rsqrt %110 : vector<1x128xf32>
    %112 = arith.mulf %94, %111 : vector<1x128xf32>
    %113 = arith.mulf %99, %112 : vector<1x128xf32>
    %114 = arith.subf %95, %113 : vector<1x128xf32>
    %115 = vector.extract_strided_slice %1 {offsets = [0, 1, 1, 0], sizes = [2, 16, 16, 128], strides = [1, 1, 1, 1]} : vector<2x18x18x128xbf16> to vector<2x16x16x128xbf16>
    %116 = vector.shape_cast %115 : vector<2x16x16x128xbf16> to vector<512x128xbf16>
    %c0_73 = arith.constant 0 : index
    %c0_74 = arith.constant 0 : index
    %117 = vector.load %arg3[%c0_73, %c0_74] : memref<128x128xbf16, #tpu.memory_space<vmem>>, vector<128x128xbf16>
    %cst_75 = arith.constant dense<0.000000e+00> : vector<512x128xf32>
    %118 = tpu.matmul %116, %117, %cst_75 {dimension_numbers = #tpu.dot_dimension_numbers<[1], [0], [0], [1], [0, 0, 1, 1], [], []>} : vector<512x128xbf16>, vector<128x128xbf16>, vector<512x128xf32> -> vector<512x128xf32>
    %c0_76 = arith.constant 0 : index
    %c0_77 = arith.constant 0 : index
    %119 = vector.load %arg8[%c0_76, %c0_77] : memref<1x128xf32, #tpu.memory_space<vmem>>, vector<1x128xf32>
    %c0_78 = arith.constant 0 : index
    %c0_79 = arith.constant 0 : index
    %120 = vector.load %arg9[%c0_78, %c0_79] : memref<1x128xf32, #tpu.memory_space<vmem>>, vector<1x128xf32>
    %cst_80 = arith.constant dense<0.000000e+00> : vector<128xf32>
    %121 = vector.multi_reduction <add>, %118, %cst_80 [0] : vector<512x128xf32> to vector<128xf32>
    %122 = vector.shape_cast %121 : vector<128xf32> to vector<1x128xf32>
    %cst_81 = arith.constant 0.001953125 : f32
    %123 = vector.broadcast %cst_81 : f32 to vector<1x128xf32>
    %124 = arith.mulf %122, %123 : vector<1x128xf32>
    %125 = arith.mulf %118, %118 : vector<512x128xf32>
    %cst_82 = arith.constant dense<0.000000e+00> : vector<128xf32>
    %126 = vector.multi_reduction <add>, %125, %cst_82 [0] : vector<512x128xf32> to vector<128xf32>
    %127 = vector.shape_cast %126 : vector<128xf32> to vector<1x128xf32>
    %cst_83 = arith.constant 0.001953125 : f32
    %128 = vector.broadcast %cst_83 : f32 to vector<1x128xf32>
    %129 = arith.mulf %127, %128 : vector<1x128xf32>
    %130 = arith.mulf %124, %124 : vector<1x128xf32>
    %131 = arith.subf %129, %130 : vector<1x128xf32>
    %cst_84 = arith.constant 0.000000e+00 : f32
    %132 = vector.broadcast %cst_84 : f32 to vector<1x128xf32>
    %133 = arith.maximumf %131, %132 : vector<1x128xf32>
    %cst_85 = arith.constant 9.99999974E-6 : f32
    %134 = vector.broadcast %cst_85 : f32 to vector<1x128xf32>
    %135 = arith.addf %133, %134 : vector<1x128xf32>
    %136 = math.rsqrt %135 : vector<1x128xf32>
    %137 = arith.mulf %119, %136 : vector<1x128xf32>
    %138 = arith.mulf %124, %137 : vector<1x128xf32>
    %139 = arith.subf %120, %138 : vector<1x128xf32>
    %140 = vector.broadcast %137 : vector<1x128xf32> to vector<512x128xf32>
    %141 = arith.mulf %118, %140 : vector<512x128xf32>
    %142 = vector.broadcast %139 : vector<1x128xf32> to vector<512x128xf32>
    %143 = arith.addf %141, %142 : vector<512x128xf32>
    %144 = vector.broadcast %112 : vector<1x128xf32> to vector<512x128xf32>
    %145 = arith.mulf %93, %144 : vector<512x128xf32>
    %146 = vector.broadcast %114 : vector<1x128xf32> to vector<512x128xf32>
    %147 = arith.addf %145, %146 : vector<512x128xf32>
    %148 = arith.addf %147, %143 : vector<512x128xf32>
    %cst_86 = arith.constant 0.000000e+00 : f32
    %149 = vector.broadcast %cst_86 : f32 to vector<512x128xf32>
    %150 = arith.maximumf %148, %149 : vector<512x128xf32>
    %c0_87 = arith.constant 0 : index
    %c0_88 = arith.constant 0 : index
    %151 = vector.load %arg10[%c0_87, %c0_88] : memref<512x128xf32, #tpu.memory_space<vmem>>, vector<512x128xf32>
    tpu.vector_store %arg10[%c0_87, %c0_88], %150 {strides = array<i32>} : memref<512x128xf32, #tpu.memory_space<vmem>>, vector<512x128xf32>,
    return
  }
}

</mosaic_0001>

<llo_original>
// kernel: tpu_custom_call.1
$region0: #{tpu_custom_call.1}
  #allocation0 [shape = 'u32[]', space=smem, size = 0x4, offset = 0x4, fixed_abs, tag = 'smem constant byte address 0x4 - core index']
  #allocation1 [shape = 'u32[72,128]{1,0:T(1,128)}', space=vmem, size = 0x9000, scoped, tag = 'internal scratch']
  #allocation2 [shape = 'bf16[2,18,26,128]{3,2,1,0:T(8,128)(2,1)}', space=vmem, size = 0x48000, scoped, tag = 'scratch operand']
  %s0 = inlined_call_operand.vmem [shape: f32[2,18,18,128], index: 0, kind: input, shape index: {}]
  %s1 = inlined_call_operand.vmem [shape: bf16[1152,128], index: 1, kind: input, shape index: {}]
  %s2 = inlined_call_operand.vmem [shape: bf16[1152,128], index: 2, kind: input, shape index: {}]
  %s3 = inlined_call_operand.vmem [shape: bf16[128,128], index: 3, kind: input, shape index: {}]
  %s4 = inlined_call_operand.vmem [shape: f32[1,128], index: 4, kind: input, shape index: {}]
  %s5 = inlined_call_operand.vmem [shape: f32[1,128], index: 5, kind: input, shape index: {}]
  %s6 = inlined_call_operand.vmem [shape: f32[1,128], index: 6, kind: input, shape index: {}]
  %s7 = inlined_call_operand.vmem [shape: f32[1,128], index: 7, kind: input, shape index: {}]
  %s8 = inlined_call_operand.vmem [shape: f32[1,128], index: 8, kind: input, shape index: {}]
  %s9 = inlined_call_operand.vmem [shape: f32[1,128], index: 9, kind: input, shape index: {}]
  %s10 = inlined_call_operand.hbm [shape: f32[512,128], index: 10, kind: output, shape index: {}]
  %s11 = sld [smem:[#allocation0]]
  $region50: #{tpu_custom_call.1} parent=0
    _
  %s13 = ssub.s32 1, %s11
  %s14 = scalar_select 0, %s13, %s11
  $region1: #{tpu_custom_call.1} parent=0
    #allocation3 [shape = 'u8[262144]{0}', space=vmem, size = 0x40000, scoped, tag = 'output window, operand 0, single buffered']
    #allocation4 [shape = 's32[1]{0}', space=sflag, size = 0x4, scoped, tag = 'scoped memory for tpu_custom_call.1']
    %15 = vsyncpa [#allocation4], 0
    // Predicated region
    $region2: #{tpu_custom_call.1} parent=1 // pred_check
      _
    $region3: #{tpu_custom_call.1} parent=1 // pred_check_branch
      %17 = sbr.rel (0) target = $region5
    $region4: #{tpu_custom_call.1} parent=1 // pred_region
      _
    $region5: #{tpu_custom_call.1} parent=1 // pred_fallthru
      _
    // Predicated region
    $region6: #{tpu_custom_call.1} parent=1 // pred_check
      _
    $region7: #{tpu_custom_call.1} parent=1 // pred_check_branch
      %19 = sbr.rel (0) target = $region9
    $region8: #{tpu_custom_call.1} parent=1 // pred_region
      _
    $region9: #{tpu_custom_call.1} parent=1 // pred_fallthru
      _
    // Predicated region
    $region10: #{tpu_custom_call.1} parent=1 // pred_check
      _
    $region11: #{tpu_custom_call.1} parent=1 // pred_check_branch
      %21 = sbr.rel (0) target = $region13
    $region12: #{tpu_custom_call.1} parent=1 // pred_region
      _
    $region13: #{tpu_custom_call.1} parent=1 // pred_fallthru
      _
    // Predicated region
    $region14: #{tpu_custom_call.1} parent=1 // pred_check
      _
    $region15: #{tpu_custom_call.1} parent=1 // pred_check_branch
      %23 = sbr.rel (0) target = $region17
    $region16: #{tpu_custom_call.1} parent=1 // pred_region
      _
    $region17: #{tpu_custom_call.1} parent=1 // pred_fallthru
      _
    // Predicated region
    $region18: #{tpu_custom_call.1} parent=1 // pred_check
      _
    $region19: #{tpu_custom_call.1} parent=1 // pred_check_branch
      %25 = sbr.rel (0) target = $region21
    $region20: #{tpu_custom_call.1} parent=1 // pred_region
      _
    $region21: #{tpu_custom_call.1} parent=1 // pred_fallthru
      _
    // Predicated region
    $region22: #{tpu_custom_call.1} parent=1 // pred_check
      _
    $region23: #{tpu_custom_call.1} parent=1 // pred_check_branch
      %27 = sbr.rel (0) target = $region25
    $region24: #{tpu_custom_call.1} parent=1 // pred_region
      _
    $region25: #{tpu_custom_call.1} parent=1 // pred_fallthru
      _
    // Predicated region
    $region26: #{tpu_custom_call.1} parent=1 // pred_check
      _
    $region27: #{tpu_custom_call.1} parent=1 // pred_check_branch
      %29 = sbr.rel (0) target = $region29
    $region28: #{tpu_custom_call.1} parent=1 // pred_region
      _
    $region29: #{tpu_custom_call.1} parent=1 // pred_fallthru
      _
    // Predicated region
    $region30: #{tpu_custom_call.1} parent=1 // pred_check
      _
    $region31: #{tpu_custom_call.1} parent=1 // pred_check_branch
      %31 = sbr.rel (0) target = $region33
    $region32: #{tpu_custom_call.1} parent=1 // pred_region
      _
    $region33: #{tpu_custom_call.1} parent=1 // pred_fallthru
      _
    // Predicated region
    $region34: #{tpu_custom_call.1} parent=1 // pred_check
      _
    $region35: #{tpu_custom_call.1} parent=1 // pred_check_branch
      %33 = sbr.rel (0) target = $region37
    $region36: #{tpu_custom_call.1} parent=1 // pred_region
      _
    $region37: #{tpu_custom_call.1} parent=1 // pred_fallthru
      _
    // Predicated region
    $region38: #{tpu_custom_call.1} parent=1 // pred_check
      _
    $region39: #{tpu_custom_call.1} parent=1 // pred_check_branch
      %35 = sbr.rel (0) target = $region41
    $region40: #{tpu_custom_call.1} parent=1 // pred_region
      _
    $region41: #{tpu_custom_call.1} parent=1 // pred_fallthru
      _
    %v37 = vld [vmem:[%s0] sm:$0xff]
    %v38 = vld [vmem:[%s0 + $0x8] sm:$0xff]
    %v39 = vld [vmem:[%s0 + $0x10] sm:$0x3]
    %v40 = vld [vmem:[%s0 + $0x18] sm:$0xff]
    %v41 = vld [vmem:[%s0 + $0x20] sm:$0xff]
    %v42 = vld [vmem:[%s0 + $0x28] sm:$0x3]
    %v43 = vld [vmem:[%s0 + $0x30] sm:$0xff]
    %v44 = vld [vmem:[%s0 + $0x38] sm:$0xff]
    %v45 = vld [vmem:[%s0 + $0x40] sm:$0x3]
    %v46 = vld [vmem:[%s0 + $0x48] sm:$0xff]
    %v47 = vld [vmem:[%s0 + $0x50] sm:$0xff]
    %v48 = vld [vmem:[%s0 + $0x58] sm:$0x3]
    %v49 = vld [vmem:[%s0 + $0x60] sm:$0xff]
    %v50 = vld [vmem:[%s0 + $0x68] sm:$0xff]
    %v51 = vld [vmem:[%s0 + $0x70] sm:$0x3]
    %v52 = vld [vmem:[%s0 + $0x78] sm:$0xff]
    %v53 = vld [vmem:[%s0 + $0x80] sm:$0xff]
    %v54 = vld [vmem:[%s0 + $0x88] sm:$0x3]
    %v55 = vld [vmem:[%s0 + $0x90] sm:$0xff]
    %v56 = vld [vmem:[%s0 + $0x98] sm:$0xff]
    %v57 = vld [vmem:[%s0 + $0xa0] sm:$0x3]
    %v58 = vld [vmem:[%s0 + $0xa8] sm:$0xff]
    %v59 = vld [vmem:[%s0 + $0xb0] sm:$0xff]
    %v60 = vld [vmem:[%s0 + $0xb8] sm:$0x3]
    %v61 = vld [vmem:[%s0 + $0xc0] sm:$0xff]
    %v62 = vld [vmem:[%s0 + $0xc8] sm:$0xff]
    %v63 = vld [vmem:[%s0 + $0xd0] sm:$0x3]
    %v64 = vld [vmem:[%s0 + $0xd8] sm:$0xff]
    %v65 = vld [vmem:[%s0 + $0xe0] sm:$0xff]
    %v66 = vld [vmem:[%s0 + $0xe8] sm:$0x3]
    %v67 = vld [vmem:[%s0 + $0xf0] sm:$0xff]
    %v68 = vld [vmem:[%s0 + $0xf8] sm:$0xff]
    %v69 = vld [vmem:[%s0 + $0x100] sm:$0x3]
    %v70 = vld [vmem:[%s0 + $0x108] sm:$0xff]
    %v71 = vld [vmem:[%s0 + $0x110] sm:$0xff]
    %v72 = vld [vmem:[%s0 + $0x118] sm:$0x3]
    %v73 = vld [vmem:[%s0 + $0x120] sm:$0xff]
    %v74 = vld [vmem:[%s0 + $0x128] sm:$0xff]
    %v75 = vld [vmem:[%s0 + $0x130] sm:$0x3]
    %v76 = vld [vmem:[%s0 + $0x138] sm:$0xff]
    %v77 = vld [vmem:[%s0 + $0x140] sm:$0xff]
    %v78 = vld [vmem:[%s0 + $0x148] sm:$0x3]
    %v79 = vld [vmem:[%s0 + $0x150] sm:$0xff]
    %v80 = vld [vmem:[%s0 + $0x158] sm:$0xff]
    %v81 = vld [vmem:[%s0 + $0x160] sm:$0x3]
    %v82 = vld [vmem:[%s0 + $0x168] sm:$0xff]
    %v83 = vld [vmem:[%s0 + $0x170] sm:$0xff]
    %v84 = vld [vmem:[%s0 + $0x178] sm:$0x3]
    %v85 = vld [vmem:[%s0 + $0x180] sm:$0xff]
    %v86 = vld [vmem:[%s0 + $0x188] sm:$0xff]
    %v87 = vld [vmem:[%s0 + $0x190] sm:$0x3]
    %v88 = vld [vmem:[%s0 + $0x198] sm:$0xff]
    %v89 = vld [vmem:[%s0 + $0x1a0] sm:$0xff]
    %v90 = vld [vmem:[%s0 + $0x1a8] sm:$0x3]
    %v91 = vld [vmem:[%s0 + $0x1b0] sm:$0xff]
    %v92 = vld [vmem:[%s0 + $0x1b8] sm:$0xff]
    %v93 = vld [vmem:[%s0 + $0x1c0] sm:$0x3]
    %v94 = vld [vmem:[%s0 + $0x1c8] sm:$0xff]
    %v95 = vld [vmem:[%s0 + $0x1d0] sm:$0xff]
    %v96 = vld [vmem:[%s0 + $0x1d8] sm:$0x3]
    %v97 = vld [vmem:[%s0 + $0x1e0] sm:$0xff]
    %v98 = vld [vmem:[%s0 + $0x1e8] sm:$0xff]
    %v99 = vld [vmem:[%s0 + $0x1f0] sm:$0x3]
    %v100 = vld [vmem:[%s0 + $0x1f8] sm:$0xff]
    %v101 = vld [vmem:[%s0 + $0x200] sm:$0xff]
    %v102 = vld [vmem:[%s0 + $0x208] sm:$0x3]
    %v103 = vld [vmem:[%s0 + $0x210] sm:$0xff]
    %v104 = vld [vmem:[%s0 + $0x218] sm:$0xff]
    %v105 = vld [vmem:[%s0 + $0x220] sm:$0x3]
    %v106 = vld [vmem:[%s0 + $0x228] sm:$0xff]
    %v107 = vld [vmem:[%s0 + $0x230] sm:$0xff]
    %v108 = vld [vmem:[%s0 + $0x238] sm:$0x3]
    %v109 = vld [vmem:[%s0 + $0x240] sm:$0xff]
    %v110 = vld [vmem:[%s0 + $0x248] sm:$0xff]
    %v111 = vld [vmem:[%s0 + $0x250] sm:$0x3]
    %v112 = vld [vmem:[%s0 + $0x258] sm:$0xff]
    %v113 = vld [vmem:[%s0 + $0x260] sm:$0xff]
    %v114 = vld [vmem:[%s0 + $0x268] sm:$0x3]
    %v115 = vld [vmem:[%s0 + $0x270] sm:$0xff]
    %v116 = vld [vmem:[%s0 + $0x278] sm:$0xff]
    %v117 = vld [vmem:[%s0 + $0x280] sm:$0x3]
    %v118 = vld [vmem:[%s0 + $0x288] sm:$0xff]
    %v119 = vld [vmem:[%s0 + $0x290] sm:$0xff]
    %v120 = vld [vmem:[%s0 + $0x298] sm:$0x3]
    %v121 = vld [vmem:[%s0 + $0x2a0] sm:$0xff]
    %v122 = vld [vmem:[%s0 + $0x2a8] sm:$0xff]
    %v123 = vld [vmem:[%s0 + $0x2b0] sm:$0x3]
    %v124 = vld [vmem:[%s0 + $0x2b8] sm:$0xff]
    %v125 = vld [vmem:[%s0 + $0x2c0] sm:$0xff]
    %v126 = vld [vmem:[%s0 + $0x2c8] sm:$0x3]
    %v127 = vld [vmem:[%s0 + $0x2d0] sm:$0xff]
    %v128 = vld [vmem:[%s0 + $0x2d8] sm:$0xff]
    %v129 = vld [vmem:[%s0 + $0x2e0] sm:$0x3]
    %v130 = vld [vmem:[%s0 + $0x2e8] sm:$0xff]
    %v131 = vld [vmem:[%s0 + $0x2f0] sm:$0xff]
    %v132 = vld [vmem:[%s0 + $0x2f8] sm:$0x3]
    %v133 = vld [vmem:[%s0 + $0x300] sm:$0xff]
    %v134 = vld [vmem:[%s0 + $0x308] sm:$0xff]
    %v135 = vld [vmem:[%s0 + $0x310] sm:$0x3]
    %v136 = vld [vmem:[%s0 + $0x318] sm:$0xff]
    %v137 = vld [vmem:[%s0 + $0x320] sm:$0xff]
    %v138 = vld [vmem:[%s0 + $0x328] sm:$0x3]
    %v139 = vld [vmem:[%s0 + $0x330] sm:$0xff]
    %v140 = vld [vmem:[%s0 + $0x338] sm:$0xff]
    %v141 = vld [vmem:[%s0 + $0x340] sm:$0x3]
    %v142 = vld [vmem:[%s0 + $0x348] sm:$0xff]
    %v143 = vld [vmem:[%s0 + $0x350] sm:$0xff]
    %v144 = vld [vmem:[%s0 + $0x358] sm:$0x3]
    %v145 = vpack.c.bf16 %v37, %v37
    %v146 = vpack.c.bf16 %v38, %v38
    %v147 = vpack.c.bf16 %v39, %v39
    %v148 = vpack.c.bf16 %v40, %v40
    %v149 = vpack.c.bf16 %v41, %v41
    %v150 = vpack.c.bf16 %v42, %v42
    %v151 = vpack.c.bf16 %v43, %v43
    %v152 = vpack.c.bf16 %v44, %v44
    %v153 = vpack.c.bf16 %v45, %v45
    %v154 = vpack.c.bf16 %v46, %v46
    %v155 = vpack.c.bf16 %v47, %v47
    %v156 = vpack.c.bf16 %v48, %v48
    %v157 = vpack.c.bf16 %v49, %v49
    %v158 = vpack.c.bf16 %v50, %v50
    %v159 = vpack.c.bf16 %v51, %v51
    %v160 = vpack.c.bf16 %v52, %v52
    %v161 = vpack.c.bf16 %v53, %v53
    %v162 = vpack.c.bf16 %v54, %v54
    %v163 = vpack.c.bf16 %v55, %v55
    %v164 = vpack.c.bf16 %v56, %v56
    %v165 = vpack.c.bf16 %v57, %v57
    %v166 = vpack.c.bf16 %v58, %v58
    %v167 = vpack.c.bf16 %v59, %v59
    %v168 = vpack.c.bf16 %v60, %v60
    %v169 = vpack.c.bf16 %v61, %v61
    %v170 = vpack.c.bf16 %v62, %v62
    %v171 = vpack.c.bf16 %v63, %v63
    %v172 = vpack.c.bf16 %v64, %v64
    %v173 = vpack.c.bf16 %v65, %v65
    %v174 = vpack.c.bf16 %v66, %v66
    %v175 = vpack.c.bf16 %v67, %v67
    %v176 = vpack.c.bf16 %v68, %v68
    %v177 = vpack.c.bf16 %v69, %v69
    %v178 = vpack.c.bf16 %v70, %v70
    %v179 = vpack.c.bf16 %v71, %v71
    %v180 = vpack.c.bf16 %v72, %v72
    %v181 = vpack.c.bf16 %v73, %v73
    %v182 = vpack.c.bf16 %v74, %v74
    %v183 = vpack.c.bf16 %v75, %v75
    %v184 = vpack.c.bf16 %v76, %v76
    %v185 = vpack.c.bf16 %v77, %v77
    %v186 = vpack.c.bf16 %v78, %v78
    %v187 = vpack.c.bf16 %v79, %v79
    %v188 = vpack.c.bf16 %v80, %v80
    %v189 = vpack.c.bf16 %v81, %v81
    %v190 = vpack.c.bf16 %v82, %v82
    %v191 = vpack.c.bf16 %v83, %v83
    %v192 = vpack.c.bf16 %v84, %v84
    %v193 = vpack.c.bf16 %v85, %v85
    %v194 = vpack.c.bf16 %v86, %v86
    %v195 = vpack.c.bf16 %v87, %v87
    %v196 = vpack.c.bf16 %v88, %v88
    %v197 = vpack.c.bf16 %v89, %v89
    %v198 = vpack.c.bf16 %v90, %v90
    %v199 = vpack.c.bf16 %v91, %v91
    %v200 = vpack.c.bf16 %v92, %v92
    %v201 = vpack.c.bf16 %v93, %v93
    %v202 = vpack.c.bf16 %v94, %v94
    %v203 = vpack.c.bf16 %v95, %v95
    %v204 = vpack.c.bf16 %v96, %v96
    %v205 = vpack.c.bf16 %v97, %v97
    %v206 = vpack.c.bf16 %v98, %v98
    %v207 = vpack.c.bf16 %v99, %v99
    %v208 = vpack.c.bf16 %v100, %v100
    %v209 = vpack.c.bf16 %v101, %v101
    %v210 = vpack.c.bf16 %v102, %v102
    %v211 = vpack.c.bf16 %v103, %v103
    %v212 = vpack.c.bf16 %v104, %v104
    %v213 = vpack.c.bf16 %v105, %v105
    %v214 = vpack.c.bf16 %v106, %v106
    %v215 = vpack.c.bf16 %v107, %v107
    %v216 = vpack.c.bf16 %v108, %v108
    %v217 = vpack.c.bf16 %v109, %v109
    %v218 = vpack.c.bf16 %v110, %v110
    %v219 = vpack.c.bf16 %v111, %v111
    %v220 = vpack.c.bf16 %v112, %v112
    %v221 = vpack.c.bf16 %v113, %v113
    %v222 = vpack.c.bf16 %v114, %v114
    %v223 = vpack.c.bf16 %v115, %v115
    %v224 = vpack.c.bf16 %v116, %v116
    %v225 = vpack.c.bf16 %v117, %v117
    %v226 = vpack.c.bf16 %v118, %v118
    %v227 = vpack.c.bf16 %v119, %v119
    %v228 = vpack.c.bf16 %v120, %v120
    %v229 = vpack.c.bf16 %v121, %v121
    %v230 = vpack.c.bf16 %v122, %v122
    %v231 = vpack.c.bf16 %v123, %v123
    %v232 = vpack.c.bf16 %v124, %v124
    %v233 = vpack.c.bf16 %v125, %v125
    %v234 = vpack.c.bf16 %v126, %v126
    %v235 = vpack.c.bf16 %v127, %v127
    %v236 = vpack.c.bf16 %v128, %v128
    %v237 = vpack.c.bf16 %v129, %v129
    %v238 = vpack.c.bf16 %v130, %v130
    %v239 = vpack.c.bf16 %v131, %v131
    %v240 = vpack.c.bf16 %v132, %v132
    %v241 = vpack.c.bf16 %v133, %v133
    %v242 = vpack.c.bf16 %v134, %v134
    %v243 = vpack.c.bf16 %v135, %v135
    %v244 = vpack.c.bf16 %v136, %v136
    %v245 = vpack.c.bf16 %v137, %v137
    %v246 = vpack.c.bf16 %v138, %v138
    %v247 = vpack.c.bf16 %v139, %v139
    %v248 = vpack.c.bf16 %v140, %v140
    %v249 = vpack.c.bf16 %v141, %v141
    %v250 = vpack.c.bf16 %v142, %v142
    %v251 = vpack.c.bf16 %v143, %v143
    %v252 = vpack.c.bf16 %v144, %v144
    %v253 = vld [vmem:[%s1] sm:$0xf]
    %v254 = vld [vmem:[%s1 + $0x4] sm:$0xf]
    %v255 = vld [vmem:[%s1 + $0x8] sm:$0xf]
    %v256 = vld [vmem:[%s1 + $0xc] sm:$0xf]
    %v257 = vld [vmem:[%s1 + $0x10] sm:$0xf]
    %v258 = vld [vmem:[%s1 + $0x14] sm:$0xf]
    %v259 = vld [vmem:[%s1 + $0x18] sm:$0xf]
    %v260 = vld [vmem:[%s1 + $0x1c] sm:$0xf]
    %v261 = vld [vmem:[%s1 + $0x20] sm:$0xf]
    %v262 = vld [vmem:[%s1 + $0x24] sm:$0xf]
    %v263 = vld [vmem:[%s1 + $0x28] sm:$0xf]
    %v264 = vld [vmem:[%s1 + $0x2c] sm:$0xf]
    %v265 = vld [vmem:[%s1 + $0x30] sm:$0xf]
    %v266 = vld [vmem:[%s1 + $0x34] sm:$0xf]
    %v267 = vld [vmem:[%s1 + $0x38] sm:$0xf]
    %v268 = vld [vmem:[%s1 + $0x3c] sm:$0xf]
    %v269 = vld [vmem:[%s1 + $0x40] sm:$0xf]
    %v270 = vld [vmem:[%s1 + $0x44] sm:$0xf]
    %v271 = vld [vmem:[%s1 + $0x48] sm:$0xf]
    %v272 = vld [vmem:[%s1 + $0x4c] sm:$0xf]
    %v273 = vld [vmem:[%s1 + $0x50] sm:$0xf]
    %v274 = vld [vmem:[%s1 + $0x54] sm:$0xf]
    %v275 = vld [vmem:[%s1 + $0x58] sm:$0xf]
    %v276 = vld [vmem:[%s1 + $0x5c] sm:$0xf]
    %v277 = vld [vmem:[%s1 + $0x60] sm:$0xf]
    %v278 = vld [vmem:[%s1 + $0x64] sm:$0xf]
    %v279 = vld [vmem:[%s1 + $0x68] sm:$0xf]
    %v280 = vld [vmem:[%s1 + $0x6c] sm:$0xf]
    %v281 = vld [vmem:[%s1 + $0x70] sm:$0xf]
    %v282 = vld [vmem:[%s1 + $0x74] sm:$0xf]
    %v283 = vld [vmem:[%s1 + $0x78] sm:$0xf]
    %v284 = vld [vmem:[%s1 + $0x7c] sm:$0xf]
    %v285 = vld [vmem:[%s1 + $0x80] sm:$0xf]
    %v286 = vld [vmem:[%s1 + $0x84] sm:$0xf]
    %v287 = vld [vmem:[%s1 + $0x88] sm:$0xf]
    %v288 = vld [vmem:[%s1 + $0x8c] sm:$0xf]
    %v289 = vld [vmem:[%s1 + $0x90] sm:$0xf]
    %v290 = vld [vmem:[%s1 + $0x94] sm:$0xf]
    %v291 = vld [vmem:[%s1 + $0x98] sm:$0xf]
    %v292 = vld [vmem:[%s1 + $0x9c] sm:$0xf]
    %v293 = vld [vmem:[%s1 + $0xa0] sm:$0xf]
    %v294 = vld [vmem:[%s1 + $0xa4] sm:$0xf]
    %v295 = vld [vmem:[%s1 + $0xa8] sm:$0xf]
    %v296 = vld [vmem:[%s1 + $0xac] sm:$0xf]
    %v297 = vld [vmem:[%s1 + $0xb0] sm:$0xf]
    %v298 = vld [vmem:[%s1 + $0xb4] sm:$0xf]
    %v299 = vld [vmem:[%s1 + $0xb8] sm:$0xf]
    %v300 = vld [vmem:[%s1 + $0xbc] sm:$0xf]
    %v301 = vld [vmem:[%s1 + $0xc0] sm:$0xf]
    %v302 = vld [vmem:[%s1 + $0xc4] sm:$0xf]
    %v303 = vld [vmem:[%s1 + $0xc8] sm:$0xf]
    %v304 = vld [vmem:[%s1 + $0xcc] sm:$0xf]
    %v305 = vld [vmem:[%s1 + $0xd0] sm:$0xf]
    %v306 = vld [vmem:[%s1 + $0xd4] sm:$0xf]
    %v307 = vld [vmem:[%s1 + $0xd8] sm:$0xf]
    %v308 = vld [vmem:[%s1 + $0xdc] sm:$0xf]
    %v309 = vld [vmem:[%s1 + $0xe0] sm:$0xf]
    %v310 = vld [vmem:[%s1 + $0xe4] sm:$0xf]
    %v311 = vld [vmem:[%s1 + $0xe8] sm:$0xf]
    %v312 = vld [vmem:[%s1 + $0xec] sm:$0xf]
    %v313 = vld [vmem:[%s1 + $0xf0] sm:$0xf]
    %v314 = vld [vmem:[%s1 + $0xf4] sm:$0xf]
    %v315 = vld [vmem:[%s1 + $0xf8] sm:$0xf]
    %v316 = vld [vmem:[%s1 + $0xfc] sm:$0xf]
    %v317 = vld [vmem:[%s1 + $0x100] sm:$0xf]
    %v318 = vld [vmem:[%s1 + $0x104] sm:$0xf]
    %v319 = vld [vmem:[%s1 + $0x108] sm:$0xf]
    %v320 = vld [vmem:[%s1 + $0x10c] sm:$0xf]
    %v321 = vld [vmem:[%s1 + $0x110] sm:$0xf]
    %v322 = vld [vmem:[%s1 + $0x114] sm:$0xf]
    %v323 = vld [vmem:[%s1 + $0x118] sm:$0xf]
    %v324 = vld [vmem:[%s1 + $0x11c] sm:$0xf]
    %v325 = vld [vmem:[%s1 + $0x120] sm:$0xf]
    %v326 = vld [vmem:[%s1 + $0x124] sm:$0xf]
    %v327 = vld [vmem:[%s1 + $0x128] sm:$0xf]
    %v328 = vld [vmem:[%s1 + $0x12c] sm:$0xf]
    %v329 = vld [vmem:[%s1 + $0x130] sm:$0xf]
    %v330 = vld [vmem:[%s1 + $0x134] sm:$0xf]
    %v331 = vld [vmem:[%s1 + $0x138] sm:$0xf]
    %v332 = vld [vmem:[%s1 + $0x13c] sm:$0xf]
    %v333 = vld [vmem:[%s1 + $0x140] sm:$0xf]
    %v334 = vld [vmem:[%s1 + $0x144] sm:$0xf]
    %v335 = vld [vmem:[%s1 + $0x148] sm:$0xf]
    %v336 = vld [vmem:[%s1 + $0x14c] sm:$0xf]
    %v337 = vld [vmem:[%s1 + $0x150] sm:$0xf]
    %v338 = vld [vmem:[%s1 + $0x154] sm:$0xf]
    %v339 = vld [vmem:[%s1 + $0x158] sm:$0xf]
    %v340 = vld [vmem:[%s1 + $0x15c] sm:$0xf]
    %v341 = vld [vmem:[%s1 + $0x160] sm:$0xf]
    %v342 = vld [vmem:[%s1 + $0x164] sm:$0xf]
    %v343 = vld [vmem:[%s1 + $0x168] sm:$0xf]
    %v344 = vld [vmem:[%s1 + $0x16c] sm:$0xf]
    %v345 = vld [vmem:[%s1 + $0x170] sm:$0xf]
    %v346 = vld [vmem:[%s1 + $0x174] sm:$0xf]
    %v347 = vld [vmem:[%s1 + $0x178] sm:$0xf]
    %v348 = vld [vmem:[%s1 + $0x17c] sm:$0xf]
    %v349 = vld [vmem:[%s1 + $0x180] sm:$0xf]
    %v350 = vld [vmem:[%s1 + $0x184] sm:$0xf]
    %v351 = vld [vmem:[%s1 + $0x188] sm:$0xf]
    %v352 = vld [vmem:[%s1 + $0x18c] sm:$0xf]
    %v353 = vld [vmem:[%s1 + $0x190] sm:$0xf]
    %v354 = vld [vmem:[%s1 + $0x194] sm:$0xf]
    %v355 = vld [vmem:[%s1 + $0x198] sm:$0xf]
    %v356 = vld [vmem:[%s1 + $0x19c] sm:$0xf]
    %v357 = vld [vmem:[%s1 + $0x1a0] sm:$0xf]
    %v358 = vld [vmem:[%s1 + $0x1a4] sm:$0xf]
    %v359 = vld [vmem:[%s1 + $0x1a8] sm:$0xf]
    %v360 = vld [vmem:[%s1 + $0x1ac] sm:$0xf]
    %v361 = vld [vmem:[%s1 + $0x1b0] sm:$0xf]
    %v362 = vld [vmem:[%s1 + $0x1b4] sm:$0xf]
    %v363 = vld [vmem:[%s1 + $0x1b8] sm:$0xf]
    %v364 = vld [vmem:[%s1 + $0x1bc] sm:$0xf]
    %v365 = vld [vmem:[%s1 + $0x1c0] sm:$0xf]
    %v366 = vld [vmem:[%s1 + $0x1c4] sm:$0xf]
    %v367 = vld [vmem:[%s1 + $0x1c8] sm:$0xf]
    %v368 = vld [vmem:[%s1 + $0x1cc] sm:$0xf]
    %v369 = vld [vmem:[%s1 + $0x1d0] sm:$0xf]
    %v370 = vld [vmem:[%s1 + $0x1d4] sm:$0xf]
    %v371 = vld [vmem:[%s1 + $0x1d8] sm:$0xf]
    %v372 = vld [vmem:[%s1 + $0x1dc] sm:$0xf]
    %v373 = vld [vmem:[%s1 + $0x1e0] sm:$0xf]
    %v374 = vld [vmem:[%s1 + $0x1e4] sm:$0xf]
    %v375 = vld [vmem:[%s1 + $0x1e8] sm:$0xf]
    %v376 = vld [vmem:[%s1 + $0x1ec] sm:$0xf]
    %v377 = vld [vmem:[%s1 + $0x1f0] sm:$0xf]
    %v378 = vld [vmem:[%s1 + $0x1f4] sm:$0xf]
    %v379 = vld [vmem:[%s1 + $0x1f8] sm:$0xf]
    %v380 = vld [vmem:[%s1 + $0x1fc] sm:$0xf]
    %v381 = vld [vmem:[%s1 + $0x200] sm:$0xf]
    %v382 = vld [vmem:[%s1 + $0x204] sm:$0xf]
    %v383 = vld [vmem:[%s1 + $0x208] sm:$0xf]
    %v384 = vld [vmem:[%s1 + $0x20c] sm:$0xf]
    %v385 = vld [vmem:[%s1 + $0x210] sm:$0xf]
    %v386 = vld [vmem:[%s1 + $0x214] sm:$0xf]
    %v387 = vld [vmem:[%s1 + $0x218] sm:$0xf]
    %v388 = vld [vmem:[%s1 + $0x21c] sm:$0xf]
    %v389 = vld [vmem:[%s1 + $0x220] sm:$0xf]
    %v390 = vld [vmem:[%s1 + $0x224] sm:$0xf]
    %v391 = vld [vmem:[%s1 + $0x228] sm:$0xf]
    %v392 = vld [vmem:[%s1 + $0x22c] sm:$0xf]
    %v393 = vld [vmem:[%s1 + $0x230] sm:$0xf]
    %v394 = vld [vmem:[%s1 + $0x234] sm:$0xf]
    %v395 = vld [vmem:[%s1 + $0x238] sm:$0xf]
    %v396 = vld [vmem:[%s1 + $0x23c] sm:$0xf]
    %vm397 = vsmask.f32 3328
    %vm398 = vsmask.f32 7440
    %vm399 = vmor %vm397, %vm398
    %v401 = vshrl.u32 %v145, 16
    %v403 = vrot.slane %v401, 4
    %v404 = vshll.u32 %v145, 16
    %v406 = vrot.slane %v404, 5
    %v407 = vor.u32 %v403, %v406
    %v408 = vrot.slane %v407, 4
    %v410 = vshll.u32 %v146, 16
    %v412 = vrot.slane %v410, 5
    %v413 = vsel %vm399, %v408, %v412
    %v414 = vshrl.u32 %v146, 16
    %v416 = vrot.slane %v414, 4
    %v417 = vor.u32 %v416, %v412
    %v418 = vrot.slane %v417, 4
    %v420 = vshll.u32 %v147, 16
    %v422 = vrot.slane %v420, 5
    %v423 = vsel %vm399, %v418, %v422
    %v425 = vshrl.u32 %v148, 16
    %v427 = vrot.slane %v425, 4
    %v428 = vshll.u32 %v148, 16
    %v430 = vrot.slane %v428, 5
    %v431 = vor.u32 %v427, %v430
    %v432 = vrot.slane %v431, 4
    %v434 = vshll.u32 %v149, 16
    %v436 = vrot.slane %v434, 5
    %v437 = vsel %vm399, %v432, %v436
    %v438 = vshrl.u32 %v149, 16
    %v440 = vrot.slane %v438, 4
    %v441 = vor.u32 %v440, %v436
    %v442 = vrot.slane %v441, 4
    %v444 = vshll.u32 %v150, 16
    %v446 = vrot.slane %v444, 5
    %v447 = vsel %vm399, %v442, %v446
    %v449 = vshrl.u32 %v151, 16
    %v451 = vrot.slane %v449, 4
    %v452 = vshll.u32 %v151, 16
    %v454 = vrot.slane %v452, 5
    %v455 = vor.u32 %v451, %v454
    %v456 = vrot.slane %v455, 4
    %v458 = vshll.u32 %v152, 16
    %v460 = vrot.slane %v458, 5
    %v461 = vsel %vm399, %v456, %v460
    %v462 = vshrl.u32 %v152, 16
    %v464 = vrot.slane %v462, 4
    %v465 = vor.u32 %v464, %v460
    %v466 = vrot.slane %v465, 4
    %v468 = vshll.u32 %v153, 16
    %v470 = vrot.slane %v468, 5
    %v471 = vsel %vm399, %v466, %v470
    %v473 = vshrl.u32 %v154, 16
    %v475 = vrot.slane %v473, 4
    %v476 = vshll.u32 %v154, 16
    %v478 = vrot.slane %v476, 5
    %v479 = vor.u32 %v475, %v478
    %v480 = vrot.slane %v479, 4
    %v482 = vshll.u32 %v155, 16
    %v484 = vrot.slane %v482, 5
    %v485 = vsel %vm399, %v480, %v484
    %v486 = vshrl.u32 %v155, 16
    %v488 = vrot.slane %v486, 4
    %v489 = vor.u32 %v488, %v484
    %v490 = vrot.slane %v489, 4
    %v492 = vshll.u32 %v156, 16
    %v494 = vrot.slane %v492, 5
    %v495 = vsel %vm399, %v490, %v494
    %v497 = vshrl.u32 %v157, 16
    %v499 = vrot.slane %v497, 4
    %v500 = vshll.u32 %v157, 16
    %v502 = vrot.slane %v500, 5
    %v503 = vor.u32 %v499, %v502
    %v504 = vrot.slane %v503, 4
    %v506 = vshll.u32 %v158, 16
    %v508 = vrot.slane %v506, 5
    %v509 = vsel %vm399, %v504, %v508
    %v510 = vshrl.u32 %v158, 16
    %v512 = vrot.slane %v510, 4
    %v513 = vor.u32 %v512, %v508
    %v514 = vrot.slane %v513, 4
    %v516 = vshll.u32 %v159, 16
    %v518 = vrot.slane %v516, 5
    %v519 = vsel %vm399, %v514, %v518
    %v521 = vshrl.u32 %v160, 16
    %v523 = vrot.slane %v521, 4
    %v524 = vshll.u32 %v160, 16
    %v526 = vrot.slane %v524, 5
    %v527 = vor.u32 %v523, %v526
    %v528 = vrot.slane %v527, 4
    %v530 = vshll.u32 %v161, 16
    %v532 = vrot.slane %v530, 5
    %v533 = vsel %vm399, %v528, %v532
    %v534 = vshrl.u32 %v161, 16
    %v536 = vrot.slane %v534, 4
    %v537 = vor.u32 %v536, %v532
    %v538 = vrot.slane %v537, 4
    %v540 = vshll.u32 %v162, 16
    %v542 = vrot.slane %v540, 5
    %v543 = vsel %vm399, %v538, %v542
    %v545 = vshrl.u32 %v163, 16
    %v547 = vrot.slane %v545, 4
    %v548 = vshll.u32 %v163, 16
    %v550 = vrot.slane %v548, 5
    %v551 = vor.u32 %v547, %v550
    %v552 = vrot.slane %v551, 4
    %v554 = vshll.u32 %v164, 16
    %v556 = vrot.slane %v554, 5
    %v557 = vsel %vm399, %v552, %v556
    %v558 = vshrl.u32 %v164, 16
    %v560 = vrot.slane %v558, 4
    %v561 = vor.u32 %v560, %v556
    %v562 = vrot.slane %v561, 4
    %v564 = vshll.u32 %v165, 16
    %v566 = vrot.slane %v564, 5
    %v567 = vsel %vm399, %v562, %v566
    %v569 = vshrl.u32 %v166, 16
    %v571 = vrot.slane %v569, 4
    %v572 = vshll.u32 %v166, 16
    %v574 = vrot.slane %v572, 5
    %v575 = vor.u32 %v571, %v574
    %v576 = vrot.slane %v575, 4
    %v578 = vshll.u32 %v167, 16
    %v580 = vrot.slane %v578, 5
    %v581 = vsel %vm399, %v576, %v580
    %v582 = vshrl.u32 %v167, 16
    %v584 = vrot.slane %v582, 4
    %v585 = vor.u32 %v584, %v580
    %v586 = vrot.slane %v585, 4
    %v588 = vshll.u32 %v168, 16
    %v590 = vrot.slane %v588, 5
    %v591 = vsel %vm399, %v586, %v590
    %v593 = vshrl.u32 %v169, 16
    %v595 = vrot.slane %v593, 4
    %v596 = vshll.u32 %v169, 16
    %v598 = vrot.slane %v596, 5
    %v599 = vor.u32 %v595, %v598
    %v600 = vrot.slane %v599, 4
    %v602 = vshll.u32 %v170, 16
    %v604 = vrot.slane %v602, 5
    %v605 = vsel %vm399, %v600, %v604
    %v606 = vshrl.u32 %v170, 16
    %v608 = vrot.slane %v606, 4
    %v609 = vor.u32 %v608, %v604
    %v610 = vrot.slane %v609, 4
    %v612 = vshll.u32 %v171, 16
    %v614 = vrot.slane %v612, 5
    %v615 = vsel %vm399, %v610, %v614
    %v617 = vshrl.u32 %v172, 16
    %v619 = vrot.slane %v617, 4
    %v620 = vshll.u32 %v172, 16
    %v622 = vrot.slane %v620, 5
    %v623 = vor.u32 %v619, %v622
    %v624 = vrot.slane %v623, 4
    %v626 = vshll.u32 %v173, 16
    %v628 = vrot.slane %v626, 5
    %v629 = vsel %vm399, %v624, %v628
    %v630 = vshrl.u32 %v173, 16
    %v632 = vrot.slane %v630, 4
    %v633 = vor.u32 %v632, %v628
    %v634 = vrot.slane %v633, 4
    %v636 = vshll.u32 %v174, 16
    %v638 = vrot.slane %v636, 5
    %v639 = vsel %vm399, %v634, %v638
    %v641 = vshrl.u32 %v175, 16
    %v643 = vrot.slane %v641, 4
    %v644 = vshll.u32 %v175, 16
    %v646 = vrot.slane %v644, 5
    %v647 = vor.u32 %v643, %v646
    %v648 = vrot.slane %v647, 4
    %v650 = vshll.u32 %v176, 16
    %v652 = vrot.slane %v650, 5
    %v653 = vsel %vm399, %v648, %v652
    %v654 = vshrl.u32 %v176, 16
    %v656 = vrot.slane %v654, 4
    %v657 = vor.u32 %v656, %v652
    %v658 = vrot.slane %v657, 4
    %v660 = vshll.u32 %v177, 16
    %v662 = vrot.slane %v660, 5
    %v663 = vsel %vm399, %v658, %v662
    %v665 = vshrl.u32 %v178, 16
    %v667 = vrot.slane %v665, 4
    %v668 = vshll.u32 %v178, 16
    %v670 = vrot.slane %v668, 5
    %v671 = vor.u32 %v667, %v670
    %v672 = vrot.slane %v671, 4
    %v674 = vshll.u32 %v179, 16
    %v676 = vrot.slane %v674, 5
    %v677 = vsel %vm399, %v672, %v676
    %v678 = vshrl.u32 %v179, 16
    %v680 = vrot.slane %v678, 4
    %v681 = vor.u32 %v680, %v676
    %v682 = vrot.slane %v681, 4
    %v684 = vshll.u32 %v180, 16
    %v686 = vrot.slane %v684, 5
    %v687 = vsel %vm399, %v682, %v686
    %v689 = vshrl.u32 %v181, 16
    %v691 = vrot.slane %v689, 4
    %v692 = vshll.u32 %v181, 16
    %v694 = vrot.slane %v692, 5
    %v695 = vor.u32 %v691, %v694
    %v696 = vrot.slane %v695, 4
    %v698 = vshll.u32 %v182, 16
    %v700 = vrot.slane %v698, 5
    %v701 = vsel %vm399, %v696, %v700
    %v702 = vshrl.u32 %v182, 16
    %v704 = vrot.slane %v702, 4
    %v705 = vor.u32 %v704, %v700
    %v706 = vrot.slane %v705, 4
    %v708 = vshll.u32 %v183, 16
    %v710 = vrot.slane %v708, 5
    %v711 = vsel %vm399, %v706, %v710
    %v713 = vshrl.u32 %v184, 16
    %v715 = vrot.slane %v713, 4
    %v716 = vshll.u32 %v184, 16
    %v718 = vrot.slane %v716, 5
    %v719 = vor.u32 %v715, %v718
    %v720 = vrot.slane %v719, 4
    %v722 = vshll.u32 %v185, 16
    %v724 = vrot.slane %v722, 5
    %v725 = vsel %vm399, %v720, %v724
    %v726 = vshrl.u32 %v185, 16
    %v728 = vrot.slane %v726, 4
    %v729 = vor.u32 %v728, %v724
    %v730 = vrot.slane %v729, 4
    %v732 = vshll.u32 %v186, 16
    %v734 = vrot.slane %v732, 5
    %v735 = vsel %vm399, %v730, %v734
    %v737 = vshrl.u32 %v187, 16
    %v739 = vrot.slane %v737, 4
    %v740 = vshll.u32 %v187, 16
    %v742 = vrot.slane %v740, 5
    %v743 = vor.u32 %v739, %v742
    %v744 = vrot.slane %v743, 4
    %v746 = vshll.u32 %v188, 16
    %v748 = vrot.slane %v746, 5
    %v749 = vsel %vm399, %v744, %v748
    %v750 = vshrl.u32 %v188, 16
    %v752 = vrot.slane %v750, 4
    %v753 = vor.u32 %v752, %v748
    %v754 = vrot.slane %v753, 4
    %v756 = vshll.u32 %v189, 16
    %v758 = vrot.slane %v756, 5
    %v759 = vsel %vm399, %v754, %v758
    %v761 = vshrl.u32 %v190, 16
    %v763 = vrot.slane %v761, 4
    %v764 = vshll.u32 %v190, 16
    %v766 = vrot.slane %v764, 5
    %v767 = vor.u32 %v763, %v766
    %v768 = vrot.slane %v767, 4
    %v770 = vshll.u32 %v191, 16
    %v772 = vrot.slane %v770, 5
    %v773 = vsel %vm399, %v768, %v772
    %v774 = vshrl.u32 %v191, 16
    %v776 = vrot.slane %v774, 4
    %v777 = vor.u32 %v776, %v772
    %v778 = vrot.slane %v777, 4
    %v780 = vshll.u32 %v192, 16
    %v782 = vrot.slane %v780, 5
    %v783 = vsel %vm399, %v778, %v782
    %v785 = vshrl.u32 %v199, 16
    %v787 = vrot.slane %v785, 4
    %v788 = vshll.u32 %v199, 16
    %v790 = vrot.slane %v788, 5
    %v791 = vor.u32 %v787, %v790
    %v792 = vrot.slane %v791, 4
    %v794 = vshll.u32 %v200, 16
    %v796 = vrot.slane %v794, 5
    %v797 = vsel %vm399, %v792, %v796
    %v798 = vshrl.u32 %v200, 16
    %v800 = vrot.slane %v798, 4
    %v801 = vor.u32 %v800, %v796
    %v802 = vrot.slane %v801, 4
    %v804 = vshll.u32 %v201, 16
    %v806 = vrot.slane %v804, 5
    %v807 = vsel %vm399, %v802, %v806
    %v809 = vshrl.u32 %v202, 16
    %v811 = vrot.slane %v809, 4
    %v812 = vshll.u32 %v202, 16
    %v814 = vrot.slane %v812, 5
    %v815 = vor.u32 %v811, %v814
    %v816 = vrot.slane %v815, 4
    %v818 = vshll.u32 %v203, 16
    %v820 = vrot.slane %v818, 5
    %v821 = vsel %vm399, %v816, %v820
    %v822 = vshrl.u32 %v203, 16
    %v824 = vrot.slane %v822, 4
    %v825 = vor.u32 %v824, %v820
    %v826 = vrot.slane %v825, 4
    %v828 = vshll.u32 %v204, 16
    %v830 = vrot.slane %v828, 5
    %v831 = vsel %vm399, %v826, %v830
    %v833 = vshrl.u32 %v205, 16
    %v835 = vrot.slane %v833, 4
    %v836 = vshll.u32 %v205, 16
    %v838 = vrot.slane %v836, 5
    %v839 = vor.u32 %v835, %v838
    %v840 = vrot.slane %v839, 4
    %v842 = vshll.u32 %v206, 16
    %v844 = vrot.slane %v842, 5
    %v845 = vsel %vm399, %v840, %v844
    %v846 = vshrl.u32 %v206, 16
    %v848 = vrot.slane %v846, 4
    %v849 = vor.u32 %v848, %v844
    %v850 = vrot.slane %v849, 4
    %v852 = vshll.u32 %v207, 16
    %v854 = vrot.slane %v852, 5
    %v855 = vsel %vm399, %v850, %v854
    %v857 = vshrl.u32 %v208, 16
    %v859 = vrot.slane %v857, 4
    %v860 = vshll.u32 %v208, 16
    %v862 = vrot.slane %v860, 5
    %v863 = vor.u32 %v859, %v862
    %v864 = vrot.slane %v863, 4
    %v866 = vshll.u32 %v209, 16
    %v868 = vrot.slane %v866, 5
    %v869 = vsel %vm399, %v864, %v868
    %v870 = vshrl.u32 %v209, 16
    %v872 = vrot.slane %v870, 4
    %v873 = vor.u32 %v872, %v868
    %v874 = vrot.slane %v873, 4
    %v876 = vshll.u32 %v210, 16
    %v878 = vrot.slane %v876, 5
    %v879 = vsel %vm399, %v874, %v878
    %v881 = vshrl.u32 %v211, 16
    %v883 = vrot.slane %v881, 4
    %v884 = vshll.u32 %v211, 16
    %v886 = vrot.slane %v884, 5
    %v887 = vor.u32 %v883, %v886
    %v888 = vrot.slane %v887, 4
    %v890 = vshll.u32 %v212, 16
    %v892 = vrot.slane %v890, 5
    %v893 = vsel %vm399, %v888, %v892
    %v894 = vshrl.u32 %v212, 16
    %v896 = vrot.slane %v894, 4
    %v897 = vor.u32 %v896, %v892
    %v898 = vrot.slane %v897, 4
    %v900 = vshll.u32 %v213, 16
    %v902 = vrot.slane %v900, 5
    %v903 = vsel %vm399, %v898, %v902
    %v905 = vshrl.u32 %v214, 16
    %v907 = vrot.slane %v905, 4
    %v908 = vshll.u32 %v214, 16
    %v910 = vrot.slane %v908, 5
    %v911 = vor.u32 %v907, %v910
    %v912 = vrot.slane %v911, 4
    %v914 = vshll.u32 %v215, 16
    %v916 = vrot.slane %v914, 5
    %v917 = vsel %vm399, %v912, %v916
    %v918 = vshrl.u32 %v215, 16
    %v920 = vrot.slane %v918, 4
    %v921 = vor.u32 %v920, %v916
    %v922 = vrot.slane %v921, 4
    %v924 = vshll.u32 %v216, 16
    %v926 = vrot.slane %v924, 5
    %v927 = vsel %vm399, %v922, %v926
    %v929 = vshrl.u32 %v217, 16
    %v931 = vrot.slane %v929, 4
    %v932 = vshll.u32 %v217, 16
    %v934 = vrot.slane %v932, 5
    %v935 = vor.u32 %v931, %v934
    %v936 = vrot.slane %v935, 4
    %v938 = vshll.u32 %v218, 16
    %v940 = vrot.slane %v938, 5
    %v941 = vsel %vm399, %v936, %v940
    %v942 = vshrl.u32 %v218, 16
    %v944 = vrot.slane %v942, 4
    %v945 = vor.u32 %v944, %v940
    %v946 = vrot.slane %v945, 4
    %v948 = vshll.u32 %v219, 16
    %v950 = vrot.slane %v948, 5
    %v951 = vsel %vm399, %v946, %v950
    %v953 = vshrl.u32 %v220, 16
    %v955 = vrot.slane %v953, 4
    %v956 = vshll.u32 %v220, 16
    %v958 = vrot.slane %v956, 5
    %v959 = vor.u32 %v955, %v958
    %v960 = vrot.slane %v959, 4
    %v962 = vshll.u32 %v221, 16
    %v964 = vrot.slane %v962, 5
    %v965 = vsel %vm399, %v960, %v964
    %v966 = vshrl.u32 %v221, 16
    %v968 = vrot.slane %v966, 4
    %v969 = vor.u32 %v968, %v964
    %v970 = vrot.slane %v969, 4
    %v972 = vshll.u32 %v222, 16
    %v974 = vrot.slane %v972, 5
    %v975 = vsel %vm399, %v970, %v974
    %v977 = vshrl.u32 %v223, 16
    %v979 = vrot.slane %v977, 4
    %v980 = vshll.u32 %v223, 16
    %v982 = vrot.slane %v980, 5
    %v983 = vor.u32 %v979, %v982
    %v984 = vrot.slane %v983, 4
    %v986 = vshll.u32 %v224, 16
    %v988 = vrot.slane %v986, 5
    %v989 = vsel %vm399, %v984, %v988
    %v990 = vshrl.u32 %v224, 16
    %v992 = vrot.slane %v990, 4
    %v993 = vor.u32 %v992, %v988
    %v994 = vrot.slane %v993, 4
    %v996 = vshll.u32 %v225, 16
    %v998 = vrot.slane %v996, 5
    %v999 = vsel %vm399, %v994, %v998
    %v1001 = vshrl.u32 %v226, 16
    %v1003 = vrot.slane %v1001, 4
    %v1004 = vshll.u32 %v226, 16
    %v1006 = vrot.slane %v1004, 5
    %v1007 = vor.u32 %v1003, %v1006
    %v1008 = vrot.slane %v1007, 4
    %v1010 = vshll.u32 %v227, 16
    %v1012 = vrot.slane %v1010, 5
    %v1013 = vsel %vm399, %v1008, %v1012
    %v1014 = vshrl.u32 %v227, 16
    %v1016 = vrot.slane %v1014, 4
    %v1017 = vor.u32 %v1016, %v1012
    %v1018 = vrot.slane %v1017, 4
    %v1020 = vshll.u32 %v228, 16
    %v1022 = vrot.slane %v1020, 5
    %v1023 = vsel %vm399, %v1018, %v1022
    %v1025 = vshrl.u32 %v229, 16
    %v1027 = vrot.slane %v1025, 4
    %v1028 = vshll.u32 %v229, 16
    %v1030 = vrot.slane %v1028, 5
    %v1031 = vor.u32 %v1027, %v1030
    %v1032 = vrot.slane %v1031, 4
    %v1034 = vshll.u32 %v230, 16
    %v1036 = vrot.slane %v1034, 5
    %v1037 = vsel %vm399, %v1032, %v1036
    %v1038 = vshrl.u32 %v230, 16
    %v1040 = vrot.slane %v1038, 4
    %v1041 = vor.u32 %v1040, %v1036
    %v1042 = vrot.slane %v1041, 4
    %v1044 = vshll.u32 %v231, 16
    %v1046 = vrot.slane %v1044, 5
    %v1047 = vsel %vm399, %v1042, %v1046
    %v1049 = vshrl.u32 %v232, 16
    %v1051 = vrot.slane %v1049, 4
    %v1052 = vshll.u32 %v232, 16
    %v1054 = vrot.slane %v1052, 5
    %v1055 = vor.u32 %v1051, %v1054
    %v1056 = vrot.slane %v1055, 4
    %v1058 = vshll.u32 %v233, 16
    %v1060 = vrot.slane %v1058, 5
    %v1061 = vsel %vm399, %v1056, %v1060
    %v1062 = vshrl.u32 %v233, 16
    %v1064 = vrot.slane %v1062, 4
    %v1065 = vor.u32 %v1064, %v1060
    %v1066 = vrot.slane %v1065, 4
    %v1068 = vshll.u32 %v234, 16
    %v1070 = vrot.slane %v1068, 5
    %v1071 = vsel %vm399, %v1066, %v1070
    %v1073 = vshrl.u32 %v235, 16
    %v1075 = vrot.slane %v1073, 4
    %v1076 = vshll.u32 %v235, 16
    %v1078 = vrot.slane %v1076, 5
    %v1079 = vor.u32 %v1075, %v1078
    %v1080 = vrot.slane %v1079, 4
    %v1082 = vshll.u32 %v236, 16
    %v1084 = vrot.slane %v1082, 5
    %v1085 = vsel %vm399, %v1080, %v1084
    %v1086 = vshrl.u32 %v236, 16
    %v1088 = vrot.slane %v1086, 4
    %v1089 = vor.u32 %v1088, %v1084
    %v1090 = vrot.slane %v1089, 4
    %v1092 = vshll.u32 %v237, 16
    %v1094 = vrot.slane %v1092, 5
    %v1095 = vsel %vm399, %v1090, %v1094
    %v1097 = vshrl.u32 %v238, 16
    %v1099 = vrot.slane %v1097, 4
    %v1100 = vshll.u32 %v238, 16
    %v1102 = vrot.slane %v1100, 5
    %v1103 = vor.u32 %v1099, %v1102
    %v1104 = vrot.slane %v1103, 4
    %v1106 = vshll.u32 %v239, 16
    %v1108 = vrot.slane %v1106, 5
    %v1109 = vsel %vm399, %v1104, %v1108
    %v1110 = vshrl.u32 %v239, 16
    %v1112 = vrot.slane %v1110, 4
    %v1113 = vor.u32 %v1112, %v1108
    %v1114 = vrot.slane %v1113, 4
    %v1116 = vshll.u32 %v240, 16
    %v1118 = vrot.slane %v1116, 5
    %v1119 = vsel %vm399, %v1114, %v1118
    %v1121 = vshrl.u32 %v241, 16
    %v1123 = vrot.slane %v1121, 4
    %v1124 = vshll.u32 %v241, 16
    %v1126 = vrot.slane %v1124, 5
    %v1127 = vor.u32 %v1123, %v1126
    %v1128 = vrot.slane %v1127, 4
    %v1130 = vshll.u32 %v242, 16
    %v1132 = vrot.slane %v1130, 5
    %v1133 = vsel %vm399, %v1128, %v1132
    %v1134 = vshrl.u32 %v242, 16
    %v1136 = vrot.slane %v1134, 4
    %v1137 = vor.u32 %v1136, %v1132
    %v1138 = vrot.slane %v1137, 4
    %v1140 = vshll.u32 %v243, 16
    %v1142 = vrot.slane %v1140, 5
    %v1143 = vsel %vm399, %v1138, %v1142
    %v1145 = vshrl.u32 %v244, 16
    %v1147 = vrot.slane %v1145, 4
    %v1148 = vshll.u32 %v244, 16
    %v1150 = vrot.slane %v1148, 5
    %v1151 = vor.u32 %v1147, %v1150
    %v1152 = vrot.slane %v1151, 4
    %v1154 = vshll.u32 %v245, 16
    %v1156 = vrot.slane %v1154, 5
    %v1157 = vsel %vm399, %v1152, %v1156
    %v1158 = vshrl.u32 %v245, 16
    %v1160 = vrot.slane %v1158, 4
    %v1161 = vor.u32 %v1160, %v1156
    %v1162 = vrot.slane %v1161, 4
    %v1164 = vshll.u32 %v246, 16
    %v1166 = vrot.slane %v1164, 5
    %v1167 = vsel %vm399, %v1162, %v1166
    %vm1264 = vcmask 1042432
    %vm1265 = vcmask 1046532
    %vm1266 = vmor %vm1264, %vm1265
    %v1267 = vrot.slane %v145, 5
    %v1268 = vrot.slane %v1267, 4
    %v1269 = vrot.slane %v146, 5
    %v1270 = vsel %vm1266, %v1268, %v1269
    %v1271 = vrot.slane %v1269, 4
    %v1272 = vrot.slane %v147, 5
    %v1273 = vsel %vm1266, %v1271, %v1272
    %v1274 = vrot.slane %v148, 5
    %v1275 = vrot.slane %v1274, 4
    %v1276 = vrot.slane %v149, 5
    %v1277 = vsel %vm1266, %v1275, %v1276
    %v1278 = vrot.slane %v1276, 4
    %v1279 = vrot.slane %v150, 5
    %v1280 = vsel %vm1266, %v1278, %v1279
    %v1281 = vrot.slane %v151, 5
    %v1282 = vrot.slane %v1281, 4
    %v1283 = vrot.slane %v152, 5
    %v1284 = vsel %vm1266, %v1282, %v1283
    %v1285 = vrot.slane %v1283, 4
    %v1286 = vrot.slane %v153, 5
    %v1287 = vsel %vm1266, %v1285, %v1286
    %v1288 = vrot.slane %v154, 5
    %v1289 = vrot.slane %v1288, 4
    %v1290 = vrot.slane %v155, 5
    %v1291 = vsel %vm1266, %v1289, %v1290
    %v1292 = vrot.slane %v1290, 4
    %v1293 = vrot.slane %v156, 5
    %v1294 = vsel %vm1266, %v1292, %v1293
    %v1295 = vrot.slane %v157, 5
    %v1296 = vrot.slane %v1295, 4
    %v1297 = vrot.slane %v158, 5
    %v1298 = vsel %vm1266, %v1296, %v1297
    %v1299 = vrot.slane %v1297, 4
    %v1300 = vrot.slane %v159, 5
    %v1301 = vsel %vm1266, %v1299, %v1300
    %v1302 = vrot.slane %v160, 5
    %v1303 = vrot.slane %v1302, 4
    %v1304 = vrot.slane %v161, 5
    %v1305 = vsel %vm1266, %v1303, %v1304
    %v1306 = vrot.slane %v1304, 4
    %v1307 = vrot.slane %v162, 5
    %v1308 = vsel %vm1266, %v1306, %v1307
    %v1309 = vrot.slane %v163, 5
    %v1310 = vrot.slane %v1309, 4
    %v1311 = vrot.slane %v164, 5
    %v1312 = vsel %vm1266, %v1310, %v1311
    %v1313 = vrot.slane %v1311, 4
    %v1314 = vrot.slane %v165, 5
    %v1315 = vsel %vm1266, %v1313, %v1314
    %v1316 = vrot.slane %v166, 5
    %v1317 = vrot.slane %v1316, 4
    %v1318 = vrot.slane %v167, 5
    %v1319 = vsel %vm1266, %v1317, %v1318
    %v1320 = vrot.slane %v1318, 4
    %v1321 = vrot.slane %v168, 5
    %v1322 = vsel %vm1266, %v1320, %v1321
    %v1323 = vrot.slane %v169, 5
    %v1324 = vrot.slane %v1323, 4
    %v1325 = vrot.slane %v170, 5
    %v1326 = vsel %vm1266, %v1324, %v1325
    %v1327 = vrot.slane %v1325, 4
    %v1328 = vrot.slane %v171, 5
    %v1329 = vsel %vm1266, %v1327, %v1328
    %v1330 = vrot.slane %v172, 5
    %v1331 = vrot.slane %v1330, 4
    %v1332 = vrot.slane %v173, 5
    %v1333 = vsel %vm1266, %v1331, %v1332
    %v1334 = vrot.slane %v1332, 4
    %v1335 = vrot.slane %v174, 5
    %v1336 = vsel %vm1266, %v1334, %v1335
    %v1337 = vrot.slane %v175, 5
    %v1338 = vrot.slane %v1337, 4
    %v1339 = vrot.slane %v176, 5
    %v1340 = vsel %vm1266, %v1338, %v1339
    %v1341 = vrot.slane %v1339, 4
    %v1342 = vrot.slane %v177, 5
    %v1343 = vsel %vm1266, %v1341, %v1342
    %v1344 = vrot.slane %v178, 5
    %v1345 = vrot.slane %v1344, 4
    %v1346 = vrot.slane %v179, 5
    %v1347 = vsel %vm1266, %v1345, %v1346
    %v1348 = vrot.slane %v1346, 4
    %v1349 = vrot.slane %v180, 5
    %v1350 = vsel %vm1266, %v1348, %v1349
    %v1351 = vrot.slane %v181, 5
    %v1352 = vrot.slane %v1351, 4
    %v1353 = vrot.slane %v182, 5
    %v1354 = vsel %vm1266, %v1352, %v1353
    %v1355 = vrot.slane %v1353, 4
    %v1356 = vrot.slane %v183, 5
    %v1357 = vsel %vm1266, %v1355, %v1356
    %v1358 = vrot.slane %v184, 5
    %v1359 = vrot.slane %v1358, 4
    %v1360 = vrot.slane %v185, 5
    %v1361 = vsel %vm1266, %v1359, %v1360
    %v1362 = vrot.slane %v1360, 4
    %v1363 = vrot.slane %v186, 5
    %v1364 = vsel %vm1266, %v1362, %v1363
    %v1365 = vrot.slane %v187, 5
    %v1366 = vrot.slane %v1365, 4
    %v1367 = vrot.slane %v188, 5
    %v1368 = vsel %vm1266, %v1366, %v1367
    %v1369 = vrot.slane %v1367, 4
    %v1370 = vrot.slane %v189, 5
    %v1371 = vsel %vm1266, %v1369, %v1370
    %v1372 = vrot.slane %v190, 5
    %v1373 = vrot.slane %v1372, 4
    %v1374 = vrot.slane %v191, 5
    %v1375 = vsel %vm1266, %v1373, %v1374
    %v1376 = vrot.slane %v1374, 4
    %v1377 = vrot.slane %v192, 5
    %v1378 = vsel %vm1266, %v1376, %v1377
    %v1379 = vrot.slane %v199, 5
    %v1380 = vrot.slane %v1379, 4
    %v1381 = vrot.slane %v200, 5
    %v1382 = vsel %vm1266, %v1380, %v1381
    %v1383 = vrot.slane %v1381, 4
    %v1384 = vrot.slane %v201, 5
    %v1385 = vsel %vm1266, %v1383, %v1384
    %v1386 = vrot.slane %v202, 5
    %v1387 = vrot.slane %v1386, 4
    %v1388 = vrot.slane %v203, 5
    %v1389 = vsel %vm1266, %v1387, %v1388
    %v1390 = vrot.slane %v1388, 4
    %v1391 = vrot.slane %v204, 5
    %v1392 = vsel %vm1266, %v1390, %v1391
    %v1393 = vrot.slane %v205, 5
    %v1394 = vrot.slane %v1393, 4
    %v1395 = vrot.slane %v206, 5
    %v1396 = vsel %vm1266, %v1394, %v1395
    %v1397 = vrot.slane %v1395, 4
    %v1398 = vrot.slane %v207, 5
    %v1399 = vsel %vm1266, %v1397, %v1398
    %v1400 = vrot.slane %v208, 5
    %v1401 = vrot.slane %v1400, 4
    %v1402 = vrot.slane %v209, 5
    %v1403 = vsel %vm1266, %v1401, %v1402
    %v1404 = vrot.slane %v1402, 4
    %v1405 = vrot.slane %v210, 5
    %v1406 = vsel %vm1266, %v1404, %v1405
    %v1407 = vrot.slane %v211, 5
    %v1408 = vrot.slane %v1407, 4
    %v1409 = vrot.slane %v212, 5
    %v1410 = vsel %vm1266, %v1408, %v1409
    %v1411 = vrot.slane %v1409, 4
    %v1412 = vrot.slane %v213, 5
    %v1413 = vsel %vm1266, %v1411, %v1412
    %v1414 = vrot.slane %v214, 5
    %v1415 = vrot.slane %v1414, 4
    %v1416 = vrot.slane %v215, 5
    %v1417 = vsel %vm1266, %v1415, %v1416
    %v1418 = vrot.slane %v1416, 4
    %v1419 = vrot.slane %v216, 5
    %v1420 = vsel %vm1266, %v1418, %v1419
    %v1421 = vrot.slane %v217, 5
    %v1422 = vrot.slane %v1421, 4
    %v1423 = vrot.slane %v218, 5
    %v1424 = vsel %vm1266, %v1422, %v1423
    %v1425 = vrot.slane %v1423, 4
    %v1426 = vrot.slane %v219, 5
    %v1427 = vsel %vm1266, %v1425, %v1426
    %v1428 = vrot.slane %v220, 5
    %v1429 = vrot.slane %v1428, 4
    %v1430 = vrot.slane %v221, 5
    %v1431 = vsel %vm1266, %v1429, %v1430
    %v1432 = vrot.slane %v1430, 4
    %v1433 = vrot.slane %v222, 5
    %v1434 = vsel %vm1266, %v1432, %v1433
    %v1435 = vrot.slane %v223, 5
    %v1436 = vrot.slane %v1435, 4
    %v1437 = vrot.slane %v224, 5
    %v1438 = vsel %vm1266, %v1436, %v1437
    %v1439 = vrot.slane %v1437, 4
    %v1440 = vrot.slane %v225, 5
    %v1441 = vsel %vm1266, %v1439, %v1440
    %v1442 = vrot.slane %v226, 5
    %v1443 = vrot.slane %v1442, 4
    %v1444 = vrot.slane %v227, 5
    %v1445 = vsel %vm1266, %v1443, %v1444
    %v1446 = vrot.slane %v1444, 4
    %v1447 = vrot.slane %v228, 5
    %v1448 = vsel %vm1266, %v1446, %v1447
    %v1449 = vrot.slane %v229, 5
    %v1450 = vrot.slane %v1449, 4
    %v1451 = vrot.slane %v230, 5
    %v1452 = vsel %vm1266, %v1450, %v1451
    %v1453 = vrot.slane %v1451, 4
    %v1454 = vrot.slane %v231, 5
    %v1455 = vsel %vm1266, %v1453, %v1454
    %v1456 = vrot.slane %v232, 5
    %v1457 = vrot.slane %v1456, 4
    %v1458 = vrot.slane %v233, 5
    %v1459 = vsel %vm1266, %v1457, %v1458
    %v1460 = vrot.slane %v1458, 4
    %v1461 = vrot.slane %v234, 5
    %v1462 = vsel %vm1266, %v1460, %v1461
    %v1463 = vrot.slane %v235, 5
    %v1464 = vrot.slane %v1463, 4
    %v1465 = vrot.slane %v236, 5
    %v1466 = vsel %vm1266, %v1464, %v1465
    %v1467 = vrot.slane %v1465, 4
    %v1468 = vrot.slane %v237, 5
    %v1469 = vsel %vm1266, %v1467, %v1468
    %v1470 = vrot.slane %v238, 5
    %v1471 = vrot.slane %v1470, 4
    %v1472 = vrot.slane %v239, 5
    %v1473 = vsel %vm1266, %v1471, %v1472
    %v1474 = vrot.slane %v1472, 4
    %v1475 = vrot.slane %v240, 5
    %v1476 = vsel %vm1266, %v1474, %v1475
    %v1477 = vrot.slane %v241, 5
    %v1478 = vrot.slane %v1477, 4
    %v1479 = vrot.slane %v242, 5
    %v1480 = vsel %vm1266, %v1478, %v1479
    %v1481 = vrot.slane %v1479, 4
    %v1482 = vrot.slane %v243, 5
    %v1483 = vsel %vm1266, %v1481, %v1482
    %v1484 = vrot.slane %v244, 5
    %v1485 = vrot.slane %v1484, 4
    %v1486 = vrot.slane %v245, 5
    %v1487 = vsel %vm1266, %v1485, %v1486
    %v1488 = vrot.slane %v1486, 4
    %v1489 = vrot.slane %v246, 5
    %v1490 = vsel %vm1266, %v1488, %v1489
    %v1491 = vunpack.c.l.b16 %v145
    %v1492 = vunpack.c.l.b16 %v146
    %v1493 = vunpack.c.l.b16 %v148
    %v1494 = vunpack.c.l.b16 %v149
    %v1495 = vunpack.c.l.b16 %v151
    %v1496 = vunpack.c.l.b16 %v152
    %v1497 = vunpack.c.l.b16 %v154
    %v1498 = vunpack.c.l.b16 %v155
    %v1499 = vunpack.c.l.b16 %v157
    %v1500 = vunpack.c.l.b16 %v158
    %v1501 = vunpack.c.l.b16 %v160
    %v1502 = vunpack.c.l.b16 %v161
    %v1503 = vunpack.c.l.b16 %v163
    %v1504 = vunpack.c.l.b16 %v164
    %v1505 = vunpack.c.l.b16 %v166
    %v1506 = vunpack.c.l.b16 %v167
    %v1507 = vunpack.c.l.b16 %v169
    %v1508 = vunpack.c.l.b16 %v170
    %v1509 = vunpack.c.l.b16 %v172
    %v1510 = vunpack.c.l.b16 %v173
    %v1511 = vunpack.c.l.b16 %v175
    %v1512 = vunpack.c.l.b16 %v176
    %v1513 = vunpack.c.l.b16 %v178
    %v1514 = vunpack.c.l.b16 %v179
    %v1515 = vunpack.c.l.b16 %v181
    %v1516 = vunpack.c.l.b16 %v182
    %v1517 = vunpack.c.l.b16 %v184
    %v1518 = vunpack.c.l.b16 %v185
    %v1519 = vunpack.c.l.b16 %v187
    %v1520 = vunpack.c.l.b16 %v188
    %v1521 = vunpack.c.l.b16 %v190
    %v1522 = vunpack.c.l.b16 %v191
    %v1523 = vunpack.c.l.b16 %v199
    %v1524 = vunpack.c.l.b16 %v200
    %v1525 = vunpack.c.l.b16 %v202
    %v1526 = vunpack.c.l.b16 %v203
    %v1527 = vunpack.c.l.b16 %v205
    %v1528 = vunpack.c.l.b16 %v206
    %v1529 = vunpack.c.l.b16 %v208
    %v1530 = vunpack.c.l.b16 %v209
    %v1531 = vunpack.c.l.b16 %v211
    %v1532 = vunpack.c.l.b16 %v212
    %v1533 = vunpack.c.l.b16 %v214
    %v1534 = vunpack.c.l.b16 %v215
    %v1535 = vunpack.c.l.b16 %v217
    %v1536 = vunpack.c.l.b16 %v218
    %v1537 = vunpack.c.l.b16 %v220
    %v1538 = vunpack.c.l.b16 %v221
    %v1539 = vunpack.c.l.b16 %v223
    %v1540 = vunpack.c.l.b16 %v224
    %v1541 = vunpack.c.l.b16 %v226
    %v1542 = vunpack.c.l.b16 %v227
    %v1543 = vunpack.c.l.b16 %v229
    %v1544 = vunpack.c.l.b16 %v230
    %v1545 = vunpack.c.l.b16 %v232
    %v1546 = vunpack.c.l.b16 %v233
    %v1547 = vunpack.c.l.b16 %v235
    %v1548 = vunpack.c.l.b16 %v236
    %v1549 = vunpack.c.l.b16 %v238
    %v1550 = vunpack.c.l.b16 %v239
    %v1551 = vunpack.c.l.b16 %v241
    %v1552 = vunpack.c.l.b16 %v242
    %v1553 = vunpack.c.l.b16 %v244
    %v1554 = vunpack.c.l.b16 %v245
    %v1555 = vpack.c.b16 %v1492, %v1491
    %v1556 = vpack.c.b16 %v1494, %v1493
    %v1557 = vpack.c.b16 %v1496, %v1495
    %v1558 = vpack.c.b16 %v1498, %v1497
    %v1559 = vpack.c.b16 %v1500, %v1499
    %v1560 = vpack.c.b16 %v1502, %v1501
    %v1561 = vpack.c.b16 %v1504, %v1503
    %v1562 = vpack.c.b16 %v1506, %v1505
    %v1563 = vpack.c.b16 %v1508, %v1507
    %v1564 = vpack.c.b16 %v1510, %v1509
    %v1565 = vpack.c.b16 %v1512, %v1511
    %v1566 = vpack.c.b16 %v1514, %v1513
    %v1567 = vpack.c.b16 %v1516, %v1515
    %v1568 = vpack.c.b16 %v1518, %v1517
    %v1569 = vpack.c.b16 %v1520, %v1519
    %v1570 = vpack.c.b16 %v1522, %v1521
    %v1571 = vpack.c.b16 %v1524, %v1523
    %v1572 = vpack.c.b16 %v1526, %v1525
    %v1573 = vpack.c.b16 %v1528, %v1527
    %v1574 = vpack.c.b16 %v1530, %v1529
    %v1575 = vpack.c.b16 %v1532, %v1531
    %v1576 = vpack.c.b16 %v1534, %v1533
    %v1577 = vpack.c.b16 %v1536, %v1535
    %v1578 = vpack.c.b16 %v1538, %v1537
    %v1579 = vpack.c.b16 %v1540, %v1539
    %v1580 = vpack.c.b16 %v1542, %v1541
    %v1581 = vpack.c.b16 %v1544, %v1543
    %v1582 = vpack.c.b16 %v1546, %v1545
    %v1583 = vpack.c.b16 %v1548, %v1547
    %v1584 = vpack.c.b16 %v1550, %v1549
    %v1585 = vpack.c.b16 %v1552, %v1551
    %v1586 = vpack.c.b16 %v1554, %v1553
    %v1619 = vunpack.c.l.b16 %v413
    %v1620 = vunpack.c.l.b16 %v423
    %v1621 = vunpack.c.l.b16 %v437
    %v1622 = vunpack.c.l.b16 %v447
    %v1623 = vunpack.c.l.b16 %v461
    %v1624 = vunpack.c.l.b16 %v471
    %v1625 = vunpack.c.l.b16 %v485
    %v1626 = vunpack.c.l.b16 %v495
    %v1627 = vunpack.c.l.b16 %v509
    %v1628 = vunpack.c.l.b16 %v519
    %v1629 = vunpack.c.l.b16 %v533
    %v1630 = vunpack.c.l.b16 %v543
    %v1631 = vunpack.c.l.b16 %v557
    %v1632 = vunpack.c.l.b16 %v567
    %v1633 = vunpack.c.l.b16 %v581
    %v1634 = vunpack.c.l.b16 %v591
    %v1635 = vunpack.c.l.b16 %v605
    %v1636 = vunpack.c.l.b16 %v615
    %v1637 = vunpack.c.l.b16 %v629
    %v1638 = vunpack.c.l.b16 %v639
    %v1639 = vunpack.c.l.b16 %v653
    %v1640 = vunpack.c.l.b16 %v663
    %v1641 = vunpack.c.l.b16 %v677
    %v1642 = vunpack.c.l.b16 %v687
    %v1643 = vunpack.c.l.b16 %v701
    %v1644 = vunpack.c.l.b16 %v711
    %v1645 = vunpack.c.l.b16 %v725
    %v1646 = vunpack.c.l.b16 %v735
    %v1647 = vunpack.c.l.b16 %v749
    %v1648 = vunpack.c.l.b16 %v759
    %v1649 = vunpack.c.l.b16 %v773
    %v1650 = vunpack.c.l.b16 %v783
    %v1651 = vunpack.c.l.b16 %v797
    %v1652 = vunpack.c.l.b16 %v807
    %v1653 = vunpack.c.l.b16 %v821
    %v1654 = vunpack.c.l.b16 %v831
    %v1655 = vunpack.c.l.b16 %v845
    %v1656 = vunpack.c.l.b16 %v855
    %v1657 = vunpack.c.l.b16 %v869
    %v1658 = vunpack.c.l.b16 %v879
    %v1659 = vunpack.c.l.b16 %v893
    %v1660 = vunpack.c.l.b16 %v903
    %v1661 = vunpack.c.l.b16 %v917
    %v1662 = vunpack.c.l.b16 %v927
    %v1663 = vunpack.c.l.b16 %v941
    %v1664 = vunpack.c.l.b16 %v951
    %v1665 = vunpack.c.l.b16 %v965
    %v1666 = vunpack.c.l.b16 %v975
    %v1667 = vunpack.c.l.b16 %v989
    %v1668 = vunpack.c.l.b16 %v999
    %v1669 = vunpack.c.l.b16 %v1013
    %v1670 = vunpack.c.l.b16 %v1023
    %v1671 = vunpack.c.l.b16 %v1037
    %v1672 = vunpack.c.l.b16 %v1047
    %v1673 = vunpack.c.l.b16 %v1061
    %v1674 = vunpack.c.l.b16 %v1071
    %v1675 = vunpack.c.l.b16 %v1085
    %v1676 = vunpack.c.l.b16 %v1095
    %v1677 = vunpack.c.l.b16 %v1109
    %v1678 = vunpack.c.l.b16 %v1119
    %v1679 = vunpack.c.l.b16 %v1133
    %v1680 = vunpack.c.l.b16 %v1143
    %v1681 = vunpack.c.l.b16 %v1157
    %v1682 = vunpack.c.l.b16 %v1167
    %v1683 = vpack.c.b16 %v1620, %v1619
    %v1684 = vpack.c.b16 %v1622, %v1621
    %v1685 = vpack.c.b16 %v1624, %v1623
    %v1686 = vpack.c.b16 %v1626, %v1625
    %v1687 = vpack.c.b16 %v1628, %v1627
    %v1688 = vpack.c.b16 %v1630, %v1629
    %v1689 = vpack.c.b16 %v1632, %v1631
    %v1690 = vpack.c.b16 %v1634, %v1633
    %v1691 = vpack.c.b16 %v1636, %v1635
    %v1692 = vpack.c.b16 %v1638, %v1637
    %v1693 = vpack.c.b16 %v1640, %v1639
    %v1694 = vpack.c.b16 %v1642, %v1641
    %v1695 = vpack.c.b16 %v1644, %v1643
    %v1696 = vpack.c.b16 %v1646, %v1645
    %v1697 = vpack.c.b16 %v1648, %v1647
    %v1698 = vpack.c.b16 %v1650, %v1649
    %v1699 = vpack.c.b16 %v1652, %v1651
    %v1700 = vpack.c.b16 %v1654, %v1653
    %v1701 = vpack.c.b16 %v1656, %v1655
    %v1702 = vpack.c.b16 %v1658, %v1657
    %v1703 = vpack.c.b16 %v1660, %v1659
    %v1704 = vpack.c.b16 %v1662, %v1661
    %v1705 = vpack.c.b16 %v1664, %v1663
    %v1706 = vpack.c.b16 %v1666, %v1665
    %v1707 = vpack.c.b16 %v1668, %v1667
    %v1708 = vpack.c.b16 %v1670, %v1669
    %v1709 = vpack.c.b16 %v1672, %v1671
    %v1710 = vpack.c.b16 %v1674, %v1673
    %v1711 = vpack.c.b16 %v1676, %v1675
    %v1712 = vpack.c.b16 %v1678, %v1677
    %v1713 = vpack.c.b16 %v1680, %v1679
    %v1714 = vpack.c.b16 %v1682, %v1681
    %v1747 = vunpack.c.l.b16 %v1270
    %v1748 = vunpack.c.l.b16 %v1273
    %v1749 = vunpack.c.l.b16 %v1277
    %v1750 = vunpack.c.l.b16 %v1280
    %v1751 = vunpack.c.l.b16 %v1284
    %v1752 = vunpack.c.l.b16 %v1287
    %v1753 = vunpack.c.l.b16 %v1291
    %v1754 = vunpack.c.l.b16 %v1294
    %v1755 = vunpack.c.l.b16 %v1298
    %v1756 = vunpack.c.l.b16 %v1301
    %v1757 = vunpack.c.l.b16 %v1305
    %v1758 = vunpack.c.l.b16 %v1308
    %v1759 = vunpack.c.l.b16 %v1312
    %v1760 = vunpack.c.l.b16 %v1315
    %v1761 = vunpack.c.l.b16 %v1319
    %v1762 = vunpack.c.l.b16 %v1322
    %v1763 = vunpack.c.l.b16 %v1326
    %v1764 = vunpack.c.l.b16 %v1329
    %v1765 = vunpack.c.l.b16 %v1333
    %v1766 = vunpack.c.l.b16 %v1336
    %v1767 = vunpack.c.l.b16 %v1340
    %v1768 = vunpack.c.l.b16 %v1343
    %v1769 = vunpack.c.l.b16 %v1347
    %v1770 = vunpack.c.l.b16 %v1350
    %v1771 = vunpack.c.l.b16 %v1354
    %v1772 = vunpack.c.l.b16 %v1357
    %v1773 = vunpack.c.l.b16 %v1361
    %v1774 = vunpack.c.l.b16 %v1364
    %v1775 = vunpack.c.l.b16 %v1368
    %v1776 = vunpack.c.l.b16 %v1371
    %v1777 = vunpack.c.l.b16 %v1375
    %v1778 = vunpack.c.l.b16 %v1378
    %v1779 = vunpack.c.l.b16 %v1382
    %v1780 = vunpack.c.l.b16 %v1385
    %v1781 = vunpack.c.l.b16 %v1389
    %v1782 = vunpack.c.l.b16 %v1392
    %v1783 = vunpack.c.l.b16 %v1396
    %v1784 = vunpack.c.l.b16 %v1399
    %v1785 = vunpack.c.l.b16 %v1403
    %v1786 = vunpack.c.l.b16 %v1406
    %v1787 = vunpack.c.l.b16 %v1410
    %v1788 = vunpack.c.l.b16 %v1413
    %v1789 = vunpack.c.l.b16 %v1417
    %v1790 = vunpack.c.l.b16 %v1420
    %v1791 = vunpack.c.l.b16 %v1424
    %v1792 = vunpack.c.l.b16 %v1427
    %v1793 = vunpack.c.l.b16 %v1431
    %v1794 = vunpack.c.l.b16 %v1434
    %v1795 = vunpack.c.l.b16 %v1438
    %v1796 = vunpack.c.l.b16 %v1441
    %v1797 = vunpack.c.l.b16 %v1445
    %v1798 = vunpack.c.l.b16 %v1448
    %v1799 = vunpack.c.l.b16 %v1452
    %v1800 = vunpack.c.l.b16 %v1455
    %v1801 = vunpack.c.l.b16 %v1459
    %v1802 = vunpack.c.l.b16 %v1462
    %v1803 = vunpack.c.l.b16 %v1466
    %v1804 = vunpack.c.l.b16 %v1469
    %v1805 = vunpack.c.l.b16 %v1473
    %v1806 = vunpack.c.l.b16 %v1476
    %v1807 = vunpack.c.l.b16 %v1480
    %v1808 = vunpack.c.l.b16 %v1483
    %v1809 = vunpack.c.l.b16 %v1487
    %v1810 = vunpack.c.l.b16 %v1490
    %v1811 = vpack.c.b16 %v1748, %v1747
    %v1812 = vpack.c.b16 %v1750, %v1749
    %v1813 = vpack.c.b16 %v1752, %v1751
    %v1814 = vpack.c.b16 %v1754, %v1753
    %v1815 = vpack.c.b16 %v1756, %v1755
    %v1816 = vpack.c.b16 %v1758, %v1757
    %v1817 = vpack.c.b16 %v1760, %v1759
    %v1818 = vpack.c.b16 %v1762, %v1761
    %v1819 = vpack.c.b16 %v1764, %v1763
    %v1820 = vpack.c.b16 %v1766, %v1765
    %v1821 = vpack.c.b16 %v1768, %v1767
    %v1822 = vpack.c.b16 %v1770, %v1769
    %v1823 = vpack.c.b16 %v1772, %v1771
    %v1824 = vpack.c.b16 %v1774, %v1773
    %v1825 = vpack.c.b16 %v1776, %v1775
    %v1826 = vpack.c.b16 %v1778, %v1777
    %v1827 = vpack.c.b16 %v1780, %v1779
    %v1828 = vpack.c.b16 %v1782, %v1781
    %v1829 = vpack.c.b16 %v1784, %v1783
    %v1830 = vpack.c.b16 %v1786, %v1785
    %v1831 = vpack.c.b16 %v1788, %v1787
    %v1832 = vpack.c.b16 %v1790, %v1789
    %v1833 = vpack.c.b16 %v1792, %v1791
    %v1834 = vpack.c.b16 %v1794, %v1793
    %v1835 = vpack.c.b16 %v1796, %v1795
    %v1836 = vpack.c.b16 %v1798, %v1797
    %v1837 = vpack.c.b16 %v1800, %v1799
    %v1838 = vpack.c.b16 %v1802, %v1801
    %v1839 = vpack.c.b16 %v1804, %v1803
    %v1840 = vpack.c.b16 %v1806, %v1805
    %v1841 = vpack.c.b16 %v1808, %v1807
    %v1842 = vpack.c.b16 %v1810, %v1809
    %v1876 = vshrl.u32 %v193, 16
    %v1878 = vrot.slane %v1876, 4
    %v1879 = vshll.u32 %v193, 16
    %v1881 = vrot.slane %v1879, 5
    %v1882 = vor.u32 %v1878, %v1881
    %v1883 = vrot.slane %v1882, 4
    %v1885 = vshll.u32 %v194, 16
    %v1887 = vrot.slane %v1885, 5
    %v1888 = vsel %vm399, %v1883, %v1887
    %v1889 = vshrl.u32 %v194, 16
    %v1891 = vrot.slane %v1889, 4
    %v1892 = vor.u32 %v1891, %v1887
    %v1893 = vrot.slane %v1892, 4
    %v1895 = vshll.u32 %v195, 16
    %v1897 = vrot.slane %v1895, 5
    %v1898 = vsel %vm399, %v1893, %v1897
    %v1900 = vshrl.u32 %v247, 16
    %v1902 = vrot.slane %v1900, 4
    %v1903 = vshll.u32 %v247, 16
    %v1905 = vrot.slane %v1903, 5
    %v1906 = vor.u32 %v1902, %v1905
    %v1907 = vrot.slane %v1906, 4
    %v1909 = vshll.u32 %v248, 16
    %v1911 = vrot.slane %v1909, 5
    %v1912 = vsel %vm399, %v1907, %v1911
    %v1913 = vshrl.u32 %v248, 16
    %v1915 = vrot.slane %v1913, 4
    %v1916 = vor.u32 %v1915, %v1911
    %v1917 = vrot.slane %v1916, 4
    %v1919 = vshll.u32 %v249, 16
    %v1921 = vrot.slane %v1919, 5
    %v1922 = vsel %vm399, %v1917, %v1921
    %v1929 = vrot.slane %v193, 5
    %v1930 = vrot.slane %v1929, 4
    %v1931 = vrot.slane %v194, 5
    %v1932 = vsel %vm1266, %v1930, %v1931
    %v1933 = vrot.slane %v1931, 4
    %v1934 = vrot.slane %v195, 5
    %v1935 = vsel %vm1266, %v1933, %v1934
    %v1936 = vrot.slane %v247, 5
    %v1937 = vrot.slane %v1936, 4
    %v1938 = vrot.slane %v248, 5
    %v1939 = vsel %vm1266, %v1937, %v1938
    %v1940 = vrot.slane %v1938, 4
    %v1941 = vrot.slane %v249, 5
    %v1942 = vsel %vm1266, %v1940, %v1941
    %v1943 = vunpack.c.l.b16 %v193
    %v1944 = vunpack.c.l.b16 %v194
    %v1945 = vunpack.c.l.b16 %v247
    %v1946 = vunpack.c.l.b16 %v248
    %v1947 = vpack.c.b16 %v1944, %v1943
    %v1948 = vpack.c.b16 %v1946, %v1945
    %v1951 = vunpack.c.l.b16 %v1888
    %v1952 = vunpack.c.l.b16 %v1898
    %v1953 = vunpack.c.l.b16 %v1912
    %v1954 = vunpack.c.l.b16 %v1922
    %v1955 = vpack.c.b16 %v1952, %v1951
    %v1956 = vpack.c.b16 %v1954, %v1953
    %v1959 = vunpack.c.l.b16 %v1932
    %v1960 = vunpack.c.l.b16 %v1935
    %v1961 = vunpack.c.l.b16 %v1939
    %v1962 = vunpack.c.l.b16 %v1942
    %v1963 = vpack.c.b16 %v1960, %v1959
    %v1964 = vpack.c.b16 %v1962, %v1961
    %v2015 = vunpack.c.l.b16 %v301
    %v2016 = vunpack.c.l.b16 %v302
    %v2017 = vunpack.c.l.b16 %v303
    %v2018 = vunpack.c.l.b16 %v304
    %v2019 = vunpack.c.l.b16 %v305
    %v2020 = vunpack.c.l.b16 %v306
    %v2021 = vunpack.c.l.b16 %v307
    %v2022 = vunpack.c.l.b16 %v308
    %v2023 = vunpack.c.l.b16 %v309
    %v2024 = vunpack.c.l.b16 %v310
    %v2025 = vunpack.c.l.b16 %v311
    %v2026 = vunpack.c.l.b16 %v312
    %v2027 = vunpack.c.l.b16 %v313
    %v2028 = vunpack.c.l.b16 %v314
    %v2029 = vunpack.c.l.b16 %v315
    %v2030 = vunpack.c.l.b16 %v316
    %v2031 = vunpack.c.l.b16 %v317
    %v2032 = vunpack.c.l.b16 %v318
    %v2033 = vunpack.c.l.b16 %v319
    %v2034 = vunpack.c.l.b16 %v320
    %v2035 = vunpack.c.l.b16 %v321
    %v2036 = vunpack.c.l.b16 %v322
    %v2037 = vunpack.c.l.b16 %v323
    %v2038 = vunpack.c.l.b16 %v324
    %v2039 = vunpack.c.l.b16 %v325
    %v2040 = vunpack.c.l.b16 %v326
    %v2041 = vunpack.c.l.b16 %v327
    %v2042 = vunpack.c.l.b16 %v328
    %v2043 = vunpack.c.l.b16 %v329
    %v2044 = vunpack.c.l.b16 %v330
    %v2045 = vunpack.c.l.b16 %v331
    %v2046 = vunpack.c.l.b16 %v332
    %v2047 = vunpack.c.l.b16 %v333
    %v2048 = vunpack.c.l.b16 %v334
    %v2049 = vunpack.c.l.b16 %v335
    %v2050 = vunpack.c.l.b16 %v336
    %v2051 = vunpack.c.l.b16 %v337
    %v2052 = vunpack.c.l.b16 %v338
    %v2053 = vunpack.c.l.b16 %v339
    %v2054 = vunpack.c.l.b16 %v340
    %v2055 = vunpack.c.l.b16 %v341
    %v2056 = vunpack.c.l.b16 %v342
    %v2057 = vunpack.c.l.b16 %v343
    %v2058 = vunpack.c.l.b16 %v344
    %v2059 = vunpack.c.l.b16 %v345
    %v2060 = vunpack.c.l.b16 %v346
    %v2061 = vunpack.c.l.b16 %v347
    %v2062 = vunpack.c.l.b16 %v348
    %v2063 = vpack.c.b16 %v2016, %v2015
    %v2064 = vpack.c.b16 %v2018, %v2017
    %v2065 = vpack.c.b16 %v2020, %v2019
    %v2066 = vpack.c.b16 %v2022, %v2021
    %v2067 = vpack.c.b16 %v2024, %v2023
    %v2068 = vpack.c.b16 %v2026, %v2025
    %v2069 = vpack.c.b16 %v2028, %v2027
    %v2070 = vpack.c.b16 %v2030, %v2029
    %v2071 = vpack.c.b16 %v2032, %v2031
    %v2072 = vpack.c.b16 %v2034, %v2033
    %v2073 = vpack.c.b16 %v2036, %v2035
    %v2074 = vpack.c.b16 %v2038, %v2037
    %v2075 = vpack.c.b16 %v2040, %v2039
    %v2076 = vpack.c.b16 %v2042, %v2041
    %v2077 = vpack.c.b16 %v2044, %v2043
    %v2078 = vpack.c.b16 %v2046, %v2045
    %v2079 = vpack.c.b16 %v2048, %v2047
    %v2080 = vpack.c.b16 %v2050, %v2049
    %v2081 = vpack.c.b16 %v2052, %v2051
    %v2082 = vpack.c.b16 %v2054, %v2053
    %v2083 = vpack.c.b16 %v2056, %v2055
    %v2084 = vpack.c.b16 %v2058, %v2057
    %v2085 = vpack.c.b16 %v2060, %v2059
    %v2086 = vpack.c.b16 %v2062, %v2061
    %2111 = vmatpush.bf16.msra.mxu0 %v2070
    %2112 = vmatpush.bf16.msra.mxu0 %v2069
    %2113 = vmatpush.bf16.msra.mxu0 %v2068
    %2114 = vmatpush.bf16.msra.mxu0 %v2067
    %2115 = vmatpush.bf16.msra.mxu0 %v2066
    %2116 = vmatpush.bf16.msra.mxu0 %v2065
    %2117 = vmatpush.bf16.msra.mxu0 %v2064
    %2118 = vmatpush.bf16.msra.mxu0 %v2063
    %2119 = vmatmul.bf16.gmra.mxu0 %v1556
    %v2120 = vpop.f32.mrf.mxu0
    %v2121 = vadd.f32 0.0, %v2120
    %v2122 = vpop.f32.mrf.mxu0
    %v2123 = vadd.f32 0.0, %v2122
    %2124 = vmatmul.bf16.gmra.mxu0 %v1557
    %v2125 = vpop.f32.mrf.mxu0
    %v2126 = vadd.f32 0.0, %v2125
    %v2127 = vpop.f32.mrf.mxu0
    %v2128 = vadd.f32 0.0, %v2127
    %2129 = vmatmul.bf16.gmra.mxu0 %v1558
    %v2130 = vpop.f32.mrf.mxu0
    %v2131 = vadd.f32 0.0, %v2130
    %v2132 = vpop.f32.mrf.mxu0
    %v2133 = vadd.f32 0.0, %v2132
    %2134 = vmatmul.bf16.gmra.mxu0 %v1559
    %v2135 = vpop.f32.mrf.mxu0
    %v2136 = vadd.f32 0.0, %v2135
    %v2137 = vpop.f32.mrf.mxu0
    %v2138 = vadd.f32 0.0, %v2137
    %2139 = vmatmul.bf16.gmra.mxu0 %v1560
    %v2140 = vpop.f32.mrf.mxu0
    %v2141 = vadd.f32 0.0, %v2140
    %v2142 = vpop.f32.mrf.mxu0
    %v2143 = vadd.f32 0.0, %v2142
    %2144 = vmatmul.bf16.gmra.mxu0 %v1561
    %v2145 = vpop.f32.mrf.mxu0
    %v2146 = vadd.f32 0.0, %v2145
    %v2147 = vpop.f32.mrf.mxu0
    %v2148 = vadd.f32 0.0, %v2147
    %2149 = vmatmul.bf16.gmra.mxu0 %v1562
    %v2150 = vpop.f32.mrf.mxu0
    %v2151 = vadd.f32 0.0, %v2150
    %v2152 = vpop.f32.mrf.mxu0
    %v2153 = vadd.f32 0.0, %v2152
    %2154 = vmatmul.bf16.gmra.mxu0 %v1563
    %v2155 = vpop.f32.mrf.mxu0
    %v2156 = vadd.f32 0.0, %v2155
    %v2157 = vpop.f32.mrf.mxu0
    %v2158 = vadd.f32 0.0, %v2157
    %2159 = vmatmul.bf16.gmra.mxu0 %v1564
    %v2160 = vpop.f32.mrf.mxu0
    %v2161 = vadd.f32 0.0, %v2160
    %v2162 = vpop.f32.mrf.mxu0
    %v2163 = vadd.f32 0.0, %v2162
    %2164 = vmatmul.bf16.gmra.mxu0 %v1565
    %v2165 = vpop.f32.mrf.mxu0
    %v2166 = vadd.f32 0.0, %v2165
    %v2167 = vpop.f32.mrf.mxu0
    %v2168 = vadd.f32 0.0, %v2167
    %2169 = vmatmul.bf16.gmra.mxu0 %v1566
    %v2170 = vpop.f32.mrf.mxu0
    %v2171 = vadd.f32 0.0, %v2170
    %v2172 = vpop.f32.mrf.mxu0
    %v2173 = vadd.f32 0.0, %v2172
    %2174 = vmatmul.bf16.gmra.mxu0 %v1567
    %v2175 = vpop.f32.mrf.mxu0
    %v2176 = vadd.f32 0.0, %v2175
    %v2177 = vpop.f32.mrf.mxu0
    %v2178 = vadd.f32 0.0, %v2177
    %2179 = vmatmul.bf16.gmra.mxu0 %v1568
    %v2180 = vpop.f32.mrf.mxu0
    %v2181 = vadd.f32 0.0, %v2180
    %v2182 = vpop.f32.mrf.mxu0
    %v2183 = vadd.f32 0.0, %v2182
    %2184 = vmatmul.bf16.gmra.mxu0 %v1569
    %v2185 = vpop.f32.mrf.mxu0
    %v2186 = vadd.f32 0.0, %v2185
    %v2187 = vpop.f32.mrf.mxu0
    %v2188 = vadd.f32 0.0, %v2187
    %2189 = vmatmul.bf16.gmra.mxu0 %v1570
    %v2190 = vpop.f32.mrf.mxu0
    %v2191 = vadd.f32 0.0, %v2190
    %v2192 = vpop.f32.mrf.mxu0
    %v2193 = vadd.f32 0.0, %v2192
    %2194 = vmatmul.bf16.gmra.mxu0 %v1947
    %v2195 = vpop.f32.mrf.mxu0
    %v2196 = vadd.f32 0.0, %v2195
    %v2197 = vpop.f32.mrf.mxu0
    %v2198 = vadd.f32 0.0, %v2197
    %2199 = vmatmul.bf16.gmra.mxu0 %v1572
    %v2200 = vpop.f32.mrf.mxu0
    %v2201 = vadd.f32 0.0, %v2200
    %v2202 = vpop.f32.mrf.mxu0
    %v2203 = vadd.f32 0.0, %v2202
    %2204 = vmatmul.bf16.gmra.mxu0 %v1573
    %v2205 = vpop.f32.mrf.mxu0
    %v2206 = vadd.f32 0.0, %v2205
    %v2207 = vpop.f32.mrf.mxu0
    %v2208 = vadd.f32 0.0, %v2207
    %2209 = vmatmul.bf16.gmra.mxu0 %v1574
    %v2210 = vpop.f32.mrf.mxu0
    %v2211 = vadd.f32 0.0, %v2210
    %v2212 = vpop.f32.mrf.mxu0
    %v2213 = vadd.f32 0.0, %v2212
    %2214 = vmatmul.bf16.gmra.mxu0 %v1575
    %v2215 = vpop.f32.mrf.mxu0
    %v2216 = vadd.f32 0.0, %v2215
    %v2217 = vpop.f32.mrf.mxu0
    %v2218 = vadd.f32 0.0, %v2217
    %2219 = vmatmul.bf16.gmra.mxu0 %v1576
    %v2220 = vpop.f32.mrf.mxu0
    %v2221 = vadd.f32 0.0, %v2220
    %v2222 = vpop.f32.mrf.mxu0
    %v2223 = vadd.f32 0.0, %v2222
    %2224 = vmatmul.bf16.gmra.mxu0 %v1577
    %v2225 = vpop.f32.mrf.mxu0
    %v2226 = vadd.f32 0.0, %v2225
    %v2227 = vpop.f32.mrf.mxu0
    %v2228 = vadd.f32 0.0, %v2227
    %2229 = vmatmul.bf16.gmra.mxu0 %v1578
    %v2230 = vpop.f32.mrf.mxu0
    %v2231 = vadd.f32 0.0, %v2230
    %v2232 = vpop.f32.mrf.mxu0
    %v2233 = vadd.f32 0.0, %v2232
    %2234 = vmatmul.bf16.gmra.mxu0 %v1579
    %v2235 = vpop.f32.mrf.mxu0
    %v2236 = vadd.f32 0.0, %v2235
    %v2237 = vpop.f32.mrf.mxu0
    %v2238 = vadd.f32 0.0, %v2237
    %2239 = vmatmul.bf16.gmra.mxu0 %v1580
    %v2240 = vpop.f32.mrf.mxu0
    %v2241 = vadd.f32 0.0, %v2240
    %v2242 = vpop.f32.mrf.mxu0
    %v2243 = vadd.f32 0.0, %v2242
    %2244 = vmatmul.bf16.gmra.mxu0 %v1581
    %v2245 = vpop.f32.mrf.mxu0
    %v2246 = vadd.f32 0.0, %v2245
    %v2247 = vpop.f32.mrf.mxu0
    %v2248 = vadd.f32 0.0, %v2247
    %2249 = vmatmul.bf16.gmra.mxu0 %v1582
    %v2250 = vpop.f32.mrf.mxu0
    %v2251 = vadd.f32 0.0, %v2250
    %v2252 = vpop.f32.mrf.mxu0
    %v2253 = vadd.f32 0.0, %v2252
    %2254 = vmatmul.bf16.gmra.mxu0 %v1583
    %v2255 = vpop.f32.mrf.mxu0
    %v2256 = vadd.f32 0.0, %v2255
    %v2257 = vpop.f32.mrf.mxu0
    %v2258 = vadd.f32 0.0, %v2257
    %2259 = vmatmul.bf16.gmra.mxu0 %v1584
    %v2260 = vpop.f32.mrf.mxu0
    %v2261 = vadd.f32 0.0, %v2260
    %v2262 = vpop.f32.mrf.mxu0
    %v2263 = vadd.f32 0.0, %v2262
    %2264 = vmatmul.bf16.gmra.mxu0 %v1585
    %v2265 = vpop.f32.mrf.mxu0
    %v2266 = vadd.f32 0.0, %v2265
    %v2267 = vpop.f32.mrf.mxu0
    %v2268 = vadd.f32 0.0, %v2267
    %2269 = vmatmul.bf16.gmra.mxu0 %v1586
    %v2270 = vpop.f32.mrf.mxu0
    %v2271 = vadd.f32 0.0, %v2270
    %v2272 = vpop.f32.mrf.mxu0
    %v2273 = vadd.f32 0.0, %v2272
    %2274 = vmatmul.bf16.gmra.mxu0 %v1948
    %v2275 = vpop.f32.mrf.mxu0
    %v2276 = vadd.f32 0.0, %v2275
    %v2277 = vpop.f32.mrf.mxu0
    %v2278 = vadd.f32 0.0, %v2277
    %2279 = vdwg.mxu0
    %2280 = vmatpush.bf16.msra.mxu0 %v2078
    %2281 = vmatpush.bf16.msra.mxu0 %v2077
    %2282 = vmatpush.bf16.msra.mxu0 %v2076
    %2283 = vmatpush.bf16.msra.mxu0 %v2075
    %2284 = vmatpush.bf16.msra.mxu0 %v2074
    %2285 = vmatpush.bf16.msra.mxu0 %v2073
    %2286 = vmatpush.bf16.msra.mxu0 %v2072
    %2287 = vmatpush.bf16.msra.mxu0 %v2071
    %2288 = vmatmul.bf16.gmra.mxu0 %v1684
    %v2289 = vpop.f32.mrf.mxu0
    %v2290 = vadd.f32 %v2121, %v2289
    %v2291 = vpop.f32.mrf.mxu0
    %v2292 = vadd.f32 %v2123, %v2291
    %2293 = vmatmul.bf16.gmra.mxu0 %v1685
    %v2294 = vpop.f32.mrf.mxu0
    %v2295 = vadd.f32 %v2126, %v2294
    %v2296 = vpop.f32.mrf.mxu0
    %v2297 = vadd.f32 %v2128, %v2296
    %2298 = vmatmul.bf16.gmra.mxu0 %v1686
    %v2299 = vpop.f32.mrf.mxu0
    %v2300 = vadd.f32 %v2131, %v2299
    %v2301 = vpop.f32.mrf.mxu0
    %v2302 = vadd.f32 %v2133, %v2301
    %2303 = vmatmul.bf16.gmra.mxu0 %v1687
    %v2304 = vpop.f32.mrf.mxu0
    %v2305 = vadd.f32 %v2136, %v2304
    %v2306 = vpop.f32.mrf.mxu0
    %v2307 = vadd.f32 %v2138, %v2306
    %2308 = vmatmul.bf16.gmra.mxu0 %v1688
    %v2309 = vpop.f32.mrf.mxu0
    %v2310 = vadd.f32 %v2141, %v2309
    %v2311 = vpop.f32.mrf.mxu0
    %v2312 = vadd.f32 %v2143, %v2311
    %2313 = vmatmul.bf16.gmra.mxu0 %v1689
    %v2314 = vpop.f32.mrf.mxu0
    %v2315 = vadd.f32 %v2146, %v2314
    %v2316 = vpop.f32.mrf.mxu0
    %v2317 = vadd.f32 %v2148, %v2316
    %2318 = vmatmul.bf16.gmra.mxu0 %v1690
    %v2319 = vpop.f32.mrf.mxu0
    %v2320 = vadd.f32 %v2151, %v2319
    %v2321 = vpop.f32.mrf.mxu0
    %v2322 = vadd.f32 %v2153, %v2321
    %2323 = vmatmul.bf16.gmra.mxu0 %v1691
    %v2324 = vpop.f32.mrf.mxu0
    %v2325 = vadd.f32 %v2156, %v2324
    %v2326 = vpop.f32.mrf.mxu0
    %v2327 = vadd.f32 %v2158, %v2326
    %2328 = vmatmul.bf16.gmra.mxu0 %v1692
    %v2329 = vpop.f32.mrf.mxu0
    %v2330 = vadd.f32 %v2161, %v2329
    %v2331 = vpop.f32.mrf.mxu0
    %v2332 = vadd.f32 %v2163, %v2331
    %2333 = vmatmul.bf16.gmra.mxu0 %v1693
    %v2334 = vpop.f32.mrf.mxu0
    %v2335 = vadd.f32 %v2166, %v2334
    %v2336 = vpop.f32.mrf.mxu0
    %v2337 = vadd.f32 %v2168, %v2336
    %2338 = vmatmul.bf16.gmra.mxu0 %v1694
    %v2339 = vpop.f32.mrf.mxu0
    %v2340 = vadd.f32 %v2171, %v2339
    %v2341 = vpop.f32.mrf.mxu0
    %v2342 = vadd.f32 %v2173, %v2341
    %2343 = vmatmul.bf16.gmra.mxu0 %v1695
    %v2344 = vpop.f32.mrf.mxu0
    %v2345 = vadd.f32 %v2176, %v2344
    %v2346 = vpop.f32.mrf.mxu0
    %v2347 = vadd.f32 %v2178, %v2346
    %2348 = vmatmul.bf16.gmra.mxu0 %v1696
    %v2349 = vpop.f32.mrf.mxu0
    %v2350 = vadd.f32 %v2181, %v2349
    %v2351 = vpop.f32.mrf.mxu0
    %v2352 = vadd.f32 %v2183, %v2351
    %2353 = vmatmul.bf16.gmra.mxu0 %v1697
    %v2354 = vpop.f32.mrf.mxu0
    %v2355 = vadd.f32 %v2186, %v2354
    %v2356 = vpop.f32.mrf.mxu0
    %v2357 = vadd.f32 %v2188, %v2356
    %2358 = vmatmul.bf16.gmra.mxu0 %v1698
    %v2359 = vpop.f32.mrf.mxu0
    %v2360 = vadd.f32 %v2191, %v2359
    %v2361 = vpop.f32.mrf.mxu0
    %v2362 = vadd.f32 %v2193, %v2361
    %2363 = vmatmul.bf16.gmra.mxu0 %v1955
    %v2364 = vpop.f32.mrf.mxu0
    %v2365 = vadd.f32 %v2196, %v2364
    %v2366 = vpop.f32.mrf.mxu0
    %v2367 = vadd.f32 %v2198, %v2366
    %2368 = vmatmul.bf16.gmra.mxu0 %v1700
    %v2369 = vpop.f32.mrf.mxu0
    %v2370 = vadd.f32 %v2201, %v2369
    %v2371 = vpop.f32.mrf.mxu0
    %v2372 = vadd.f32 %v2203, %v2371
    %2373 = vmatmul.bf16.gmra.mxu0 %v1701
    %v2374 = vpop.f32.mrf.mxu0
    %v2375 = vadd.f32 %v2206, %v2374
    %v2376 = vpop.f32.mrf.mxu0
    %v2377 = vadd.f32 %v2208, %v2376
    %2378 = vmatmul.bf16.gmra.mxu0 %v1702
    %v2379 = vpop.f32.mrf.mxu0
    %v2380 = vadd.f32 %v2211, %v2379
    %v2381 = vpop.f32.mrf.mxu0
    %v2382 = vadd.f32 %v2213, %v2381
    %2383 = vmatmul.bf16.gmra.mxu0 %v1703
    %v2384 = vpop.f32.mrf.mxu0
    %v2385 = vadd.f32 %v2216, %v2384
    %v2386 = vpop.f32.mrf.mxu0
    %v2387 = vadd.f32 %v2218, %v2386
    %2388 = vmatmul.bf16.gmra.mxu0 %v1704
    %v2389 = vpop.f32.mrf.mxu0
    %v2390 = vadd.f32 %v2221, %v2389
    %v2391 = vpop.f32.mrf.mxu0
    %v2392 = vadd.f32 %v2223, %v2391
    %2393 = vmatmul.bf16.gmra.mxu0 %v1705
    %v2394 = vpop.f32.mrf.mxu0
    %v2395 = vadd.f32 %v2226, %v2394
    %v2396 = vpop.f32.mrf.mxu0
    %v2397 = vadd.f32 %v2228, %v2396
    %2398 = vmatmul.bf16.gmra.mxu0 %v1706
    %v2399 = vpop.f32.mrf.mxu0
    %v2400 = vadd.f32 %v2231, %v2399
    %v2401 = vpop.f32.mrf.mxu0
    %v2402 = vadd.f32 %v2233, %v2401
    %2403 = vmatmul.bf16.gmra.mxu0 %v1707
    %v2404 = vpop.f32.mrf.mxu0
    %v2405 = vadd.f32 %v2236, %v2404
    %v2406 = vpop.f32.mrf.mxu0
    %v2407 = vadd.f32 %v2238, %v2406
    %2408 = vmatmul.bf16.gmra.mxu0 %v1708
    %v2409 = vpop.f32.mrf.mxu0
    %v2410 = vadd.f32 %v2241, %v2409
    %v2411 = vpop.f32.mrf.mxu0
    %v2412 = vadd.f32 %v2243, %v2411
    %2413 = vmatmul.bf16.gmra.mxu0 %v1709
    %v2414 = vpop.f32.mrf.mxu0
    %v2415 = vadd.f32 %v2246, %v2414
    %v2416 = vpop.f32.mrf.mxu0
    %v2417 = vadd.f32 %v2248, %v2416
    %2418 = vmatmul.bf16.gmra.mxu0 %v1710
    %v2419 = vpop.f32.mrf.mxu0
    %v2420 = vadd.f32 %v2251, %v2419
    %v2421 = vpop.f32.mrf.mxu0
    %v2422 = vadd.f32 %v2253, %v2421
    %2423 = vmatmul.bf16.gmra.mxu0 %v1711
    %v2424 = vpop.f32.mrf.mxu0
    %v2425 = vadd.f32 %v2256, %v2424
    %v2426 = vpop.f32.mrf.mxu0
    %v2427 = vadd.f32 %v2258, %v2426
    %2428 = vmatmul.bf16.gmra.mxu0 %v1712
    %v2429 = vpop.f32.mrf.mxu0
    %v2430 = vadd.f32 %v2261, %v2429
    %v2431 = vpop.f32.mrf.mxu0
    %v2432 = vadd.f32 %v2263, %v2431
    %2433 = vmatmul.bf16.gmra.mxu0 %v1713
    %v2434 = vpop.f32.mrf.mxu0
    %v2435 = vadd.f32 %v2266, %v2434
    %v2436 = vpop.f32.mrf.mxu0
    %v2437 = vadd.f32 %v2268, %v2436
    %2438 = vmatmul.bf16.gmra.mxu0 %v1714
    %v2439 = vpop.f32.mrf.mxu0
    %v2440 = vadd.f32 %v2271, %v2439
    %v2441 = vpop.f32.mrf.mxu0
    %v2442 = vadd.f32 %v2273, %v2441
    %2443 = vmatmul.bf16.gmra.mxu0 %v1956
    %v2444 = vpop.f32.mrf.mxu0
    %v2445 = vadd.f32 %v2276, %v2444
    %v2446 = vpop.f32.mrf.mxu0
    %v2447 = vadd.f32 %v2278, %v2446
    %2448 = vdwg.mxu0
    %2449 = vmatpush.bf16.msra.mxu0 %v2086
    %2450 = vmatpush.bf16.msra.mxu0 %v2085
    %2451 = vmatpush.bf16.msra.mxu0 %v2084
    %2452 = vmatpush.bf16.msra.mxu0 %v2083
    %2453 = vmatpush.bf16.msra.mxu0 %v2082
    %2454 = vmatpush.bf16.msra.mxu0 %v2081
    %2455 = vmatpush.bf16.msra.mxu0 %v2080
    %2456 = vmatpush.bf16.msra.mxu0 %v2079
    %2457 = vmatmul.bf16.gmra.mxu0 %v1812
    %v2458 = vpop.f32.mrf.mxu0
    %v2459 = vadd.f32 %v2290, %v2458
    %v2460 = vpop.f32.mrf.mxu0
    %v2461 = vadd.f32 %v2292, %v2460
    %2462 = vmatmul.bf16.gmra.mxu0 %v1813
    %v2463 = vpop.f32.mrf.mxu0
    %v2464 = vadd.f32 %v2295, %v2463
    %v2465 = vpop.f32.mrf.mxu0
    %v2466 = vadd.f32 %v2297, %v2465
    %2467 = vmatmul.bf16.gmra.mxu0 %v1814
    %v2468 = vpop.f32.mrf.mxu0
    %v2469 = vadd.f32 %v2300, %v2468
    %v2470 = vpop.f32.mrf.mxu0
    %v2471 = vadd.f32 %v2302, %v2470
    %2472 = vmatmul.bf16.gmra.mxu0 %v1815
    %v2473 = vpop.f32.mrf.mxu0
    %v2474 = vadd.f32 %v2305, %v2473
    %v2475 = vpop.f32.mrf.mxu0
    %v2476 = vadd.f32 %v2307, %v2475
    %2477 = vmatmul.bf16.gmra.mxu0 %v1816
    %v2478 = vpop.f32.mrf.mxu0
    %v2479 = vadd.f32 %v2310, %v2478
    %v2480 = vpop.f32.mrf.mxu0
    %v2481 = vadd.f32 %v2312, %v2480
    %2482 = vmatmul.bf16.gmra.mxu0 %v1817
    %v2483 = vpop.f32.mrf.mxu0
    %v2484 = vadd.f32 %v2315, %v2483
    %v2485 = vpop.f32.mrf.mxu0
    %v2486 = vadd.f32 %v2317, %v2485
    %2487 = vmatmul.bf16.gmra.mxu0 %v1818
    %v2488 = vpop.f32.mrf.mxu0
    %v2489 = vadd.f32 %v2320, %v2488
    %v2490 = vpop.f32.mrf.mxu0
    %v2491 = vadd.f32 %v2322, %v2490
    %2492 = vmatmul.bf16.gmra.mxu0 %v1819
    %v2493 = vpop.f32.mrf.mxu0
    %v2494 = vadd.f32 %v2325, %v2493
    %v2495 = vpop.f32.mrf.mxu0
    %v2496 = vadd.f32 %v2327, %v2495
    %2497 = vmatmul.bf16.gmra.mxu0 %v1820
    %v2498 = vpop.f32.mrf.mxu0
    %v2499 = vadd.f32 %v2330, %v2498
    %v2500 = vpop.f32.mrf.mxu0
    %v2501 = vadd.f32 %v2332, %v2500
    %2502 = vmatmul.bf16.gmra.mxu0 %v1821
    %v2503 = vpop.f32.mrf.mxu0
    %v2504 = vadd.f32 %v2335, %v2503
    %v2505 = vpop.f32.mrf.mxu0
    %v2506 = vadd.f32 %v2337, %v2505
    %2507 = vmatmul.bf16.gmra.mxu0 %v1822
    %v2508 = vpop.f32.mrf.mxu0
    %v2509 = vadd.f32 %v2340, %v2508
    %v2510 = vpop.f32.mrf.mxu0
    %v2511 = vadd.f32 %v2342, %v2510
    %2512 = vmatmul.bf16.gmra.mxu0 %v1823
    %v2513 = vpop.f32.mrf.mxu0
    %v2514 = vadd.f32 %v2345, %v2513
    %v2515 = vpop.f32.mrf.mxu0
    %v2516 = vadd.f32 %v2347, %v2515
    %2517 = vmatmul.bf16.gmra.mxu0 %v1824
    %v2518 = vpop.f32.mrf.mxu0
    %v2519 = vadd.f32 %v2350, %v2518
    %v2520 = vpop.f32.mrf.mxu0
    %v2521 = vadd.f32 %v2352, %v2520
    %2522 = vmatmul.bf16.gmra.mxu0 %v1825
    %v2523 = vpop.f32.mrf.mxu0
    %v2524 = vadd.f32 %v2355, %v2523
    %v2525 = vpop.f32.mrf.mxu0
    %v2526 = vadd.f32 %v2357, %v2525
    %2527 = vmatmul.bf16.gmra.mxu0 %v1826
    %v2528 = vpop.f32.mrf.mxu0
    %v2529 = vadd.f32 %v2360, %v2528
    %v2530 = vpop.f32.mrf.mxu0
    %v2531 = vadd.f32 %v2362, %v2530
    %2532 = vmatmul.bf16.gmra.mxu0 %v1963
    %v2533 = vpop.f32.mrf.mxu0
    %v2534 = vadd.f32 %v2365, %v2533
    %v2535 = vpop.f32.mrf.mxu0
    %v2536 = vadd.f32 %v2367, %v2535
    %2537 = vmatmul.bf16.gmra.mxu0 %v1828
    %v2538 = vpop.f32.mrf.mxu0
    %v2539 = vadd.f32 %v2370, %v2538
    %v2540 = vpop.f32.mrf.mxu0
    %v2541 = vadd.f32 %v2372, %v2540
    %2542 = vmatmul.bf16.gmra.mxu0 %v1829
    %v2543 = vpop.f32.mrf.mxu0
    %v2544 = vadd.f32 %v2375, %v2543
    %v2545 = vpop.f32.mrf.mxu0
    %v2546 = vadd.f32 %v2377, %v2545
    %2547 = vmatmul.bf16.gmra.mxu0 %v1830
    %v2548 = vpop.f32.mrf.mxu0
    %v2549 = vadd.f32 %v2380, %v2548
    %v2550 = vpop.f32.mrf.mxu0
    %v2551 = vadd.f32 %v2382, %v2550
    %2552 = vmatmul.bf16.gmra.mxu0 %v1831
    %v2553 = vpop.f32.mrf.mxu0
    %v2554 = vadd.f32 %v2385, %v2553
    %v2555 = vpop.f32.mrf.mxu0
    %v2556 = vadd.f32 %v2387, %v2555
    %2557 = vmatmul.bf16.gmra.mxu0 %v1832
    %v2558 = vpop.f32.mrf.mxu0
    %v2559 = vadd.f32 %v2390, %v2558
    %v2560 = vpop.f32.mrf.mxu0
    %v2561 = vadd.f32 %v2392, %v2560
    %2562 = vmatmul.bf16.gmra.mxu0 %v1833
    %v2563 = vpop.f32.mrf.mxu0
    %v2564 = vadd.f32 %v2395, %v2563
    %v2565 = vpop.f32.mrf.mxu0
    %v2566 = vadd.f32 %v2397, %v2565
    %2567 = vmatmul.bf16.gmra.mxu0 %v1834
    %v2568 = vpop.f32.mrf.mxu0
    %v2569 = vadd.f32 %v2400, %v2568
    %v2570 = vpop.f32.mrf.mxu0
    %v2571 = vadd.f32 %v2402, %v2570
    %2572 = vmatmul.bf16.gmra.mxu0 %v1835
    %v2573 = vpop.f32.mrf.mxu0
    %v2574 = vadd.f32 %v2405, %v2573
    %v2575 = vpop.f32.mrf.mxu0
    %v2576 = vadd.f32 %v2407, %v2575
    %2577 = vmatmul.bf16.gmra.mxu0 %v1836
    %v2578 = vpop.f32.mrf.mxu0
    %v2579 = vadd.f32 %v2410, %v2578
    %v2580 = vpop.f32.mrf.mxu0
    %v2581 = vadd.f32 %v2412, %v2580
    %2582 = vmatmul.bf16.gmra.mxu0 %v1837
    %v2583 = vpop.f32.mrf.mxu0
    %v2584 = vadd.f32 %v2415, %v2583
    %v2585 = vpop.f32.mrf.mxu0
    %v2586 = vadd.f32 %v2417, %v2585
    %2587 = vmatmul.bf16.gmra.mxu0 %v1838
    %v2588 = vpop.f32.mrf.mxu0
    %v2589 = vadd.f32 %v2420, %v2588
    %v2590 = vpop.f32.mrf.mxu0
    %v2591 = vadd.f32 %v2422, %v2590
    %2592 = vmatmul.bf16.gmra.mxu0 %v1839
    %v2593 = vpop.f32.mrf.mxu0
    %v2594 = vadd.f32 %v2425, %v2593
    %v2595 = vpop.f32.mrf.mxu0
    %v2596 = vadd.f32 %v2427, %v2595
    %2597 = vmatmul.bf16.gmra.mxu0 %v1840
    %v2598 = vpop.f32.mrf.mxu0
    %v2599 = vadd.f32 %v2430, %v2598
    %v2600 = vpop.f32.mrf.mxu0
    %v2601 = vadd.f32 %v2432, %v2600
    %2602 = vmatmul.bf16.gmra.mxu0 %v1841
    %v2603 = vpop.f32.mrf.mxu0
    %v2604 = vadd.f32 %v2435, %v2603
    %v2605 = vpop.f32.mrf.mxu0
    %v2606 = vadd.f32 %v2437, %v2605
    %2607 = vmatmul.bf16.gmra.mxu0 %v1842
    %v2608 = vpop.f32.mrf.mxu0
    %v2609 = vadd.f32 %v2440, %v2608
    %v2610 = vpop.f32.mrf.mxu0
    %v2611 = vadd.f32 %v2442, %v2610
    %2612 = vmatmul.bf16.gmra.mxu0 %v1964
    %v2613 = vpop.f32.mrf.mxu0
    %v2614 = vadd.f32 %v2445, %v2613
    %v2615 = vpop.f32.mrf.mxu0
    %v2616 = vadd.f32 %v2447, %v2615
    %2617 = vdwg.mxu0
    %v2666 = vunpack.c.l.b16 %v253
    %v2667 = vunpack.c.l.b16 %v254
    %v2668 = vunpack.c.l.b16 %v255
    %v2669 = vunpack.c.l.b16 %v256
    %v2670 = vunpack.c.l.b16 %v257
    %v2671 = vunpack.c.l.b16 %v258
    %v2672 = vunpack.c.l.b16 %v259
    %v2673 = vunpack.c.l.b16 %v260
    %v2674 = vunpack.c.l.b16 %v261
    %v2675 = vunpack.c.l.b16 %v262
    %v2676 = vunpack.c.l.b16 %v263
    %v2677 = vunpack.c.l.b16 %v264
    %v2678 = vunpack.c.l.b16 %v265
    %v2679 = vunpack.c.l.b16 %v266
    %v2680 = vunpack.c.l.b16 %v267
    %v2681 = vunpack.c.l.b16 %v268
    %v2682 = vunpack.c.l.b16 %v269
    %v2683 = vunpack.c.l.b16 %v270
    %v2684 = vunpack.c.l.b16 %v271
    %v2685 = vunpack.c.l.b16 %v272
    %v2686 = vunpack.c.l.b16 %v273
    %v2687 = vunpack.c.l.b16 %v274
    %v2688 = vunpack.c.l.b16 %v275
    %v2689 = vunpack.c.l.b16 %v276
    %v2690 = vunpack.c.l.b16 %v277
    %v2691 = vunpack.c.l.b16 %v278
    %v2692 = vunpack.c.l.b16 %v279
    %v2693 = vunpack.c.l.b16 %v280
    %v2694 = vunpack.c.l.b16 %v281
    %v2695 = vunpack.c.l.b16 %v282
    %v2696 = vunpack.c.l.b16 %v283
    %v2697 = vunpack.c.l.b16 %v284
    %v2698 = vunpack.c.l.b16 %v285
    %v2699 = vunpack.c.l.b16 %v286
    %v2700 = vunpack.c.l.b16 %v287
    %v2701 = vunpack.c.l.b16 %v288
    %v2702 = vunpack.c.l.b16 %v289
    %v2703 = vunpack.c.l.b16 %v290
    %v2704 = vunpack.c.l.b16 %v291
    %v2705 = vunpack.c.l.b16 %v292
    %v2706 = vunpack.c.l.b16 %v293
    %v2707 = vunpack.c.l.b16 %v294
    %v2708 = vunpack.c.l.b16 %v295
    %v2709 = vunpack.c.l.b16 %v296
    %v2710 = vunpack.c.l.b16 %v297
    %v2711 = vunpack.c.l.b16 %v298
    %v2712 = vunpack.c.l.b16 %v299
    %v2713 = vunpack.c.l.b16 %v300
    %v2714 = vpack.c.b16 %v2667, %v2666
    %v2715 = vpack.c.b16 %v2669, %v2668
    %v2716 = vpack.c.b16 %v2671, %v2670
    %v2717 = vpack.c.b16 %v2673, %v2672
    %v2718 = vpack.c.b16 %v2675, %v2674
    %v2719 = vpack.c.b16 %v2677, %v2676
    %v2720 = vpack.c.b16 %v2679, %v2678
    %v2721 = vpack.c.b16 %v2681, %v2680
    %v2722 = vpack.c.b16 %v2683, %v2682
    %v2723 = vpack.c.b16 %v2685, %v2684
    %v2724 = vpack.c.b16 %v2687, %v2686
    %v2725 = vpack.c.b16 %v2689, %v2688
    %v2726 = vpack.c.b16 %v2691, %v2690
    %v2727 = vpack.c.b16 %v2693, %v2692
    %v2728 = vpack.c.b16 %v2695, %v2694
    %v2729 = vpack.c.b16 %v2697, %v2696
    %v2730 = vpack.c.b16 %v2699, %v2698
    %v2731 = vpack.c.b16 %v2701, %v2700
    %v2732 = vpack.c.b16 %v2703, %v2702
    %v2733 = vpack.c.b16 %v2705, %v2704
    %v2734 = vpack.c.b16 %v2707, %v2706
    %v2735 = vpack.c.b16 %v2709, %v2708
    %v2736 = vpack.c.b16 %v2711, %v2710
    %v2737 = vpack.c.b16 %v2713, %v2712
    %2762 = vmatpush.bf16.msra.mxu0 %v2721
    %2763 = vmatpush.bf16.msra.mxu0 %v2720
    %2764 = vmatpush.bf16.msra.mxu0 %v2719
    %2765 = vmatpush.bf16.msra.mxu0 %v2718
    %2766 = vmatpush.bf16.msra.mxu0 %v2717
    %2767 = vmatpush.bf16.msra.mxu0 %v2716
    %2768 = vmatpush.bf16.msra.mxu0 %v2715
    %2769 = vmatpush.bf16.msra.mxu0 %v2714
    %2770 = vmatmul.bf16.gmra.mxu0 %v1555
    %v2771 = vpop.f32.mrf.mxu0
    %v2772 = vadd.f32 %v2459, %v2771
    %v2773 = vpop.f32.mrf.mxu0
    %v2774 = vadd.f32 %v2461, %v2773
    %2775 = vmatmul.bf16.gmra.mxu0 %v1556
    %v2776 = vpop.f32.mrf.mxu0
    %v2777 = vadd.f32 %v2464, %v2776
    %v2778 = vpop.f32.mrf.mxu0
    %v2779 = vadd.f32 %v2466, %v2778
    %2780 = vmatmul.bf16.gmra.mxu0 %v1557
    %v2781 = vpop.f32.mrf.mxu0
    %v2782 = vadd.f32 %v2469, %v2781
    %v2783 = vpop.f32.mrf.mxu0
    %v2784 = vadd.f32 %v2471, %v2783
    %2785 = vmatmul.bf16.gmra.mxu0 %v1558
    %v2786 = vpop.f32.mrf.mxu0
    %v2787 = vadd.f32 %v2474, %v2786
    %v2788 = vpop.f32.mrf.mxu0
    %v2789 = vadd.f32 %v2476, %v2788
    %2790 = vmatmul.bf16.gmra.mxu0 %v1559
    %v2791 = vpop.f32.mrf.mxu0
    %v2792 = vadd.f32 %v2479, %v2791
    %v2793 = vpop.f32.mrf.mxu0
    %v2794 = vadd.f32 %v2481, %v2793
    %2795 = vmatmul.bf16.gmra.mxu0 %v1560
    %v2796 = vpop.f32.mrf.mxu0
    %v2797 = vadd.f32 %v2484, %v2796
    %v2798 = vpop.f32.mrf.mxu0
    %v2799 = vadd.f32 %v2486, %v2798
    %2800 = vmatmul.bf16.gmra.mxu0 %v1561
    %v2801 = vpop.f32.mrf.mxu0
    %v2802 = vadd.f32 %v2489, %v2801
    %v2803 = vpop.f32.mrf.mxu0
    %v2804 = vadd.f32 %v2491, %v2803
    %2805 = vmatmul.bf16.gmra.mxu0 %v1562
    %v2806 = vpop.f32.mrf.mxu0
    %v2807 = vadd.f32 %v2494, %v2806
    %v2808 = vpop.f32.mrf.mxu0
    %v2809 = vadd.f32 %v2496, %v2808
    %2810 = vmatmul.bf16.gmra.mxu0 %v1563
    %v2811 = vpop.f32.mrf.mxu0
    %v2812 = vadd.f32 %v2499, %v2811
    %v2813 = vpop.f32.mrf.mxu0
    %v2814 = vadd.f32 %v2501, %v2813
    %2815 = vmatmul.bf16.gmra.mxu0 %v1564
    %v2816 = vpop.f32.mrf.mxu0
    %v2817 = vadd.f32 %v2504, %v2816
    %v2818 = vpop.f32.mrf.mxu0
    %v2819 = vadd.f32 %v2506, %v2818
    %2820 = vmatmul.bf16.gmra.mxu0 %v1565
    %v2821 = vpop.f32.mrf.mxu0
    %v2822 = vadd.f32 %v2509, %v2821
    %v2823 = vpop.f32.mrf.mxu0
    %v2824 = vadd.f32 %v2511, %v2823
    %2825 = vmatmul.bf16.gmra.mxu0 %v1566
    %v2826 = vpop.f32.mrf.mxu0
    %v2827 = vadd.f32 %v2514, %v2826
    %v2828 = vpop.f32.mrf.mxu0
    %v2829 = vadd.f32 %v2516, %v2828
    %2830 = vmatmul.bf16.gmra.mxu0 %v1567
    %v2831 = vpop.f32.mrf.mxu0
    %v2832 = vadd.f32 %v2519, %v2831
    %v2833 = vpop.f32.mrf.mxu0
    %v2834 = vadd.f32 %v2521, %v2833
    %2835 = vmatmul.bf16.gmra.mxu0 %v1568
    %v2836 = vpop.f32.mrf.mxu0
    %v2837 = vadd.f32 %v2524, %v2836
    %v2838 = vpop.f32.mrf.mxu0
    %v2839 = vadd.f32 %v2526, %v2838
    %2840 = vmatmul.bf16.gmra.mxu0 %v1569
    %v2841 = vpop.f32.mrf.mxu0
    %v2842 = vadd.f32 %v2529, %v2841
    %v2843 = vpop.f32.mrf.mxu0
    %v2844 = vadd.f32 %v2531, %v2843
    %2845 = vmatmul.bf16.gmra.mxu0 %v1570
    %v2846 = vpop.f32.mrf.mxu0
    %v2847 = vadd.f32 %v2534, %v2846
    %v2848 = vpop.f32.mrf.mxu0
    %v2849 = vadd.f32 %v2536, %v2848
    %2850 = vmatmul.bf16.gmra.mxu0 %v1571
    %v2851 = vpop.f32.mrf.mxu0
    %v2852 = vadd.f32 %v2539, %v2851
    %v2853 = vpop.f32.mrf.mxu0
    %v2854 = vadd.f32 %v2541, %v2853
    %2855 = vmatmul.bf16.gmra.mxu0 %v1572
    %v2856 = vpop.f32.mrf.mxu0
    %v2857 = vadd.f32 %v2544, %v2856
    %v2858 = vpop.f32.mrf.mxu0
    %v2859 = vadd.f32 %v2546, %v2858
    %2860 = vmatmul.bf16.gmra.mxu0 %v1573
    %v2861 = vpop.f32.mrf.mxu0
    %v2862 = vadd.f32 %v2549, %v2861
    %v2863 = vpop.f32.mrf.mxu0
    %v2864 = vadd.f32 %v2551, %v2863
    %2865 = vmatmul.bf16.gmra.mxu0 %v1574
    %v2866 = vpop.f32.mrf.mxu0
    %v2867 = vadd.f32 %v2554, %v2866
    %v2868 = vpop.f32.mrf.mxu0
    %v2869 = vadd.f32 %v2556, %v2868
    %2870 = vmatmul.bf16.gmra.mxu0 %v1575
    %v2871 = vpop.f32.mrf.mxu0
    %v2872 = vadd.f32 %v2559, %v2871
    %v2873 = vpop.f32.mrf.mxu0
    %v2874 = vadd.f32 %v2561, %v2873
    %2875 = vmatmul.bf16.gmra.mxu0 %v1576
    %v2876 = vpop.f32.mrf.mxu0
    %v2877 = vadd.f32 %v2564, %v2876
    %v2878 = vpop.f32.mrf.mxu0
    %v2879 = vadd.f32 %v2566, %v2878
    %2880 = vmatmul.bf16.gmra.mxu0 %v1577
    %v2881 = vpop.f32.mrf.mxu0
    %v2882 = vadd.f32 %v2569, %v2881
    %v2883 = vpop.f32.mrf.mxu0
    %v2884 = vadd.f32 %v2571, %v2883
    %2885 = vmatmul.bf16.gmra.mxu0 %v1578
    %v2886 = vpop.f32.mrf.mxu0
    %v2887 = vadd.f32 %v2574, %v2886
    %v2888 = vpop.f32.mrf.mxu0
    %v2889 = vadd.f32 %v2576, %v2888
    %2890 = vmatmul.bf16.gmra.mxu0 %v1579
    %v2891 = vpop.f32.mrf.mxu0
    %v2892 = vadd.f32 %v2579, %v2891
    %v2893 = vpop.f32.mrf.mxu0
    %v2894 = vadd.f32 %v2581, %v2893
    %2895 = vmatmul.bf16.gmra.mxu0 %v1580
    %v2896 = vpop.f32.mrf.mxu0
    %v2897 = vadd.f32 %v2584, %v2896
    %v2898 = vpop.f32.mrf.mxu0
    %v2899 = vadd.f32 %v2586, %v2898
    %2900 = vmatmul.bf16.gmra.mxu0 %v1581
    %v2901 = vpop.f32.mrf.mxu0
    %v2902 = vadd.f32 %v2589, %v2901
    %v2903 = vpop.f32.mrf.mxu0
    %v2904 = vadd.f32 %v2591, %v2903
    %2905 = vmatmul.bf16.gmra.mxu0 %v1582
    %v2906 = vpop.f32.mrf.mxu0
    %v2907 = vadd.f32 %v2594, %v2906
    %v2908 = vpop.f32.mrf.mxu0
    %v2909 = vadd.f32 %v2596, %v2908
    %2910 = vmatmul.bf16.gmra.mxu0 %v1583
    %v2911 = vpop.f32.mrf.mxu0
    %v2912 = vadd.f32 %v2599, %v2911
    %v2913 = vpop.f32.mrf.mxu0
    %v2914 = vadd.f32 %v2601, %v2913
    %2915 = vmatmul.bf16.gmra.mxu0 %v1584
    %v2916 = vpop.f32.mrf.mxu0
    %v2917 = vadd.f32 %v2604, %v2916
    %v2918 = vpop.f32.mrf.mxu0
    %v2919 = vadd.f32 %v2606, %v2918
    %2920 = vmatmul.bf16.gmra.mxu0 %v1585
    %v2921 = vpop.f32.mrf.mxu0
    %v2922 = vadd.f32 %v2609, %v2921
    %v2923 = vpop.f32.mrf.mxu0
    %v2924 = vadd.f32 %v2611, %v2923
    %2925 = vmatmul.bf16.gmra.mxu0 %v1586
    %v2926 = vpop.f32.mrf.mxu0
    %v2927 = vadd.f32 %v2614, %v2926
    %v2928 = vpop.f32.mrf.mxu0
    %v2929 = vadd.f32 %v2616, %v2928
    %2930 = vdwg.mxu0
    %2931 = vmatpush.bf16.msra.mxu0 %v2729
    %2932 = vmatpush.bf16.msra.mxu0 %v2728
    %2933 = vmatpush.bf16.msra.mxu0 %v2727
    %2934 = vmatpush.bf16.msra.mxu0 %v2726
    %2935 = vmatpush.bf16.msra.mxu0 %v2725
    %2936 = vmatpush.bf16.msra.mxu0 %v2724
    %2937 = vmatpush.bf16.msra.mxu0 %v2723
    %2938 = vmatpush.bf16.msra.mxu0 %v2722
    %2939 = vmatmul.bf16.gmra.mxu0 %v1683
    %v2940 = vpop.f32.mrf.mxu0
    %v2941 = vadd.f32 %v2772, %v2940
    %v2942 = vpop.f32.mrf.mxu0
    %v2943 = vadd.f32 %v2774, %v2942
    %2944 = vmatmul.bf16.gmra.mxu0 %v1684
    %v2945 = vpop.f32.mrf.mxu0
    %v2946 = vadd.f32 %v2777, %v2945
    %v2947 = vpop.f32.mrf.mxu0
    %v2948 = vadd.f32 %v2779, %v2947
    %2949 = vmatmul.bf16.gmra.mxu0 %v1685
    %v2950 = vpop.f32.mrf.mxu0
    %v2951 = vadd.f32 %v2782, %v2950
    %v2952 = vpop.f32.mrf.mxu0
    %v2953 = vadd.f32 %v2784, %v2952
    %2954 = vmatmul.bf16.gmra.mxu0 %v1686
    %v2955 = vpop.f32.mrf.mxu0
    %v2956 = vadd.f32 %v2787, %v2955
    %v2957 = vpop.f32.mrf.mxu0
    %v2958 = vadd.f32 %v2789, %v2957
    %2959 = vmatmul.bf16.gmra.mxu0 %v1687
    %v2960 = vpop.f32.mrf.mxu0
    %v2961 = vadd.f32 %v2792, %v2960
    %v2962 = vpop.f32.mrf.mxu0
    %v2963 = vadd.f32 %v2794, %v2962
    %2964 = vmatmul.bf16.gmra.mxu0 %v1688
    %v2965 = vpop.f32.mrf.mxu0
    %v2966 = vadd.f32 %v2797, %v2965
    %v2967 = vpop.f32.mrf.mxu0
    %v2968 = vadd.f32 %v2799, %v2967
    %2969 = vmatmul.bf16.gmra.mxu0 %v1689
    %v2970 = vpop.f32.mrf.mxu0
    %v2971 = vadd.f32 %v2802, %v2970
    %v2972 = vpop.f32.mrf.mxu0
    %v2973 = vadd.f32 %v2804, %v2972
    %2974 = vmatmul.bf16.gmra.mxu0 %v1690
    %v2975 = vpop.f32.mrf.mxu0
    %v2976 = vadd.f32 %v2807, %v2975
    %v2977 = vpop.f32.mrf.mxu0
    %v2978 = vadd.f32 %v2809, %v2977
    %2979 = vmatmul.bf16.gmra.mxu0 %v1691
    %v2980 = vpop.f32.mrf.mxu0
    %v2981 = vadd.f32 %v2812, %v2980
    %v2982 = vpop.f32.mrf.mxu0
    %v2983 = vadd.f32 %v2814, %v2982
    %2984 = vmatmul.bf16.gmra.mxu0 %v1692
    %v2985 = vpop.f32.mrf.mxu0
    %v2986 = vadd.f32 %v2817, %v2985
    %v2987 = vpop.f32.mrf.mxu0
    %v2988 = vadd.f32 %v2819, %v2987
    %2989 = vmatmul.bf16.gmra.mxu0 %v1693
    %v2990 = vpop.f32.mrf.mxu0
    %v2991 = vadd.f32 %v2822, %v2990
    %v2992 = vpop.f32.mrf.mxu0
    %v2993 = vadd.f32 %v2824, %v2992
    %2994 = vmatmul.bf16.gmra.mxu0 %v1694
    %v2995 = vpop.f32.mrf.mxu0
    %v2996 = vadd.f32 %v2827, %v2995
    %v2997 = vpop.f32.mrf.mxu0
    %v2998 = vadd.f32 %v2829, %v2997
    %2999 = vmatmul.bf16.gmra.mxu0 %v1695
    %v3000 = vpop.f32.mrf.mxu0
    %v3001 = vadd.f32 %v2832, %v3000
    %v3002 = vpop.f32.mrf.mxu0
    %v3003 = vadd.f32 %v2834, %v3002
    %3004 = vmatmul.bf16.gmra.mxu0 %v1696
    %v3005 = vpop.f32.mrf.mxu0
    %v3006 = vadd.f32 %v2837, %v3005
    %v3007 = vpop.f32.mrf.mxu0
    %v3008 = vadd.f32 %v2839, %v3007
    %3009 = vmatmul.bf16.gmra.mxu0 %v1697
    %v3010 = vpop.f32.mrf.mxu0
    %v3011 = vadd.f32 %v2842, %v3010
    %v3012 = vpop.f32.mrf.mxu0
    %v3013 = vadd.f32 %v2844, %v3012
    %3014 = vmatmul.bf16.gmra.mxu0 %v1698
    %v3015 = vpop.f32.mrf.mxu0
    %v3016 = vadd.f32 %v2847, %v3015
    %v3017 = vpop.f32.mrf.mxu0
    %v3018 = vadd.f32 %v2849, %v3017
    %3019 = vmatmul.bf16.gmra.mxu0 %v1699
    %v3020 = vpop.f32.mrf.mxu0
    %v3021 = vadd.f32 %v2852, %v3020
    %v3022 = vpop.f32.mrf.mxu0
    %v3023 = vadd.f32 %v2854, %v3022
    %3024 = vmatmul.bf16.gmra.mxu0 %v1700
    %v3025 = vpop.f32.mrf.mxu0
    %v3026 = vadd.f32 %v2857, %v3025
    %v3027 = vpop.f32.mrf.mxu0
    %v3028 = vadd.f32 %v2859, %v3027
    %3029 = vmatmul.bf16.gmra.mxu0 %v1701
    %v3030 = vpop.f32.mrf.mxu0
    %v3031 = vadd.f32 %v2862, %v3030
    %v3032 = vpop.f32.mrf.mxu0
    %v3033 = vadd.f32 %v2864, %v3032
    %3034 = vmatmul.bf16.gmra.mxu0 %v1702
    %v3035 = vpop.f32.mrf.mxu0
    %v3036 = vadd.f32 %v2867, %v3035
    %v3037 = vpop.f32.mrf.mxu0
    %v3038 = vadd.f32 %v2869, %v3037
    %3039 = vmatmul.bf16.gmra.mxu0 %v1703
    %v3040 = vpop.f32.mrf.mxu0
    %v3041 = vadd.f32 %v2872, %v3040
    %v3042 = vpop.f32.mrf.mxu0
    %v3043 = vadd.f32 %v2874, %v3042
    %3044 = vmatmul.bf16.gmra.mxu0 %v1704
    %v3045 = vpop.f32.mrf.mxu0
    %v3046 = vadd.f32 %v2877, %v3045
    %v3047 = vpop.f32.mrf.mxu0
    %v3048 = vadd.f32 %v2879, %v3047
    %3049 = vmatmul.bf16.gmra.mxu0 %v1705
    %v3050 = vpop.f32.mrf.mxu0
    %v3051 = vadd.f32 %v2882, %v3050
    %v3052 = vpop.f32.mrf.mxu0
    %v3053 = vadd.f32 %v2884, %v3052
    %3054 = vmatmul.bf16.gmra.mxu0 %v1706
    %v3055 = vpop.f32.mrf.mxu0
    %v3056 = vadd.f32 %v2887, %v3055
    %v3057 = vpop.f32.mrf.mxu0
    %v3058 = vadd.f32 %v2889, %v3057
    %3059 = vmatmul.bf16.gmra.mxu0 %v1707
    %v3060 = vpop.f32.mrf.mxu0
    %v3061 = vadd.f32 %v2892, %v3060
    %v3062 = vpop.f32.mrf.mxu0
    %v3063 = vadd.f32 %v2894, %v3062
    %3064 = vmatmul.bf16.gmra.mxu0 %v1708
    %v3065 = vpop.f32.mrf.mxu0
    %v3066 = vadd.f32 %v2897, %v3065
    %v3067 = vpop.f32.mrf.mxu0
    %v3068 = vadd.f32 %v2899, %v3067
    %3069 = vmatmul.bf16.gmra.mxu0 %v1709
    %v3070 = vpop.f32.mrf.mxu0
    %v3071 = vadd.f32 %v2902, %v3070
    %v3072 = vpop.f32.mrf.mxu0
    %v3073 = vadd.f32 %v2904, %v3072
    %3074 = vmatmul.bf16.gmra.mxu0 %v1710
    %v3075 = vpop.f32.mrf.mxu0
    %v3076 = vadd.f32 %v2907, %v3075
    %v3077 = vpop.f32.mrf.mxu0
    %v3078 = vadd.f32 %v2909, %v3077
    %3079 = vmatmul.bf16.gmra.mxu0 %v1711
    %v3080 = vpop.f32.mrf.mxu0
    %v3081 = vadd.f32 %v2912, %v3080
    %v3082 = vpop.f32.mrf.mxu0
    %v3083 = vadd.f32 %v2914, %v3082
    %3084 = vmatmul.bf16.gmra.mxu0 %v1712
    %v3085 = vpop.f32.mrf.mxu0
    %v3086 = vadd.f32 %v2917, %v3085
    %v3087 = vpop.f32.mrf.mxu0
    %v3088 = vadd.f32 %v2919, %v3087
    %3089 = vmatmul.bf16.gmra.mxu0 %v1713
    %v3090 = vpop.f32.mrf.mxu0
    %v3091 = vadd.f32 %v2922, %v3090
    %v3092 = vpop.f32.mrf.mxu0
    %v3093 = vadd.f32 %v2924, %v3092
    %3094 = vmatmul.bf16.gmra.mxu0 %v1714
    %v3095 = vpop.f32.mrf.mxu0
    %v3096 = vadd.f32 %v2927, %v3095
    %v3097 = vpop.f32.mrf.mxu0
    %v3098 = vadd.f32 %v2929, %v3097
    %3099 = vdwg.mxu0
    %3100 = vmatpush.bf16.msra.mxu0 %v2737
    %3101 = vmatpush.bf16.msra.mxu0 %v2736
    %3102 = vmatpush.bf16.msra.mxu0 %v2735
    %3103 = vmatpush.bf16.msra.mxu0 %v2734
    %3104 = vmatpush.bf16.msra.mxu0 %v2733
    %3105 = vmatpush.bf16.msra.mxu0 %v2732
    %3106 = vmatpush.bf16.msra.mxu0 %v2731
    %3107 = vmatpush.bf16.msra.mxu0 %v2730
    %3108 = vmatmul.bf16.gmra.mxu0 %v1811
    %v3109 = vpop.f32.mrf.mxu0
    %v3110 = vadd.f32 %v2941, %v3109
    %v3111 = vpop.f32.mrf.mxu0
    %v3112 = vadd.f32 %v2943, %v3111
    %3113 = vmatmul.bf16.gmra.mxu0 %v1812
    %v3114 = vpop.f32.mrf.mxu0
    %v3115 = vadd.f32 %v2946, %v3114
    %v3116 = vpop.f32.mrf.mxu0
    %v3117 = vadd.f32 %v2948, %v3116
    %3118 = vmatmul.bf16.gmra.mxu0 %v1813
    %v3119 = vpop.f32.mrf.mxu0
    %v3120 = vadd.f32 %v2951, %v3119
    %v3121 = vpop.f32.mrf.mxu0
    %v3122 = vadd.f32 %v2953, %v3121
    %3123 = vmatmul.bf16.gmra.mxu0 %v1814
    %v3124 = vpop.f32.mrf.mxu0
    %v3125 = vadd.f32 %v2956, %v3124
    %v3126 = vpop.f32.mrf.mxu0
    %v3127 = vadd.f32 %v2958, %v3126
    %3128 = vmatmul.bf16.gmra.mxu0 %v1815
    %v3129 = vpop.f32.mrf.mxu0
    %v3130 = vadd.f32 %v2961, %v3129
    %v3131 = vpop.f32.mrf.mxu0
    %v3132 = vadd.f32 %v2963, %v3131
    %3133 = vmatmul.bf16.gmra.mxu0 %v1816
    %v3134 = vpop.f32.mrf.mxu0
    %v3135 = vadd.f32 %v2966, %v3134
    %v3136 = vpop.f32.mrf.mxu0
    %v3137 = vadd.f32 %v2968, %v3136
    %3138 = vmatmul.bf16.gmra.mxu0 %v1817
    %v3139 = vpop.f32.mrf.mxu0
    %v3140 = vadd.f32 %v2971, %v3139
    %v3141 = vpop.f32.mrf.mxu0
    %v3142 = vadd.f32 %v2973, %v3141
    %3143 = vmatmul.bf16.gmra.mxu0 %v1818
    %v3144 = vpop.f32.mrf.mxu0
    %v3145 = vadd.f32 %v2976, %v3144
    %v3146 = vpop.f32.mrf.mxu0
    %v3147 = vadd.f32 %v2978, %v3146
    %3148 = vmatmul.bf16.gmra.mxu0 %v1819
    %v3149 = vpop.f32.mrf.mxu0
    %v3150 = vadd.f32 %v2981, %v3149
    %v3151 = vpop.f32.mrf.mxu0
    %v3152 = vadd.f32 %v2983, %v3151
    %3153 = vmatmul.bf16.gmra.mxu0 %v1820
    %v3154 = vpop.f32.mrf.mxu0
    %v3155 = vadd.f32 %v2986, %v3154
    %v3156 = vpop.f32.mrf.mxu0
    %v3157 = vadd.f32 %v2988, %v3156
    %3158 = vmatmul.bf16.gmra.mxu0 %v1821
    %v3159 = vpop.f32.mrf.mxu0
    %v3160 = vadd.f32 %v2991, %v3159
    %v3161 = vpop.f32.mrf.mxu0
    %v3162 = vadd.f32 %v2993, %v3161
    %3163 = vmatmul.bf16.gmra.mxu0 %v1822
    %v3164 = vpop.f32.mrf.mxu0
    %v3165 = vadd.f32 %v2996, %v3164
    %v3166 = vpop.f32.mrf.mxu0
    %v3167 = vadd.f32 %v2998, %v3166
    %3168 = vmatmul.bf16.gmra.mxu0 %v1823
    %v3169 = vpop.f32.mrf.mxu0
    %v3170 = vadd.f32 %v3001, %v3169
    %v3171 = vpop.f32.mrf.mxu0
    %v3172 = vadd.f32 %v3003, %v3171
    %3173 = vmatmul.bf16.gmra.mxu0 %v1824
    %v3174 = vpop.f32.mrf.mxu0
    %v3175 = vadd.f32 %v3006, %v3174
    %v3176 = vpop.f32.mrf.mxu0
    %v3177 = vadd.f32 %v3008, %v3176
    %3178 = vmatmul.bf16.gmra.mxu0 %v1825
    %v3179 = vpop.f32.mrf.mxu0
    %v3180 = vadd.f32 %v3011, %v3179
    %v3181 = vpop.f32.mrf.mxu0
    %v3182 = vadd.f32 %v3013, %v3181
    %3183 = vmatmul.bf16.gmra.mxu0 %v1826
    %v3184 = vpop.f32.mrf.mxu0
    %v3185 = vadd.f32 %v3016, %v3184
    %v3186 = vpop.f32.mrf.mxu0
    %v3187 = vadd.f32 %v3018, %v3186
    %3188 = vmatmul.bf16.gmra.mxu0 %v1827
    %v3189 = vpop.f32.mrf.mxu0
    %v3190 = vadd.f32 %v3021, %v3189
    %v3191 = vpop.f32.mrf.mxu0
    %v3192 = vadd.f32 %v3023, %v3191
    %3193 = vmatmul.bf16.gmra.mxu0 %v1828
    %v3194 = vpop.f32.mrf.mxu0
    %v3195 = vadd.f32 %v3026, %v3194
    %v3196 = vpop.f32.mrf.mxu0
    %v3197 = vadd.f32 %v3028, %v3196
    %3198 = vmatmul.bf16.gmra.mxu0 %v1829
    %v3199 = vpop.f32.mrf.mxu0
    %v3200 = vadd.f32 %v3031, %v3199
    %v3201 = vpop.f32.mrf.mxu0
    %v3202 = vadd.f32 %v3033, %v3201
    %3203 = vmatmul.bf16.gmra.mxu0 %v1830
    %v3204 = vpop.f32.mrf.mxu0
    %v3205 = vadd.f32 %v3036, %v3204
    %v3206 = vpop.f32.mrf.mxu0
    %v3207 = vadd.f32 %v3038, %v3206
    %3208 = vmatmul.bf16.gmra.mxu0 %v1831
    %v3209 = vpop.f32.mrf.mxu0
    %v3210 = vadd.f32 %v3041, %v3209
    %v3211 = vpop.f32.mrf.mxu0
    %v3212 = vadd.f32 %v3043, %v3211
    %3213 = vmatmul.bf16.gmra.mxu0 %v1832
    %v3214 = vpop.f32.mrf.mxu0
    %v3215 = vadd.f32 %v3046, %v3214
    %v3216 = vpop.f32.mrf.mxu0
    %v3217 = vadd.f32 %v3048, %v3216
    %3218 = vmatmul.bf16.gmra.mxu0 %v1833
    %v3219 = vpop.f32.mrf.mxu0
    %v3220 = vadd.f32 %v3051, %v3219
    %v3221 = vpop.f32.mrf.mxu0
    %v3222 = vadd.f32 %v3053, %v3221
    %3223 = vmatmul.bf16.gmra.mxu0 %v1834
    %v3224 = vpop.f32.mrf.mxu0
    %v3225 = vadd.f32 %v3056, %v3224
    %v3226 = vpop.f32.mrf.mxu0
    %v3227 = vadd.f32 %v3058, %v3226
    %3228 = vmatmul.bf16.gmra.mxu0 %v1835
    %v3229 = vpop.f32.mrf.mxu0
    %v3230 = vadd.f32 %v3061, %v3229
    %v3231 = vpop.f32.mrf.mxu0
    %v3232 = vadd.f32 %v3063, %v3231
    %3233 = vmatmul.bf16.gmra.mxu0 %v1836
    %v3234 = vpop.f32.mrf.mxu0
    %v3235 = vadd.f32 %v3066, %v3234
    %v3236 = vpop.f32.mrf.mxu0
    %v3237 = vadd.f32 %v3068, %v3236
    %3238 = vmatmul.bf16.gmra.mxu0 %v1837
    %v3239 = vpop.f32.mrf.mxu0
    %v3240 = vadd.f32 %v3071, %v3239
    %v3241 = vpop.f32.mrf.mxu0
    %v3242 = vadd.f32 %v3073, %v3241
    %3243 = vmatmul.bf16.gmra.mxu0 %v1838
    %v3244 = vpop.f32.mrf.mxu0
    %v3245 = vadd.f32 %v3076, %v3244
    %v3246 = vpop.f32.mrf.mxu0
    %v3247 = vadd.f32 %v3078, %v3246
    %3248 = vmatmul.bf16.gmra.mxu0 %v1839
    %v3249 = vpop.f32.mrf.mxu0
    %v3250 = vadd.f32 %v3081, %v3249
    %v3251 = vpop.f32.mrf.mxu0
    %v3252 = vadd.f32 %v3083, %v3251
    %3253 = vmatmul.bf16.gmra.mxu0 %v1840
    %v3254 = vpop.f32.mrf.mxu0
    %v3255 = vadd.f32 %v3086, %v3254
    %v3256 = vpop.f32.mrf.mxu0
    %v3257 = vadd.f32 %v3088, %v3256
    %3258 = vmatmul.bf16.gmra.mxu0 %v1841
    %v3259 = vpop.f32.mrf.mxu0
    %v3260 = vadd.f32 %v3091, %v3259
    %v3261 = vpop.f32.mrf.mxu0
    %v3262 = vadd.f32 %v3093, %v3261
    %3263 = vmatmul.bf16.gmra.mxu0 %v1842
    %v3264 = vpop.f32.mrf.mxu0
    %v3265 = vadd.f32 %v3096, %v3264
    %v3266 = vpop.f32.mrf.mxu0
    %v3267 = vadd.f32 %v3098, %v3266
    %3268 = vdwg.mxu0
    %v3270 = vshrl.u32 %v196, 16
    %v3272 = vrot.slane %v3270, 4
    %v3273 = vshll.u32 %v196, 16
    %v3275 = vrot.slane %v3273, 5
    %v3276 = vor.u32 %v3272, %v3275
    %v3277 = vrot.slane %v3276, 4
    %v3279 = vshll.u32 %v197, 16
    %v3281 = vrot.slane %v3279, 5
    %v3282 = vsel %vm399, %v3277, %v3281
    %v3283 = vshrl.u32 %v197, 16
    %v3285 = vrot.slane %v3283, 4
    %v3286 = vor.u32 %v3285, %v3281
    %v3287 = vrot.slane %v3286, 4
    %v3289 = vshll.u32 %v198, 16
    %v3291 = vrot.slane %v3289, 5
    %v3292 = vsel %vm399, %v3287, %v3291
    %v3294 = vshrl.u32 %v250, 16
    %v3296 = vrot.slane %v3294, 4
    %v3297 = vshll.u32 %v250, 16
    %v3299 = vrot.slane %v3297, 5
    %v3300 = vor.u32 %v3296, %v3299
    %v3301 = vrot.slane %v3300, 4
    %v3303 = vshll.u32 %v251, 16
    %v3305 = vrot.slane %v3303, 5
    %v3306 = vsel %vm399, %v3301, %v3305
    %v3307 = vshrl.u32 %v251, 16
    %v3309 = vrot.slane %v3307, 4
    %v3310 = vor.u32 %v3309, %v3305
    %v3311 = vrot.slane %v3310, 4
    %v3313 = vshll.u32 %v252, 16
    %v3315 = vrot.slane %v3313, 5
    %v3316 = vsel %vm399, %v3311, %v3315
    %v3323 = vrot.slane %v196, 5
    %v3324 = vrot.slane %v3323, 4
    %v3325 = vrot.slane %v197, 5
    %v3326 = vsel %vm1266, %v3324, %v3325
    %v3327 = vrot.slane %v3325, 4
    %v3328 = vrot.slane %v198, 5
    %v3329 = vsel %vm1266, %v3327, %v3328
    %v3330 = vrot.slane %v250, 5
    %v3331 = vrot.slane %v3330, 4
    %v3332 = vrot.slane %v251, 5
    %v3333 = vsel %vm1266, %v3331, %v3332
    %v3334 = vrot.slane %v3332, 4
    %v3335 = vrot.slane %v252, 5
    %v3336 = vsel %vm1266, %v3334, %v3335
    %v3337 = vunpack.c.l.b16 %v196
    %v3338 = vunpack.c.l.b16 %v197
    %v3339 = vunpack.c.l.b16 %v250
    %v3340 = vunpack.c.l.b16 %v251
    %v3341 = vpack.c.b16 %v3338, %v3337
    %v3342 = vpack.c.b16 %v3340, %v3339
    %v3345 = vunpack.c.l.b16 %v3282
    %v3346 = vunpack.c.l.b16 %v3292
    %v3347 = vunpack.c.l.b16 %v3306
    %v3348 = vunpack.c.l.b16 %v3316
    %v3349 = vpack.c.b16 %v3346, %v3345
    %v3350 = vpack.c.b16 %v3348, %v3347
    %v3353 = vunpack.c.l.b16 %v3326
    %v3354 = vunpack.c.l.b16 %v3329
    %v3355 = vunpack.c.l.b16 %v3333
    %v3356 = vunpack.c.l.b16 %v3336
    %v3357 = vpack.c.b16 %v3354, %v3353
    %v3358 = vpack.c.b16 %v3356, %v3355
    %v3409 = vunpack.c.l.b16 %v349
    %v3410 = vunpack.c.l.b16 %v350
    %v3411 = vunpack.c.l.b16 %v351
    %v3412 = vunpack.c.l.b16 %v352
    %v3413 = vunpack.c.l.b16 %v353
    %v3414 = vunpack.c.l.b16 %v354
    %v3415 = vunpack.c.l.b16 %v355
    %v3416 = vunpack.c.l.b16 %v356
    %v3417 = vunpack.c.l.b16 %v357
    %v3418 = vunpack.c.l.b16 %v358
    %v3419 = vunpack.c.l.b16 %v359
    %v3420 = vunpack.c.l.b16 %v360
    %v3421 = vunpack.c.l.b16 %v361
    %v3422 = vunpack.c.l.b16 %v362
    %v3423 = vunpack.c.l.b16 %v363
    %v3424 = vunpack.c.l.b16 %v364
    %v3425 = vunpack.c.l.b16 %v365
    %v3426 = vunpack.c.l.b16 %v366
    %v3427 = vunpack.c.l.b16 %v367
    %v3428 = vunpack.c.l.b16 %v368
    %v3429 = vunpack.c.l.b16 %v369
    %v3430 = vunpack.c.l.b16 %v370
    %v3431 = vunpack.c.l.b16 %v371
    %v3432 = vunpack.c.l.b16 %v372
    %v3433 = vunpack.c.l.b16 %v373
    %v3434 = vunpack.c.l.b16 %v374
    %v3435 = vunpack.c.l.b16 %v375
    %v3436 = vunpack.c.l.b16 %v376
    %v3437 = vunpack.c.l.b16 %v377
    %v3438 = vunpack.c.l.b16 %v378
    %v3439 = vunpack.c.l.b16 %v379
    %v3440 = vunpack.c.l.b16 %v380
    %v3441 = vunpack.c.l.b16 %v381
    %v3442 = vunpack.c.l.b16 %v382
    %v3443 = vunpack.c.l.b16 %v383
    %v3444 = vunpack.c.l.b16 %v384
    %v3445 = vunpack.c.l.b16 %v385
    %v3446 = vunpack.c.l.b16 %v386
    %v3447 = vunpack.c.l.b16 %v387
    %v3448 = vunpack.c.l.b16 %v388
    %v3449 = vunpack.c.l.b16 %v389
    %v3450 = vunpack.c.l.b16 %v390
    %v3451 = vunpack.c.l.b16 %v391
    %v3452 = vunpack.c.l.b16 %v392
    %v3453 = vunpack.c.l.b16 %v393
    %v3454 = vunpack.c.l.b16 %v394
    %v3455 = vunpack.c.l.b16 %v395
    %v3456 = vunpack.c.l.b16 %v396
    %v3457 = vpack.c.b16 %v3410, %v3409
    %v3458 = vpack.c.b16 %v3412, %v3411
    %v3459 = vpack.c.b16 %v3414, %v3413
    %v3460 = vpack.c.b16 %v3416, %v3415
    %v3461 = vpack.c.b16 %v3418, %v3417
    %v3462 = vpack.c.b16 %v3420, %v3419
    %v3463 = vpack.c.b16 %v3422, %v3421
    %v3464 = vpack.c.b16 %v3424, %v3423
    %v3465 = vpack.c.b16 %v3426, %v3425
    %v3466 = vpack.c.b16 %v3428, %v3427
    %v3467 = vpack.c.b16 %v3430, %v3429
    %v3468 = vpack.c.b16 %v3432, %v3431
    %v3469 = vpack.c.b16 %v3434, %v3433
    %v3470 = vpack.c.b16 %v3436, %v3435
    %v3471 = vpack.c.b16 %v3438, %v3437
    %v3472 = vpack.c.b16 %v3440, %v3439
    %v3473 = vpack.c.b16 %v3442, %v3441
    %v3474 = vpack.c.b16 %v3444, %v3443
    %v3475 = vpack.c.b16 %v3446, %v3445
    %v3476 = vpack.c.b16 %v3448, %v3447
    %v3477 = vpack.c.b16 %v3450, %v3449
    %v3478 = vpack.c.b16 %v3452, %v3451
    %v3479 = vpack.c.b16 %v3454, %v3453
    %v3480 = vpack.c.b16 %v3456, %v3455
    %3505 = vmatpush.bf16.msra.mxu0 %v3464
    %3506 = vmatpush.bf16.msra.mxu0 %v3463
    %3507 = vmatpush.bf16.msra.mxu0 %v3462
    %3508 = vmatpush.bf16.msra.mxu0 %v3461
    %3509 = vmatpush.bf16.msra.mxu0 %v3460
    %3510 = vmatpush.bf16.msra.mxu0 %v3459
    %3511 = vmatpush.bf16.msra.mxu0 %v3458
    %3512 = vmatpush.bf16.msra.mxu0 %v3457
    %3513 = vmatmul.bf16.gmra.mxu0 %v1557
    %v3514 = vpop.f32.mrf.mxu0
    %v3515 = vadd.f32 0.0, %v3514
    %v3516 = vpop.f32.mrf.mxu0
    %v3517 = vadd.f32 0.0, %v3516
    %3518 = vmatmul.bf16.gmra.mxu0 %v1558
    %v3519 = vpop.f32.mrf.mxu0
    %v3520 = vadd.f32 0.0, %v3519
    %v3521 = vpop.f32.mrf.mxu0
    %v3522 = vadd.f32 0.0, %v3521
    %3523 = vmatmul.bf16.gmra.mxu0 %v1559
    %v3524 = vpop.f32.mrf.mxu0
    %v3525 = vadd.f32 0.0, %v3524
    %v3526 = vpop.f32.mrf.mxu0
    %v3527 = vadd.f32 0.0, %v3526
    %3528 = vmatmul.bf16.gmra.mxu0 %v1560
    %v3529 = vpop.f32.mrf.mxu0
    %v3530 = vadd.f32 0.0, %v3529
    %v3531 = vpop.f32.mrf.mxu0
    %v3532 = vadd.f32 0.0, %v3531
    %3533 = vmatmul.bf16.gmra.mxu0 %v1561
    %v3534 = vpop.f32.mrf.mxu0
    %v3535 = vadd.f32 0.0, %v3534
    %v3536 = vpop.f32.mrf.mxu0
    %v3537 = vadd.f32 0.0, %v3536
    %3538 = vmatmul.bf16.gmra.mxu0 %v1562
    %v3539 = vpop.f32.mrf.mxu0
    %v3540 = vadd.f32 0.0, %v3539
    %v3541 = vpop.f32.mrf.mxu0
    %v3542 = vadd.f32 0.0, %v3541
    %3543 = vmatmul.bf16.gmra.mxu0 %v1563
    %v3544 = vpop.f32.mrf.mxu0
    %v3545 = vadd.f32 0.0, %v3544
    %v3546 = vpop.f32.mrf.mxu0
    %v3547 = vadd.f32 0.0, %v3546
    %3548 = vmatmul.bf16.gmra.mxu0 %v1564
    %v3549 = vpop.f32.mrf.mxu0
    %v3550 = vadd.f32 0.0, %v3549
    %v3551 = vpop.f32.mrf.mxu0
    %v3552 = vadd.f32 0.0, %v3551
    %3553 = vmatmul.bf16.gmra.mxu0 %v1565
    %v3554 = vpop.f32.mrf.mxu0
    %v3555 = vadd.f32 0.0, %v3554
    %v3556 = vpop.f32.mrf.mxu0
    %v3557 = vadd.f32 0.0, %v3556
    %3558 = vmatmul.bf16.gmra.mxu0 %v1566
    %v3559 = vpop.f32.mrf.mxu0
    %v3560 = vadd.f32 0.0, %v3559
    %v3561 = vpop.f32.mrf.mxu0
    %v3562 = vadd.f32 0.0, %v3561
    %3563 = vmatmul.bf16.gmra.mxu0 %v1567
    %v3564 = vpop.f32.mrf.mxu0
    %v3565 = vadd.f32 0.0, %v3564
    %v3566 = vpop.f32.mrf.mxu0
    %v3567 = vadd.f32 0.0, %v3566
    %3568 = vmatmul.bf16.gmra.mxu0 %v1568
    %v3569 = vpop.f32.mrf.mxu0
    %v3570 = vadd.f32 0.0, %v3569
    %v3571 = vpop.f32.mrf.mxu0
    %v3572 = vadd.f32 0.0, %v3571
    %3573 = vmatmul.bf16.gmra.mxu0 %v1569
    %v3574 = vpop.f32.mrf.mxu0
    %v3575 = vadd.f32 0.0, %v3574
    %v3576 = vpop.f32.mrf.mxu0
    %v3577 = vadd.f32 0.0, %v3576
    %3578 = vmatmul.bf16.gmra.mxu0 %v1570
    %v3579 = vpop.f32.mrf.mxu0
    %v3580 = vadd.f32 0.0, %v3579
    %v3581 = vpop.f32.mrf.mxu0
    %v3582 = vadd.f32 0.0, %v3581
    %3583 = vmatmul.bf16.gmra.mxu0 %v1947
    %v3584 = vpop.f32.mrf.mxu0
    %v3585 = vadd.f32 0.0, %v3584
    %v3586 = vpop.f32.mrf.mxu0
    %v3587 = vadd.f32 0.0, %v3586
    %3588 = vmatmul.bf16.gmra.mxu0 %v3341
    %v3589 = vpop.f32.mrf.mxu0
    %v3590 = vadd.f32 0.0, %v3589
    %v3591 = vpop.f32.mrf.mxu0
    %v3592 = vadd.f32 0.0, %v3591
    %3593 = vmatmul.bf16.gmra.mxu0 %v1573
    %v3594 = vpop.f32.mrf.mxu0
    %v3595 = vadd.f32 0.0, %v3594
    %v3596 = vpop.f32.mrf.mxu0
    %v3597 = vadd.f32 0.0, %v3596
    %3598 = vmatmul.bf16.gmra.mxu0 %v1574
    %v3599 = vpop.f32.mrf.mxu0
    %v3600 = vadd.f32 0.0, %v3599
    %v3601 = vpop.f32.mrf.mxu0
    %v3602 = vadd.f32 0.0, %v3601
    %3603 = vmatmul.bf16.gmra.mxu0 %v1575
    %v3604 = vpop.f32.mrf.mxu0
    %v3605 = vadd.f32 0.0, %v3604
    %v3606 = vpop.f32.mrf.mxu0
    %v3607 = vadd.f32 0.0, %v3606
    %3608 = vmatmul.bf16.gmra.mxu0 %v1576
    %v3609 = vpop.f32.mrf.mxu0
    %v3610 = vadd.f32 0.0, %v3609
    %v3611 = vpop.f32.mrf.mxu0
    %v3612 = vadd.f32 0.0, %v3611
    %3613 = vmatmul.bf16.gmra.mxu0 %v1577
    %v3614 = vpop.f32.mrf.mxu0
    %v3615 = vadd.f32 0.0, %v3614
    %v3616 = vpop.f32.mrf.mxu0
    %v3617 = vadd.f32 0.0, %v3616
    %3618 = vmatmul.bf16.gmra.mxu0 %v1578
    %v3619 = vpop.f32.mrf.mxu0
    %v3620 = vadd.f32 0.0, %v3619
    %v3621 = vpop.f32.mrf.mxu0
    %v3622 = vadd.f32 0.0, %v3621
    %3623 = vmatmul.bf16.gmra.mxu0 %v1579
    %v3624 = vpop.f32.mrf.mxu0
    %v3625 = vadd.f32 0.0, %v3624
    %v3626 = vpop.f32.mrf.mxu0
    %v3627 = vadd.f32 0.0, %v3626
    %3628 = vmatmul.bf16.gmra.mxu0 %v1580
    %v3629 = vpop.f32.mrf.mxu0
    %v3630 = vadd.f32 0.0, %v3629
    %v3631 = vpop.f32.mrf.mxu0
    %v3632 = vadd.f32 0.0, %v3631
    %3633 = vmatmul.bf16.gmra.mxu0 %v1581
    %v3634 = vpop.f32.mrf.mxu0
    %v3635 = vadd.f32 0.0, %v3634
    %v3636 = vpop.f32.mrf.mxu0
    %v3637 = vadd.f32 0.0, %v3636
    %3638 = vmatmul.bf16.gmra.mxu0 %v1582
    %v3639 = vpop.f32.mrf.mxu0
    %v3640 = vadd.f32 0.0, %v3639
    %v3641 = vpop.f32.mrf.mxu0
    %v3642 = vadd.f32 0.0, %v3641
    %3643 = vmatmul.bf16.gmra.mxu0 %v1583
    %v3644 = vpop.f32.mrf.mxu0
    %v3645 = vadd.f32 0.0, %v3644
    %v3646 = vpop.f32.mrf.mxu0
    %v3647 = vadd.f32 0.0, %v3646
    %3648 = vmatmul.bf16.gmra.mxu0 %v1584
    %v3649 = vpop.f32.mrf.mxu0
    %v3650 = vadd.f32 0.0, %v3649
    %v3651 = vpop.f32.mrf.mxu0
    %v3652 = vadd.f32 0.0, %v3651
    %3653 = vmatmul.bf16.gmra.mxu0 %v1585
    %v3654 = vpop.f32.mrf.mxu0
    %v3655 = vadd.f32 0.0, %v3654
    %v3656 = vpop.f32.mrf.mxu0
    %v3657 = vadd.f32 0.0, %v3656
    %3658 = vmatmul.bf16.gmra.mxu0 %v1586
    %v3659 = vpop.f32.mrf.mxu0
    %v3660 = vadd.f32 0.0, %v3659
    %v3661 = vpop.f32.mrf.mxu0
    %v3662 = vadd.f32 0.0, %v3661
    %3663 = vmatmul.bf16.gmra.mxu0 %v1948
    %v3664 = vpop.f32.mrf.mxu0
    %v3665 = vadd.f32 0.0, %v3664
    %v3666 = vpop.f32.mrf.mxu0
    %v3667 = vadd.f32 0.0, %v3666
    %3668 = vmatmul.bf16.gmra.mxu0 %v3342
    %v3669 = vpop.f32.mrf.mxu0
    %v3670 = vadd.f32 0.0, %v3669
    %v3671 = vpop.f32.mrf.mxu0
    %v3672 = vadd.f32 0.0, %v3671
    %3673 = vdwg.mxu0
    %3674 = vmatpush.bf16.msra.mxu0 %v3472
    %3675 = vmatpush.bf16.msra.mxu0 %v3471
    %3676 = vmatpush.bf16.msra.mxu0 %v3470
    %3677 = vmatpush.bf16.msra.mxu0 %v3469
    %3678 = vmatpush.bf16.msra.mxu0 %v3468
    %3679 = vmatpush.bf16.msra.mxu0 %v3467
    %3680 = vmatpush.bf16.msra.mxu0 %v3466
    %3681 = vmatpush.bf16.msra.mxu0 %v3465
    %3682 = vmatmul.bf16.gmra.mxu0 %v1685
    %v3683 = vpop.f32.mrf.mxu0
    %v3684 = vadd.f32 %v3515, %v3683
    %v3685 = vpop.f32.mrf.mxu0
    %v3686 = vadd.f32 %v3517, %v3685
    %3687 = vmatmul.bf16.gmra.mxu0 %v1686
    %v3688 = vpop.f32.mrf.mxu0
    %v3689 = vadd.f32 %v3520, %v3688
    %v3690 = vpop.f32.mrf.mxu0
    %v3691 = vadd.f32 %v3522, %v3690
    %3692 = vmatmul.bf16.gmra.mxu0 %v1687
    %v3693 = vpop.f32.mrf.mxu0
    %v3694 = vadd.f32 %v3525, %v3693
    %v3695 = vpop.f32.mrf.mxu0
    %v3696 = vadd.f32 %v3527, %v3695
    %3697 = vmatmul.bf16.gmra.mxu0 %v1688
    %v3698 = vpop.f32.mrf.mxu0
    %v3699 = vadd.f32 %v3530, %v3698
    %v3700 = vpop.f32.mrf.mxu0
    %v3701 = vadd.f32 %v3532, %v3700
    %3702 = vmatmul.bf16.gmra.mxu0 %v1689
    %v3703 = vpop.f32.mrf.mxu0
    %v3704 = vadd.f32 %v3535, %v3703
    %v3705 = vpop.f32.mrf.mxu0
    %v3706 = vadd.f32 %v3537, %v3705
    %3707 = vmatmul.bf16.gmra.mxu0 %v1690
    %v3708 = vpop.f32.mrf.mxu0
    %v3709 = vadd.f32 %v3540, %v3708
    %v3710 = vpop.f32.mrf.mxu0
    %v3711 = vadd.f32 %v3542, %v3710
    %3712 = vmatmul.bf16.gmra.mxu0 %v1691
    %v3713 = vpop.f32.mrf.mxu0
    %v3714 = vadd.f32 %v3545, %v3713
    %v3715 = vpop.f32.mrf.mxu0
    %v3716 = vadd.f32 %v3547, %v3715
    %3717 = vmatmul.bf16.gmra.mxu0 %v1692
    %v3718 = vpop.f32.mrf.mxu0
    %v3719 = vadd.f32 %v3550, %v3718
    %v3720 = vpop.f32.mrf.mxu0
    %v3721 = vadd.f32 %v3552, %v3720
    %3722 = vmatmul.bf16.gmra.mxu0 %v1693
    %v3723 = vpop.f32.mrf.mxu0
    %v3724 = vadd.f32 %v3555, %v3723
    %v3725 = vpop.f32.mrf.mxu0
    %v3726 = vadd.f32 %v3557, %v3725
    %3727 = vmatmul.bf16.gmra.mxu0 %v1694
    %v3728 = vpop.f32.mrf.mxu0
    %v3729 = vadd.f32 %v3560, %v3728
    %v3730 = vpop.f32.mrf.mxu0
    %v3731 = vadd.f32 %v3562, %v3730
    %3732 = vmatmul.bf16.gmra.mxu0 %v1695
    %v3733 = vpop.f32.mrf.mxu0
    %v3734 = vadd.f32 %v3565, %v3733
    %v3735 = vpop.f32.mrf.mxu0
    %v3736 = vadd.f32 %v3567, %v3735
    %3737 = vmatmul.bf16.gmra.mxu0 %v1696
    %v3738 = vpop.f32.mrf.mxu0
    %v3739 = vadd.f32 %v3570, %v3738
    %v3740 = vpop.f32.mrf.mxu0
    %v3741 = vadd.f32 %v3572, %v3740
    %3742 = vmatmul.bf16.gmra.mxu0 %v1697
    %v3743 = vpop.f32.mrf.mxu0
    %v3744 = vadd.f32 %v3575, %v3743
    %v3745 = vpop.f32.mrf.mxu0
    %v3746 = vadd.f32 %v3577, %v3745
    %3747 = vmatmul.bf16.gmra.mxu0 %v1698
    %v3748 = vpop.f32.mrf.mxu0
    %v3749 = vadd.f32 %v3580, %v3748
    %v3750 = vpop.f32.mrf.mxu0
    %v3751 = vadd.f32 %v3582, %v3750
    %3752 = vmatmul.bf16.gmra.mxu0 %v1955
    %v3753 = vpop.f32.mrf.mxu0
    %v3754 = vadd.f32 %v3585, %v3753
    %v3755 = vpop.f32.mrf.mxu0
    %v3756 = vadd.f32 %v3587, %v3755
    %3757 = vmatmul.bf16.gmra.mxu0 %v3349
    %v3758 = vpop.f32.mrf.mxu0
    %v3759 = vadd.f32 %v3590, %v3758
    %v3760 = vpop.f32.mrf.mxu0
    %v3761 = vadd.f32 %v3592, %v3760
    %3762 = vmatmul.bf16.gmra.mxu0 %v1701
    %v3763 = vpop.f32.mrf.mxu0
    %v3764 = vadd.f32 %v3595, %v3763
    %v3765 = vpop.f32.mrf.mxu0
    %v3766 = vadd.f32 %v3597, %v3765
    %3767 = vmatmul.bf16.gmra.mxu0 %v1702
    %v3768 = vpop.f32.mrf.mxu0
    %v3769 = vadd.f32 %v3600, %v3768
    %v3770 = vpop.f32.mrf.mxu0
    %v3771 = vadd.f32 %v3602, %v3770
    %3772 = vmatmul.bf16.gmra.mxu0 %v1703
    %v3773 = vpop.f32.mrf.mxu0
    %v3774 = vadd.f32 %v3605, %v3773
    %v3775 = vpop.f32.mrf.mxu0
    %v3776 = vadd.f32 %v3607, %v3775
    %3777 = vmatmul.bf16.gmra.mxu0 %v1704
    %v3778 = vpop.f32.mrf.mxu0
    %v3779 = vadd.f32 %v3610, %v3778
    %v3780 = vpop.f32.mrf.mxu0
    %v3781 = vadd.f32 %v3612, %v3780
    %3782 = vmatmul.bf16.gmra.mxu0 %v1705
    %v3783 = vpop.f32.mrf.mxu0
    %v3784 = vadd.f32 %v3615, %v3783
    %v3785 = vpop.f32.mrf.mxu0
    %v3786 = vadd.f32 %v3617, %v3785
    %3787 = vmatmul.bf16.gmra.mxu0 %v1706
    %v3788 = vpop.f32.mrf.mxu0
    %v3789 = vadd.f32 %v3620, %v3788
    %v3790 = vpop.f32.mrf.mxu0
    %v3791 = vadd.f32 %v3622, %v3790
    %3792 = vmatmul.bf16.gmra.mxu0 %v1707
    %v3793 = vpop.f32.mrf.mxu0
    %v3794 = vadd.f32 %v3625, %v3793
    %v3795 = vpop.f32.mrf.mxu0
    %v3796 = vadd.f32 %v3627, %v3795
    %3797 = vmatmul.bf16.gmra.mxu0 %v1708
    %v3798 = vpop.f32.mrf.mxu0
    %v3799 = vadd.f32 %v3630, %v3798
    %v3800 = vpop.f32.mrf.mxu0
    %v3801 = vadd.f32 %v3632, %v3800
    %3802 = vmatmul.bf16.gmra.mxu0 %v1709
    %v3803 = vpop.f32.mrf.mxu0
    %v3804 = vadd.f32 %v3635, %v3803
    %v3805 = vpop.f32.mrf.mxu0
    %v3806 = vadd.f32 %v3637, %v3805
    %3807 = vmatmul.bf16.gmra.mxu0 %v1710
    %v3808 = vpop.f32.mrf.mxu0
    %v3809 = vadd.f32 %v3640, %v3808
    %v3810 = vpop.f32.mrf.mxu0
    %v3811 = vadd.f32 %v3642, %v3810
    %3812 = vmatmul.bf16.gmra.mxu0 %v1711
    %v3813 = vpop.f32.mrf.mxu0
    %v3814 = vadd.f32 %v3645, %v3813
    %v3815 = vpop.f32.mrf.mxu0
    %v3816 = vadd.f32 %v3647, %v3815
    %3817 = vmatmul.bf16.gmra.mxu0 %v1712
    %v3818 = vpop.f32.mrf.mxu0
    %v3819 = vadd.f32 %v3650, %v3818
    %v3820 = vpop.f32.mrf.mxu0
    %v3821 = vadd.f32 %v3652, %v3820
    %3822 = vmatmul.bf16.gmra.mxu0 %v1713
    %v3823 = vpop.f32.mrf.mxu0
    %v3824 = vadd.f32 %v3655, %v3823
    %v3825 = vpop.f32.mrf.mxu0
    %v3826 = vadd.f32 %v3657, %v3825
    %3827 = vmatmul.bf16.gmra.mxu0 %v1714
    %v3828 = vpop.f32.mrf.mxu0
    %v3829 = vadd.f32 %v3660, %v3828
    %v3830 = vpop.f32.mrf.mxu0
    %v3831 = vadd.f32 %v3662, %v3830
    %3832 = vmatmul.bf16.gmra.mxu0 %v1956
    %v3833 = vpop.f32.mrf.mxu0
    %v3834 = vadd.f32 %v3665, %v3833
    %v3835 = vpop.f32.mrf.mxu0
    %v3836 = vadd.f32 %v3667, %v3835
    %3837 = vmatmul.bf16.gmra.mxu0 %v3350
    %v3838 = vpop.f32.mrf.mxu0
    %v3839 = vadd.f32 %v3670, %v3838
    %v3840 = vpop.f32.mrf.mxu0
    %v3841 = vadd.f32 %v3672, %v3840
    %3842 = vdwg.mxu0
    %3843 = vmatpush.bf16.msra.mxu0 %v3480
    %3844 = vmatpush.bf16.msra.mxu0 %v3479
    %3845 = vmatpush.bf16.msra.mxu0 %v3478
    %3846 = vmatpush.bf16.msra.mxu0 %v3477
    %3847 = vmatpush.bf16.msra.mxu0 %v3476
    %3848 = vmatpush.bf16.msra.mxu0 %v3475
    %3849 = vmatpush.bf16.msra.mxu0 %v3474
    %3850 = vmatpush.bf16.msra.mxu0 %v3473
    %3851 = vmatmul.bf16.gmra.mxu0 %v1813
    %v3852 = vpop.f32.mrf.mxu0
    %v3853 = vadd.f32 %v3684, %v3852
    %v3854 = vpop.f32.mrf.mxu0
    %v3855 = vadd.f32 %v3686, %v3854
    %3856 = vmatmul.bf16.gmra.mxu0 %v1814
    %v3857 = vpop.f32.mrf.mxu0
    %v3858 = vadd.f32 %v3689, %v3857
    %v3859 = vpop.f32.mrf.mxu0
    %v3860 = vadd.f32 %v3691, %v3859
    %3861 = vmatmul.bf16.gmra.mxu0 %v1815
    %v3862 = vpop.f32.mrf.mxu0
    %v3863 = vadd.f32 %v3694, %v3862
    %v3864 = vpop.f32.mrf.mxu0
    %v3865 = vadd.f32 %v3696, %v3864
    %3866 = vmatmul.bf16.gmra.mxu0 %v1816
    %v3867 = vpop.f32.mrf.mxu0
    %v3868 = vadd.f32 %v3699, %v3867
    %v3869 = vpop.f32.mrf.mxu0
    %v3870 = vadd.f32 %v3701, %v3869
    %3871 = vmatmul.bf16.gmra.mxu0 %v1817
    %v3872 = vpop.f32.mrf.mxu0
    %v3873 = vadd.f32 %v3704, %v3872
    %v3874 = vpop.f32.mrf.mxu0
    %v3875 = vadd.f32 %v3706, %v3874
    %3876 = vmatmul.bf16.gmra.mxu0 %v1818
    %v3877 = vpop.f32.mrf.mxu0
    %v3878 = vadd.f32 %v3709, %v3877
    %v3879 = vpop.f32.mrf.mxu0
    %v3880 = vadd.f32 %v3711, %v3879
    %3881 = vmatmul.bf16.gmra.mxu0 %v1819
    %v3882 = vpop.f32.mrf.mxu0
    %v3883 = vadd.f32 %v3714, %v3882
    %v3884 = vpop.f32.mrf.mxu0
    %v3885 = vadd.f32 %v3716, %v3884
    %3886 = vmatmul.bf16.gmra.mxu0 %v1820
    %v3887 = vpop.f32.mrf.mxu0
    %v3888 = vadd.f32 %v3719, %v3887
    %v3889 = vpop.f32.mrf.mxu0
    %v3890 = vadd.f32 %v3721, %v3889
    %3891 = vmatmul.bf16.gmra.mxu0 %v1821
    %v3892 = vpop.f32.mrf.mxu0
    %v3893 = vadd.f32 %v3724, %v3892
    %v3894 = vpop.f32.mrf.mxu0
    %v3895 = vadd.f32 %v3726, %v3894
    %3896 = vmatmul.bf16.gmra.mxu0 %v1822
    %v3897 = vpop.f32.mrf.mxu0
    %v3898 = vadd.f32 %v3729, %v3897
    %v3899 = vpop.f32.mrf.mxu0
    %v3900 = vadd.f32 %v3731, %v3899
    %3901 = vmatmul.bf16.gmra.mxu0 %v1823
    %v3902 = vpop.f32.mrf.mxu0
    %v3903 = vadd.f32 %v3734, %v3902
    %v3904 = vpop.f32.mrf.mxu0
    %v3905 = vadd.f32 %v3736, %v3904
    %3906 = vmatmul.bf16.gmra.mxu0 %v1824
    %v3907 = vpop.f32.mrf.mxu0
    %v3908 = vadd.f32 %v3739, %v3907
    %v3909 = vpop.f32.mrf.mxu0
    %v3910 = vadd.f32 %v3741, %v3909
    %3911 = vmatmul.bf16.gmra.mxu0 %v1825
    %v3912 = vpop.f32.mrf.mxu0
    %v3913 = vadd.f32 %v3744, %v3912
    %v3914 = vpop.f32.mrf.mxu0
    %v3915 = vadd.f32 %v3746, %v3914
    %3916 = vmatmul.bf16.gmra.mxu0 %v1826
    %v3917 = vpop.f32.mrf.mxu0
    %v3918 = vadd.f32 %v3749, %v3917
    %v3919 = vpop.f32.mrf.mxu0
    %v3920 = vadd.f32 %v3751, %v3919
    %3921 = vmatmul.bf16.gmra.mxu0 %v1963
    %v3922 = vpop.f32.mrf.mxu0
    %v3923 = vadd.f32 %v3754, %v3922
    %v3924 = vpop.f32.mrf.mxu0
    %v3925 = vadd.f32 %v3756, %v3924
    %3926 = vmatmul.bf16.gmra.mxu0 %v3357
    %v3927 = vpop.f32.mrf.mxu0
    %v3928 = vadd.f32 %v3759, %v3927
    %v3929 = vpop.f32.mrf.mxu0
    %v3930 = vadd.f32 %v3761, %v3929
    %3931 = vmatmul.bf16.gmra.mxu0 %v1829
    %v3932 = vpop.f32.mrf.mxu0
    %v3933 = vadd.f32 %v3764, %v3932
    %v3934 = vpop.f32.mrf.mxu0
    %v3935 = vadd.f32 %v3766, %v3934
    %3936 = vmatmul.bf16.gmra.mxu0 %v1830
    %v3937 = vpop.f32.mrf.mxu0
    %v3938 = vadd.f32 %v3769, %v3937
    %v3939 = vpop.f32.mrf.mxu0
    %v3940 = vadd.f32 %v3771, %v3939
    %3941 = vmatmul.bf16.gmra.mxu0 %v1831
    %v3942 = vpop.f32.mrf.mxu0
    %v3943 = vadd.f32 %v3774, %v3942
    %v3944 = vpop.f32.mrf.mxu0
    %v3945 = vadd.f32 %v3776, %v3944
    %3946 = vmatmul.bf16.gmra.mxu0 %v1832
    %v3947 = vpop.f32.mrf.mxu0
    %v3948 = vadd.f32 %v3779, %v3947
    %v3949 = vpop.f32.mrf.mxu0
    %v3950 = vadd.f32 %v3781, %v3949
    %3951 = vmatmul.bf16.gmra.mxu0 %v1833
    %v3952 = vpop.f32.mrf.mxu0
    %v3953 = vadd.f32 %v3784, %v3952
    %v3954 = vpop.f32.mrf.mxu0
    %v3955 = vadd.f32 %v3786, %v3954
    %3956 = vmatmul.bf16.gmra.mxu0 %v1834
    %v3957 = vpop.f32.mrf.mxu0
    %v3958 = vadd.f32 %v3789, %v3957
    %v3959 = vpop.f32.mrf.mxu0
    %v3960 = vadd.f32 %v3791, %v3959
    %3961 = vmatmul.bf16.gmra.mxu0 %v1835
    %v3962 = vpop.f32.mrf.mxu0
    %v3963 = vadd.f32 %v3794, %v3962
    %v3964 = vpop.f32.mrf.mxu0
    %v3965 = vadd.f32 %v3796, %v3964
    %3966 = vmatmul.bf16.gmra.mxu0 %v1836
    %v3967 = vpop.f32.mrf.mxu0
    %v3968 = vadd.f32 %v3799, %v3967
    %v3969 = vpop.f32.mrf.mxu0
    %v3970 = vadd.f32 %v3801, %v3969
    %3971 = vmatmul.bf16.gmra.mxu0 %v1837
    %v3972 = vpop.f32.mrf.mxu0
    %v3973 = vadd.f32 %v3804, %v3972
    %v3974 = vpop.f32.mrf.mxu0
    %v3975 = vadd.f32 %v3806, %v3974
    %3976 = vmatmul.bf16.gmra.mxu0 %v1838
    %v3977 = vpop.f32.mrf.mxu0
    %v3978 = vadd.f32 %v3809, %v3977
    %v3979 = vpop.f32.mrf.mxu0
    %v3980 = vadd.f32 %v3811, %v3979
    %3981 = vmatmul.bf16.gmra.mxu0 %v1839
    %v3982 = vpop.f32.mrf.mxu0
    %v3983 = vadd.f32 %v3814, %v3982
    %v3984 = vpop.f32.mrf.mxu0
    %v3985 = vadd.f32 %v3816, %v3984
    %3986 = vmatmul.bf16.gmra.mxu0 %v1840
    %v3987 = vpop.f32.mrf.mxu0
    %v3988 = vadd.f32 %v3819, %v3987
    %v3989 = vpop.f32.mrf.mxu0
    %v3990 = vadd.f32 %v3821, %v3989
    %3991 = vmatmul.bf16.gmra.mxu0 %v1841
    %v3992 = vpop.f32.mrf.mxu0
    %v3993 = vadd.f32 %v3824, %v3992
    %v3994 = vpop.f32.mrf.mxu0
    %v3995 = vadd.f32 %v3826, %v3994
    %3996 = vmatmul.bf16.gmra.mxu0 %v1842
    %v3997 = vpop.f32.mrf.mxu0
    %v3998 = vadd.f32 %v3829, %v3997
    %v3999 = vpop.f32.mrf.mxu0
    %v4000 = vadd.f32 %v3831, %v3999
    %4001 = vmatmul.bf16.gmra.mxu0 %v1964
    %v4002 = vpop.f32.mrf.mxu0
    %v4003 = vadd.f32 %v3834, %v4002
    %v4004 = vpop.f32.mrf.mxu0
    %v4005 = vadd.f32 %v3836, %v4004
    %4006 = vmatmul.bf16.gmra.mxu0 %v3358
    %v4007 = vpop.f32.mrf.mxu0
    %v4008 = vadd.f32 %v3839, %v4007
    %v4009 = vpop.f32.mrf.mxu0
    %v4010 = vadd.f32 %v3841, %v4009
    %4011 = vdwg.mxu0
    %v4012 = vadd.f32 %v3110, %v3853
    %v4013 = vadd.f32 %v3112, %v3855
    %v4014 = vadd.f32 %v3115, %v3858
    %v4015 = vadd.f32 %v3117, %v3860
    %v4016 = vadd.f32 %v3120, %v3863
    %v4017 = vadd.f32 %v3122, %v3865
    %v4018 = vadd.f32 %v3125, %v3868
    %v4019 = vadd.f32 %v3127, %v3870
    %v4020 = vadd.f32 %v3130, %v3873
    %v4021 = vadd.f32 %v3132, %v3875
    %v4022 = vadd.f32 %v3135, %v3878
    %v4023 = vadd.f32 %v3137, %v3880
    %v4024 = vadd.f32 %v3140, %v3883
    %v4025 = vadd.f32 %v3142, %v3885
    %v4026 = vadd.f32 %v3145, %v3888
    %v4027 = vadd.f32 %v3147, %v3890
    %v4028 = vadd.f32 %v3150, %v3893
    %v4029 = vadd.f32 %v3152, %v3895
    %v4030 = vadd.f32 %v3155, %v3898
    %v4031 = vadd.f32 %v3157, %v3900
    %v4032 = vadd.f32 %v3160, %v3903
    %v4033 = vadd.f32 %v3162, %v3905
    %v4034 = vadd.f32 %v3165, %v3908
    %v4035 = vadd.f32 %v3167, %v3910
    %v4036 = vadd.f32 %v3170, %v3913
    %v4037 = vadd.f32 %v3172, %v3915
    %v4038 = vadd.f32 %v3175, %v3918
    %v4039 = vadd.f32 %v3177, %v3920
    %v4040 = vadd.f32 %v3180, %v3923
    %v4041 = vadd.f32 %v3182, %v3925
    %v4042 = vadd.f32 %v3185, %v3928
    %v4043 = vadd.f32 %v3187, %v3930
    %v4044 = vadd.f32 %v3190, %v3933
    %v4045 = vadd.f32 %v3192, %v3935
    %v4046 = vadd.f32 %v3195, %v3938
    %v4047 = vadd.f32 %v3197, %v3940
    %v4048 = vadd.f32 %v3200, %v3943
    %v4049 = vadd.f32 %v3202, %v3945
    %v4050 = vadd.f32 %v3205, %v3948
    %v4051 = vadd.f32 %v3207, %v3950
    %v4052 = vadd.f32 %v3210, %v3953
    %v4053 = vadd.f32 %v3212, %v3955
    %v4054 = vadd.f32 %v3215, %v3958
    %v4055 = vadd.f32 %v3217, %v3960
    %v4056 = vadd.f32 %v3220, %v3963
    %v4057 = vadd.f32 %v3222, %v3965
    %v4058 = vadd.f32 %v3225, %v3968
    %v4059 = vadd.f32 %v3227, %v3970
    %v4060 = vadd.f32 %v3230, %v3973
    %v4061 = vadd.f32 %v3232, %v3975
    %v4062 = vadd.f32 %v3235, %v3978
    %v4063 = vadd.f32 %v3237, %v3980
    %v4064 = vadd.f32 %v3240, %v3983
    %v4065 = vadd.f32 %v3242, %v3985
    %v4066 = vadd.f32 %v3245, %v3988
    %v4067 = vadd.f32 %v3247, %v3990
    %v4068 = vadd.f32 %v3250, %v3993
    %v4069 = vadd.f32 %v3252, %v3995
    %v4070 = vadd.f32 %v3255, %v3998
    %v4071 = vadd.f32 %v3257, %v4000
    %v4072 = vadd.f32 %v3260, %v4003
    %v4073 = vadd.f32 %v3262, %v4005
    %v4074 = vadd.f32 %v3265, %v4008
    %v4075 = vadd.f32 %v3267, %v4010
    %v4076 = vld [vmem:[%s4] sm:$0x1]
    %v4077 = vld [vmem:[%s5] sm:$0x1]
    %v4078 = vadd.f32 %v4012, %v4013
    %v4079 = vadd.f32 %v4078, %v4014
    %v4080 = vadd.f32 %v4079, %v4015
    %v4081 = vadd.f32 %v4080, %v4016
    %v4082 = vadd.f32 %v4081, %v4017
    %v4083 = vadd.f32 %v4082, %v4018
    %v4084 = vadd.f32 %v4083, %v4019
    %v4085 = vadd.f32 %v4084, %v4020
    %v4086 = vadd.f32 %v4085, %v4021
    %v4087 = vadd.f32 %v4086, %v4022
    %v4088 = vadd.f32 %v4087, %v4023
    %v4089 = vadd.f32 %v4088, %v4024
    %v4090 = vadd.f32 %v4089, %v4025
    %v4091 = vadd.f32 %v4090, %v4026
    %v4092 = vadd.f32 %v4091, %v4027
    %v4093 = vadd.f32 %v4092, %v4028
    %v4094 = vadd.f32 %v4093, %v4029
    %v4095 = vadd.f32 %v4094, %v4030
    %v4096 = vadd.f32 %v4095, %v4031
    %v4097 = vadd.f32 %v4096, %v4032
    %v4098 = vadd.f32 %v4097, %v4033
    %v4099 = vadd.f32 %v4098, %v4034
    %v4100 = vadd.f32 %v4099, %v4035
    %v4101 = vadd.f32 %v4100, %v4036
    %v4102 = vadd.f32 %v4101, %v4037
    %v4103 = vadd.f32 %v4102, %v4038
    %v4104 = vadd.f32 %v4103, %v4039
    %v4105 = vadd.f32 %v4104, %v4040
    %v4106 = vadd.f32 %v4105, %v4041
    %v4107 = vadd.f32 %v4106, %v4042
    %v4108 = vadd.f32 %v4107, %v4043
    %v4109 = vadd.f32 %v4108, %v4044
    %v4110 = vadd.f32 %v4109, %v4045
    %v4111 = vadd.f32 %v4110, %v4046
    %v4112 = vadd.f32 %v4111, %v4047
    %v4113 = vadd.f32 %v4112, %v4048
    %v4114 = vadd.f32 %v4113, %v4049
    %v4115 = vadd.f32 %v4114, %v4050
    %v4116 = vadd.f32 %v4115, %v4051
    %v4117 = vadd.f32 %v4116, %v4052
    %v4118 = vadd.f32 %v4117, %v4053
    %v4119 = vadd.f32 %v4118, %v4054
    %v4120 = vadd.f32 %v4119, %v4055
    %v4121 = vadd.f32 %v4120, %v4056
    %v4122 = vadd.f32 %v4121, %v4057
    %v4123 = vadd.f32 %v4122, %v4058
    %v4124 = vadd.f32 %v4123, %v4059
    %v4125 = vadd.f32 %v4124, %v4060
    %v4126 = vadd.f32 %v4125, %v4061
    %v4127 = vadd.f32 %v4126, %v4062
    %v4128 = vadd.f32 %v4127, %v4063
    %v4129 = vadd.f32 %v4128, %v4064
    %v4130 = vadd.f32 %v4129, %v4065
    %v4131 = vadd.f32 %v4130, %v4066
    %v4132 = vadd.f32 %v4131, %v4067
    %v4133 = vadd.f32 %v4132, %v4068
    %v4134 = vadd.f32 %v4133, %v4069
    %v4135 = vadd.f32 %v4134, %v4070
    %v4136 = vadd.f32 %v4135, %v4071
    %v4137 = vadd.f32 %v4136, %v4072
    %v4138 = vadd.f32 %v4137, %v4073
    %v4139 = vadd.f32 %v4138, %v4074
    %v4140 = vadd.f32 %v4139, %v4075
    %v4141 = vrot.slane %v4140, 4
    %v4142 = vadd.f32 %v4140, %v4141
    %v4143 = vrot.slane %v4142, 2
    %v4144 = vadd.f32 %v4142, %v4143
    %v4145 = vrot.slane %v4144, 1
    %v4146 = vadd.f32 %v4144, %v4145
    %v4147 = vmul.f32 %v4146, 0.001953125
    %v4148 = vmul.f32 %v4012, %v4012
    %v4149 = vmul.f32 %v4013, %v4013
    %v4150 = vmul.f32 %v4014, %v4014
    %v4151 = vmul.f32 %v4015, %v4015
    %v4152 = vmul.f32 %v4016, %v4016
    %v4153 = vmul.f32 %v4017, %v4017
    %v4154 = vmul.f32 %v4018, %v4018
    %v4155 = vmul.f32 %v4019, %v4019
    %v4156 = vmul.f32 %v4020, %v4020
    %v4157 = vmul.f32 %v4021, %v4021
    %v4158 = vmul.f32 %v4022, %v4022
    %v4159 = vmul.f32 %v4023, %v4023
    %v4160 = vmul.f32 %v4024, %v4024
    %v4161 = vmul.f32 %v4025, %v4025
    %v4162 = vmul.f32 %v4026, %v4026
    %v4163 = vmul.f32 %v4027, %v4027
    %v4164 = vmul.f32 %v4028, %v4028
    %v4165 = vmul.f32 %v4029, %v4029
    %v4166 = vmul.f32 %v4030, %v4030
    %v4167 = vmul.f32 %v4031, %v4031
    %v4168 = vmul.f32 %v4032, %v4032
    %v4169 = vmul.f32 %v4033, %v4033
    %v4170 = vmul.f32 %v4034, %v4034
    %v4171 = vmul.f32 %v4035, %v4035
    %v4172 = vmul.f32 %v4036, %v4036
    %v4173 = vmul.f32 %v4037, %v4037
    %v4174 = vmul.f32 %v4038, %v4038
    %v4175 = vmul.f32 %v4039, %v4039
    %v4176 = vmul.f32 %v4040, %v4040
    %v4177 = vmul.f32 %v4041, %v4041
    %v4178 = vmul.f32 %v4042, %v4042
    %v4179 = vmul.f32 %v4043, %v4043
    %v4180 = vmul.f32 %v4044, %v4044
    %v4181 = vmul.f32 %v4045, %v4045
    %v4182 = vmul.f32 %v4046, %v4046
    %v4183 = vmul.f32 %v4047, %v4047
    %v4184 = vmul.f32 %v4048, %v4048
    %v4185 = vmul.f32 %v4049, %v4049
    %v4186 = vmul.f32 %v4050, %v4050
    %v4187 = vmul.f32 %v4051, %v4051
    %v4188 = vmul.f32 %v4052, %v4052
    %v4189 = vmul.f32 %v4053, %v4053
    %v4190 = vmul.f32 %v4054, %v4054
    %v4191 = vmul.f32 %v4055, %v4055
    %v4192 = vmul.f32 %v4056, %v4056
    %v4193 = vmul.f32 %v4057, %v4057
    %v4194 = vmul.f32 %v4058, %v4058
    %v4195 = vmul.f32 %v4059, %v4059
    %v4196 = vmul.f32 %v4060, %v4060
    %v4197 = vmul.f32 %v4061, %v4061
    %v4198 = vmul.f32 %v4062, %v4062
    %v4199 = vmul.f32 %v4063, %v4063
    %v4200 = vmul.f32 %v4064, %v4064
    %v4201 = vmul.f32 %v4065, %v4065
    %v4202 = vmul.f32 %v4066, %v4066
    %v4203 = vmul.f32 %v4067, %v4067
    %v4204 = vmul.f32 %v4068, %v4068
    %v4205 = vmul.f32 %v4069, %v4069
    %v4206 = vmul.f32 %v4070, %v4070
    %v4207 = vmul.f32 %v4071, %v4071
    %v4208 = vmul.f32 %v4072, %v4072
    %v4209 = vmul.f32 %v4073, %v4073
    %v4210 = vmul.f32 %v4074, %v4074
    %v4211 = vmul.f32 %v4075, %v4075
    %v4212 = vadd.f32 %v4148, %v4149
    %v4213 = vadd.f32 %v4212, %v4150
    %v4214 = vadd.f32 %v4213, %v4151
    %v4215 = vadd.f32 %v4214, %v4152
    %v4216 = vadd.f32 %v4215, %v4153
    %v4217 = vadd.f32 %v4216, %v4154
    %v4218 = vadd.f32 %v4217, %v4155
    %v4219 = vadd.f32 %v4218, %v4156
    %v4220 = vadd.f32 %v4219, %v4157
    %v4221 = vadd.f32 %v4220, %v4158
    %v4222 = vadd.f32 %v4221, %v4159
    %v4223 = vadd.f32 %v4222, %v4160
    %v4224 = vadd.f32 %v4223, %v4161
    %v4225 = vadd.f32 %v4224, %v4162
    %v4226 = vadd.f32 %v4225, %v4163
    %v4227 = vadd.f32 %v4226, %v4164
    %v4228 = vadd.f32 %v4227, %v4165
    %v4229 = vadd.f32 %v4228, %v4166
    %v4230 = vadd.f32 %v4229, %v4167
    %v4231 = vadd.f32 %v4230, %v4168
    %v4232 = vadd.f32 %v4231, %v4169
    %v4233 = vadd.f32 %v4232, %v4170
    %v4234 = vadd.f32 %v4233, %v4171
    %v4235 = vadd.f32 %v4234, %v4172
    %v4236 = vadd.f32 %v4235, %v4173
    %v4237 = vadd.f32 %v4236, %v4174
    %v4238 = vadd.f32 %v4237, %v4175
    %v4239 = vadd.f32 %v4238, %v4176
    %v4240 = vadd.f32 %v4239, %v4177
    %v4241 = vadd.f32 %v4240, %v4178
    %v4242 = vadd.f32 %v4241, %v4179
    %v4243 = vadd.f32 %v4242, %v4180
    %v4244 = vadd.f32 %v4243, %v4181
    %v4245 = vadd.f32 %v4244, %v4182
    %v4246 = vadd.f32 %v4245, %v4183
    %v4247 = vadd.f32 %v4246, %v4184
    %v4248 = vadd.f32 %v4247, %v4185
    %v4249 = vadd.f32 %v4248, %v4186
    %v4250 = vadd.f32 %v4249, %v4187
    %v4251 = vadd.f32 %v4250, %v4188
    %v4252 = vadd.f32 %v4251, %v4189
    %v4253 = vadd.f32 %v4252, %v4190
    %v4254 = vadd.f32 %v4253, %v4191
    %v4255 = vadd.f32 %v4254, %v4192
    %v4256 = vadd.f32 %v4255, %v4193
    %v4257 = vadd.f32 %v4256, %v4194
    %v4258 = vadd.f32 %v4257, %v4195
    %v4259 = vadd.f32 %v4258, %v4196
    %v4260 = vadd.f32 %v4259, %v4197
    %v4261 = vadd.f32 %v4260, %v4198
    %v4262 = vadd.f32 %v4261, %v4199
    %v4263 = vadd.f32 %v4262, %v4200
    %v4264 = vadd.f32 %v4263, %v4201
    %v4265 = vadd.f32 %v4264, %v4202
    %v4266 = vadd.f32 %v4265, %v4203
    %v4267 = vadd.f32 %v4266, %v4204
    %v4268 = vadd.f32 %v4267, %v4205
    %v4269 = vadd.f32 %v4268, %v4206
    %v4270 = vadd.f32 %v4269, %v4207
    %v4271 = vadd.f32 %v4270, %v4208
    %v4272 = vadd.f32 %v4271, %v4209
    %v4273 = vadd.f32 %v4272, %v4210
    %v4274 = vadd.f32 %v4273, %v4211
    %v4275 = vrot.slane %v4274, 4
    %v4276 = vadd.f32 %v4274, %v4275
    %v4277 = vrot.slane %v4276, 2
    %v4278 = vadd.f32 %v4276, %v4277
    %v4279 = vrot.slane %v4278, 1
    %v4280 = vadd.f32 %v4278, %v4279
    %v4281 = vmul.f32 %v4280, 0.001953125
    %v4282 = vmul.f32 %v4147, %v4147
    %v4283 = vsub.f32 %v4281, %v4282
    %v4284 = vmax.f32 %v4283, 0.0
    %v4285 = vadd.f32 %v4284, 1e-05
    %v4286 = vrsqrt.pop %v4285
    %v4287 = vmul.f32 %v4286, %v4285
    %v4288 = vmul.f32 %v4287, %v4286
    %v4289 = vmul.f32 0.5, %v4288
    %v4290 = vsub.f32 1.5, %v4289
    %v4291 = vmul.f32 %v4286, %v4290
    %vm4292 = vweird.f32 %v4285
    %vm4293 = vweird.f32 %v4286
    %vm4294 = vmor %vm4292, %vm4293
    %v4295 = vsel %vm4294, %v4286, %v4291
    %v4296 = vmul.f32 %v4076, %v4295
    %v4297 = vmul.f32 %v4147, %v4296
    %v4298 = vsub.f32 %v4077, %v4297
    %v4300 = vperm.slane %v4296, 0
    %v4302 = vmul.f32 %v4012, %v4300
    %v4303 = vmul.f32 %v4013, %v4300
    %v4304 = vmul.f32 %v4014, %v4300
    %v4305 = vmul.f32 %v4015, %v4300
    %v4306 = vmul.f32 %v4016, %v4300
    %v4307 = vmul.f32 %v4017, %v4300
    %v4308 = vmul.f32 %v4018, %v4300
    %v4309 = vmul.f32 %v4019, %v4300
    %v4310 = vmul.f32 %v4020, %v4300
    %v4311 = vmul.f32 %v4021, %v4300
    %v4312 = vmul.f32 %v4022, %v4300
    %v4313 = vmul.f32 %v4023, %v4300
    %v4314 = vmul.f32 %v4024, %v4300
    %v4315 = vmul.f32 %v4025, %v4300
    %v4316 = vmul.f32 %v4026, %v4300
    %v4317 = vmul.f32 %v4027, %v4300
    %v4318 = vmul.f32 %v4028, %v4300
    %v4319 = vmul.f32 %v4029, %v4300
    %v4320 = vmul.f32 %v4030, %v4300
    %v4321 = vmul.f32 %v4031, %v4300
    %v4322 = vmul.f32 %v4032, %v4300
    %v4323 = vmul.f32 %v4033, %v4300
    %v4324 = vmul.f32 %v4034, %v4300
    %v4325 = vmul.f32 %v4035, %v4300
    %v4326 = vmul.f32 %v4036, %v4300
    %v4327 = vmul.f32 %v4037, %v4300
    %v4328 = vmul.f32 %v4038, %v4300
    %v4329 = vmul.f32 %v4039, %v4300
    %v4330 = vmul.f32 %v4040, %v4300
    %v4331 = vmul.f32 %v4041, %v4300
    %v4332 = vmul.f32 %v4042, %v4300
    %v4333 = vmul.f32 %v4043, %v4300
    %v4334 = vmul.f32 %v4044, %v4300
    %v4335 = vmul.f32 %v4045, %v4300
    %v4336 = vmul.f32 %v4046, %v4300
    %v4337 = vmul.f32 %v4047, %v4300
    %v4338 = vmul.f32 %v4048, %v4300
    %v4339 = vmul.f32 %v4049, %v4300
    %v4340 = vmul.f32 %v4050, %v4300
    %v4341 = vmul.f32 %v4051, %v4300
    %v4342 = vmul.f32 %v4052, %v4300
    %v4343 = vmul.f32 %v4053, %v4300
    %v4344 = vmul.f32 %v4054, %v4300
    %v4345 = vmul.f32 %v4055, %v4300
    %v4346 = vmul.f32 %v4056, %v4300
    %v4347 = vmul.f32 %v4057, %v4300
    %v4348 = vmul.f32 %v4058, %v4300
    %v4349 = vmul.f32 %v4059, %v4300
    %v4350 = vmul.f32 %v4060, %v4300
    %v4351 = vmul.f32 %v4061, %v4300
    %v4352 = vmul.f32 %v4062, %v4300
    %v4353 = vmul.f32 %v4063, %v4300
    %v4354 = vmul.f32 %v4064, %v4300
    %v4355 = vmul.f32 %v4065, %v4300
    %v4356 = vmul.f32 %v4066, %v4300
    %v4357 = vmul.f32 %v4067, %v4300
    %v4358 = vmul.f32 %v4068, %v4300
    %v4359 = vmul.f32 %v4069, %v4300
    %v4360 = vmul.f32 %v4070, %v4300
    %v4361 = vmul.f32 %v4071, %v4300
    %v4362 = vmul.f32 %v4072, %v4300
    %v4363 = vmul.f32 %v4073, %v4300
    %v4364 = vmul.f32 %v4074, %v4300
    %v4365 = vmul.f32 %v4075, %v4300
    %v4367 = vperm.slane %v4298, 0
    %v4369 = vadd.f32 %v4302, %v4367
    %v4370 = vadd.f32 %v4303, %v4367
    %v4371 = vadd.f32 %v4304, %v4367
    %v4372 = vadd.f32 %v4305, %v4367
    %v4373 = vadd.f32 %v4306, %v4367
    %v4374 = vadd.f32 %v4307, %v4367
    %v4375 = vadd.f32 %v4308, %v4367
    %v4376 = vadd.f32 %v4309, %v4367
    %v4377 = vadd.f32 %v4310, %v4367
    %v4378 = vadd.f32 %v4311, %v4367
    %v4379 = vadd.f32 %v4312, %v4367
    %v4380 = vadd.f32 %v4313, %v4367
    %v4381 = vadd.f32 %v4314, %v4367
    %v4382 = vadd.f32 %v4315, %v4367
    %v4383 = vadd.f32 %v4316, %v4367
    %v4384 = vadd.f32 %v4317, %v4367
    %v4385 = vadd.f32 %v4318, %v4367
    %v4386 = vadd.f32 %v4319, %v4367
    %v4387 = vadd.f32 %v4320, %v4367
    %v4388 = vadd.f32 %v4321, %v4367
    %v4389 = vadd.f32 %v4322, %v4367
    %v4390 = vadd.f32 %v4323, %v4367
    %v4391 = vadd.f32 %v4324, %v4367
    %v4392 = vadd.f32 %v4325, %v4367
    %v4393 = vadd.f32 %v4326, %v4367
    %v4394 = vadd.f32 %v4327, %v4367
    %v4395 = vadd.f32 %v4328, %v4367
    %v4396 = vadd.f32 %v4329, %v4367
    %v4397 = vadd.f32 %v4330, %v4367
    %v4398 = vadd.f32 %v4331, %v4367
    %v4399 = vadd.f32 %v4332, %v4367
    %v4400 = vadd.f32 %v4333, %v4367
    %v4401 = vadd.f32 %v4334, %v4367
    %v4402 = vadd.f32 %v4335, %v4367
    %v4403 = vadd.f32 %v4336, %v4367
    %v4404 = vadd.f32 %v4337, %v4367
    %v4405 = vadd.f32 %v4338, %v4367
    %v4406 = vadd.f32 %v4339, %v4367
    %v4407 = vadd.f32 %v4340, %v4367
    %v4408 = vadd.f32 %v4341, %v4367
    %v4409 = vadd.f32 %v4342, %v4367
    %v4410 = vadd.f32 %v4343, %v4367
    %v4411 = vadd.f32 %v4344, %v4367
    %v4412 = vadd.f32 %v4345, %v4367
    %v4413 = vadd.f32 %v4346, %v4367
    %v4414 = vadd.f32 %v4347, %v4367
    %v4415 = vadd.f32 %v4348, %v4367
    %v4416 = vadd.f32 %v4349, %v4367
    %v4417 = vadd.f32 %v4350, %v4367
    %v4418 = vadd.f32 %v4351, %v4367
    %v4419 = vadd.f32 %v4352, %v4367
    %v4420 = vadd.f32 %v4353, %v4367
    %v4421 = vadd.f32 %v4354, %v4367
    %v4422 = vadd.f32 %v4355, %v4367
    %v4423 = vadd.f32 %v4356, %v4367
    %v4424 = vadd.f32 %v4357, %v4367
    %v4425 = vadd.f32 %v4358, %v4367
    %v4426 = vadd.f32 %v4359, %v4367
    %v4427 = vadd.f32 %v4360, %v4367
    %v4428 = vadd.f32 %v4361, %v4367
    %v4429 = vadd.f32 %v4362, %v4367
    %v4430 = vadd.f32 %v4363, %v4367
    %v4431 = vadd.f32 %v4364, %v4367
    %v4432 = vadd.f32 %v4365, %v4367
    %v4433 = vmax.f32 %v4369, 0.0
    %v4434 = vmax.f32 %v4370, 0.0
    %v4435 = vmax.f32 %v4371, 0.0
    %v4436 = vmax.f32 %v4372, 0.0
    %v4437 = vmax.f32 %v4373, 0.0
    %v4438 = vmax.f32 %v4374, 0.0
    %v4439 = vmax.f32 %v4375, 0.0
    %v4440 = vmax.f32 %v4376, 0.0
    %v4441 = vmax.f32 %v4377, 0.0
    %v4442 = vmax.f32 %v4378, 0.0
    %v4443 = vmax.f32 %v4379, 0.0
    %v4444 = vmax.f32 %v4380, 0.0
    %v4445 = vmax.f32 %v4381, 0.0
    %v4446 = vmax.f32 %v4382, 0.0
    %v4447 = vmax.f32 %v4383, 0.0
    %v4448 = vmax.f32 %v4384, 0.0
    %v4449 = vmax.f32 %v4385, 0.0
    %v4450 = vmax.f32 %v4386, 0.0
    %v4451 = vmax.f32 %v4387, 0.0
    %v4452 = vmax.f32 %v4388, 0.0
    %v4453 = vmax.f32 %v4389, 0.0
    %v4454 = vmax.f32 %v4390, 0.0
    %v4455 = vmax.f32 %v4391, 0.0
    %v4456 = vmax.f32 %v4392, 0.0
    %v4457 = vmax.f32 %v4393, 0.0
    %v4458 = vmax.f32 %v4394, 0.0
    %v4459 = vmax.f32 %v4395, 0.0
    %v4460 = vmax.f32 %v4396, 0.0
    %v4461 = vmax.f32 %v4397, 0.0
    %v4462 = vmax.f32 %v4398, 0.0
    %v4463 = vmax.f32 %v4399, 0.0
    %v4464 = vmax.f32 %v4400, 0.0
    %v4465 = vmax.f32 %v4401, 0.0
    %v4466 = vmax.f32 %v4402, 0.0
    %v4467 = vmax.f32 %v4403, 0.0
    %v4468 = vmax.f32 %v4404, 0.0
    %v4469 = vmax.f32 %v4405, 0.0
    %v4470 = vmax.f32 %v4406, 0.0
    %v4471 = vmax.f32 %v4407, 0.0
    %v4472 = vmax.f32 %v4408, 0.0
    %v4473 = vmax.f32 %v4409, 0.0
    %v4474 = vmax.f32 %v4410, 0.0
    %v4475 = vmax.f32 %v4411, 0.0
    %v4476 = vmax.f32 %v4412, 0.0
    %v4477 = vmax.f32 %v4413, 0.0
    %v4478 = vmax.f32 %v4414, 0.0
    %v4479 = vmax.f32 %v4415, 0.0
    %v4480 = vmax.f32 %v4416, 0.0
    %v4481 = vmax.f32 %v4417, 0.0
    %v4482 = vmax.f32 %v4418, 0.0
    %v4483 = vmax.f32 %v4419, 0.0
    %v4484 = vmax.f32 %v4420, 0.0
    %v4485 = vmax.f32 %v4421, 0.0
    %v4486 = vmax.f32 %v4422, 0.0
    %v4487 = vmax.f32 %v4423, 0.0
    %v4488 = vmax.f32 %v4424, 0.0
    %v4489 = vmax.f32 %v4425, 0.0
    %v4490 = vmax.f32 %v4426, 0.0
    %v4491 = vmax.f32 %v4427, 0.0
    %v4492 = vmax.f32 %v4428, 0.0
    %v4493 = vmax.f32 %v4429, 0.0
    %v4494 = vmax.f32 %v4430, 0.0
    %v4495 = vmax.f32 %v4431, 0.0
    %v4496 = vmax.f32 %v4432, 0.0
    %v4497 = vpack.c.bf16 %v4433, %v4433
    %v4498 = vpack.c.bf16 %v4434, %v4434
    %v4499 = vpack.c.bf16 %v4435, %v4435
    %v4500 = vpack.c.bf16 %v4436, %v4436
    %v4501 = vpack.c.bf16 %v4437, %v4437
    %v4502 = vpack.c.bf16 %v4438, %v4438
    %v4503 = vpack.c.bf16 %v4439, %v4439
    %v4504 = vpack.c.bf16 %v4440, %v4440
    %v4505 = vpack.c.bf16 %v4441, %v4441
    %v4506 = vpack.c.bf16 %v4442, %v4442
    %v4507 = vpack.c.bf16 %v4443, %v4443
    %v4508 = vpack.c.bf16 %v4444, %v4444
    %v4509 = vpack.c.bf16 %v4445, %v4445
    %v4510 = vpack.c.bf16 %v4446, %v4446
    %v4511 = vpack.c.bf16 %v4447, %v4447
    %v4512 = vpack.c.bf16 %v4448, %v4448
    %v4513 = vpack.c.bf16 %v4449, %v4449
    %v4514 = vpack.c.bf16 %v4450, %v4450
    %v4515 = vpack.c.bf16 %v4451, %v4451
    %v4516 = vpack.c.bf16 %v4452, %v4452
    %v4517 = vpack.c.bf16 %v4453, %v4453
    %v4518 = vpack.c.bf16 %v4454, %v4454
    %v4519 = vpack.c.bf16 %v4455, %v4455
    %v4520 = vpack.c.bf16 %v4456, %v4456
    %v4521 = vpack.c.bf16 %v4457, %v4457
    %v4522 = vpack.c.bf16 %v4458, %v4458
    %v4523 = vpack.c.bf16 %v4459, %v4459
    %v4524 = vpack.c.bf16 %v4460, %v4460
    %v4525 = vpack.c.bf16 %v4461, %v4461
    %v4526 = vpack.c.bf16 %v4462, %v4462
    %v4527 = vpack.c.bf16 %v4463, %v4463
    %v4528 = vpack.c.bf16 %v4464, %v4464
    %v4529 = vpack.c.bf16 %v4465, %v4465
    %v4530 = vpack.c.bf16 %v4466, %v4466
    %v4531 = vpack.c.bf16 %v4467, %v4467
    %v4532 = vpack.c.bf16 %v4468, %v4468
    %v4533 = vpack.c.bf16 %v4469, %v4469
    %v4534 = vpack.c.bf16 %v4470, %v4470
    %v4535 = vpack.c.bf16 %v4471, %v4471
    %v4536 = vpack.c.bf16 %v4472, %v4472
    %v4537 = vpack.c.bf16 %v4473, %v4473
    %v4538 = vpack.c.bf16 %v4474, %v4474
    %v4539 = vpack.c.bf16 %v4475, %v4475
    %v4540 = vpack.c.bf16 %v4476, %v4476
    %v4541 = vpack.c.bf16 %v4477, %v4477
    %v4542 = vpack.c.bf16 %v4478, %v4478
    %v4543 = vpack.c.bf16 %v4479, %v4479
    %v4544 = vpack.c.bf16 %v4480, %v4480
    %v4545 = vpack.c.bf16 %v4481, %v4481
    %v4546 = vpack.c.bf16 %v4482, %v4482
    %v4547 = vpack.c.bf16 %v4483, %v4483
    %v4548 = vpack.c.bf16 %v4484, %v4484
    %v4549 = vpack.c.bf16 %v4485, %v4485
    %v4550 = vpack.c.bf16 %v4486, %v4486
    %v4551 = vpack.c.bf16 %v4487, %v4487
    %v4552 = vpack.c.bf16 %v4488, %v4488
    %v4553 = vpack.c.bf16 %v4489, %v4489
    %v4554 = vpack.c.bf16 %v4490, %v4490
    %v4555 = vpack.c.bf16 %v4491, %v4491
    %v4556 = vpack.c.bf16 %v4492, %v4492
    %v4557 = vpack.c.bf16 %v4493, %v4493
    %v4558 = vpack.c.bf16 %v4494, %v4494
    %v4559 = vpack.c.bf16 %v4495, %v4495
    %v4560 = vpack.c.bf16 %v4496, %v4496
    %4561 = vst [vmem:[#allocation2] sm:$0xf] 0
    %4562 = vst [vmem:[#allocation2 + $0x4] sm:$0xf] 0
    %4563 = vst [vmem:[#allocation2 + $0x8] sm:$0xf] 0
    %4564 = vst [vmem:[#allocation2 + $0xc] sm:$0x1] 0
    %4565 = vst [vmem:[#allocation2 + $0x10] sm:$0xf] 0
    %4566 = vst [vmem:[#allocation2 + $0x14] sm:$0xf] 0
    %4567 = vst [vmem:[#allocation2 + $0x18] sm:$0xf] 0
    %4568 = vst [vmem:[#allocation2 + $0x1c] sm:$0x1] 0
    %4569 = vst [vmem:[#allocation2 + $0x20] sm:$0xf] 0
    %4570 = vst [vmem:[#allocation2 + $0x24] sm:$0xf] 0
    %4571 = vst [vmem:[#allocation2 + $0x28] sm:$0xf] 0
    %4572 = vst [vmem:[#allocation2 + $0x2c] sm:$0x1] 0
    %4573 = vst [vmem:[#allocation2 + $0x30] sm:$0xf] 0
    %4574 = vst [vmem:[#allocation2 + $0x34] sm:$0xf] 0
    %4575 = vst [vmem:[#allocation2 + $0x38] sm:$0xf] 0
    %4576 = vst [vmem:[#allocation2 + $0x3c] sm:$0x1] 0
    %4577 = vst [vmem:[#allocation2 + $0x40] sm:$0xf] 0
    %4578 = vst [vmem:[#allocation2 + $0x44] sm:$0xf] 0
    %4579 = vst [vmem:[#allocation2 + $0x48] sm:$0xf] 0
    %4580 = vst [vmem:[#allocation2 + $0x4c] sm:$0x1] 0
    %4581 = vst [vmem:[#allocation2 + $0x50] sm:$0xf] 0
    %4582 = vst [vmem:[#allocation2 + $0x54] sm:$0xf] 0
    %4583 = vst [vmem:[#allocation2 + $0x58] sm:$0xf] 0
    %4584 = vst [vmem:[#allocation2 + $0x5c] sm:$0x1] 0
    %4585 = vst [vmem:[#allocation2 + $0x60] sm:$0xf] 0
    %4586 = vst [vmem:[#allocation2 + $0x64] sm:$0xf] 0
    %4587 = vst [vmem:[#allocation2 + $0x68] sm:$0xf] 0
    %4588 = vst [vmem:[#allocation2 + $0x6c] sm:$0x1] 0
    %4589 = vst [vmem:[#allocation2 + $0x70] sm:$0xf] 0
    %4590 = vst [vmem:[#allocation2 + $0x74] sm:$0xf] 0
    %4591 = vst [vmem:[#allocation2 + $0x78] sm:$0xf] 0
    %4592 = vst [vmem:[#allocation2 + $0x7c] sm:$0x1] 0
    %4593 = vst [vmem:[#allocation2 + $0x80] sm:$0xf] 0
    %4594 = vst [vmem:[#allocation2 + $0x84] sm:$0xf] 0
    %4595 = vst [vmem:[#allocation2 + $0x88] sm:$0xf] 0
    %4596 = vst [vmem:[#allocation2 + $0x8c] sm:$0x1] 0
    %4597 = vst [vmem:[#allocation2 + $0x90] sm:$0xf] 0
    %4598 = vst [vmem:[#allocation2 + $0x94] sm:$0xf] 0
    %4599 = vst [vmem:[#allocation2 + $0x98] sm:$0xf] 0
    %4600 = vst [vmem:[#allocation2 + $0x9c] sm:$0x1] 0
    %4601 = vst [vmem:[#allocation2 + $0xa0] sm:$0xf] 0
    %4602 = vst [vmem:[#allocation2 + $0xa4] sm:$0xf] 0
    %4603 = vst [vmem:[#allocation2 + $0xa8] sm:$0xf] 0
    %4604 = vst [vmem:[#allocation2 + $0xac] sm:$0x1] 0
    %4605 = vst [vmem:[#allocation2 + $0xb0] sm:$0xf] 0
    %4606 = vst [vmem:[#allocation2 + $0xb4] sm:$0xf] 0
    %4607 = vst [vmem:[#allocation2 + $0xb8] sm:$0xf] 0
    %4608 = vst [vmem:[#allocation2 + $0xbc] sm:$0x1] 0
    %4609 = vst [vmem:[#allocation2 + $0xc0] sm:$0xf] 0
    %4610 = vst [vmem:[#allocation2 + $0xc4] sm:$0xf] 0
    %4611 = vst [vmem:[#allocation2 + $0xc8] sm:$0xf] 0
    %4612 = vst [vmem:[#allocation2 + $0xcc] sm:$0x1] 0
    %4613 = vst [vmem:[#allocation2 + $0xd0] sm:$0xf] 0
    %4614 = vst [vmem:[#allocation2 + $0xd4] sm:$0xf] 0
    %4615 = vst [vmem:[#allocation2 + $0xd8] sm:$0xf] 0
    %4616 = vst [vmem:[#allocation2 + $0xdc] sm:$0x1] 0
    %4617 = vst [vmem:[#allocation2 + $0xe0] sm:$0xf] 0
    %4618 = vst [vmem:[#allocation2 + $0xe4] sm:$0xf] 0
    %4619 = vst [vmem:[#allocation2 + $0xe8] sm:$0xf] 0
    %4620 = vst [vmem:[#allocation2 + $0xec] sm:$0x1] 0
    %4621 = vst [vmem:[#allocation2 + $0xf0] sm:$0xf] 0
    %4622 = vst [vmem:[#allocation2 + $0xf4] sm:$0xf] 0
    %4623 = vst [vmem:[#allocation2 + $0xf8] sm:$0xf] 0
    %4624 = vst [vmem:[#allocation2 + $0xfc] sm:$0x1] 0
    %4625 = vst [vmem:[#allocation2 + $0x100] sm:$0xf] 0
    %4626 = vst [vmem:[#allocation2 + $0x104] sm:$0xf] 0
    %4627 = vst [vmem:[#allocation2 + $0x108] sm:$0xf] 0
    %4628 = vst [vmem:[#allocation2 + $0x10c] sm:$0x1] 0
    %4629 = vst [vmem:[#allocation2 + $0x110] sm:$0xf] 0
    %4630 = vst [vmem:[#allocation2 + $0x114] sm:$0xf] 0
    %4631 = vst [vmem:[#allocation2 + $0x118] sm:$0xf] 0
    %4632 = vst [vmem:[#allocation2 + $0x11c] sm:$0x1] 0
    %4633 = vst [vmem:[#allocation2 + $0x120] sm:$0xf] 0
    %4634 = vst [vmem:[#allocation2 + $0x124] sm:$0xf] 0
    %4635 = vst [vmem:[#allocation2 + $0x128] sm:$0xf] 0
    %4636 = vst [vmem:[#allocation2 + $0x12c] sm:$0x1] 0
    %4637 = vst [vmem:[#allocation2 + $0x130] sm:$0xf] 0
    %4638 = vst [vmem:[#allocation2 + $0x134] sm:$0xf] 0
    %4639 = vst [vmem:[#allocation2 + $0x138] sm:$0xf] 0
    %4640 = vst [vmem:[#allocation2 + $0x13c] sm:$0x1] 0
    %4641 = vst [vmem:[#allocation2 + $0x140] sm:$0xf] 0
    %4642 = vst [vmem:[#allocation2 + $0x144] sm:$0xf] 0
    %4643 = vst [vmem:[#allocation2 + $0x148] sm:$0xf] 0
    %4644 = vst [vmem:[#allocation2 + $0x14c] sm:$0x1] 0
    %4645 = vst [vmem:[#allocation2 + $0x150] sm:$0xf] 0
    %4646 = vst [vmem:[#allocation2 + $0x154] sm:$0xf] 0
    %4647 = vst [vmem:[#allocation2 + $0x158] sm:$0xf] 0
    %4648 = vst [vmem:[#allocation2 + $0x15c] sm:$0x1] 0
    %4649 = vst [vmem:[#allocation2 + $0x160] sm:$0xf] 0
    %4650 = vst [vmem:[#allocation2 + $0x164] sm:$0xf] 0
    %4651 = vst [vmem:[#allocation2 + $0x168] sm:$0xf] 0
    %4652 = vst [vmem:[#allocation2 + $0x16c] sm:$0x1] 0
    %4653 = vst [vmem:[#allocation2 + $0x170] sm:$0xf] 0
    %4654 = vst [vmem:[#allocation2 + $0x174] sm:$0xf] 0
    %4655 = vst [vmem:[#allocation2 + $0x178] sm:$0xf] 0
    %4656 = vst [vmem:[#allocation2 + $0x17c] sm:$0x1] 0
    %4657 = vst [vmem:[#allocation2 + $0x180] sm:$0xf] 0
    %4658 = vst [vmem:[#allocation2 + $0x184] sm:$0xf] 0
    %4659 = vst [vmem:[#allocation2 + $0x188] sm:$0xf] 0
    %4660 = vst [vmem:[#allocation2 + $0x18c] sm:$0x1] 0
    %4661 = vst [vmem:[#allocation2 + $0x190] sm:$0xf] 0
    %4662 = vst [vmem:[#allocation2 + $0x194] sm:$0xf] 0
    %4663 = vst [vmem:[#allocation2 + $0x198] sm:$0xf] 0
    %4664 = vst [vmem:[#allocation2 + $0x19c] sm:$0x1] 0
    %4665 = vst [vmem:[#allocation2 + $0x1a0] sm:$0xf] 0
    %4666 = vst [vmem:[#allocation2 + $0x1a4] sm:$0xf] 0
    %4667 = vst [vmem:[#allocation2 + $0x1a8] sm:$0xf] 0
    %4668 = vst [vmem:[#allocation2 + $0x1ac] sm:$0x1] 0
    %4669 = vst [vmem:[#allocation2 + $0x1b0] sm:$0xf] 0
    %4670 = vst [vmem:[#allocation2 + $0x1b4] sm:$0xf] 0
    %4671 = vst [vmem:[#allocation2 + $0x1b8] sm:$0xf] 0
    %4672 = vst [vmem:[#allocation2 + $0x1bc] sm:$0x1] 0
    %4673 = vst [vmem:[#allocation2 + $0x1c0] sm:$0xf] 0
    %4674 = vst [vmem:[#allocation2 + $0x1c4] sm:$0xf] 0
    %4675 = vst [vmem:[#allocation2 + $0x1c8] sm:$0xf] 0
    %4676 = vst [vmem:[#allocation2 + $0x1cc] sm:$0x1] 0
    %4677 = vst [vmem:[#allocation2 + $0x1d0] sm:$0xf] 0
    %4678 = vst [vmem:[#allocation2 + $0x1d4] sm:$0xf] 0
    %4679 = vst [vmem:[#allocation2 + $0x1d8] sm:$0xf] 0
    %4680 = vst [vmem:[#allocation2 + $0x1dc] sm:$0x1] 0
    %4681 = vst [vmem:[#allocation2 + $0x1e0] sm:$0xf] 0
    %4682 = vst [vmem:[#allocation2 + $0x1e4] sm:$0xf] 0
    %4683 = vst [vmem:[#allocation2 + $0x1e8] sm:$0xf] 0
    %4684 = vst [vmem:[#allocation2 + $0x1ec] sm:$0x1] 0
    %4685 = vst [vmem:[#allocation2 + $0x1f0] sm:$0xf] 0
    %4686 = vst [vmem:[#allocation2 + $0x1f4] sm:$0xf] 0
    %4687 = vst [vmem:[#allocation2 + $0x1f8] sm:$0xf] 0
    %4688 = vst [vmem:[#allocation2 + $0x1fc] sm:$0x1] 0
    %4689 = vst [vmem:[#allocation2 + $0x200] sm:$0xf] 0
    %4690 = vst [vmem:[#allocation2 + $0x204] sm:$0xf] 0
    %4691 = vst [vmem:[#allocation2 + $0x208] sm:$0xf] 0
    %4692 = vst [vmem:[#allocation2 + $0x20c] sm:$0x1] 0
    %4693 = vst [vmem:[#allocation2 + $0x210] sm:$0xf] 0
    %4694 = vst [vmem:[#allocation2 + $0x214] sm:$0xf] 0
    %4695 = vst [vmem:[#allocation2 + $0x218] sm:$0xf] 0
    %4696 = vst [vmem:[#allocation2 + $0x21c] sm:$0x1] 0
    %4697 = vst [vmem:[#allocation2 + $0x220] sm:$0xf] 0
    %4698 = vst [vmem:[#allocation2 + $0x224] sm:$0xf] 0
    %4699 = vst [vmem:[#allocation2 + $0x228] sm:$0xf] 0
    %4700 = vst [vmem:[#allocation2 + $0x22c] sm:$0x1] 0
    %4701 = vst [vmem:[#allocation2 + $0x230] sm:$0xf] 0
    %4702 = vst [vmem:[#allocation2 + $0x234] sm:$0xf] 0
    %4703 = vst [vmem:[#allocation2 + $0x238] sm:$0xf] 0
    %4704 = vst [vmem:[#allocation2 + $0x23c] sm:$0x1] 0
    %s4705 = scalar_lea.vmem [#allocation2], 16
    %4706 = vst [vmem:[%s4705 + $0x4] sm:$0xf] %v4497
    %4707 = vst [vmem:[%s4705 + $0x8] sm:$0xf] %v4498
    %4708 = vst [vmem:[%s4705 + $0x14] sm:$0xf] %v4499
    %4709 = vst [vmem:[%s4705 + $0x18] sm:$0xf] %v4500
    %4710 = vst [vmem:[%s4705 + $0x24] sm:$0xf] %v4501
    %4711 = vst [vmem:[%s4705 + $0x28] sm:$0xf] %v4502
    %4712 = vst [vmem:[%s4705 + $0x34] sm:$0xf] %v4503
    %4713 = vst [vmem:[%s4705 + $0x38] sm:$0xf] %v4504
    %4714 = vst [vmem:[%s4705 + $0x44] sm:$0xf] %v4505
    %4715 = vst [vmem:[%s4705 + $0x48] sm:$0xf] %v4506
    %4716 = vst [vmem:[%s4705 + $0x54] sm:$0xf] %v4507
    %4717 = vst [vmem:[%s4705 + $0x58] sm:$0xf] %v4508
    %4718 = vst [vmem:[%s4705 + $0x64] sm:$0xf] %v4509
    %4719 = vst [vmem:[%s4705 + $0x68] sm:$0xf] %v4510
    %4720 = vst [vmem:[%s4705 + $0x74] sm:$0xf] %v4511
    %4721 = vst [vmem:[%s4705 + $0x78] sm:$0xf] %v4512
    %4722 = vst [vmem:[%s4705 + $0x84] sm:$0xf] %v4513
    %4723 = vst [vmem:[%s4705 + $0x88] sm:$0xf] %v4514
    %4724 = vst [vmem:[%s4705 + $0x94] sm:$0xf] %v4515
    %4725 = vst [vmem:[%s4705 + $0x98] sm:$0xf] %v4516
    %4726 = vst [vmem:[%s4705 + $0xa4] sm:$0xf] %v4517
    %4727 = vst [vmem:[%s4705 + $0xa8] sm:$0xf] %v4518
    %4728 = vst [vmem:[%s4705 + $0xb4] sm:$0xf] %v4519
    %4729 = vst [vmem:[%s4705 + $0xb8] sm:$0xf] %v4520
    %4730 = vst [vmem:[%s4705 + $0xc4] sm:$0xf] %v4521
    %4731 = vst [vmem:[%s4705 + $0xc8] sm:$0xf] %v4522
    %4732 = vst [vmem:[%s4705 + $0xd4] sm:$0xf] %v4523
    %4733 = vst [vmem:[%s4705 + $0xd8] sm:$0xf] %v4524
    %4734 = vst [vmem:[%s4705 + $0xe4] sm:$0xf] %v4525
    %4735 = vst [vmem:[%s4705 + $0xe8] sm:$0xf] %v4526
    %4736 = vst [vmem:[%s4705 + $0xf4] sm:$0xf] %v4527
    %4737 = vst [vmem:[%s4705 + $0xf8] sm:$0xf] %v4528
    %4738 = vst [vmem:[%s4705 + $0x124] sm:$0xf] %v4529
    %4739 = vst [vmem:[%s4705 + $0x128] sm:$0xf] %v4530
    %4740 = vst [vmem:[%s4705 + $0x134] sm:$0xf] %v4531
    %4741 = vst [vmem:[%s4705 + $0x138] sm:$0xf] %v4532
    %4742 = vst [vmem:[%s4705 + $0x144] sm:$0xf] %v4533
    %4743 = vst [vmem:[%s4705 + $0x148] sm:$0xf] %v4534
    %4744 = vst [vmem:[%s4705 + $0x154] sm:$0xf] %v4535
    %4745 = vst [vmem:[%s4705 + $0x158] sm:$0xf] %v4536
    %4746 = vst [vmem:[%s4705 + $0x164] sm:$0xf] %v4537
    %4747 = vst [vmem:[%s4705 + $0x168] sm:$0xf] %v4538
    %4748 = vst [vmem:[%s4705 + $0x174] sm:$0xf] %v4539
    %4749 = vst [vmem:[%s4705 + $0x178] sm:$0xf] %v4540
    %4750 = vst [vmem:[%s4705 + $0x184] sm:$0xf] %v4541
    %4751 = vst [vmem:[%s4705 + $0x188] sm:$0xf] %v4542
    %4752 = vst [vmem:[%s4705 + $0x194] sm:$0xf] %v4543
    %4753 = vst [vmem:[%s4705 + $0x198] sm:$0xf] %v4544
    %4754 = vst [vmem:[%s4705 + $0x1a4] sm:$0xf] %v4545
    %4755 = vst [vmem:[%s4705 + $0x1a8] sm:$0xf] %v4546
    %4756 = vst [vmem:[%s4705 + $0x1b4] sm:$0xf] %v4547
    %4757 = vst [vmem:[%s4705 + $0x1b8] sm:$0xf] %v4548
    %4758 = vst [vmem:[%s4705 + $0x1c4] sm:$0xf] %v4549
    %4759 = vst [vmem:[%s4705 + $0x1c8] sm:$0xf] %v4550
    %4760 = vst [vmem:[%s4705 + $0x1d4] sm:$0xf] %v4551
    %4761 = vst [vmem:[%s4705 + $0x1d8] sm:$0xf] %v4552
    %4762 = vst [vmem:[%s4705 + $0x1e4] sm:$0xf] %v4553
    %4763 = vst [vmem:[%s4705 + $0x1e8] sm:$0xf] %v4554
    %4764 = vst [vmem:[%s4705 + $0x1f4] sm:$0xf] %v4555
    %4765 = vst [vmem:[%s4705 + $0x1f8] sm:$0xf] %v4556
    %4766 = vst [vmem:[%s4705 + $0x204] sm:$0xf] %v4557
    %4767 = vst [vmem:[%s4705 + $0x208] sm:$0xf] %v4558
    %4768 = vst [vmem:[%s4705 + $0x214] sm:$0xf] %v4559
    %4769 = vst [vmem:[%s4705 + $0x218] sm:$0xf] %v4560
    %v4770 = vld [vmem:[%s2] sm:$0xf]
    %v4771 = vld [vmem:[%s2 + $0x4] sm:$0xf]
    %v4772 = vld [vmem:[%s2 + $0x8] sm:$0xf]
    %v4773 = vld [vmem:[%s2 + $0xc] sm:$0xf]
    %v4774 = vld [vmem:[%s2 + $0x10] sm:$0xf]
    %v4775 = vld [vmem:[%s2 + $0x14] sm:$0xf]
    %v4776 = vld [vmem:[%s2 + $0x18] sm:$0xf]
    %v4777 = vld [vmem:[%s2 + $0x1c] sm:$0xf]
    %v4778 = vld [vmem:[%s2 + $0x20] sm:$0xf]
    %v4779 = vld [vmem:[%s2 + $0x24] sm:$0xf]
    %v4780 = vld [vmem:[%s2 + $0x28] sm:$0xf]
    %v4781 = vld [vmem:[%s2 + $0x2c] sm:$0xf]
    %v4782 = vld [vmem:[%s2 + $0x30] sm:$0xf]
    %v4783 = vld [vmem:[%s2 + $0x34] sm:$0xf]
    %v4784 = vld [vmem:[%s2 + $0x38] sm:$0xf]
    %v4785 = vld [vmem:[%s2 + $0x3c] sm:$0xf]
    %v4786 = vld [vmem:[%s2 + $0x40] sm:$0xf]
    %v4787 = vld [vmem:[%s2 + $0x44] sm:$0xf]
    %v4788 = vld [vmem:[%s2 + $0x48] sm:$0xf]
    %v4789 = vld [vmem:[%s2 + $0x4c] sm:$0xf]
    %v4790 = vld [vmem:[%s2 + $0x50] sm:$0xf]
    %v4791 = vld [vmem:[%s2 + $0x54] sm:$0xf]
    %v4792 = vld [vmem:[%s2 + $0x58] sm:$0xf]
    %v4793 = vld [vmem:[%s2 + $0x5c] sm:$0xf]
    %v4794 = vld [vmem:[%s2 + $0x60] sm:$0xf]
    %v4795 = vld [vmem:[%s2 + $0x64] sm:$0xf]
    %v4796 = vld [vmem:[%s2 + $0x68] sm:$0xf]
    %v4797 = vld [vmem:[%s2 + $0x6c] sm:$0xf]
    %v4798 = vld [vmem:[%s2 + $0x70] sm:$0xf]
    %v4799 = vld [vmem:[%s2 + $0x74] sm:$0xf]
    %v4800 = vld [vmem:[%s2 + $0x78] sm:$0xf]
    %v4801 = vld [vmem:[%s2 + $0x7c] sm:$0xf]
    %v4802 = vld [vmem:[%s2 + $0x80] sm:$0xf]
    %v4803 = vld [vmem:[%s2 + $0x84] sm:$0xf]
    %v4804 = vld [vmem:[%s2 + $0x88] sm:$0xf]
    %v4805 = vld [vmem:[%s2 + $0x8c] sm:$0xf]
    %v4806 = vld [vmem:[%s2 + $0x90] sm:$0xf]
    %v4807 = vld [vmem:[%s2 + $0x94] sm:$0xf]
    %v4808 = vld [vmem:[%s2 + $0x98] sm:$0xf]
    %v4809 = vld [vmem:[%s2 + $0x9c] sm:$0xf]
    %v4810 = vld [vmem:[%s2 + $0xa0] sm:$0xf]
    %v4811 = vld [vmem:[%s2 + $0xa4] sm:$0xf]
    %v4812 = vld [vmem:[%s2 + $0xa8] sm:$0xf]
    %v4813 = vld [vmem:[%s2 + $0xac] sm:$0xf]
    %v4814 = vld [vmem:[%s2 + $0xb0] sm:$0xf]
    %v4815 = vld [vmem:[%s2 + $0xb4] sm:$0xf]
    %v4816 = vld [vmem:[%s2 + $0xb8] sm:$0xf]
    %v4817 = vld [vmem:[%s2 + $0xbc] sm:$0xf]
    %v4818 = vld [vmem:[%s2 + $0xc0] sm:$0xf]
    %v4819 = vld [vmem:[%s2 + $0xc4] sm:$0xf]
    %v4820 = vld [vmem:[%s2 + $0xc8] sm:$0xf]
    %v4821 = vld [vmem:[%s2 + $0xcc] sm:$0xf]
    %v4822 = vld [vmem:[%s2 + $0xd0] sm:$0xf]
    %v4823 = vld [vmem:[%s2 + $0xd4] sm:$0xf]
    %v4824 = vld [vmem:[%s2 + $0xd8] sm:$0xf]
    %v4825 = vld [vmem:[%s2 + $0xdc] sm:$0xf]
    %v4826 = vld [vmem:[%s2 + $0xe0] sm:$0xf]
    %v4827 = vld [vmem:[%s2 + $0xe4] sm:$0xf]
    %v4828 = vld [vmem:[%s2 + $0xe8] sm:$0xf]
    %v4829 = vld [vmem:[%s2 + $0xec] sm:$0xf]
    %v4830 = vld [vmem:[%s2 + $0xf0] sm:$0xf]
    %v4831 = vld [vmem:[%s2 + $0xf4] sm:$0xf]
    %v4832 = vld [vmem:[%s2 + $0xf8] sm:$0xf]
    %v4833 = vld [vmem:[%s2 + $0xfc] sm:$0xf]
    %v4834 = vld [vmem:[%s2 + $0x100] sm:$0xf]
    %v4835 = vld [vmem:[%s2 + $0x104] sm:$0xf]
    %v4836 = vld [vmem:[%s2 + $0x108] sm:$0xf]
    %v4837 = vld [vmem:[%s2 + $0x10c] sm:$0xf]
    %v4838 = vld [vmem:[%s2 + $0x110] sm:$0xf]
    %v4839 = vld [vmem:[%s2 + $0x114] sm:$0xf]
    %v4840 = vld [vmem:[%s2 + $0x118] sm:$0xf]
    %v4841 = vld [vmem:[%s2 + $0x11c] sm:$0xf]
    %v4842 = vld [vmem:[%s2 + $0x120] sm:$0xf]
    %v4843 = vld [vmem:[%s2 + $0x124] sm:$0xf]
    %v4844 = vld [vmem:[%s2 + $0x128] sm:$0xf]
    %v4845 = vld [vmem:[%s2 + $0x12c] sm:$0xf]
    %v4846 = vld [vmem:[%s2 + $0x130] sm:$0xf]
    %v4847 = vld [vmem:[%s2 + $0x134] sm:$0xf]
    %v4848 = vld [vmem:[%s2 + $0x138] sm:$0xf]
    %v4849 = vld [vmem:[%s2 + $0x13c] sm:$0xf]
    %v4850 = vld [vmem:[%s2 + $0x140] sm:$0xf]
    %v4851 = vld [vmem:[%s2 + $0x144] sm:$0xf]
    %v4852 = vld [vmem:[%s2 + $0x148] sm:$0xf]
    %v4853 = vld [vmem:[%s2 + $0x14c] sm:$0xf]
    %v4854 = vld [vmem:[%s2 + $0x150] sm:$0xf]
    %v4855 = vld [vmem:[%s2 + $0x154] sm:$0xf]
    %v4856 = vld [vmem:[%s2 + $0x158] sm:$0xf]
    %v4857 = vld [vmem:[%s2 + $0x15c] sm:$0xf]
    %v4858 = vld [vmem:[%s2 + $0x160] sm:$0xf]
    %v4859 = vld [vmem:[%s2 + $0x164] sm:$0xf]
    %v4860 = vld [vmem:[%s2 + $0x168] sm:$0xf]
    %v4861 = vld [vmem:[%s2 + $0x16c] sm:$0xf]
    %v4862 = vld [vmem:[%s2 + $0x170] sm:$0xf]
    %v4863 = vld [vmem:[%s2 + $0x174] sm:$0xf]
    %v4864 = vld [vmem:[%s2 + $0x178] sm:$0xf]
    %v4865 = vld [vmem:[%s2 + $0x17c] sm:$0xf]
    %v4866 = vld [vmem:[%s2 + $0x180] sm:$0xf]
    %v4867 = vld [vmem:[%s2 + $0x184] sm:$0xf]
    %v4868 = vld [vmem:[%s2 + $0x188] sm:$0xf]
    %v4869 = vld [vmem:[%s2 + $0x18c] sm:$0xf]
    %v4870 = vld [vmem:[%s2 + $0x190] sm:$0xf]
    %v4871 = vld [vmem:[%s2 + $0x194] sm:$0xf]
    %v4872 = vld [vmem:[%s2 + $0x198] sm:$0xf]
    %v4873 = vld [vmem:[%s2 + $0x19c] sm:$0xf]
    %v4874 = vld [vmem:[%s2 + $0x1a0] sm:$0xf]
    %v4875 = vld [vmem:[%s2 + $0x1a4] sm:$0xf]
    %v4876 = vld [vmem:[%s2 + $0x1a8] sm:$0xf]
    %v4877 = vld [vmem:[%s2 + $0x1ac] sm:$0xf]
    %v4878 = vld [vmem:[%s2 + $0x1b0] sm:$0xf]
    %v4879 = vld [vmem:[%s2 + $0x1b4] sm:$0xf]
    %v4880 = vld [vmem:[%s2 + $0x1b8] sm:$0xf]
    %v4881 = vld [vmem:[%s2 + $0x1bc] sm:$0xf]
    %v4882 = vld [vmem:[%s2 + $0x1c0] sm:$0xf]
    %v4883 = vld [vmem:[%s2 + $0x1c4] sm:$0xf]
    %v4884 = vld [vmem:[%s2 + $0x1c8] sm:$0xf]
    %v4885 = vld [vmem:[%s2 + $0x1cc] sm:$0xf]
    %v4886 = vld [vmem:[%s2 + $0x1d0] sm:$0xf]
    %v4887 = vld [vmem:[%s2 + $0x1d4] sm:$0xf]
    %v4888 = vld [vmem:[%s2 + $0x1d8] sm:$0xf]
    %v4889 = vld [vmem:[%s2 + $0x1dc] sm:$0xf]
    %v4890 = vld [vmem:[%s2 + $0x1e0] sm:$0xf]
    %v4891 = vld [vmem:[%s2 + $0x1e4] sm:$0xf]
    %v4892 = vld [vmem:[%s2 + $0x1e8] sm:$0xf]
    %v4893 = vld [vmem:[%s2 + $0x1ec] sm:$0xf]
    %v4894 = vld [vmem:[%s2 + $0x1f0] sm:$0xf]
    %v4895 = vld [vmem:[%s2 + $0x1f4] sm:$0xf]
    %v4896 = vld [vmem:[%s2 + $0x1f8] sm:$0xf]
    %v4897 = vld [vmem:[%s2 + $0x1fc] sm:$0xf]
    %v4898 = vld [vmem:[%s2 + $0x200] sm:$0xf]
    %v4899 = vld [vmem:[%s2 + $0x204] sm:$0xf]
    %v4900 = vld [vmem:[%s2 + $0x208] sm:$0xf]
    %v4901 = vld [vmem:[%s2 + $0x20c] sm:$0xf]
    %v4902 = vld [vmem:[%s2 + $0x210] sm:$0xf]
    %v4903 = vld [vmem:[%s2 + $0x214] sm:$0xf]
    %v4904 = vld [vmem:[%s2 + $0x218] sm:$0xf]
    %v4905 = vld [vmem:[%s2 + $0x21c] sm:$0xf]
    %v4906 = vld [vmem:[%s2 + $0x220] sm:$0xf]
    %v4907 = vld [vmem:[%s2 + $0x224] sm:$0xf]
    %v4908 = vld [vmem:[%s2 + $0x228] sm:$0xf]
    %v4909 = vld [vmem:[%s2 + $0x22c] sm:$0xf]
    %v4910 = vld [vmem:[%s2 + $0x230] sm:$0xf]
    %v4911 = vld [vmem:[%s2 + $0x234] sm:$0xf]
    %v4912 = vld [vmem:[%s2 + $0x238] sm:$0xf]
    %v4913 = vld [vmem:[%s2 + $0x23c] sm:$0xf]
    %v4914 = vld [vmem:[#allocation2] sm:$0x8]
    %v4915 = vld [vmem:[#allocation2 + $0x4] sm:$0xf]
    %v4916 = vld [vmem:[#allocation2 + $0x8] sm:$0xf]
    %v4917 = vld [vmem:[#allocation2 + $0x10] sm:$0x8]
    %v4918 = vld [vmem:[#allocation2 + $0x14] sm:$0xf]
    %v4919 = vld [vmem:[#allocation2 + $0x18] sm:$0xf]
    %v4920 = vld [vmem:[#allocation2 + $0x20] sm:$0x8]
    %v4921 = vld [vmem:[#allocation2 + $0x24] sm:$0xf]
    %v4922 = vld [vmem:[#allocation2 + $0x28] sm:$0xf]
    %v4923 = vld [vmem:[#allocation2 + $0x30] sm:$0x8]
    %v4924 = vld [vmem:[#allocation2 + $0x34] sm:$0xf]
    %v4925 = vld [vmem:[#allocation2 + $0x38] sm:$0xf]
    %v4926 = vld [vmem:[#allocation2 + $0x40] sm:$0x8]
    %v4927 = vld [vmem:[#allocation2 + $0x44] sm:$0xf]
    %v4928 = vld [vmem:[#allocation2 + $0x48] sm:$0xf]
    %v4929 = vld [vmem:[#allocation2 + $0x50] sm:$0x8]
    %v4930 = vld [vmem:[#allocation2 + $0x54] sm:$0xf]
    %v4931 = vld [vmem:[#allocation2 + $0x58] sm:$0xf]
    %v4932 = vld [vmem:[#allocation2 + $0x60] sm:$0x8]
    %v4933 = vld [vmem:[#allocation2 + $0x64] sm:$0xf]
    %v4934 = vld [vmem:[#allocation2 + $0x68] sm:$0xf]
    %v4935 = vld [vmem:[#allocation2 + $0x70] sm:$0x8]
    %v4936 = vld [vmem:[#allocation2 + $0x74] sm:$0xf]
    %v4937 = vld [vmem:[#allocation2 + $0x78] sm:$0xf]
    %v4938 = vld [vmem:[#allocation2 + $0x80] sm:$0x8]
    %v4939 = vld [vmem:[#allocation2 + $0x84] sm:$0xf]
    %v4940 = vld [vmem:[#allocation2 + $0x88] sm:$0xf]
    %v4941 = vld [vmem:[#allocation2 + $0x90] sm:$0x8]
    %v4942 = vld [vmem:[#allocation2 + $0x94] sm:$0xf]
    %v4943 = vld [vmem:[#allocation2 + $0x98] sm:$0xf]
    %v4944 = vld [vmem:[#allocation2 + $0xa0] sm:$0x8]
    %v4945 = vld [vmem:[#allocation2 + $0xa4] sm:$0xf]
    %v4946 = vld [vmem:[#allocation2 + $0xa8] sm:$0xf]
    %v4947 = vld [vmem:[#allocation2 + $0xb0] sm:$0x8]
    %v4948 = vld [vmem:[#allocation2 + $0xb4] sm:$0xf]
    %v4949 = vld [vmem:[#allocation2 + $0xb8] sm:$0xf]
    %v4950 = vld [vmem:[#allocation2 + $0xc0] sm:$0x8]
    %v4951 = vld [vmem:[#allocation2 + $0xc4] sm:$0xf]
    %v4952 = vld [vmem:[#allocation2 + $0xc8] sm:$0xf]
    %v4953 = vld [vmem:[#allocation2 + $0xd0] sm:$0x8]
    %v4954 = vld [vmem:[#allocation2 + $0xd4] sm:$0xf]
    %v4955 = vld [vmem:[#allocation2 + $0xd8] sm:$0xf]
    %v4956 = vld [vmem:[#allocation2 + $0xe0] sm:$0x8]
    %v4957 = vld [vmem:[#allocation2 + $0xe4] sm:$0xf]
    %v4958 = vld [vmem:[#allocation2 + $0xe8] sm:$0xf]
    %v4959 = vld [vmem:[#allocation2 + $0xf0] sm:$0x8]
    %v4960 = vld [vmem:[#allocation2 + $0xf4] sm:$0xf]
    %v4961 = vld [vmem:[#allocation2 + $0xf8] sm:$0xf]
    %v4962 = vld [vmem:[#allocation2 + $0x120] sm:$0x8]
    %v4963 = vld [vmem:[#allocation2 + $0x124] sm:$0xf]
    %v4964 = vld [vmem:[#allocation2 + $0x128] sm:$0xf]
    %v4965 = vld [vmem:[#allocation2 + $0x130] sm:$0x8]
    %v4966 = vld [vmem:[#allocation2 + $0x134] sm:$0xf]
    %v4967 = vld [vmem:[#allocation2 + $0x138] sm:$0xf]
    %v4968 = vld [vmem:[#allocation2 + $0x140] sm:$0x8]
    %v4969 = vld [vmem:[#allocation2 + $0x144] sm:$0xf]
    %v4970 = vld [vmem:[#allocation2 + $0x148] sm:$0xf]
    %v4971 = vld [vmem:[#allocation2 + $0x150] sm:$0x8]
    %v4972 = vld [vmem:[#allocation2 + $0x154] sm:$0xf]
    %v4973 = vld [vmem:[#allocation2 + $0x158] sm:$0xf]
    %v4974 = vld [vmem:[#allocation2 + $0x160] sm:$0x8]
    %v4975 = vld [vmem:[#allocation2 + $0x164] sm:$0xf]
    %v4976 = vld [vmem:[#allocation2 + $0x168] sm:$0xf]
    %v4977 = vld [vmem:[#allocation2 + $0x170] sm:$0x8]
    %v4978 = vld [vmem:[#allocation2 + $0x174] sm:$0xf]
    %v4979 = vld [vmem:[#allocation2 + $0x178] sm:$0xf]
    %v4980 = vld [vmem:[#allocation2 + $0x180] sm:$0x8]
    %v4981 = vld [vmem:[#allocation2 + $0x184] sm:$0xf]
    %v4982 = vld [vmem:[#allocation2 + $0x188] sm:$0xf]
    %v4983 = vld [vmem:[#allocation2 + $0x190] sm:$0x8]
    %v4984 = vld [vmem:[#allocation2 + $0x194] sm:$0xf]
    %v4985 = vld [vmem:[#allocation2 + $0x198] sm:$0xf]
    %v4986 = vld [vmem:[#allocation2 + $0x1a0] sm:$0x8]
    %v4987 = vld [vmem:[#allocation2 + $0x1a4] sm:$0xf]
    %v4988 = vld [vmem:[#allocation2 + $0x1a8] sm:$0xf]
    %v4989 = vld [vmem:[#allocation2 + $0x1b0] sm:$0x8]
    %v4990 = vld [vmem:[#allocation2 + $0x1b4] sm:$0xf]
    %v4991 = vld [vmem:[#allocation2 + $0x1b8] sm:$0xf]
    %v4992 = vld [vmem:[#allocation2 + $0x1c0] sm:$0x8]
    %v4993 = vld [vmem:[#allocation2 + $0x1c4] sm:$0xf]
    %v4994 = vld [vmem:[#allocation2 + $0x1c8] sm:$0xf]
    %v4995 = vld [vmem:[#allocation2 + $0x1d0] sm:$0x8]
    %v4996 = vld [vmem:[#allocation2 + $0x1d4] sm:$0xf]
    %v4997 = vld [vmem:[#allocation2 + $0x1d8] sm:$0xf]
    %v4998 = vld [vmem:[#allocation2 + $0x1e0] sm:$0x8]
    %v4999 = vld [vmem:[#allocation2 + $0x1e4] sm:$0xf]
    %v5000 = vld [vmem:[#allocation2 + $0x1e8] sm:$0xf]
    %v5001 = vld [vmem:[#allocation2 + $0x1f0] sm:$0x8]
    %v5002 = vld [vmem:[#allocation2 + $0x1f4] sm:$0xf]
    %v5003 = vld [vmem:[#allocation2 + $0x1f8] sm:$0xf]
    %v5004 = vld [vmem:[#allocation2 + $0x200] sm:$0x8]
    %v5005 = vld [vmem:[#allocation2 + $0x204] sm:$0xf]
    %v5006 = vld [vmem:[#allocation2 + $0x208] sm:$0xf]
    %v5007 = vld [vmem:[#allocation2 + $0x210] sm:$0x8]
    %v5008 = vld [vmem:[#allocation2 + $0x214] sm:$0xf]
    %v5009 = vld [vmem:[#allocation2 + $0x218] sm:$0xf]
    %vm5010 = vsmask.f32 256
    %vm5011 = vsmask.f32 4368
    %vm5012 = vmor %vm5010, %vm5011
    %v5014 = vshrl.u32 %v4914, 16
    %v5016 = vrot.slane %v5014, 7
    %v5017 = vrot.slane %v5016, 4
    %v5019 = vshrl.u32 %v4915, 16
    %v5021 = vrot.slane %v5019, 7
    %v5022 = vshll.u32 %v4915, 16
    %v5024 = vor.u32 %v5021, %v5022
    %v5025 = vsel %vm5012, %v5017, %v5024
    %v5026 = vrot.slane %v5021, 4
    %v5028 = vshrl.u32 %v4916, 16
    %v5030 = vrot.slane %v5028, 7
    %v5031 = vshll.u32 %v4916, 16
    %v5033 = vor.u32 %v5030, %v5031
    %v5034 = vsel %vm5012, %v5026, %v5033
    %v5036 = vshrl.u32 %v4917, 16
    %v5038 = vrot.slane %v5036, 7
    %v5039 = vrot.slane %v5038, 4
    %v5041 = vshrl.u32 %v4918, 16
    %v5043 = vrot.slane %v5041, 7
    %v5044 = vshll.u32 %v4918, 16
    %v5046 = vor.u32 %v5043, %v5044
    %v5047 = vsel %vm5012, %v5039, %v5046
    %v5048 = vrot.slane %v5043, 4
    %v5050 = vshrl.u32 %v4919, 16
    %v5052 = vrot.slane %v5050, 7
    %v5053 = vshll.u32 %v4919, 16
    %v5055 = vor.u32 %v5052, %v5053
    %v5056 = vsel %vm5012, %v5048, %v5055
    %v5058 = vshrl.u32 %v4920, 16
    %v5060 = vrot.slane %v5058, 7
    %v5061 = vrot.slane %v5060, 4
    %v5063 = vshrl.u32 %v4921, 16
    %v5065 = vrot.slane %v5063, 7
    %v5066 = vshll.u32 %v4921, 16
    %v5068 = vor.u32 %v5065, %v5066
    %v5069 = vsel %vm5012, %v5061, %v5068
    %v5070 = vrot.slane %v5065, 4
    %v5072 = vshrl.u32 %v4922, 16
    %v5074 = vrot.slane %v5072, 7
    %v5075 = vshll.u32 %v4922, 16
    %v5077 = vor.u32 %v5074, %v5075
    %v5078 = vsel %vm5012, %v5070, %v5077
    %v5080 = vshrl.u32 %v4923, 16
    %v5082 = vrot.slane %v5080, 7
    %v5083 = vrot.slane %v5082, 4
    %v5085 = vshrl.u32 %v4924, 16
    %v5087 = vrot.slane %v5085, 7
    %v5088 = vshll.u32 %v4924, 16
    %v5090 = vor.u32 %v5087, %v5088
    %v5091 = vsel %vm5012, %v5083, %v5090
    %v5092 = vrot.slane %v5087, 4
    %v5094 = vshrl.u32 %v4925, 16
    %v5096 = vrot.slane %v5094, 7
    %v5097 = vshll.u32 %v4925, 16
    %v5099 = vor.u32 %v5096, %v5097
    %v5100 = vsel %vm5012, %v5092, %v5099
    %v5102 = vshrl.u32 %v4926, 16
    %v5104 = vrot.slane %v5102, 7
    %v5105 = vrot.slane %v5104, 4
    %v5107 = vshrl.u32 %v4927, 16
    %v5109 = vrot.slane %v5107, 7
    %v5110 = vshll.u32 %v4927, 16
    %v5112 = vor.u32 %v5109, %v5110
    %v5113 = vsel %vm5012, %v5105, %v5112
    %v5114 = vrot.slane %v5109, 4
    %v5116 = vshrl.u32 %v4928, 16
    %v5118 = vrot.slane %v5116, 7
    %v5119 = vshll.u32 %v4928, 16
    %v5121 = vor.u32 %v5118, %v5119
    %v5122 = vsel %vm5012, %v5114, %v5121
    %v5124 = vshrl.u32 %v4929, 16
    %v5126 = vrot.slane %v5124, 7
    %v5127 = vrot.slane %v5126, 4
    %v5129 = vshrl.u32 %v4930, 16
    %v5131 = vrot.slane %v5129, 7
    %v5132 = vshll.u32 %v4930, 16
    %v5134 = vor.u32 %v5131, %v5132
    %v5135 = vsel %vm5012, %v5127, %v5134
    %v5136 = vrot.slane %v5131, 4
    %v5138 = vshrl.u32 %v4931, 16
    %v5140 = vrot.slane %v5138, 7
    %v5141 = vshll.u32 %v4931, 16
    %v5143 = vor.u32 %v5140, %v5141
    %v5144 = vsel %vm5012, %v5136, %v5143
    %v5146 = vshrl.u32 %v4932, 16
    %v5148 = vrot.slane %v5146, 7
    %v5149 = vrot.slane %v5148, 4
    %v5151 = vshrl.u32 %v4933, 16
    %v5153 = vrot.slane %v5151, 7
    %v5154 = vshll.u32 %v4933, 16
    %v5156 = vor.u32 %v5153, %v5154
    %v5157 = vsel %vm5012, %v5149, %v5156
    %v5158 = vrot.slane %v5153, 4
    %v5160 = vshrl.u32 %v4934, 16
    %v5162 = vrot.slane %v5160, 7
    %v5163 = vshll.u32 %v4934, 16
    %v5165 = vor.u32 %v5162, %v5163
    %v5166 = vsel %vm5012, %v5158, %v5165
    %v5168 = vshrl.u32 %v4935, 16
    %v5170 = vrot.slane %v5168, 7
    %v5171 = vrot.slane %v5170, 4
    %v5173 = vshrl.u32 %v4936, 16
    %v5175 = vrot.slane %v5173, 7
    %v5176 = vshll.u32 %v4936, 16
    %v5178 = vor.u32 %v5175, %v5176
    %v5179 = vsel %vm5012, %v5171, %v5178
    %v5180 = vrot.slane %v5175, 4
    %v5182 = vshrl.u32 %v4937, 16
    %v5184 = vrot.slane %v5182, 7
    %v5185 = vshll.u32 %v4937, 16
    %v5187 = vor.u32 %v5184, %v5185
    %v5188 = vsel %vm5012, %v5180, %v5187
    %v5190 = vshrl.u32 %v4938, 16
    %v5192 = vrot.slane %v5190, 7
    %v5193 = vrot.slane %v5192, 4
    %v5195 = vshrl.u32 %v4939, 16
    %v5197 = vrot.slane %v5195, 7
    %v5198 = vshll.u32 %v4939, 16
    %v5200 = vor.u32 %v5197, %v5198
    %v5201 = vsel %vm5012, %v5193, %v5200
    %v5202 = vrot.slane %v5197, 4
    %v5204 = vshrl.u32 %v4940, 16
    %v5206 = vrot.slane %v5204, 7
    %v5207 = vshll.u32 %v4940, 16
    %v5209 = vor.u32 %v5206, %v5207
    %v5210 = vsel %vm5012, %v5202, %v5209
    %v5212 = vshrl.u32 %v4941, 16
    %v5214 = vrot.slane %v5212, 7
    %v5215 = vrot.slane %v5214, 4
    %v5217 = vshrl.u32 %v4942, 16
    %v5219 = vrot.slane %v5217, 7
    %v5220 = vshll.u32 %v4942, 16
    %v5222 = vor.u32 %v5219, %v5220
    %v5223 = vsel %vm5012, %v5215, %v5222
    %v5224 = vrot.slane %v5219, 4
    %v5226 = vshrl.u32 %v4943, 16
    %v5228 = vrot.slane %v5226, 7
    %v5229 = vshll.u32 %v4943, 16
    %v5231 = vor.u32 %v5228, %v5229
    %v5232 = vsel %vm5012, %v5224, %v5231
    %v5234 = vshrl.u32 %v4944, 16
    %v5236 = vrot.slane %v5234, 7
    %v5237 = vrot.slane %v5236, 4
    %v5239 = vshrl.u32 %v4945, 16
    %v5241 = vrot.slane %v5239, 7
    %v5242 = vshll.u32 %v4945, 16
    %v5244 = vor.u32 %v5241, %v5242
    %v5245 = vsel %vm5012, %v5237, %v5244
    %v5246 = vrot.slane %v5241, 4
    %v5248 = vshrl.u32 %v4946, 16
    %v5250 = vrot.slane %v5248, 7
    %v5251 = vshll.u32 %v4946, 16
    %v5253 = vor.u32 %v5250, %v5251
    %v5254 = vsel %vm5012, %v5246, %v5253
    %v5256 = vshrl.u32 %v4947, 16
    %v5258 = vrot.slane %v5256, 7
    %v5259 = vrot.slane %v5258, 4
    %v5261 = vshrl.u32 %v4948, 16
    %v5263 = vrot.slane %v5261, 7
    %v5264 = vshll.u32 %v4948, 16
    %v5266 = vor.u32 %v5263, %v5264
    %v5267 = vsel %vm5012, %v5259, %v5266
    %v5268 = vrot.slane %v5263, 4
    %v5270 = vshrl.u32 %v4949, 16
    %v5272 = vrot.slane %v5270, 7
    %v5273 = vshll.u32 %v4949, 16
    %v5275 = vor.u32 %v5272, %v5273
    %v5276 = vsel %vm5012, %v5268, %v5275
    %v5278 = vshrl.u32 %v4950, 16
    %v5280 = vrot.slane %v5278, 7
    %v5281 = vrot.slane %v5280, 4
    %v5283 = vshrl.u32 %v4951, 16
    %v5285 = vrot.slane %v5283, 7
    %v5286 = vshll.u32 %v4951, 16
    %v5288 = vor.u32 %v5285, %v5286
    %v5289 = vsel %vm5012, %v5281, %v5288
    %v5290 = vrot.slane %v5285, 4
    %v5292 = vshrl.u32 %v4952, 16
    %v5294 = vrot.slane %v5292, 7
    %v5295 = vshll.u32 %v4952, 16
    %v5297 = vor.u32 %v5294, %v5295
    %v5298 = vsel %vm5012, %v5290, %v5297
    %v5300 = vshrl.u32 %v4953, 16
    %v5302 = vrot.slane %v5300, 7
    %v5303 = vrot.slane %v5302, 4
    %v5305 = vshrl.u32 %v4954, 16
    %v5307 = vrot.slane %v5305, 7
    %v5308 = vshll.u32 %v4954, 16
    %v5310 = vor.u32 %v5307, %v5308
    %v5311 = vsel %vm5012, %v5303, %v5310
    %v5312 = vrot.slane %v5307, 4
    %v5314 = vshrl.u32 %v4955, 16
    %v5316 = vrot.slane %v5314, 7
    %v5317 = vshll.u32 %v4955, 16
    %v5319 = vor.u32 %v5316, %v5317
    %v5320 = vsel %vm5012, %v5312, %v5319
    %v5322 = vshrl.u32 %v4956, 16
    %v5324 = vrot.slane %v5322, 7
    %v5325 = vrot.slane %v5324, 4
    %v5327 = vshrl.u32 %v4957, 16
    %v5329 = vrot.slane %v5327, 7
    %v5330 = vshll.u32 %v4957, 16
    %v5332 = vor.u32 %v5329, %v5330
    %v5333 = vsel %vm5012, %v5325, %v5332
    %v5334 = vrot.slane %v5329, 4
    %v5336 = vshrl.u32 %v4958, 16
    %v5338 = vrot.slane %v5336, 7
    %v5339 = vshll.u32 %v4958, 16
    %v5341 = vor.u32 %v5338, %v5339
    %v5342 = vsel %vm5012, %v5334, %v5341
    %v5344 = vshrl.u32 %v4959, 16
    %v5346 = vrot.slane %v5344, 7
    %v5347 = vrot.slane %v5346, 4
    %v5349 = vshrl.u32 %v4960, 16
    %v5351 = vrot.slane %v5349, 7
    %v5352 = vshll.u32 %v4960, 16
    %v5354 = vor.u32 %v5351, %v5352
    %v5355 = vsel %vm5012, %v5347, %v5354
    %v5356 = vrot.slane %v5351, 4
    %v5358 = vshrl.u32 %v4961, 16
    %v5360 = vrot.slane %v5358, 7
    %v5361 = vshll.u32 %v4961, 16
    %v5363 = vor.u32 %v5360, %v5361
    %v5364 = vsel %vm5012, %v5356, %v5363
    %v5366 = vshrl.u32 %v4962, 16
    %v5368 = vrot.slane %v5366, 7
    %v5369 = vrot.slane %v5368, 4
    %v5371 = vshrl.u32 %v4963, 16
    %v5373 = vrot.slane %v5371, 7
    %v5374 = vshll.u32 %v4963, 16
    %v5376 = vor.u32 %v5373, %v5374
    %v5377 = vsel %vm5012, %v5369, %v5376
    %v5378 = vrot.slane %v5373, 4
    %v5380 = vshrl.u32 %v4964, 16
    %v5382 = vrot.slane %v5380, 7
    %v5383 = vshll.u32 %v4964, 16
    %v5385 = vor.u32 %v5382, %v5383
    %v5386 = vsel %vm5012, %v5378, %v5385
    %v5388 = vshrl.u32 %v4965, 16
    %v5390 = vrot.slane %v5388, 7
    %v5391 = vrot.slane %v5390, 4
    %v5393 = vshrl.u32 %v4966, 16
    %v5395 = vrot.slane %v5393, 7
    %v5396 = vshll.u32 %v4966, 16
    %v5398 = vor.u32 %v5395, %v5396
    %v5399 = vsel %vm5012, %v5391, %v5398
    %v5400 = vrot.slane %v5395, 4
    %v5402 = vshrl.u32 %v4967, 16
    %v5404 = vrot.slane %v5402, 7
    %v5405 = vshll.u32 %v4967, 16
    %v5407 = vor.u32 %v5404, %v5405
    %v5408 = vsel %vm5012, %v5400, %v5407
    %v5410 = vshrl.u32 %v4968, 16
    %v5412 = vrot.slane %v5410, 7
    %v5413 = vrot.slane %v5412, 4
    %v5415 = vshrl.u32 %v4969, 16
    %v5417 = vrot.slane %v5415, 7
    %v5418 = vshll.u32 %v4969, 16
    %v5420 = vor.u32 %v5417, %v5418
    %v5421 = vsel %vm5012, %v5413, %v5420
    %v5422 = vrot.slane %v5417, 4
    %v5424 = vshrl.u32 %v4970, 16
    %v5426 = vrot.slane %v5424, 7
    %v5427 = vshll.u32 %v4970, 16
    %v5429 = vor.u32 %v5426, %v5427
    %v5430 = vsel %vm5012, %v5422, %v5429
    %v5432 = vshrl.u32 %v4971, 16
    %v5434 = vrot.slane %v5432, 7
    %v5435 = vrot.slane %v5434, 4
    %v5437 = vshrl.u32 %v4972, 16
    %v5439 = vrot.slane %v5437, 7
    %v5440 = vshll.u32 %v4972, 16
    %v5442 = vor.u32 %v5439, %v5440
    %v5443 = vsel %vm5012, %v5435, %v5442
    %v5444 = vrot.slane %v5439, 4
    %v5446 = vshrl.u32 %v4973, 16
    %v5448 = vrot.slane %v5446, 7
    %v5449 = vshll.u32 %v4973, 16
    %v5451 = vor.u32 %v5448, %v5449
    %v5452 = vsel %vm5012, %v5444, %v5451
    %v5454 = vshrl.u32 %v4974, 16
    %v5456 = vrot.slane %v5454, 7
    %v5457 = vrot.slane %v5456, 4
    %v5459 = vshrl.u32 %v4975, 16
    %v5461 = vrot.slane %v5459, 7
    %v5462 = vshll.u32 %v4975, 16
    %v5464 = vor.u32 %v5461, %v5462
    %v5465 = vsel %vm5012, %v5457, %v5464
    %v5466 = vrot.slane %v5461, 4
    %v5468 = vshrl.u32 %v4976, 16
    %v5470 = vrot.slane %v5468, 7
    %v5471 = vshll.u32 %v4976, 16
    %v5473 = vor.u32 %v5470, %v5471
    %v5474 = vsel %vm5012, %v5466, %v5473
    %v5476 = vshrl.u32 %v4977, 16
    %v5478 = vrot.slane %v5476, 7
    %v5479 = vrot.slane %v5478, 4
    %v5481 = vshrl.u32 %v4978, 16
    %v5483 = vrot.slane %v5481, 7
    %v5484 = vshll.u32 %v4978, 16
    %v5486 = vor.u32 %v5483, %v5484
    %v5487 = vsel %vm5012, %v5479, %v5486
    %v5488 = vrot.slane %v5483, 4
    %v5490 = vshrl.u32 %v4979, 16
    %v5492 = vrot.slane %v5490, 7
    %v5493 = vshll.u32 %v4979, 16
    %v5495 = vor.u32 %v5492, %v5493
    %v5496 = vsel %vm5012, %v5488, %v5495
    %v5498 = vshrl.u32 %v4980, 16
    %v5500 = vrot.slane %v5498, 7
    %v5501 = vrot.slane %v5500, 4
    %v5503 = vshrl.u32 %v4981, 16
    %v5505 = vrot.slane %v5503, 7
    %v5506 = vshll.u32 %v4981, 16
    %v5508 = vor.u32 %v5505, %v5506
    %v5509 = vsel %vm5012, %v5501, %v5508
    %v5510 = vrot.slane %v5505, 4
    %v5512 = vshrl.u32 %v4982, 16
    %v5514 = vrot.slane %v5512, 7
    %v5515 = vshll.u32 %v4982, 16
    %v5517 = vor.u32 %v5514, %v5515
    %v5518 = vsel %vm5012, %v5510, %v5517
    %v5520 = vshrl.u32 %v4983, 16
    %v5522 = vrot.slane %v5520, 7
    %v5523 = vrot.slane %v5522, 4
    %v5525 = vshrl.u32 %v4984, 16
    %v5527 = vrot.slane %v5525, 7
    %v5528 = vshll.u32 %v4984, 16
    %v5530 = vor.u32 %v5527, %v5528
    %v5531 = vsel %vm5012, %v5523, %v5530
    %v5532 = vrot.slane %v5527, 4
    %v5534 = vshrl.u32 %v4985, 16
    %v5536 = vrot.slane %v5534, 7
    %v5537 = vshll.u32 %v4985, 16
    %v5539 = vor.u32 %v5536, %v5537
    %v5540 = vsel %vm5012, %v5532, %v5539
    %v5542 = vshrl.u32 %v4986, 16
    %v5544 = vrot.slane %v5542, 7
    %v5545 = vrot.slane %v5544, 4
    %v5547 = vshrl.u32 %v4987, 16
    %v5549 = vrot.slane %v5547, 7
    %v5550 = vshll.u32 %v4987, 16
    %v5552 = vor.u32 %v5549, %v5550
    %v5553 = vsel %vm5012, %v5545, %v5552
    %v5554 = vrot.slane %v5549, 4
    %v5556 = vshrl.u32 %v4988, 16
    %v5558 = vrot.slane %v5556, 7
    %v5559 = vshll.u32 %v4988, 16
    %v5561 = vor.u32 %v5558, %v5559
    %v5562 = vsel %vm5012, %v5554, %v5561
    %v5564 = vshrl.u32 %v4989, 16
    %v5566 = vrot.slane %v5564, 7
    %v5567 = vrot.slane %v5566, 4
    %v5569 = vshrl.u32 %v4990, 16
    %v5571 = vrot.slane %v5569, 7
    %v5572 = vshll.u32 %v4990, 16
    %v5574 = vor.u32 %v5571, %v5572
    %v5575 = vsel %vm5012, %v5567, %v5574
    %v5576 = vrot.slane %v5571, 4
    %v5578 = vshrl.u32 %v4991, 16
    %v5580 = vrot.slane %v5578, 7
    %v5581 = vshll.u32 %v4991, 16
    %v5583 = vor.u32 %v5580, %v5581
    %v5584 = vsel %vm5012, %v5576, %v5583
    %v5586 = vshrl.u32 %v4992, 16
    %v5588 = vrot.slane %v5586, 7
    %v5589 = vrot.slane %v5588, 4
    %v5591 = vshrl.u32 %v4993, 16
    %v5593 = vrot.slane %v5591, 7
    %v5594 = vshll.u32 %v4993, 16
    %v5596 = vor.u32 %v5593, %v5594
    %v5597 = vsel %vm5012, %v5589, %v5596
    %v5598 = vrot.slane %v5593, 4
    %v5600 = vshrl.u32 %v4994, 16
    %v5602 = vrot.slane %v5600, 7
    %v5603 = vshll.u32 %v4994, 16
    %v5605 = vor.u32 %v5602, %v5603
    %v5606 = vsel %vm5012, %v5598, %v5605
    %v5608 = vshrl.u32 %v4995, 16
    %v5610 = vrot.slane %v5608, 7
    %v5611 = vrot.slane %v5610, 4
    %v5613 = vshrl.u32 %v4996, 16
    %v5615 = vrot.slane %v5613, 7
    %v5616 = vshll.u32 %v4996, 16
    %v5618 = vor.u32 %v5615, %v5616
    %v5619 = vsel %vm5012, %v5611, %v5618
    %v5620 = vrot.slane %v5615, 4
    %v5622 = vshrl.u32 %v4997, 16
    %v5624 = vrot.slane %v5622, 7
    %v5625 = vshll.u32 %v4997, 16
    %v5627 = vor.u32 %v5624, %v5625
    %v5628 = vsel %vm5012, %v5620, %v5627
    %v5630 = vshrl.u32 %v4998, 16
    %v5632 = vrot.slane %v5630, 7
    %v5633 = vrot.slane %v5632, 4
    %v5635 = vshrl.u32 %v4999, 16
    %v5637 = vrot.slane %v5635, 7
    %v5638 = vshll.u32 %v4999, 16
    %v5640 = vor.u32 %v5637, %v5638
    %v5641 = vsel %vm5012, %v5633, %v5640
    %v5642 = vrot.slane %v5637, 4
    %v5644 = vshrl.u32 %v5000, 16
    %v5646 = vrot.slane %v5644, 7
    %v5647 = vshll.u32 %v5000, 16
    %v5649 = vor.u32 %v5646, %v5647
    %v5650 = vsel %vm5012, %v5642, %v5649
    %v5652 = vshrl.u32 %v5001, 16
    %v5654 = vrot.slane %v5652, 7
    %v5655 = vrot.slane %v5654, 4
    %v5657 = vshrl.u32 %v5002, 16
    %v5659 = vrot.slane %v5657, 7
    %v5660 = vshll.u32 %v5002, 16
    %v5662 = vor.u32 %v5659, %v5660
    %v5663 = vsel %vm5012, %v5655, %v5662
    %v5664 = vrot.slane %v5659, 4
    %v5666 = vshrl.u32 %v5003, 16
    %v5668 = vrot.slane %v5666, 7
    %v5669 = vshll.u32 %v5003, 16
    %v5671 = vor.u32 %v5668, %v5669
    %v5672 = vsel %vm5012, %v5664, %v5671
    %v5674 = vshrl.u32 %v5004, 16
    %v5676 = vrot.slane %v5674, 7
    %v5677 = vrot.slane %v5676, 4
    %v5679 = vshrl.u32 %v5005, 16
    %v5681 = vrot.slane %v5679, 7
    %v5682 = vshll.u32 %v5005, 16
    %v5684 = vor.u32 %v5681, %v5682
    %v5685 = vsel %vm5012, %v5677, %v5684
    %v5686 = vrot.slane %v5681, 4
    %v5688 = vshrl.u32 %v5006, 16
    %v5690 = vrot.slane %v5688, 7
    %v5691 = vshll.u32 %v5006, 16
    %v5693 = vor.u32 %v5690, %v5691
    %v5694 = vsel %vm5012, %v5686, %v5693
    %v5696 = vshrl.u32 %v5007, 16
    %v5698 = vrot.slane %v5696, 7
    %v5699 = vrot.slane %v5698, 4
    %v5701 = vshrl.u32 %v5008, 16
    %v5703 = vrot.slane %v5701, 7
    %v5704 = vshll.u32 %v5008, 16
    %v5706 = vor.u32 %v5703, %v5704
    %v5707 = vsel %vm5012, %v5699, %v5706
    %v5708 = vrot.slane %v5703, 4
    %v5710 = vshrl.u32 %v5009, 16
    %v5712 = vrot.slane %v5710, 7
    %v5713 = vshll.u32 %v5009, 16
    %v5715 = vor.u32 %v5712, %v5713
    %v5716 = vsel %vm5012, %v5708, %v5715
    %v5717 = vld [vmem:[#allocation2 + $0xc] sm:$0x1]
    %v5718 = vld [vmem:[#allocation2 + $0x1c] sm:$0x1]
    %v5719 = vld [vmem:[#allocation2 + $0x2c] sm:$0x1]
    %v5720 = vld [vmem:[#allocation2 + $0x3c] sm:$0x1]
    %v5721 = vld [vmem:[#allocation2 + $0x4c] sm:$0x1]
    %v5722 = vld [vmem:[#allocation2 + $0x5c] sm:$0x1]
    %v5723 = vld [vmem:[#allocation2 + $0x6c] sm:$0x1]
    %v5724 = vld [vmem:[#allocation2 + $0x7c] sm:$0x1]
    %v5725 = vld [vmem:[#allocation2 + $0x8c] sm:$0x1]
    %v5726 = vld [vmem:[#allocation2 + $0x9c] sm:$0x1]
    %v5727 = vld [vmem:[#allocation2 + $0xac] sm:$0x1]
    %v5728 = vld [vmem:[#allocation2 + $0xbc] sm:$0x1]
    %v5729 = vld [vmem:[#allocation2 + $0xcc] sm:$0x1]
    %v5730 = vld [vmem:[#allocation2 + $0xdc] sm:$0x1]
    %v5731 = vld [vmem:[#allocation2 + $0xec] sm:$0x1]
    %v5732 = vld [vmem:[#allocation2 + $0xfc] sm:$0x1]
    %v5733 = vld [vmem:[#allocation2 + $0x12c] sm:$0x1]
    %v5734 = vld [vmem:[#allocation2 + $0x13c] sm:$0x1]
    %v5735 = vld [vmem:[#allocation2 + $0x14c] sm:$0x1]
    %v5736 = vld [vmem:[#allocation2 + $0x15c] sm:$0x1]
    %v5737 = vld [vmem:[#allocation2 + $0x16c] sm:$0x1]
    %v5738 = vld [vmem:[#allocation2 + $0x17c] sm:$0x1]
    %v5739 = vld [vmem:[#allocation2 + $0x18c] sm:$0x1]
    %v5740 = vld [vmem:[#allocation2 + $0x19c] sm:$0x1]
    %v5741 = vld [vmem:[#allocation2 + $0x1ac] sm:$0x1]
    %v5742 = vld [vmem:[#allocation2 + $0x1bc] sm:$0x1]
    %v5743 = vld [vmem:[#allocation2 + $0x1cc] sm:$0x1]
    %v5744 = vld [vmem:[#allocation2 + $0x1dc] sm:$0x1]
    %v5745 = vld [vmem:[#allocation2 + $0x1ec] sm:$0x1]
    %v5746 = vld [vmem:[#allocation2 + $0x1fc] sm:$0x1]
    %v5747 = vld [vmem:[#allocation2 + $0x20c] sm:$0x1]
    %v5748 = vld [vmem:[#allocation2 + $0x21c] sm:$0x1]
    %v5749 = vrot.slane %v5019, 4
    %v5750 = vrot.slane %v5022, 5
    %v5751 = vor.u32 %v5749, %v5750
    %v5752 = vrot.slane %v5751, 4
    %v5753 = vrot.slane %v5031, 5
    %v5754 = vsel %vm399, %v5752, %v5753
    %v5755 = vrot.slane %v5028, 4
    %v5756 = vor.u32 %v5755, %v5753
    %v5757 = vrot.slane %v5756, 4
    %v5759 = vshll.u32 %v5717, 16
    %v5761 = vrot.slane %v5759, 5
    %v5762 = vsel %vm399, %v5757, %v5761
    %v5763 = vrot.slane %v5041, 4
    %v5764 = vrot.slane %v5044, 5
    %v5765 = vor.u32 %v5763, %v5764
    %v5766 = vrot.slane %v5765, 4
    %v5767 = vrot.slane %v5053, 5
    %v5768 = vsel %vm399, %v5766, %v5767
    %v5769 = vrot.slane %v5050, 4
    %v5770 = vor.u32 %v5769, %v5767
    %v5771 = vrot.slane %v5770, 4
    %v5773 = vshll.u32 %v5718, 16
    %v5775 = vrot.slane %v5773, 5
    %v5776 = vsel %vm399, %v5771, %v5775
    %v5777 = vrot.slane %v5063, 4
    %v5778 = vrot.slane %v5066, 5
    %v5779 = vor.u32 %v5777, %v5778
    %v5780 = vrot.slane %v5779, 4
    %v5781 = vrot.slane %v5075, 5
    %v5782 = vsel %vm399, %v5780, %v5781
    %v5783 = vrot.slane %v5072, 4
    %v5784 = vor.u32 %v5783, %v5781
    %v5785 = vrot.slane %v5784, 4
    %v5787 = vshll.u32 %v5719, 16
    %v5789 = vrot.slane %v5787, 5
    %v5790 = vsel %vm399, %v5785, %v5789
    %v5791 = vrot.slane %v5085, 4
    %v5792 = vrot.slane %v5088, 5
    %v5793 = vor.u32 %v5791, %v5792
    %v5794 = vrot.slane %v5793, 4
    %v5795 = vrot.slane %v5097, 5
    %v5796 = vsel %vm399, %v5794, %v5795
    %v5797 = vrot.slane %v5094, 4
    %v5798 = vor.u32 %v5797, %v5795
    %v5799 = vrot.slane %v5798, 4
    %v5801 = vshll.u32 %v5720, 16
    %v5803 = vrot.slane %v5801, 5
    %v5804 = vsel %vm399, %v5799, %v5803
    %v5805 = vrot.slane %v5107, 4
    %v5806 = vrot.slane %v5110, 5
    %v5807 = vor.u32 %v5805, %v5806
    %v5808 = vrot.slane %v5807, 4
    %v5809 = vrot.slane %v5119, 5
    %v5810 = vsel %vm399, %v5808, %v5809
    %v5811 = vrot.slane %v5116, 4
    %v5812 = vor.u32 %v5811, %v5809
    %v5813 = vrot.slane %v5812, 4
    %v5815 = vshll.u32 %v5721, 16
    %v5817 = vrot.slane %v5815, 5
    %v5818 = vsel %vm399, %v5813, %v5817
    %v5819 = vrot.slane %v5129, 4
    %v5820 = vrot.slane %v5132, 5
    %v5821 = vor.u32 %v5819, %v5820
    %v5822 = vrot.slane %v5821, 4
    %v5823 = vrot.slane %v5141, 5
    %v5824 = vsel %vm399, %v5822, %v5823
    %v5825 = vrot.slane %v5138, 4
    %v5826 = vor.u32 %v5825, %v5823
    %v5827 = vrot.slane %v5826, 4
    %v5829 = vshll.u32 %v5722, 16
    %v5831 = vrot.slane %v5829, 5
    %v5832 = vsel %vm399, %v5827, %v5831
    %v5833 = vrot.slane %v5151, 4
    %v5834 = vrot.slane %v5154, 5
    %v5835 = vor.u32 %v5833, %v5834
    %v5836 = vrot.slane %v5835, 4
    %v5837 = vrot.slane %v5163, 5
    %v5838 = vsel %vm399, %v5836, %v5837
    %v5839 = vrot.slane %v5160, 4
    %v5840 = vor.u32 %v5839, %v5837
    %v5841 = vrot.slane %v5840, 4
    %v5843 = vshll.u32 %v5723, 16
    %v5845 = vrot.slane %v5843, 5
    %v5846 = vsel %vm399, %v5841, %v5845
    %v5847 = vrot.slane %v5173, 4
    %v5848 = vrot.slane %v5176, 5
    %v5849 = vor.u32 %v5847, %v5848
    %v5850 = vrot.slane %v5849, 4
    %v5851 = vrot.slane %v5185, 5
    %v5852 = vsel %vm399, %v5850, %v5851
    %v5853 = vrot.slane %v5182, 4
    %v5854 = vor.u32 %v5853, %v5851
    %v5855 = vrot.slane %v5854, 4
    %v5857 = vshll.u32 %v5724, 16
    %v5859 = vrot.slane %v5857, 5
    %v5860 = vsel %vm399, %v5855, %v5859
    %v5861 = vrot.slane %v5195, 4
    %v5862 = vrot.slane %v5198, 5
    %v5863 = vor.u32 %v5861, %v5862
    %v5864 = vrot.slane %v5863, 4
    %v5865 = vrot.slane %v5207, 5
    %v5866 = vsel %vm399, %v5864, %v5865
    %v5867 = vrot.slane %v5204, 4
    %v5868 = vor.u32 %v5867, %v5865
    %v5869 = vrot.slane %v5868, 4
    %v5871 = vshll.u32 %v5725, 16
    %v5873 = vrot.slane %v5871, 5
    %v5874 = vsel %vm399, %v5869, %v5873
    %v5875 = vrot.slane %v5217, 4
    %v5876 = vrot.slane %v5220, 5
    %v5877 = vor.u32 %v5875, %v5876
    %v5878 = vrot.slane %v5877, 4
    %v5879 = vrot.slane %v5229, 5
    %v5880 = vsel %vm399, %v5878, %v5879
    %v5881 = vrot.slane %v5226, 4
    %v5882 = vor.u32 %v5881, %v5879
    %v5883 = vrot.slane %v5882, 4
    %v5885 = vshll.u32 %v5726, 16
    %v5887 = vrot.slane %v5885, 5
    %v5888 = vsel %vm399, %v5883, %v5887
    %v5889 = vrot.slane %v5239, 4
    %v5890 = vrot.slane %v5242, 5
    %v5891 = vor.u32 %v5889, %v5890
    %v5892 = vrot.slane %v5891, 4
    %v5893 = vrot.slane %v5251, 5
    %v5894 = vsel %vm399, %v5892, %v5893
    %v5895 = vrot.slane %v5248, 4
    %v5896 = vor.u32 %v5895, %v5893
    %v5897 = vrot.slane %v5896, 4
    %v5899 = vshll.u32 %v5727, 16
    %v5901 = vrot.slane %v5899, 5
    %v5902 = vsel %vm399, %v5897, %v5901
    %v5903 = vrot.slane %v5261, 4
    %v5904 = vrot.slane %v5264, 5
    %v5905 = vor.u32 %v5903, %v5904
    %v5906 = vrot.slane %v5905, 4
    %v5907 = vrot.slane %v5273, 5
    %v5908 = vsel %vm399, %v5906, %v5907
    %v5909 = vrot.slane %v5270, 4
    %v5910 = vor.u32 %v5909, %v5907
    %v5911 = vrot.slane %v5910, 4
    %v5913 = vshll.u32 %v5728, 16
    %v5915 = vrot.slane %v5913, 5
    %v5916 = vsel %vm399, %v5911, %v5915
    %v5917 = vrot.slane %v5283, 4
    %v5918 = vrot.slane %v5286, 5
    %v5919 = vor.u32 %v5917, %v5918
    %v5920 = vrot.slane %v5919, 4
    %v5921 = vrot.slane %v5295, 5
    %v5922 = vsel %vm399, %v5920, %v5921
    %v5923 = vrot.slane %v5292, 4
    %v5924 = vor.u32 %v5923, %v5921
    %v5925 = vrot.slane %v5924, 4
    %v5927 = vshll.u32 %v5729, 16
    %v5929 = vrot.slane %v5927, 5
    %v5930 = vsel %vm399, %v5925, %v5929
    %v5931 = vrot.slane %v5305, 4
    %v5932 = vrot.slane %v5308, 5
    %v5933 = vor.u32 %v5931, %v5932
    %v5934 = vrot.slane %v5933, 4
    %v5935 = vrot.slane %v5317, 5
    %v5936 = vsel %vm399, %v5934, %v5935
    %v5937 = vrot.slane %v5314, 4
    %v5938 = vor.u32 %v5937, %v5935
    %v5939 = vrot.slane %v5938, 4
    %v5941 = vshll.u32 %v5730, 16
    %v5943 = vrot.slane %v5941, 5
    %v5944 = vsel %vm399, %v5939, %v5943
    %v5945 = vrot.slane %v5327, 4
    %v5946 = vrot.slane %v5330, 5
    %v5947 = vor.u32 %v5945, %v5946
    %v5948 = vrot.slane %v5947, 4
    %v5949 = vrot.slane %v5339, 5
    %v5950 = vsel %vm399, %v5948, %v5949
    %v5951 = vrot.slane %v5336, 4
    %v5952 = vor.u32 %v5951, %v5949
    %v5953 = vrot.slane %v5952, 4
    %v5955 = vshll.u32 %v5731, 16
    %v5957 = vrot.slane %v5955, 5
    %v5958 = vsel %vm399, %v5953, %v5957
    %v5959 = vrot.slane %v5349, 4
    %v5960 = vrot.slane %v5352, 5
    %v5961 = vor.u32 %v5959, %v5960
    %v5962 = vrot.slane %v5961, 4
    %v5963 = vrot.slane %v5361, 5
    %v5964 = vsel %vm399, %v5962, %v5963
    %v5965 = vrot.slane %v5358, 4
    %v5966 = vor.u32 %v5965, %v5963
    %v5967 = vrot.slane %v5966, 4
    %v5969 = vshll.u32 %v5732, 16
    %v5971 = vrot.slane %v5969, 5
    %v5972 = vsel %vm399, %v5967, %v5971
    %v5973 = vrot.slane %v5371, 4
    %v5974 = vrot.slane %v5374, 5
    %v5975 = vor.u32 %v5973, %v5974
    %v5976 = vrot.slane %v5975, 4
    %v5977 = vrot.slane %v5383, 5
    %v5978 = vsel %vm399, %v5976, %v5977
    %v5979 = vrot.slane %v5380, 4
    %v5980 = vor.u32 %v5979, %v5977
    %v5981 = vrot.slane %v5980, 4
    %v5983 = vshll.u32 %v5733, 16
    %v5985 = vrot.slane %v5983, 5
    %v5986 = vsel %vm399, %v5981, %v5985
    %v5987 = vrot.slane %v5393, 4
    %v5988 = vrot.slane %v5396, 5
    %v5989 = vor.u32 %v5987, %v5988
    %v5990 = vrot.slane %v5989, 4
    %v5991 = vrot.slane %v5405, 5
    %v5992 = vsel %vm399, %v5990, %v5991
    %v5993 = vrot.slane %v5402, 4
    %v5994 = vor.u32 %v5993, %v5991
    %v5995 = vrot.slane %v5994, 4
    %v5997 = vshll.u32 %v5734, 16
    %v5999 = vrot.slane %v5997, 5
    %v6000 = vsel %vm399, %v5995, %v5999
    %v6001 = vrot.slane %v5415, 4
    %v6002 = vrot.slane %v5418, 5
    %v6003 = vor.u32 %v6001, %v6002
    %v6004 = vrot.slane %v6003, 4
    %v6005 = vrot.slane %v5427, 5
    %v6006 = vsel %vm399, %v6004, %v6005
    %v6007 = vrot.slane %v5424, 4
    %v6008 = vor.u32 %v6007, %v6005
    %v6009 = vrot.slane %v6008, 4
    %v6011 = vshll.u32 %v5735, 16
    %v6013 = vrot.slane %v6011, 5
    %v6014 = vsel %vm399, %v6009, %v6013
    %v6015 = vrot.slane %v5437, 4
    %v6016 = vrot.slane %v5440, 5
    %v6017 = vor.u32 %v6015, %v6016
    %v6018 = vrot.slane %v6017, 4
    %v6019 = vrot.slane %v5449, 5
    %v6020 = vsel %vm399, %v6018, %v6019
    %v6021 = vrot.slane %v5446, 4
    %v6022 = vor.u32 %v6021, %v6019
    %v6023 = vrot.slane %v6022, 4
    %v6025 = vshll.u32 %v5736, 16
    %v6027 = vrot.slane %v6025, 5
    %v6028 = vsel %vm399, %v6023, %v6027
    %v6029 = vrot.slane %v5459, 4
    %v6030 = vrot.slane %v5462, 5
    %v6031 = vor.u32 %v6029, %v6030
    %v6032 = vrot.slane %v6031, 4
    %v6033 = vrot.slane %v5471, 5
    %v6034 = vsel %vm399, %v6032, %v6033
    %v6035 = vrot.slane %v5468, 4
    %v6036 = vor.u32 %v6035, %v6033
    %v6037 = vrot.slane %v6036, 4
    %v6039 = vshll.u32 %v5737, 16
    %v6041 = vrot.slane %v6039, 5
    %v6042 = vsel %vm399, %v6037, %v6041
    %v6043 = vrot.slane %v5481, 4
    %v6044 = vrot.slane %v5484, 5
    %v6045 = vor.u32 %v6043, %v6044
    %v6046 = vrot.slane %v6045, 4
    %v6047 = vrot.slane %v5493, 5
    %v6048 = vsel %vm399, %v6046, %v6047
    %v6049 = vrot.slane %v5490, 4
    %v6050 = vor.u32 %v6049, %v6047
    %v6051 = vrot.slane %v6050, 4
    %v6053 = vshll.u32 %v5738, 16
    %v6055 = vrot.slane %v6053, 5
    %v6056 = vsel %vm399, %v6051, %v6055
    %v6057 = vrot.slane %v5503, 4
    %v6058 = vrot.slane %v5506, 5
    %v6059 = vor.u32 %v6057, %v6058
    %v6060 = vrot.slane %v6059, 4
    %v6061 = vrot.slane %v5515, 5
    %v6062 = vsel %vm399, %v6060, %v6061
    %v6063 = vrot.slane %v5512, 4
    %v6064 = vor.u32 %v6063, %v6061
    %v6065 = vrot.slane %v6064, 4
    %v6067 = vshll.u32 %v5739, 16
    %v6069 = vrot.slane %v6067, 5
    %v6070 = vsel %vm399, %v6065, %v6069
    %v6071 = vrot.slane %v5525, 4
    %v6072 = vrot.slane %v5528, 5
    %v6073 = vor.u32 %v6071, %v6072
    %v6074 = vrot.slane %v6073, 4
    %v6075 = vrot.slane %v5537, 5
    %v6076 = vsel %vm399, %v6074, %v6075
    %v6077 = vrot.slane %v5534, 4
    %v6078 = vor.u32 %v6077, %v6075
    %v6079 = vrot.slane %v6078, 4
    %v6081 = vshll.u32 %v5740, 16
    %v6083 = vrot.slane %v6081, 5
    %v6084 = vsel %vm399, %v6079, %v6083
    %v6085 = vrot.slane %v5547, 4
    %v6086 = vrot.slane %v5550, 5
    %v6087 = vor.u32 %v6085, %v6086
    %v6088 = vrot.slane %v6087, 4
    %v6089 = vrot.slane %v5559, 5
    %v6090 = vsel %vm399, %v6088, %v6089
    %v6091 = vrot.slane %v5556, 4
    %v6092 = vor.u32 %v6091, %v6089
    %v6093 = vrot.slane %v6092, 4
    %v6095 = vshll.u32 %v5741, 16
    %v6097 = vrot.slane %v6095, 5
    %v6098 = vsel %vm399, %v6093, %v6097
    %v6099 = vrot.slane %v5569, 4
    %v6100 = vrot.slane %v5572, 5
    %v6101 = vor.u32 %v6099, %v6100
    %v6102 = vrot.slane %v6101, 4
    %v6103 = vrot.slane %v5581, 5
    %v6104 = vsel %vm399, %v6102, %v6103
    %v6105 = vrot.slane %v5578, 4
    %v6106 = vor.u32 %v6105, %v6103
    %v6107 = vrot.slane %v6106, 4
    %v6109 = vshll.u32 %v5742, 16
    %v6111 = vrot.slane %v6109, 5
    %v6112 = vsel %vm399, %v6107, %v6111
    %v6113 = vrot.slane %v5591, 4
    %v6114 = vrot.slane %v5594, 5
    %v6115 = vor.u32 %v6113, %v6114
    %v6116 = vrot.slane %v6115, 4
    %v6117 = vrot.slane %v5603, 5
    %v6118 = vsel %vm399, %v6116, %v6117
    %v6119 = vrot.slane %v5600, 4
    %v6120 = vor.u32 %v6119, %v6117
    %v6121 = vrot.slane %v6120, 4
    %v6123 = vshll.u32 %v5743, 16
    %v6125 = vrot.slane %v6123, 5
    %v6126 = vsel %vm399, %v6121, %v6125
    %v6127 = vrot.slane %v5613, 4
    %v6128 = vrot.slane %v5616, 5
    %v6129 = vor.u32 %v6127, %v6128
    %v6130 = vrot.slane %v6129, 4
    %v6131 = vrot.slane %v5625, 5
    %v6132 = vsel %vm399, %v6130, %v6131
    %v6133 = vrot.slane %v5622, 4
    %v6134 = vor.u32 %v6133, %v6131
    %v6135 = vrot.slane %v6134, 4
    %v6137 = vshll.u32 %v5744, 16
    %v6139 = vrot.slane %v6137, 5
    %v6140 = vsel %vm399, %v6135, %v6139
    %v6141 = vrot.slane %v5635, 4
    %v6142 = vrot.slane %v5638, 5
    %v6143 = vor.u32 %v6141, %v6142
    %v6144 = vrot.slane %v6143, 4
    %v6145 = vrot.slane %v5647, 5
    %v6146 = vsel %vm399, %v6144, %v6145
    %v6147 = vrot.slane %v5644, 4
    %v6148 = vor.u32 %v6147, %v6145
    %v6149 = vrot.slane %v6148, 4
    %v6151 = vshll.u32 %v5745, 16
    %v6153 = vrot.slane %v6151, 5
    %v6154 = vsel %vm399, %v6149, %v6153
    %v6155 = vrot.slane %v5657, 4
    %v6156 = vrot.slane %v5660, 5
    %v6157 = vor.u32 %v6155, %v6156
    %v6158 = vrot.slane %v6157, 4
    %v6159 = vrot.slane %v5669, 5
    %v6160 = vsel %vm399, %v6158, %v6159
    %v6161 = vrot.slane %v5666, 4
    %v6162 = vor.u32 %v6161, %v6159
    %v6163 = vrot.slane %v6162, 4
    %v6165 = vshll.u32 %v5746, 16
    %v6167 = vrot.slane %v6165, 5
    %v6168 = vsel %vm399, %v6163, %v6167
    %v6169 = vrot.slane %v5679, 4
    %v6170 = vrot.slane %v5682, 5
    %v6171 = vor.u32 %v6169, %v6170
    %v6172 = vrot.slane %v6171, 4
    %v6173 = vrot.slane %v5691, 5
    %v6174 = vsel %vm399, %v6172, %v6173
    %v6175 = vrot.slane %v5688, 4
    %v6176 = vor.u32 %v6175, %v6173
    %v6177 = vrot.slane %v6176, 4
    %v6179 = vshll.u32 %v5747, 16
    %v6181 = vrot.slane %v6179, 5
    %v6182 = vsel %vm399, %v6177, %v6181
    %v6183 = vrot.slane %v5701, 4
    %v6184 = vrot.slane %v5704, 5
    %v6185 = vor.u32 %v6183, %v6184
    %v6186 = vrot.slane %v6185, 4
    %v6187 = vrot.slane %v5713, 5
    %v6188 = vsel %vm399, %v6186, %v6187
    %v6189 = vrot.slane %v5710, 4
    %v6190 = vor.u32 %v6189, %v6187
    %v6191 = vrot.slane %v6190, 4
    %v6193 = vshll.u32 %v5748, 16
    %v6195 = vrot.slane %v6193, 5
    %v6196 = vsel %vm399, %v6191, %v6195
    %v6197 = vunpack.c.l.b16 %v5025
    %v6198 = vunpack.c.l.b16 %v5034
    %v6199 = vunpack.c.l.b16 %v5047
    %v6200 = vunpack.c.l.b16 %v5056
    %v6201 = vunpack.c.l.b16 %v5069
    %v6202 = vunpack.c.l.b16 %v5078
    %v6203 = vunpack.c.l.b16 %v5091
    %v6204 = vunpack.c.l.b16 %v5100
    %v6205 = vunpack.c.l.b16 %v5113
    %v6206 = vunpack.c.l.b16 %v5122
    %v6207 = vunpack.c.l.b16 %v5135
    %v6208 = vunpack.c.l.b16 %v5144
    %v6209 = vunpack.c.l.b16 %v5157
    %v6210 = vunpack.c.l.b16 %v5166
    %v6211 = vunpack.c.l.b16 %v5179
    %v6212 = vunpack.c.l.b16 %v5188
    %v6213 = vunpack.c.l.b16 %v5201
    %v6214 = vunpack.c.l.b16 %v5210
    %v6215 = vunpack.c.l.b16 %v5223
    %v6216 = vunpack.c.l.b16 %v5232
    %v6217 = vunpack.c.l.b16 %v5245
    %v6218 = vunpack.c.l.b16 %v5254
    %v6219 = vunpack.c.l.b16 %v5267
    %v6220 = vunpack.c.l.b16 %v5276
    %v6221 = vunpack.c.l.b16 %v5289
    %v6222 = vunpack.c.l.b16 %v5298
    %v6223 = vunpack.c.l.b16 %v5311
    %v6224 = vunpack.c.l.b16 %v5320
    %v6225 = vunpack.c.l.b16 %v5333
    %v6226 = vunpack.c.l.b16 %v5342
    %v6227 = vunpack.c.l.b16 %v5355
    %v6228 = vunpack.c.l.b16 %v5364
    %v6229 = vunpack.c.l.b16 %v5377
    %v6230 = vunpack.c.l.b16 %v5386
    %v6231 = vunpack.c.l.b16 %v5399
    %v6232 = vunpack.c.l.b16 %v5408
    %v6233 = vunpack.c.l.b16 %v5421
    %v6234 = vunpack.c.l.b16 %v5430
    %v6235 = vunpack.c.l.b16 %v5443
    %v6236 = vunpack.c.l.b16 %v5452
    %v6237 = vunpack.c.l.b16 %v5465
    %v6238 = vunpack.c.l.b16 %v5474
    %v6239 = vunpack.c.l.b16 %v5487
    %v6240 = vunpack.c.l.b16 %v5496
    %v6241 = vunpack.c.l.b16 %v5509
    %v6242 = vunpack.c.l.b16 %v5518
    %v6243 = vunpack.c.l.b16 %v5531
    %v6244 = vunpack.c.l.b16 %v5540
    %v6245 = vunpack.c.l.b16 %v5553
    %v6246 = vunpack.c.l.b16 %v5562
    %v6247 = vunpack.c.l.b16 %v5575
    %v6248 = vunpack.c.l.b16 %v5584
    %v6249 = vunpack.c.l.b16 %v5597
    %v6250 = vunpack.c.l.b16 %v5606
    %v6251 = vunpack.c.l.b16 %v5619
    %v6252 = vunpack.c.l.b16 %v5628
    %v6253 = vunpack.c.l.b16 %v5641
    %v6254 = vunpack.c.l.b16 %v5650
    %v6255 = vunpack.c.l.b16 %v5663
    %v6256 = vunpack.c.l.b16 %v5672
    %v6257 = vunpack.c.l.b16 %v5685
    %v6258 = vunpack.c.l.b16 %v5694
    %v6259 = vunpack.c.l.b16 %v5707
    %v6260 = vunpack.c.l.b16 %v5716
    %v6261 = vpack.c.b16 %v6198, %v6197
    %v6262 = vpack.c.b16 %v6200, %v6199
    %v6263 = vpack.c.b16 %v6202, %v6201
    %v6264 = vpack.c.b16 %v6204, %v6203
    %v6265 = vpack.c.b16 %v6206, %v6205
    %v6266 = vpack.c.b16 %v6208, %v6207
    %v6267 = vpack.c.b16 %v6210, %v6209
    %v6268 = vpack.c.b16 %v6212, %v6211
    %v6269 = vpack.c.b16 %v6214, %v6213
    %v6270 = vpack.c.b16 %v6216, %v6215
    %v6271 = vpack.c.b16 %v6218, %v6217
    %v6272 = vpack.c.b16 %v6220, %v6219
    %v6273 = vpack.c.b16 %v6222, %v6221
    %v6274 = vpack.c.b16 %v6224, %v6223
    %v6275 = vpack.c.b16 %v6226, %v6225
    %v6276 = vpack.c.b16 %v6228, %v6227
    %v6277 = vpack.c.b16 %v6230, %v6229
    %v6278 = vpack.c.b16 %v6232, %v6231
    %v6279 = vpack.c.b16 %v6234, %v6233
    %v6280 = vpack.c.b16 %v6236, %v6235
    %v6281 = vpack.c.b16 %v6238, %v6237
    %v6282 = vpack.c.b16 %v6240, %v6239
    %v6283 = vpack.c.b16 %v6242, %v6241
    %v6284 = vpack.c.b16 %v6244, %v6243
    %v6285 = vpack.c.b16 %v6246, %v6245
    %v6286 = vpack.c.b16 %v6248, %v6247
    %v6287 = vpack.c.b16 %v6250, %v6249
    %v6288 = vpack.c.b16 %v6252, %v6251
    %v6289 = vpack.c.b16 %v6254, %v6253
    %v6290 = vpack.c.b16 %v6256, %v6255
    %v6291 = vpack.c.b16 %v6258, %v6257
    %v6292 = vpack.c.b16 %v6260, %v6259
    %v6389 = vunpack.c.l.b16 %v4915
    %v6390 = vunpack.c.l.b16 %v4916
    %v6391 = vunpack.c.l.b16 %v4918
    %v6392 = vunpack.c.l.b16 %v4919
    %v6393 = vunpack.c.l.b16 %v4921
    %v6394 = vunpack.c.l.b16 %v4922
    %v6395 = vunpack.c.l.b16 %v4924
    %v6396 = vunpack.c.l.b16 %v4925
    %v6397 = vunpack.c.l.b16 %v4927
    %v6398 = vunpack.c.l.b16 %v4928
    %v6399 = vunpack.c.l.b16 %v4930
    %v6400 = vunpack.c.l.b16 %v4931
    %v6401 = vunpack.c.l.b16 %v4933
    %v6402 = vunpack.c.l.b16 %v4934
    %v6403 = vunpack.c.l.b16 %v4936
    %v6404 = vunpack.c.l.b16 %v4937
    %v6405 = vunpack.c.l.b16 %v4939
    %v6406 = vunpack.c.l.b16 %v4940
    %v6407 = vunpack.c.l.b16 %v4942
    %v6408 = vunpack.c.l.b16 %v4943
    %v6409 = vunpack.c.l.b16 %v4945
    %v6410 = vunpack.c.l.b16 %v4946
    %v6411 = vunpack.c.l.b16 %v4948
    %v6412 = vunpack.c.l.b16 %v4949
    %v6413 = vunpack.c.l.b16 %v4951
    %v6414 = vunpack.c.l.b16 %v4952
    %v6415 = vunpack.c.l.b16 %v4954
    %v6416 = vunpack.c.l.b16 %v4955
    %v6417 = vunpack.c.l.b16 %v4957
    %v6418 = vunpack.c.l.b16 %v4958
    %v6419 = vunpack.c.l.b16 %v4960
    %v6420 = vunpack.c.l.b16 %v4961
    %v6421 = vunpack.c.l.b16 %v4963
    %v6422 = vunpack.c.l.b16 %v4964
    %v6423 = vunpack.c.l.b16 %v4966
    %v6424 = vunpack.c.l.b16 %v4967
    %v6425 = vunpack.c.l.b16 %v4969
    %v6426 = vunpack.c.l.b16 %v4970
    %v6427 = vunpack.c.l.b16 %v4972
    %v6428 = vunpack.c.l.b16 %v4973
    %v6429 = vunpack.c.l.b16 %v4975
    %v6430 = vunpack.c.l.b16 %v4976
    %v6431 = vunpack.c.l.b16 %v4978
    %v6432 = vunpack.c.l.b16 %v4979
    %v6433 = vunpack.c.l.b16 %v4981
    %v6434 = vunpack.c.l.b16 %v4982
    %v6435 = vunpack.c.l.b16 %v4984
    %v6436 = vunpack.c.l.b16 %v4985
    %v6437 = vunpack.c.l.b16 %v4987
    %v6438 = vunpack.c.l.b16 %v4988
    %v6439 = vunpack.c.l.b16 %v4990
    %v6440 = vunpack.c.l.b16 %v4991
    %v6441 = vunpack.c.l.b16 %v4993
    %v6442 = vunpack.c.l.b16 %v4994
    %v6443 = vunpack.c.l.b16 %v4996
    %v6444 = vunpack.c.l.b16 %v4997
    %v6445 = vunpack.c.l.b16 %v4999
    %v6446 = vunpack.c.l.b16 %v5000
    %v6447 = vunpack.c.l.b16 %v5002
    %v6448 = vunpack.c.l.b16 %v5003
    %v6449 = vunpack.c.l.b16 %v5005
    %v6450 = vunpack.c.l.b16 %v5006
    %v6451 = vunpack.c.l.b16 %v5008
    %v6452 = vunpack.c.l.b16 %v5009
    %v6453 = vpack.c.b16 %v6390, %v6389
    %v6454 = vpack.c.b16 %v6392, %v6391
    %v6455 = vpack.c.b16 %v6394, %v6393
    %v6456 = vpack.c.b16 %v6396, %v6395
    %v6457 = vpack.c.b16 %v6398, %v6397
    %v6458 = vpack.c.b16 %v6400, %v6399
    %v6459 = vpack.c.b16 %v6402, %v6401
    %v6460 = vpack.c.b16 %v6404, %v6403
    %v6461 = vpack.c.b16 %v6406, %v6405
    %v6462 = vpack.c.b16 %v6408, %v6407
    %v6463 = vpack.c.b16 %v6410, %v6409
    %v6464 = vpack.c.b16 %v6412, %v6411
    %v6465 = vpack.c.b16 %v6414, %v6413
    %v6466 = vpack.c.b16 %v6416, %v6415
    %v6467 = vpack.c.b16 %v6418, %v6417
    %v6468 = vpack.c.b16 %v6420, %v6419
    %v6469 = vpack.c.b16 %v6422, %v6421
    %v6470 = vpack.c.b16 %v6424, %v6423
    %v6471 = vpack.c.b16 %v6426, %v6425
    %v6472 = vpack.c.b16 %v6428, %v6427
    %v6473 = vpack.c.b16 %v6430, %v6429
    %v6474 = vpack.c.b16 %v6432, %v6431
    %v6475 = vpack.c.b16 %v6434, %v6433
    %v6476 = vpack.c.b16 %v6436, %v6435
    %v6477 = vpack.c.b16 %v6438, %v6437
    %v6478 = vpack.c.b16 %v6440, %v6439
    %v6479 = vpack.c.b16 %v6442, %v6441
    %v6480 = vpack.c.b16 %v6444, %v6443
    %v6481 = vpack.c.b16 %v6446, %v6445
    %v6482 = vpack.c.b16 %v6448, %v6447
    %v6483 = vpack.c.b16 %v6450, %v6449
    %v6484 = vpack.c.b16 %v6452, %v6451
    %v6517 = vunpack.c.l.b16 %v5754
    %v6518 = vunpack.c.l.b16 %v5762
    %v6519 = vunpack.c.l.b16 %v5768
    %v6520 = vunpack.c.l.b16 %v5776
    %v6521 = vunpack.c.l.b16 %v5782
    %v6522 = vunpack.c.l.b16 %v5790
    %v6523 = vunpack.c.l.b16 %v5796
    %v6524 = vunpack.c.l.b16 %v5804
    %v6525 = vunpack.c.l.b16 %v5810
    %v6526 = vunpack.c.l.b16 %v5818
    %v6527 = vunpack.c.l.b16 %v5824
    %v6528 = vunpack.c.l.b16 %v5832
    %v6529 = vunpack.c.l.b16 %v5838
    %v6530 = vunpack.c.l.b16 %v5846
    %v6531 = vunpack.c.l.b16 %v5852
    %v6532 = vunpack.c.l.b16 %v5860
    %v6533 = vunpack.c.l.b16 %v5866
    %v6534 = vunpack.c.l.b16 %v5874
    %v6535 = vunpack.c.l.b16 %v5880
    %v6536 = vunpack.c.l.b16 %v5888
    %v6537 = vunpack.c.l.b16 %v5894
    %v6538 = vunpack.c.l.b16 %v5902
    %v6539 = vunpack.c.l.b16 %v5908
    %v6540 = vunpack.c.l.b16 %v5916
    %v6541 = vunpack.c.l.b16 %v5922
    %v6542 = vunpack.c.l.b16 %v5930
    %v6543 = vunpack.c.l.b16 %v5936
    %v6544 = vunpack.c.l.b16 %v5944
    %v6545 = vunpack.c.l.b16 %v5950
    %v6546 = vunpack.c.l.b16 %v5958
    %v6547 = vunpack.c.l.b16 %v5964
    %v6548 = vunpack.c.l.b16 %v5972
    %v6549 = vunpack.c.l.b16 %v5978
    %v6550 = vunpack.c.l.b16 %v5986
    %v6551 = vunpack.c.l.b16 %v5992
    %v6552 = vunpack.c.l.b16 %v6000
    %v6553 = vunpack.c.l.b16 %v6006
    %v6554 = vunpack.c.l.b16 %v6014
    %v6555 = vunpack.c.l.b16 %v6020
    %v6556 = vunpack.c.l.b16 %v6028
    %v6557 = vunpack.c.l.b16 %v6034
    %v6558 = vunpack.c.l.b16 %v6042
    %v6559 = vunpack.c.l.b16 %v6048
    %v6560 = vunpack.c.l.b16 %v6056
    %v6561 = vunpack.c.l.b16 %v6062
    %v6562 = vunpack.c.l.b16 %v6070
    %v6563 = vunpack.c.l.b16 %v6076
    %v6564 = vunpack.c.l.b16 %v6084
    %v6565 = vunpack.c.l.b16 %v6090
    %v6566 = vunpack.c.l.b16 %v6098
    %v6567 = vunpack.c.l.b16 %v6104
    %v6568 = vunpack.c.l.b16 %v6112
    %v6569 = vunpack.c.l.b16 %v6118
    %v6570 = vunpack.c.l.b16 %v6126
    %v6571 = vunpack.c.l.b16 %v6132
    %v6572 = vunpack.c.l.b16 %v6140
    %v6573 = vunpack.c.l.b16 %v6146
    %v6574 = vunpack.c.l.b16 %v6154
    %v6575 = vunpack.c.l.b16 %v6160
    %v6576 = vunpack.c.l.b16 %v6168
    %v6577 = vunpack.c.l.b16 %v6174
    %v6578 = vunpack.c.l.b16 %v6182
    %v6579 = vunpack.c.l.b16 %v6188
    %v6580 = vunpack.c.l.b16 %v6196
    %v6581 = vpack.c.b16 %v6518, %v6517
    %v6582 = vpack.c.b16 %v6520, %v6519
    %v6583 = vpack.c.b16 %v6522, %v6521
    %v6584 = vpack.c.b16 %v6524, %v6523
    %v6585 = vpack.c.b16 %v6526, %v6525
    %v6586 = vpack.c.b16 %v6528, %v6527
    %v6587 = vpack.c.b16 %v6530, %v6529
    %v6588 = vpack.c.b16 %v6532, %v6531
    %v6589 = vpack.c.b16 %v6534, %v6533
    %v6590 = vpack.c.b16 %v6536, %v6535
    %v6591 = vpack.c.b16 %v6538, %v6537
    %v6592 = vpack.c.b16 %v6540, %v6539
    %v6593 = vpack.c.b16 %v6542, %v6541
    %v6594 = vpack.c.b16 %v6544, %v6543
    %v6595 = vpack.c.b16 %v6546, %v6545
    %v6596 = vpack.c.b16 %v6548, %v6547
    %v6597 = vpack.c.b16 %v6550, %v6549
    %v6598 = vpack.c.b16 %v6552, %v6551
    %v6599 = vpack.c.b16 %v6554, %v6553
    %v6600 = vpack.c.b16 %v6556, %v6555
    %v6601 = vpack.c.b16 %v6558, %v6557
    %v6602 = vpack.c.b16 %v6560, %v6559
    %v6603 = vpack.c.b16 %v6562, %v6561
    %v6604 = vpack.c.b16 %v6564, %v6563
    %v6605 = vpack.c.b16 %v6566, %v6565
    %v6606 = vpack.c.b16 %v6568, %v6567
    %v6607 = vpack.c.b16 %v6570, %v6569
    %v6608 = vpack.c.b16 %v6572, %v6571
    %v6609 = vpack.c.b16 %v6574, %v6573
    %v6610 = vpack.c.b16 %v6576, %v6575
    %v6611 = vpack.c.b16 %v6578, %v6577
    %v6612 = vpack.c.b16 %v6580, %v6579
    %v6645 = vld [vmem:[%s4705] sm:$0x8]
    %v6646 = vld [vmem:[%s4705 + $0x4] sm:$0xf]
    %v6647 = vld [vmem:[%s4705 + $0x8] sm:$0xf]
    %v6648 = vld [vmem:[%s4705 + $0x10] sm:$0x8]
    %v6649 = vld [vmem:[%s4705 + $0x14] sm:$0xf]
    %v6650 = vld [vmem:[%s4705 + $0x18] sm:$0xf]
    %v6651 = vld [vmem:[%s4705 + $0x20] sm:$0x8]
    %v6652 = vld [vmem:[%s4705 + $0x24] sm:$0xf]
    %v6653 = vld [vmem:[%s4705 + $0x28] sm:$0xf]
    %v6654 = vld [vmem:[%s4705 + $0x30] sm:$0x8]
    %v6655 = vld [vmem:[%s4705 + $0x34] sm:$0xf]
    %v6656 = vld [vmem:[%s4705 + $0x38] sm:$0xf]
    %v6657 = vld [vmem:[%s4705 + $0x40] sm:$0x8]
    %v6658 = vld [vmem:[%s4705 + $0x44] sm:$0xf]
    %v6659 = vld [vmem:[%s4705 + $0x48] sm:$0xf]
    %v6660 = vld [vmem:[%s4705 + $0x50] sm:$0x8]
    %v6661 = vld [vmem:[%s4705 + $0x54] sm:$0xf]
    %v6662 = vld [vmem:[%s4705 + $0x58] sm:$0xf]
    %v6663 = vld [vmem:[%s4705 + $0x60] sm:$0x8]
    %v6664 = vld [vmem:[%s4705 + $0x64] sm:$0xf]
    %v6665 = vld [vmem:[%s4705 + $0x68] sm:$0xf]
    %v6666 = vld [vmem:[%s4705 + $0x70] sm:$0x8]
    %v6667 = vld [vmem:[%s4705 + $0x74] sm:$0xf]
    %v6668 = vld [vmem:[%s4705 + $0x78] sm:$0xf]
    %v6669 = vld [vmem:[%s4705 + $0x80] sm:$0x8]
    %v6670 = vld [vmem:[%s4705 + $0x84] sm:$0xf]
    %v6671 = vld [vmem:[%s4705 + $0x88] sm:$0xf]
    %v6672 = vld [vmem:[%s4705 + $0x90] sm:$0x8]
    %v6673 = vld [vmem:[%s4705 + $0x94] sm:$0xf]
    %v6674 = vld [vmem:[%s4705 + $0x98] sm:$0xf]
    %v6675 = vld [vmem:[%s4705 + $0xa0] sm:$0x8]
    %v6676 = vld [vmem:[%s4705 + $0xa4] sm:$0xf]
    %v6677 = vld [vmem:[%s4705 + $0xa8] sm:$0xf]
    %v6678 = vld [vmem:[%s4705 + $0xb0] sm:$0x8]
    %v6679 = vld [vmem:[%s4705 + $0xb4] sm:$0xf]
    %v6680 = vld [vmem:[%s4705 + $0xb8] sm:$0xf]
    %v6681 = vld [vmem:[%s4705 + $0xc0] sm:$0x8]
    %v6682 = vld [vmem:[%s4705 + $0xc4] sm:$0xf]
    %v6683 = vld [vmem:[%s4705 + $0xc8] sm:$0xf]
    %v6684 = vld [vmem:[%s4705 + $0xd0] sm:$0x8]
    %v6685 = vld [vmem:[%s4705 + $0xd4] sm:$0xf]
    %v6686 = vld [vmem:[%s4705 + $0xd8] sm:$0xf]
    %v6687 = vld [vmem:[%s4705 + $0xe0] sm:$0x8]
    %v6688 = vld [vmem:[%s4705 + $0xe4] sm:$0xf]
    %v6689 = vld [vmem:[%s4705 + $0xe8] sm:$0xf]
    %v6690 = vld [vmem:[%s4705 + $0xf0] sm:$0x8]
    %v6691 = vld [vmem:[%s4705 + $0xf4] sm:$0xf]
    %v6692 = vld [vmem:[%s4705 + $0xf8] sm:$0xf]
    %v6693 = vld [vmem:[%s4705 + $0x120] sm:$0x8]
    %v6694 = vld [vmem:[%s4705 + $0x124] sm:$0xf]
    %v6695 = vld [vmem:[%s4705 + $0x128] sm:$0xf]
    %v6696 = vld [vmem:[%s4705 + $0x130] sm:$0x8]
    %v6697 = vld [vmem:[%s4705 + $0x134] sm:$0xf]
    %v6698 = vld [vmem:[%s4705 + $0x138] sm:$0xf]
    %v6699 = vld [vmem:[%s4705 + $0x140] sm:$0x8]
    %v6700 = vld [vmem:[%s4705 + $0x144] sm:$0xf]
    %v6701 = vld [vmem:[%s4705 + $0x148] sm:$0xf]
    %v6702 = vld [vmem:[%s4705 + $0x150] sm:$0x8]
    %v6703 = vld [vmem:[%s4705 + $0x154] sm:$0xf]
    %v6704 = vld [vmem:[%s4705 + $0x158] sm:$0xf]
    %v6705 = vld [vmem:[%s4705 + $0x160] sm:$0x8]
    %v6706 = vld [vmem:[%s4705 + $0x164] sm:$0xf]
    %v6707 = vld [vmem:[%s4705 + $0x168] sm:$0xf]
    %v6708 = vld [vmem:[%s4705 + $0x170] sm:$0x8]
    %v6709 = vld [vmem:[%s4705 + $0x174] sm:$0xf]
    %v6710 = vld [vmem:[%s4705 + $0x178] sm:$0xf]
    %v6711 = vld [vmem:[%s4705 + $0x180] sm:$0x8]
    %v6712 = vld [vmem:[%s4705 + $0x184] sm:$0xf]
    %v6713 = vld [vmem:[%s4705 + $0x188] sm:$0xf]
    %v6714 = vld [vmem:[%s4705 + $0x190] sm:$0x8]
    %v6715 = vld [vmem:[%s4705 + $0x194] sm:$0xf]
    %v6716 = vld [vmem:[%s4705 + $0x198] sm:$0xf]
    %v6717 = vld [vmem:[%s4705 + $0x1a0] sm:$0x8]
    %v6718 = vld [vmem:[%s4705 + $0x1a4] sm:$0xf]
    %v6719 = vld [vmem:[%s4705 + $0x1a8] sm:$0xf]
    %v6720 = vld [vmem:[%s4705 + $0x1b0] sm:$0x8]
    %v6721 = vld [vmem:[%s4705 + $0x1b4] sm:$0xf]
    %v6722 = vld [vmem:[%s4705 + $0x1b8] sm:$0xf]
    %v6723 = vld [vmem:[%s4705 + $0x1c0] sm:$0x8]
    %v6724 = vld [vmem:[%s4705 + $0x1c4] sm:$0xf]
    %v6725 = vld [vmem:[%s4705 + $0x1c8] sm:$0xf]
    %v6726 = vld [vmem:[%s4705 + $0x1d0] sm:$0x8]
    %v6727 = vld [vmem:[%s4705 + $0x1d4] sm:$0xf]
    %v6728 = vld [vmem:[%s4705 + $0x1d8] sm:$0xf]
    %v6729 = vld [vmem:[%s4705 + $0x1e0] sm:$0x8]
    %v6730 = vld [vmem:[%s4705 + $0x1e4] sm:$0xf]
    %v6731 = vld [vmem:[%s4705 + $0x1e8] sm:$0xf]
    %v6732 = vld [vmem:[%s4705 + $0x1f0] sm:$0x8]
    %v6733 = vld [vmem:[%s4705 + $0x1f4] sm:$0xf]
    %v6734 = vld [vmem:[%s4705 + $0x1f8] sm:$0xf]
    %v6735 = vld [vmem:[%s4705 + $0x200] sm:$0x8]
    %v6736 = vld [vmem:[%s4705 + $0x204] sm:$0xf]
    %v6737 = vld [vmem:[%s4705 + $0x208] sm:$0xf]
    %v6738 = vld [vmem:[%s4705 + $0x210] sm:$0x8]
    %v6739 = vld [vmem:[%s4705 + $0x214] sm:$0xf]
    %v6740 = vld [vmem:[%s4705 + $0x218] sm:$0xf]
    %v6742 = vshrl.u32 %v6645, 16
    %v6744 = vrot.slane %v6742, 7
    %v6745 = vrot.slane %v6744, 4
    %v6747 = vshrl.u32 %v6646, 16
    %v6749 = vrot.slane %v6747, 7
    %v6750 = vshll.u32 %v6646, 16
    %v6752 = vor.u32 %v6749, %v6750
    %v6753 = vsel %vm5012, %v6745, %v6752
    %v6754 = vrot.slane %v6749, 4
    %v6756 = vshrl.u32 %v6647, 16
    %v6758 = vrot.slane %v6756, 7
    %v6759 = vshll.u32 %v6647, 16
    %v6761 = vor.u32 %v6758, %v6759
    %v6762 = vsel %vm5012, %v6754, %v6761
    %v6764 = vshrl.u32 %v6648, 16
    %v6766 = vrot.slane %v6764, 7
    %v6767 = vrot.slane %v6766, 4
    %v6769 = vshrl.u32 %v6649, 16
    %v6771 = vrot.slane %v6769, 7
    %v6772 = vshll.u32 %v6649, 16
    %v6774 = vor.u32 %v6771, %v6772
    %v6775 = vsel %vm5012, %v6767, %v6774
    %v6776 = vrot.slane %v6771, 4
    %v6778 = vshrl.u32 %v6650, 16
    %v6780 = vrot.slane %v6778, 7
    %v6781 = vshll.u32 %v6650, 16
    %v6783 = vor.u32 %v6780, %v6781
    %v6784 = vsel %vm5012, %v6776, %v6783
    %v6786 = vshrl.u32 %v6651, 16
    %v6788 = vrot.slane %v6786, 7
    %v6789 = vrot.slane %v6788, 4
    %v6791 = vshrl.u32 %v6652, 16
    %v6793 = vrot.slane %v6791, 7
    %v6794 = vshll.u32 %v6652, 16
    %v6796 = vor.u32 %v6793, %v6794
    %v6797 = vsel %vm5012, %v6789, %v6796
    %v6798 = vrot.slane %v6793, 4
    %v6800 = vshrl.u32 %v6653, 16
    %v6802 = vrot.slane %v6800, 7
    %v6803 = vshll.u32 %v6653, 16
    %v6805 = vor.u32 %v6802, %v6803
    %v6806 = vsel %vm5012, %v6798, %v6805
    %v6808 = vshrl.u32 %v6654, 16
    %v6810 = vrot.slane %v6808, 7
    %v6811 = vrot.slane %v6810, 4
    %v6813 = vshrl.u32 %v6655, 16
    %v6815 = vrot.slane %v6813, 7
    %v6816 = vshll.u32 %v6655, 16
    %v6818 = vor.u32 %v6815, %v6816
    %v6819 = vsel %vm5012, %v6811, %v6818
    %v6820 = vrot.slane %v6815, 4
    %v6822 = vshrl.u32 %v6656, 16
    %v6824 = vrot.slane %v6822, 7
    %v6825 = vshll.u32 %v6656, 16
    %v6827 = vor.u32 %v6824, %v6825
    %v6828 = vsel %vm5012, %v6820, %v6827
    %v6830 = vshrl.u32 %v6657, 16
    %v6832 = vrot.slane %v6830, 7
    %v6833 = vrot.slane %v6832, 4
    %v6835 = vshrl.u32 %v6658, 16
    %v6837 = vrot.slane %v6835, 7
    %v6838 = vshll.u32 %v6658, 16
    %v6840 = vor.u32 %v6837, %v6838
    %v6841 = vsel %vm5012, %v6833, %v6840
    %v6842 = vrot.slane %v6837, 4
    %v6844 = vshrl.u32 %v6659, 16
    %v6846 = vrot.slane %v6844, 7
    %v6847 = vshll.u32 %v6659, 16
    %v6849 = vor.u32 %v6846, %v6847
    %v6850 = vsel %vm5012, %v6842, %v6849
    %v6852 = vshrl.u32 %v6660, 16
    %v6854 = vrot.slane %v6852, 7
    %v6855 = vrot.slane %v6854, 4
    %v6857 = vshrl.u32 %v6661, 16
    %v6859 = vrot.slane %v6857, 7
    %v6860 = vshll.u32 %v6661, 16
    %v6862 = vor.u32 %v6859, %v6860
    %v6863 = vsel %vm5012, %v6855, %v6862
    %v6864 = vrot.slane %v6859, 4
    %v6866 = vshrl.u32 %v6662, 16
    %v6868 = vrot.slane %v6866, 7
    %v6869 = vshll.u32 %v6662, 16
    %v6871 = vor.u32 %v6868, %v6869
    %v6872 = vsel %vm5012, %v6864, %v6871
    %v6874 = vshrl.u32 %v6663, 16
    %v6876 = vrot.slane %v6874, 7
    %v6877 = vrot.slane %v6876, 4
    %v6879 = vshrl.u32 %v6664, 16
    %v6881 = vrot.slane %v6879, 7
    %v6882 = vshll.u32 %v6664, 16
    %v6884 = vor.u32 %v6881, %v6882
    %v6885 = vsel %vm5012, %v6877, %v6884
    %v6886 = vrot.slane %v6881, 4
    %v6888 = vshrl.u32 %v6665, 16
    %v6890 = vrot.slane %v6888, 7
    %v6891 = vshll.u32 %v6665, 16
    %v6893 = vor.u32 %v6890, %v6891
    %v6894 = vsel %vm5012, %v6886, %v6893
    %v6896 = vshrl.u32 %v6666, 16
    %v6898 = vrot.slane %v6896, 7
    %v6899 = vrot.slane %v6898, 4
    %v6901 = vshrl.u32 %v6667, 16
    %v6903 = vrot.slane %v6901, 7
    %v6904 = vshll.u32 %v6667, 16
    %v6906 = vor.u32 %v6903, %v6904
    %v6907 = vsel %vm5012, %v6899, %v6906
    %v6908 = vrot.slane %v6903, 4
    %v6910 = vshrl.u32 %v6668, 16
    %v6912 = vrot.slane %v6910, 7
    %v6913 = vshll.u32 %v6668, 16
    %v6915 = vor.u32 %v6912, %v6913
    %v6916 = vsel %vm5012, %v6908, %v6915
    %v6918 = vshrl.u32 %v6669, 16
    %v6920 = vrot.slane %v6918, 7
    %v6921 = vrot.slane %v6920, 4
    %v6923 = vshrl.u32 %v6670, 16
    %v6925 = vrot.slane %v6923, 7
    %v6926 = vshll.u32 %v6670, 16
    %v6928 = vor.u32 %v6925, %v6926
    %v6929 = vsel %vm5012, %v6921, %v6928
    %v6930 = vrot.slane %v6925, 4
    %v6932 = vshrl.u32 %v6671, 16
    %v6934 = vrot.slane %v6932, 7
    %v6935 = vshll.u32 %v6671, 16
    %v6937 = vor.u32 %v6934, %v6935
    %v6938 = vsel %vm5012, %v6930, %v6937
    %v6940 = vshrl.u32 %v6672, 16
    %v6942 = vrot.slane %v6940, 7
    %v6943 = vrot.slane %v6942, 4
    %v6945 = vshrl.u32 %v6673, 16
    %v6947 = vrot.slane %v6945, 7
    %v6948 = vshll.u32 %v6673, 16
    %v6950 = vor.u32 %v6947, %v6948
    %v6951 = vsel %vm5012, %v6943, %v6950
    %v6952 = vrot.slane %v6947, 4
    %v6954 = vshrl.u32 %v6674, 16
    %v6956 = vrot.slane %v6954, 7
    %v6957 = vshll.u32 %v6674, 16
    %v6959 = vor.u32 %v6956, %v6957
    %v6960 = vsel %vm5012, %v6952, %v6959
    %v6962 = vshrl.u32 %v6675, 16
    %v6964 = vrot.slane %v6962, 7
    %v6965 = vrot.slane %v6964, 4
    %v6967 = vshrl.u32 %v6676, 16
    %v6969 = vrot.slane %v6967, 7
    %v6970 = vshll.u32 %v6676, 16
    %v6972 = vor.u32 %v6969, %v6970
    %v6973 = vsel %vm5012, %v6965, %v6972
    %v6974 = vrot.slane %v6969, 4
    %v6976 = vshrl.u32 %v6677, 16
    %v6978 = vrot.slane %v6976, 7
    %v6979 = vshll.u32 %v6677, 16
    %v6981 = vor.u32 %v6978, %v6979
    %v6982 = vsel %vm5012, %v6974, %v6981
    %v6984 = vshrl.u32 %v6678, 16
    %v6986 = vrot.slane %v6984, 7
    %v6987 = vrot.slane %v6986, 4
    %v6989 = vshrl.u32 %v6679, 16
    %v6991 = vrot.slane %v6989, 7
    %v6992 = vshll.u32 %v6679, 16
    %v6994 = vor.u32 %v6991, %v6992
    %v6995 = vsel %vm5012, %v6987, %v6994
    %v6996 = vrot.slane %v6991, 4
    %v6998 = vshrl.u32 %v6680, 16
    %v7000 = vrot.slane %v6998, 7
    %v7001 = vshll.u32 %v6680, 16
    %v7003 = vor.u32 %v7000, %v7001
    %v7004 = vsel %vm5012, %v6996, %v7003
    %v7006 = vshrl.u32 %v6681, 16
    %v7008 = vrot.slane %v7006, 7
    %v7009 = vrot.slane %v7008, 4
    %v7011 = vshrl.u32 %v6682, 16
    %v7013 = vrot.slane %v7011, 7
    %v7014 = vshll.u32 %v6682, 16
    %v7016 = vor.u32 %v7013, %v7014
    %v7017 = vsel %vm5012, %v7009, %v7016
    %v7018 = vrot.slane %v7013, 4
    %v7020 = vshrl.u32 %v6683, 16
    %v7022 = vrot.slane %v7020, 7
    %v7023 = vshll.u32 %v6683, 16
    %v7025 = vor.u32 %v7022, %v7023
    %v7026 = vsel %vm5012, %v7018, %v7025
    %v7028 = vshrl.u32 %v6684, 16
    %v7030 = vrot.slane %v7028, 7
    %v7031 = vrot.slane %v7030, 4
    %v7033 = vshrl.u32 %v6685, 16
    %v7035 = vrot.slane %v7033, 7
    %v7036 = vshll.u32 %v6685, 16
    %v7038 = vor.u32 %v7035, %v7036
    %v7039 = vsel %vm5012, %v7031, %v7038
    %v7040 = vrot.slane %v7035, 4
    %v7042 = vshrl.u32 %v6686, 16
    %v7044 = vrot.slane %v7042, 7
    %v7045 = vshll.u32 %v6686, 16
    %v7047 = vor.u32 %v7044, %v7045
    %v7048 = vsel %vm5012, %v7040, %v7047
    %v7050 = vshrl.u32 %v6687, 16
    %v7052 = vrot.slane %v7050, 7
    %v7053 = vrot.slane %v7052, 4
    %v7055 = vshrl.u32 %v6688, 16
    %v7057 = vrot.slane %v7055, 7
    %v7058 = vshll.u32 %v6688, 16
    %v7060 = vor.u32 %v7057, %v7058
    %v7061 = vsel %vm5012, %v7053, %v7060
    %v7062 = vrot.slane %v7057, 4
    %v7064 = vshrl.u32 %v6689, 16
    %v7066 = vrot.slane %v7064, 7
    %v7067 = vshll.u32 %v6689, 16
    %v7069 = vor.u32 %v7066, %v7067
    %v7070 = vsel %vm5012, %v7062, %v7069
    %v7072 = vshrl.u32 %v6690, 16
    %v7074 = vrot.slane %v7072, 7
    %v7075 = vrot.slane %v7074, 4
    %v7077 = vshrl.u32 %v6691, 16
    %v7079 = vrot.slane %v7077, 7
    %v7080 = vshll.u32 %v6691, 16
    %v7082 = vor.u32 %v7079, %v7080
    %v7083 = vsel %vm5012, %v7075, %v7082
    %v7084 = vrot.slane %v7079, 4
    %v7086 = vshrl.u32 %v6692, 16
    %v7088 = vrot.slane %v7086, 7
    %v7089 = vshll.u32 %v6692, 16
    %v7091 = vor.u32 %v7088, %v7089
    %v7092 = vsel %vm5012, %v7084, %v7091
    %v7094 = vshrl.u32 %v6693, 16
    %v7096 = vrot.slane %v7094, 7
    %v7097 = vrot.slane %v7096, 4
    %v7099 = vshrl.u32 %v6694, 16
    %v7101 = vrot.slane %v7099, 7
    %v7102 = vshll.u32 %v6694, 16
    %v7104 = vor.u32 %v7101, %v7102
    %v7105 = vsel %vm5012, %v7097, %v7104
    %v7106 = vrot.slane %v7101, 4
    %v7108 = vshrl.u32 %v6695, 16
    %v7110 = vrot.slane %v7108, 7
    %v7111 = vshll.u32 %v6695, 16
    %v7113 = vor.u32 %v7110, %v7111
    %v7114 = vsel %vm5012, %v7106, %v7113
    %v7116 = vshrl.u32 %v6696, 16
    %v7118 = vrot.slane %v7116, 7
    %v7119 = vrot.slane %v7118, 4
    %v7121 = vshrl.u32 %v6697, 16
    %v7123 = vrot.slane %v7121, 7
    %v7124 = vshll.u32 %v6697, 16
    %v7126 = vor.u32 %v7123, %v7124
    %v7127 = vsel %vm5012, %v7119, %v7126
    %v7128 = vrot.slane %v7123, 4
    %v7130 = vshrl.u32 %v6698, 16
    %v7132 = vrot.slane %v7130, 7
    %v7133 = vshll.u32 %v6698, 16
    %v7135 = vor.u32 %v7132, %v7133
    %v7136 = vsel %vm5012, %v7128, %v7135
    %v7138 = vshrl.u32 %v6699, 16
    %v7140 = vrot.slane %v7138, 7
    %v7141 = vrot.slane %v7140, 4
    %v7143 = vshrl.u32 %v6700, 16
    %v7145 = vrot.slane %v7143, 7
    %v7146 = vshll.u32 %v6700, 16
    %v7148 = vor.u32 %v7145, %v7146
    %v7149 = vsel %vm5012, %v7141, %v7148
    %v7150 = vrot.slane %v7145, 4
    %v7152 = vshrl.u32 %v6701, 16
    %v7154 = vrot.slane %v7152, 7
    %v7155 = vshll.u32 %v6701, 16
    %v7157 = vor.u32 %v7154, %v7155
    %v7158 = vsel %vm5012, %v7150, %v7157
    %v7160 = vshrl.u32 %v6702, 16
    %v7162 = vrot.slane %v7160, 7
    %v7163 = vrot.slane %v7162, 4
    %v7165 = vshrl.u32 %v6703, 16
    %v7167 = vrot.slane %v7165, 7
    %v7168 = vshll.u32 %v6703, 16
    %v7170 = vor.u32 %v7167, %v7168
    %v7171 = vsel %vm5012, %v7163, %v7170
    %v7172 = vrot.slane %v7167, 4
    %v7174 = vshrl.u32 %v6704, 16
    %v7176 = vrot.slane %v7174, 7
    %v7177 = vshll.u32 %v6704, 16
    %v7179 = vor.u32 %v7176, %v7177
    %v7180 = vsel %vm5012, %v7172, %v7179
    %v7182 = vshrl.u32 %v6705, 16
    %v7184 = vrot.slane %v7182, 7
    %v7185 = vrot.slane %v7184, 4
    %v7187 = vshrl.u32 %v6706, 16
    %v7189 = vrot.slane %v7187, 7
    %v7190 = vshll.u32 %v6706, 16
    %v7192 = vor.u32 %v7189, %v7190
    %v7193 = vsel %vm5012, %v7185, %v7192
    %v7194 = vrot.slane %v7189, 4
    %v7196 = vshrl.u32 %v6707, 16
    %v7198 = vrot.slane %v7196, 7
    %v7199 = vshll.u32 %v6707, 16
    %v7201 = vor.u32 %v7198, %v7199
    %v7202 = vsel %vm5012, %v7194, %v7201
    %v7204 = vshrl.u32 %v6708, 16
    %v7206 = vrot.slane %v7204, 7
    %v7207 = vrot.slane %v7206, 4
    %v7209 = vshrl.u32 %v6709, 16
    %v7211 = vrot.slane %v7209, 7
    %v7212 = vshll.u32 %v6709, 16
    %v7214 = vor.u32 %v7211, %v7212
    %v7215 = vsel %vm5012, %v7207, %v7214
    %v7216 = vrot.slane %v7211, 4
    %v7218 = vshrl.u32 %v6710, 16
    %v7220 = vrot.slane %v7218, 7
    %v7221 = vshll.u32 %v6710, 16
    %v7223 = vor.u32 %v7220, %v7221
    %v7224 = vsel %vm5012, %v7216, %v7223
    %v7226 = vshrl.u32 %v6711, 16
    %v7228 = vrot.slane %v7226, 7
    %v7229 = vrot.slane %v7228, 4
    %v7231 = vshrl.u32 %v6712, 16
    %v7233 = vrot.slane %v7231, 7
    %v7234 = vshll.u32 %v6712, 16
    %v7236 = vor.u32 %v7233, %v7234
    %v7237 = vsel %vm5012, %v7229, %v7236
    %v7238 = vrot.slane %v7233, 4
    %v7240 = vshrl.u32 %v6713, 16
    %v7242 = vrot.slane %v7240, 7
    %v7243 = vshll.u32 %v6713, 16
    %v7245 = vor.u32 %v7242, %v7243
    %v7246 = vsel %vm5012, %v7238, %v7245
    %v7248 = vshrl.u32 %v6714, 16
    %v7250 = vrot.slane %v7248, 7
    %v7251 = vrot.slane %v7250, 4
    %v7253 = vshrl.u32 %v6715, 16
    %v7255 = vrot.slane %v7253, 7
    %v7256 = vshll.u32 %v6715, 16
    %v7258 = vor.u32 %v7255, %v7256
    %v7259 = vsel %vm5012, %v7251, %v7258
    %v7260 = vrot.slane %v7255, 4
    %v7262 = vshrl.u32 %v6716, 16
    %v7264 = vrot.slane %v7262, 7
    %v7265 = vshll.u32 %v6716, 16
    %v7267 = vor.u32 %v7264, %v7265
    %v7268 = vsel %vm5012, %v7260, %v7267
    %v7270 = vshrl.u32 %v6717, 16
    %v7272 = vrot.slane %v7270, 7
    %v7273 = vrot.slane %v7272, 4
    %v7275 = vshrl.u32 %v6718, 16
    %v7277 = vrot.slane %v7275, 7
    %v7278 = vshll.u32 %v6718, 16
    %v7280 = vor.u32 %v7277, %v7278
    %v7281 = vsel %vm5012, %v7273, %v7280
    %v7282 = vrot.slane %v7277, 4
    %v7284 = vshrl.u32 %v6719, 16
    %v7286 = vrot.slane %v7284, 7
    %v7287 = vshll.u32 %v6719, 16
    %v7289 = vor.u32 %v7286, %v7287
    %v7290 = vsel %vm5012, %v7282, %v7289
    %v7292 = vshrl.u32 %v6720, 16
    %v7294 = vrot.slane %v7292, 7
    %v7295 = vrot.slane %v7294, 4
    %v7297 = vshrl.u32 %v6721, 16
    %v7299 = vrot.slane %v7297, 7
    %v7300 = vshll.u32 %v6721, 16
    %v7302 = vor.u32 %v7299, %v7300
    %v7303 = vsel %vm5012, %v7295, %v7302
    %v7304 = vrot.slane %v7299, 4
    %v7306 = vshrl.u32 %v6722, 16
    %v7308 = vrot.slane %v7306, 7
    %v7309 = vshll.u32 %v6722, 16
    %v7311 = vor.u32 %v7308, %v7309
    %v7312 = vsel %vm5012, %v7304, %v7311
    %v7314 = vshrl.u32 %v6723, 16
    %v7316 = vrot.slane %v7314, 7
    %v7317 = vrot.slane %v7316, 4
    %v7319 = vshrl.u32 %v6724, 16
    %v7321 = vrot.slane %v7319, 7
    %v7322 = vshll.u32 %v6724, 16
    %v7324 = vor.u32 %v7321, %v7322
    %v7325 = vsel %vm5012, %v7317, %v7324
    %v7326 = vrot.slane %v7321, 4
    %v7328 = vshrl.u32 %v6725, 16
    %v7330 = vrot.slane %v7328, 7
    %v7331 = vshll.u32 %v6725, 16
    %v7333 = vor.u32 %v7330, %v7331
    %v7334 = vsel %vm5012, %v7326, %v7333
    %v7336 = vshrl.u32 %v6726, 16
    %v7338 = vrot.slane %v7336, 7
    %v7339 = vrot.slane %v7338, 4
    %v7341 = vshrl.u32 %v6727, 16
    %v7343 = vrot.slane %v7341, 7
    %v7344 = vshll.u32 %v6727, 16
    %v7346 = vor.u32 %v7343, %v7344
    %v7347 = vsel %vm5012, %v7339, %v7346
    %v7348 = vrot.slane %v7343, 4
    %v7350 = vshrl.u32 %v6728, 16
    %v7352 = vrot.slane %v7350, 7
    %v7353 = vshll.u32 %v6728, 16
    %v7355 = vor.u32 %v7352, %v7353
    %v7356 = vsel %vm5012, %v7348, %v7355
    %v7358 = vshrl.u32 %v6729, 16
    %v7360 = vrot.slane %v7358, 7
    %v7361 = vrot.slane %v7360, 4
    %v7363 = vshrl.u32 %v6730, 16
    %v7365 = vrot.slane %v7363, 7
    %v7366 = vshll.u32 %v6730, 16
    %v7368 = vor.u32 %v7365, %v7366
    %v7369 = vsel %vm5012, %v7361, %v7368
    %v7370 = vrot.slane %v7365, 4
    %v7372 = vshrl.u32 %v6731, 16
    %v7374 = vrot.slane %v7372, 7
    %v7375 = vshll.u32 %v6731, 16
    %v7377 = vor.u32 %v7374, %v7375
    %v7378 = vsel %vm5012, %v7370, %v7377
    %v7380 = vshrl.u32 %v6732, 16
    %v7382 = vrot.slane %v7380, 7
    %v7383 = vrot.slane %v7382, 4
    %v7385 = vshrl.u32 %v6733, 16
    %v7387 = vrot.slane %v7385, 7
    %v7388 = vshll.u32 %v6733, 16
    %v7390 = vor.u32 %v7387, %v7388
    %v7391 = vsel %vm5012, %v7383, %v7390
    %v7392 = vrot.slane %v7387, 4
    %v7394 = vshrl.u32 %v6734, 16
    %v7396 = vrot.slane %v7394, 7
    %v7397 = vshll.u32 %v6734, 16
    %v7399 = vor.u32 %v7396, %v7397
    %v7400 = vsel %vm5012, %v7392, %v7399
    %v7402 = vshrl.u32 %v6735, 16
    %v7404 = vrot.slane %v7402, 7
    %v7405 = vrot.slane %v7404, 4
    %v7407 = vshrl.u32 %v6736, 16
    %v7409 = vrot.slane %v7407, 7
    %v7410 = vshll.u32 %v6736, 16
    %v7412 = vor.u32 %v7409, %v7410
    %v7413 = vsel %vm5012, %v7405, %v7412
    %v7414 = vrot.slane %v7409, 4
    %v7416 = vshrl.u32 %v6737, 16
    %v7418 = vrot.slane %v7416, 7
    %v7419 = vshll.u32 %v6737, 16
    %v7421 = vor.u32 %v7418, %v7419
    %v7422 = vsel %vm5012, %v7414, %v7421
    %v7424 = vshrl.u32 %v6738, 16
    %v7426 = vrot.slane %v7424, 7
    %v7427 = vrot.slane %v7426, 4
    %v7429 = vshrl.u32 %v6739, 16
    %v7431 = vrot.slane %v7429, 7
    %v7432 = vshll.u32 %v6739, 16
    %v7434 = vor.u32 %v7431, %v7432
    %v7435 = vsel %vm5012, %v7427, %v7434
    %v7436 = vrot.slane %v7431, 4
    %v7438 = vshrl.u32 %v6740, 16
    %v7440 = vrot.slane %v7438, 7
    %v7441 = vshll.u32 %v6740, 16
    %v7443 = vor.u32 %v7440, %v7441
    %v7444 = vsel %vm5012, %v7436, %v7443
    %v7445 = vld [vmem:[%s4705 + $0xc] sm:$0x1]
    %v7446 = vld [vmem:[%s4705 + $0x1c] sm:$0x1]
    %v7447 = vld [vmem:[%s4705 + $0x2c] sm:$0x1]
    %v7448 = vld [vmem:[%s4705 + $0x3c] sm:$0x1]
    %v7449 = vld [vmem:[%s4705 + $0x4c] sm:$0x1]
    %v7450 = vld [vmem:[%s4705 + $0x5c] sm:$0x1]
    %v7451 = vld [vmem:[%s4705 + $0x6c] sm:$0x1]
    %v7452 = vld [vmem:[%s4705 + $0x7c] sm:$0x1]
    %v7453 = vld [vmem:[%s4705 + $0x8c] sm:$0x1]
    %v7454 = vld [vmem:[%s4705 + $0x9c] sm:$0x1]
    %v7455 = vld [vmem:[%s4705 + $0xac] sm:$0x1]
    %v7456 = vld [vmem:[%s4705 + $0xbc] sm:$0x1]
    %v7457 = vld [vmem:[%s4705 + $0xcc] sm:$0x1]
    %v7458 = vld [vmem:[%s4705 + $0xdc] sm:$0x1]
    %v7459 = vld [vmem:[%s4705 + $0xec] sm:$0x1]
    %v7460 = vld [vmem:[%s4705 + $0xfc] sm:$0x1]
    %v7461 = vld [vmem:[%s4705 + $0x12c] sm:$0x1]
    %v7462 = vld [vmem:[%s4705 + $0x13c] sm:$0x1]
    %v7463 = vld [vmem:[%s4705 + $0x14c] sm:$0x1]
    %v7464 = vld [vmem:[%s4705 + $0x15c] sm:$0x1]
    %v7465 = vld [vmem:[%s4705 + $0x16c] sm:$0x1]
    %v7466 = vld [vmem:[%s4705 + $0x17c] sm:$0x1]
    %v7467 = vld [vmem:[%s4705 + $0x18c] sm:$0x1]
    %v7468 = vld [vmem:[%s4705 + $0x19c] sm:$0x1]
    %v7469 = vld [vmem:[%s4705 + $0x1ac] sm:$0x1]
    %v7470 = vld [vmem:[%s4705 + $0x1bc] sm:$0x1]
    %v7471 = vld [vmem:[%s4705 + $0x1cc] sm:$0x1]
    %v7472 = vld [vmem:[%s4705 + $0x1dc] sm:$0x1]
    %v7473 = vld [vmem:[%s4705 + $0x1ec] sm:$0x1]
    %v7474 = vld [vmem:[%s4705 + $0x1fc] sm:$0x1]
    %v7475 = vld [vmem:[%s4705 + $0x20c] sm:$0x1]
    %v7476 = vld [vmem:[%s4705 + $0x21c] sm:$0x1]
    %v7477 = vrot.slane %v6747, 4
    %v7478 = vrot.slane %v6750, 5
    %v7479 = vor.u32 %v7477, %v7478
    %v7480 = vrot.slane %v7479, 4
    %v7481 = vrot.slane %v6759, 5
    %v7482 = vsel %vm399, %v7480, %v7481
    %v7483 = vrot.slane %v6756, 4
    %v7484 = vor.u32 %v7483, %v7481
    %v7485 = vrot.slane %v7484, 4
    %v7487 = vshll.u32 %v7445, 16
    %v7489 = vrot.slane %v7487, 5
    %v7490 = vsel %vm399, %v7485, %v7489
    %v7491 = vrot.slane %v6769, 4
    %v7492 = vrot.slane %v6772, 5
    %v7493 = vor.u32 %v7491, %v7492
    %v7494 = vrot.slane %v7493, 4
    %v7495 = vrot.slane %v6781, 5
    %v7496 = vsel %vm399, %v7494, %v7495
    %v7497 = vrot.slane %v6778, 4
    %v7498 = vor.u32 %v7497, %v7495
    %v7499 = vrot.slane %v7498, 4
    %v7501 = vshll.u32 %v7446, 16
    %v7503 = vrot.slane %v7501, 5
    %v7504 = vsel %vm399, %v7499, %v7503
    %v7505 = vrot.slane %v6791, 4
    %v7506 = vrot.slane %v6794, 5
    %v7507 = vor.u32 %v7505, %v7506
    %v7508 = vrot.slane %v7507, 4
    %v7509 = vrot.slane %v6803, 5
    %v7510 = vsel %vm399, %v7508, %v7509
    %v7511 = vrot.slane %v6800, 4
    %v7512 = vor.u32 %v7511, %v7509
    %v7513 = vrot.slane %v7512, 4
    %v7515 = vshll.u32 %v7447, 16
    %v7517 = vrot.slane %v7515, 5
    %v7518 = vsel %vm399, %v7513, %v7517
    %v7519 = vrot.slane %v6813, 4
    %v7520 = vrot.slane %v6816, 5
    %v7521 = vor.u32 %v7519, %v7520
    %v7522 = vrot.slane %v7521, 4
    %v7523 = vrot.slane %v6825, 5
    %v7524 = vsel %vm399, %v7522, %v7523
    %v7525 = vrot.slane %v6822, 4
    %v7526 = vor.u32 %v7525, %v7523
    %v7527 = vrot.slane %v7526, 4
    %v7529 = vshll.u32 %v7448, 16
    %v7531 = vrot.slane %v7529, 5
    %v7532 = vsel %vm399, %v7527, %v7531
    %v7533 = vrot.slane %v6835, 4
    %v7534 = vrot.slane %v6838, 5
    %v7535 = vor.u32 %v7533, %v7534
    %v7536 = vrot.slane %v7535, 4
    %v7537 = vrot.slane %v6847, 5
    %v7538 = vsel %vm399, %v7536, %v7537
    %v7539 = vrot.slane %v6844, 4
    %v7540 = vor.u32 %v7539, %v7537
    %v7541 = vrot.slane %v7540, 4
    %v7543 = vshll.u32 %v7449, 16
    %v7545 = vrot.slane %v7543, 5
    %v7546 = vsel %vm399, %v7541, %v7545
    %v7547 = vrot.slane %v6857, 4
    %v7548 = vrot.slane %v6860, 5
    %v7549 = vor.u32 %v7547, %v7548
    %v7550 = vrot.slane %v7549, 4
    %v7551 = vrot.slane %v6869, 5
    %v7552 = vsel %vm399, %v7550, %v7551
    %v7553 = vrot.slane %v6866, 4
    %v7554 = vor.u32 %v7553, %v7551
    %v7555 = vrot.slane %v7554, 4
    %v7557 = vshll.u32 %v7450, 16
    %v7559 = vrot.slane %v7557, 5
    %v7560 = vsel %vm399, %v7555, %v7559
    %v7561 = vrot.slane %v6879, 4
    %v7562 = vrot.slane %v6882, 5
    %v7563 = vor.u32 %v7561, %v7562
    %v7564 = vrot.slane %v7563, 4
    %v7565 = vrot.slane %v6891, 5
    %v7566 = vsel %vm399, %v7564, %v7565
    %v7567 = vrot.slane %v6888, 4
    %v7568 = vor.u32 %v7567, %v7565
    %v7569 = vrot.slane %v7568, 4
    %v7571 = vshll.u32 %v7451, 16
    %v7573 = vrot.slane %v7571, 5
    %v7574 = vsel %vm399, %v7569, %v7573
    %v7575 = vrot.slane %v6901, 4
    %v7576 = vrot.slane %v6904, 5
    %v7577 = vor.u32 %v7575, %v7576
    %v7578 = vrot.slane %v7577, 4
    %v7579 = vrot.slane %v6913, 5
    %v7580 = vsel %vm399, %v7578, %v7579
    %v7581 = vrot.slane %v6910, 4
    %v7582 = vor.u32 %v7581, %v7579
    %v7583 = vrot.slane %v7582, 4
    %v7585 = vshll.u32 %v7452, 16
    %v7587 = vrot.slane %v7585, 5
    %v7588 = vsel %vm399, %v7583, %v7587
    %v7589 = vrot.slane %v6923, 4
    %v7590 = vrot.slane %v6926, 5
    %v7591 = vor.u32 %v7589, %v7590
    %v7592 = vrot.slane %v7591, 4
    %v7593 = vrot.slane %v6935, 5
    %v7594 = vsel %vm399, %v7592, %v7593
    %v7595 = vrot.slane %v6932, 4
    %v7596 = vor.u32 %v7595, %v7593
    %v7597 = vrot.slane %v7596, 4
    %v7599 = vshll.u32 %v7453, 16
    %v7601 = vrot.slane %v7599, 5
    %v7602 = vsel %vm399, %v7597, %v7601
    %v7603 = vrot.slane %v6945, 4
    %v7604 = vrot.slane %v6948, 5
    %v7605 = vor.u32 %v7603, %v7604
    %v7606 = vrot.slane %v7605, 4
    %v7607 = vrot.slane %v6957, 5
    %v7608 = vsel %vm399, %v7606, %v7607
    %v7609 = vrot.slane %v6954, 4
    %v7610 = vor.u32 %v7609, %v7607
    %v7611 = vrot.slane %v7610, 4
    %v7613 = vshll.u32 %v7454, 16
    %v7615 = vrot.slane %v7613, 5
    %v7616 = vsel %vm399, %v7611, %v7615
    %v7617 = vrot.slane %v6967, 4
    %v7618 = vrot.slane %v6970, 5
    %v7619 = vor.u32 %v7617, %v7618
    %v7620 = vrot.slane %v7619, 4
    %v7621 = vrot.slane %v6979, 5
    %v7622 = vsel %vm399, %v7620, %v7621
    %v7623 = vrot.slane %v6976, 4
    %v7624 = vor.u32 %v7623, %v7621
    %v7625 = vrot.slane %v7624, 4
    %v7627 = vshll.u32 %v7455, 16
    %v7629 = vrot.slane %v7627, 5
    %v7630 = vsel %vm399, %v7625, %v7629
    %v7631 = vrot.slane %v6989, 4
    %v7632 = vrot.slane %v6992, 5
    %v7633 = vor.u32 %v7631, %v7632
    %v7634 = vrot.slane %v7633, 4
    %v7635 = vrot.slane %v7001, 5
    %v7636 = vsel %vm399, %v7634, %v7635
    %v7637 = vrot.slane %v6998, 4
    %v7638 = vor.u32 %v7637, %v7635
    %v7639 = vrot.slane %v7638, 4
    %v7641 = vshll.u32 %v7456, 16
    %v7643 = vrot.slane %v7641, 5
    %v7644 = vsel %vm399, %v7639, %v7643
    %v7645 = vrot.slane %v7011, 4
    %v7646 = vrot.slane %v7014, 5
    %v7647 = vor.u32 %v7645, %v7646
    %v7648 = vrot.slane %v7647, 4
    %v7649 = vrot.slane %v7023, 5
    %v7650 = vsel %vm399, %v7648, %v7649
    %v7651 = vrot.slane %v7020, 4
    %v7652 = vor.u32 %v7651, %v7649
    %v7653 = vrot.slane %v7652, 4
    %v7655 = vshll.u32 %v7457, 16
    %v7657 = vrot.slane %v7655, 5
    %v7658 = vsel %vm399, %v7653, %v7657
    %v7659 = vrot.slane %v7033, 4
    %v7660 = vrot.slane %v7036, 5
    %v7661 = vor.u32 %v7659, %v7660
    %v7662 = vrot.slane %v7661, 4
    %v7663 = vrot.slane %v7045, 5
    %v7664 = vsel %vm399, %v7662, %v7663
    %v7665 = vrot.slane %v7042, 4
    %v7666 = vor.u32 %v7665, %v7663
    %v7667 = vrot.slane %v7666, 4
    %v7669 = vshll.u32 %v7458, 16
    %v7671 = vrot.slane %v7669, 5
    %v7672 = vsel %vm399, %v7667, %v7671
    %v7673 = vrot.slane %v7055, 4
    %v7674 = vrot.slane %v7058, 5
    %v7675 = vor.u32 %v7673, %v7674
    %v7676 = vrot.slane %v7675, 4
    %v7677 = vrot.slane %v7067, 5
    %v7678 = vsel %vm399, %v7676, %v7677
    %v7679 = vrot.slane %v7064, 4
    %v7680 = vor.u32 %v7679, %v7677
    %v7681 = vrot.slane %v7680, 4
    %v7683 = vshll.u32 %v7459, 16
    %v7685 = vrot.slane %v7683, 5
    %v7686 = vsel %vm399, %v7681, %v7685
    %v7687 = vrot.slane %v7077, 4
    %v7688 = vrot.slane %v7080, 5
    %v7689 = vor.u32 %v7687, %v7688
    %v7690 = vrot.slane %v7689, 4
    %v7691 = vrot.slane %v7089, 5
    %v7692 = vsel %vm399, %v7690, %v7691
    %v7693 = vrot.slane %v7086, 4
    %v7694 = vor.u32 %v7693, %v7691
    %v7695 = vrot.slane %v7694, 4
    %v7697 = vshll.u32 %v7460, 16
    %v7699 = vrot.slane %v7697, 5
    %v7700 = vsel %vm399, %v7695, %v7699
    %v7701 = vrot.slane %v7099, 4
    %v7702 = vrot.slane %v7102, 5
    %v7703 = vor.u32 %v7701, %v7702
    %v7704 = vrot.slane %v7703, 4
    %v7705 = vrot.slane %v7111, 5
    %v7706 = vsel %vm399, %v7704, %v7705
    %v7707 = vrot.slane %v7108, 4
    %v7708 = vor.u32 %v7707, %v7705
    %v7709 = vrot.slane %v7708, 4
    %v7711 = vshll.u32 %v7461, 16
    %v7713 = vrot.slane %v7711, 5
    %v7714 = vsel %vm399, %v7709, %v7713
    %v7715 = vrot.slane %v7121, 4
    %v7716 = vrot.slane %v7124, 5
    %v7717 = vor.u32 %v7715, %v7716
    %v7718 = vrot.slane %v7717, 4
    %v7719 = vrot.slane %v7133, 5
    %v7720 = vsel %vm399, %v7718, %v7719
    %v7721 = vrot.slane %v7130, 4
    %v7722 = vor.u32 %v7721, %v7719
    %v7723 = vrot.slane %v7722, 4
    %v7725 = vshll.u32 %v7462, 16
    %v7727 = vrot.slane %v7725, 5
    %v7728 = vsel %vm399, %v7723, %v7727
    %v7729 = vrot.slane %v7143, 4
    %v7730 = vrot.slane %v7146, 5
    %v7731 = vor.u32 %v7729, %v7730
    %v7732 = vrot.slane %v7731, 4
    %v7733 = vrot.slane %v7155, 5
    %v7734 = vsel %vm399, %v7732, %v7733
    %v7735 = vrot.slane %v7152, 4
    %v7736 = vor.u32 %v7735, %v7733
    %v7737 = vrot.slane %v7736, 4
    %v7739 = vshll.u32 %v7463, 16
    %v7741 = vrot.slane %v7739, 5
    %v7742 = vsel %vm399, %v7737, %v7741
    %v7743 = vrot.slane %v7165, 4
    %v7744 = vrot.slane %v7168, 5
    %v7745 = vor.u32 %v7743, %v7744
    %v7746 = vrot.slane %v7745, 4
    %v7747 = vrot.slane %v7177, 5
    %v7748 = vsel %vm399, %v7746, %v7747
    %v7749 = vrot.slane %v7174, 4
    %v7750 = vor.u32 %v7749, %v7747
    %v7751 = vrot.slane %v7750, 4
    %v7753 = vshll.u32 %v7464, 16
    %v7755 = vrot.slane %v7753, 5
    %v7756 = vsel %vm399, %v7751, %v7755
    %v7757 = vrot.slane %v7187, 4
    %v7758 = vrot.slane %v7190, 5
    %v7759 = vor.u32 %v7757, %v7758
    %v7760 = vrot.slane %v7759, 4
    %v7761 = vrot.slane %v7199, 5
    %v7762 = vsel %vm399, %v7760, %v7761
    %v7763 = vrot.slane %v7196, 4
    %v7764 = vor.u32 %v7763, %v7761
    %v7765 = vrot.slane %v7764, 4
    %v7767 = vshll.u32 %v7465, 16
    %v7769 = vrot.slane %v7767, 5
    %v7770 = vsel %vm399, %v7765, %v7769
    %v7771 = vrot.slane %v7209, 4
    %v7772 = vrot.slane %v7212, 5
    %v7773 = vor.u32 %v7771, %v7772
    %v7774 = vrot.slane %v7773, 4
    %v7775 = vrot.slane %v7221, 5
    %v7776 = vsel %vm399, %v7774, %v7775
    %v7777 = vrot.slane %v7218, 4
    %v7778 = vor.u32 %v7777, %v7775
    %v7779 = vrot.slane %v7778, 4
    %v7781 = vshll.u32 %v7466, 16
    %v7783 = vrot.slane %v7781, 5
    %v7784 = vsel %vm399, %v7779, %v7783
    %v7785 = vrot.slane %v7231, 4
    %v7786 = vrot.slane %v7234, 5
    %v7787 = vor.u32 %v7785, %v7786
    %v7788 = vrot.slane %v7787, 4
    %v7789 = vrot.slane %v7243, 5
    %v7790 = vsel %vm399, %v7788, %v7789
    %v7791 = vrot.slane %v7240, 4
    %v7792 = vor.u32 %v7791, %v7789
    %v7793 = vrot.slane %v7792, 4
    %v7795 = vshll.u32 %v7467, 16
    %v7797 = vrot.slane %v7795, 5
    %v7798 = vsel %vm399, %v7793, %v7797
    %v7799 = vrot.slane %v7253, 4
    %v7800 = vrot.slane %v7256, 5
    %v7801 = vor.u32 %v7799, %v7800
    %v7802 = vrot.slane %v7801, 4
    %v7803 = vrot.slane %v7265, 5
    %v7804 = vsel %vm399, %v7802, %v7803
    %v7805 = vrot.slane %v7262, 4
    %v7806 = vor.u32 %v7805, %v7803
    %v7807 = vrot.slane %v7806, 4
    %v7809 = vshll.u32 %v7468, 16
    %v7811 = vrot.slane %v7809, 5
    %v7812 = vsel %vm399, %v7807, %v7811
    %v7813 = vrot.slane %v7275, 4
    %v7814 = vrot.slane %v7278, 5
    %v7815 = vor.u32 %v7813, %v7814
    %v7816 = vrot.slane %v7815, 4
    %v7817 = vrot.slane %v7287, 5
    %v7818 = vsel %vm399, %v7816, %v7817
    %v7819 = vrot.slane %v7284, 4
    %v7820 = vor.u32 %v7819, %v7817
    %v7821 = vrot.slane %v7820, 4
    %v7823 = vshll.u32 %v7469, 16
    %v7825 = vrot.slane %v7823, 5
    %v7826 = vsel %vm399, %v7821, %v7825
    %v7827 = vrot.slane %v7297, 4
    %v7828 = vrot.slane %v7300, 5
    %v7829 = vor.u32 %v7827, %v7828
    %v7830 = vrot.slane %v7829, 4
    %v7831 = vrot.slane %v7309, 5
    %v7832 = vsel %vm399, %v7830, %v7831
    %v7833 = vrot.slane %v7306, 4
    %v7834 = vor.u32 %v7833, %v7831
    %v7835 = vrot.slane %v7834, 4
    %v7837 = vshll.u32 %v7470, 16
    %v7839 = vrot.slane %v7837, 5
    %v7840 = vsel %vm399, %v7835, %v7839
    %v7841 = vrot.slane %v7319, 4
    %v7842 = vrot.slane %v7322, 5
    %v7843 = vor.u32 %v7841, %v7842
    %v7844 = vrot.slane %v7843, 4
    %v7845 = vrot.slane %v7331, 5
    %v7846 = vsel %vm399, %v7844, %v7845
    %v7847 = vrot.slane %v7328, 4
    %v7848 = vor.u32 %v7847, %v7845
    %v7849 = vrot.slane %v7848, 4
    %v7851 = vshll.u32 %v7471, 16
    %v7853 = vrot.slane %v7851, 5
    %v7854 = vsel %vm399, %v7849, %v7853
    %v7855 = vrot.slane %v7341, 4
    %v7856 = vrot.slane %v7344, 5
    %v7857 = vor.u32 %v7855, %v7856
    %v7858 = vrot.slane %v7857, 4
    %v7859 = vrot.slane %v7353, 5
    %v7860 = vsel %vm399, %v7858, %v7859
    %v7861 = vrot.slane %v7350, 4
    %v7862 = vor.u32 %v7861, %v7859
    %v7863 = vrot.slane %v7862, 4
    %v7865 = vshll.u32 %v7472, 16
    %v7867 = vrot.slane %v7865, 5
    %v7868 = vsel %vm399, %v7863, %v7867
    %v7869 = vrot.slane %v7363, 4
    %v7870 = vrot.slane %v7366, 5
    %v7871 = vor.u32 %v7869, %v7870
    %v7872 = vrot.slane %v7871, 4
    %v7873 = vrot.slane %v7375, 5
    %v7874 = vsel %vm399, %v7872, %v7873
    %v7875 = vrot.slane %v7372, 4
    %v7876 = vor.u32 %v7875, %v7873
    %v7877 = vrot.slane %v7876, 4
    %v7879 = vshll.u32 %v7473, 16
    %v7881 = vrot.slane %v7879, 5
    %v7882 = vsel %vm399, %v7877, %v7881
    %v7883 = vrot.slane %v7385, 4
    %v7884 = vrot.slane %v7388, 5
    %v7885 = vor.u32 %v7883, %v7884
    %v7886 = vrot.slane %v7885, 4
    %v7887 = vrot.slane %v7397, 5
    %v7888 = vsel %vm399, %v7886, %v7887
    %v7889 = vrot.slane %v7394, 4
    %v7890 = vor.u32 %v7889, %v7887
    %v7891 = vrot.slane %v7890, 4
    %v7893 = vshll.u32 %v7474, 16
    %v7895 = vrot.slane %v7893, 5
    %v7896 = vsel %vm399, %v7891, %v7895
    %v7897 = vrot.slane %v7407, 4
    %v7898 = vrot.slane %v7410, 5
    %v7899 = vor.u32 %v7897, %v7898
    %v7900 = vrot.slane %v7899, 4
    %v7901 = vrot.slane %v7419, 5
    %v7902 = vsel %vm399, %v7900, %v7901
    %v7903 = vrot.slane %v7416, 4
    %v7904 = vor.u32 %v7903, %v7901
    %v7905 = vrot.slane %v7904, 4
    %v7907 = vshll.u32 %v7475, 16
    %v7909 = vrot.slane %v7907, 5
    %v7910 = vsel %vm399, %v7905, %v7909
    %v7911 = vrot.slane %v7429, 4
    %v7912 = vrot.slane %v7432, 5
    %v7913 = vor.u32 %v7911, %v7912
    %v7914 = vrot.slane %v7913, 4
    %v7915 = vrot.slane %v7441, 5
    %v7916 = vsel %vm399, %v7914, %v7915
    %v7917 = vrot.slane %v7438, 4
    %v7918 = vor.u32 %v7917, %v7915
    %v7919 = vrot.slane %v7918, 4
    %v7921 = vshll.u32 %v7476, 16
    %v7923 = vrot.slane %v7921, 5
    %v7924 = vsel %vm399, %v7919, %v7923
    %v7925 = vunpack.c.l.b16 %v6753
    %v7926 = vunpack.c.l.b16 %v6762
    %v7927 = vunpack.c.l.b16 %v6775
    %v7928 = vunpack.c.l.b16 %v6784
    %v7929 = vunpack.c.l.b16 %v6797
    %v7930 = vunpack.c.l.b16 %v6806
    %v7931 = vunpack.c.l.b16 %v6819
    %v7932 = vunpack.c.l.b16 %v6828
    %v7933 = vunpack.c.l.b16 %v6841
    %v7934 = vunpack.c.l.b16 %v6850
    %v7935 = vunpack.c.l.b16 %v6863
    %v7936 = vunpack.c.l.b16 %v6872
    %v7937 = vunpack.c.l.b16 %v6885
    %v7938 = vunpack.c.l.b16 %v6894
    %v7939 = vunpack.c.l.b16 %v6907
    %v7940 = vunpack.c.l.b16 %v6916
    %v7941 = vunpack.c.l.b16 %v6929
    %v7942 = vunpack.c.l.b16 %v6938
    %v7943 = vunpack.c.l.b16 %v6951
    %v7944 = vunpack.c.l.b16 %v6960
    %v7945 = vunpack.c.l.b16 %v6973
    %v7946 = vunpack.c.l.b16 %v6982
    %v7947 = vunpack.c.l.b16 %v6995
    %v7948 = vunpack.c.l.b16 %v7004
    %v7949 = vunpack.c.l.b16 %v7017
    %v7950 = vunpack.c.l.b16 %v7026
    %v7951 = vunpack.c.l.b16 %v7039
    %v7952 = vunpack.c.l.b16 %v7048
    %v7953 = vunpack.c.l.b16 %v7061
    %v7954 = vunpack.c.l.b16 %v7070
    %v7955 = vunpack.c.l.b16 %v7083
    %v7956 = vunpack.c.l.b16 %v7092
    %v7957 = vunpack.c.l.b16 %v7105
    %v7958 = vunpack.c.l.b16 %v7114
    %v7959 = vunpack.c.l.b16 %v7127
    %v7960 = vunpack.c.l.b16 %v7136
    %v7961 = vunpack.c.l.b16 %v7149
    %v7962 = vunpack.c.l.b16 %v7158
    %v7963 = vunpack.c.l.b16 %v7171
    %v7964 = vunpack.c.l.b16 %v7180
    %v7965 = vunpack.c.l.b16 %v7193
    %v7966 = vunpack.c.l.b16 %v7202
    %v7967 = vunpack.c.l.b16 %v7215
    %v7968 = vunpack.c.l.b16 %v7224
    %v7969 = vunpack.c.l.b16 %v7237
    %v7970 = vunpack.c.l.b16 %v7246
    %v7971 = vunpack.c.l.b16 %v7259
    %v7972 = vunpack.c.l.b16 %v7268
    %v7973 = vunpack.c.l.b16 %v7281
    %v7974 = vunpack.c.l.b16 %v7290
    %v7975 = vunpack.c.l.b16 %v7303
    %v7976 = vunpack.c.l.b16 %v7312
    %v7977 = vunpack.c.l.b16 %v7325
    %v7978 = vunpack.c.l.b16 %v7334
    %v7979 = vunpack.c.l.b16 %v7347
    %v7980 = vunpack.c.l.b16 %v7356
    %v7981 = vunpack.c.l.b16 %v7369
    %v7982 = vunpack.c.l.b16 %v7378
    %v7983 = vunpack.c.l.b16 %v7391
    %v7984 = vunpack.c.l.b16 %v7400
    %v7985 = vunpack.c.l.b16 %v7413
    %v7986 = vunpack.c.l.b16 %v7422
    %v7987 = vunpack.c.l.b16 %v7435
    %v7988 = vunpack.c.l.b16 %v7444
    %v7989 = vpack.c.b16 %v7926, %v7925
    %v7990 = vpack.c.b16 %v7928, %v7927
    %v7991 = vpack.c.b16 %v7930, %v7929
    %v7992 = vpack.c.b16 %v7932, %v7931
    %v7993 = vpack.c.b16 %v7934, %v7933
    %v7994 = vpack.c.b16 %v7936, %v7935
    %v7995 = vpack.c.b16 %v7938, %v7937
    %v7996 = vpack.c.b16 %v7940, %v7939
    %v7997 = vpack.c.b16 %v7942, %v7941
    %v7998 = vpack.c.b16 %v7944, %v7943
    %v7999 = vpack.c.b16 %v7946, %v7945
    %v8000 = vpack.c.b16 %v7948, %v7947
    %v8001 = vpack.c.b16 %v7950, %v7949
    %v8002 = vpack.c.b16 %v7952, %v7951
    %v8003 = vpack.c.b16 %v7954, %v7953
    %v8004 = vpack.c.b16 %v7956, %v7955
    %v8005 = vpack.c.b16 %v7958, %v7957
    %v8006 = vpack.c.b16 %v7960, %v7959
    %v8007 = vpack.c.b16 %v7962, %v7961
    %v8008 = vpack.c.b16 %v7964, %v7963
    %v8009 = vpack.c.b16 %v7966, %v7965
    %v8010 = vpack.c.b16 %v7968, %v7967
    %v8011 = vpack.c.b16 %v7970, %v7969
    %v8012 = vpack.c.b16 %v7972, %v7971
    %v8013 = vpack.c.b16 %v7974, %v7973
    %v8014 = vpack.c.b16 %v7976, %v7975
    %v8015 = vpack.c.b16 %v7978, %v7977
    %v8016 = vpack.c.b16 %v7980, %v7979
    %v8017 = vpack.c.b16 %v7982, %v7981
    %v8018 = vpack.c.b16 %v7984, %v7983
    %v8019 = vpack.c.b16 %v7986, %v7985
    %v8020 = vpack.c.b16 %v7988, %v7987
    %v8117 = vunpack.c.l.b16 %v6646
    %v8118 = vunpack.c.l.b16 %v6647
    %v8119 = vunpack.c.l.b16 %v6649
    %v8120 = vunpack.c.l.b16 %v6650
    %v8121 = vunpack.c.l.b16 %v6652
    %v8122 = vunpack.c.l.b16 %v6653
    %v8123 = vunpack.c.l.b16 %v6655
    %v8124 = vunpack.c.l.b16 %v6656
    %v8125 = vunpack.c.l.b16 %v6658
    %v8126 = vunpack.c.l.b16 %v6659
    %v8127 = vunpack.c.l.b16 %v6661
    %v8128 = vunpack.c.l.b16 %v6662
    %v8129 = vunpack.c.l.b16 %v6664
    %v8130 = vunpack.c.l.b16 %v6665
    %v8131 = vunpack.c.l.b16 %v6667
    %v8132 = vunpack.c.l.b16 %v6668
    %v8133 = vunpack.c.l.b16 %v6670
    %v8134 = vunpack.c.l.b16 %v6671
    %v8135 = vunpack.c.l.b16 %v6673
    %v8136 = vunpack.c.l.b16 %v6674
    %v8137 = vunpack.c.l.b16 %v6676
    %v8138 = vunpack.c.l.b16 %v6677
    %v8139 = vunpack.c.l.b16 %v6679
    %v8140 = vunpack.c.l.b16 %v6680
    %v8141 = vunpack.c.l.b16 %v6682
    %v8142 = vunpack.c.l.b16 %v6683
    %v8143 = vunpack.c.l.b16 %v6685
    %v8144 = vunpack.c.l.b16 %v6686
    %v8145 = vunpack.c.l.b16 %v6688
    %v8146 = vunpack.c.l.b16 %v6689
    %v8147 = vunpack.c.l.b16 %v6691
    %v8148 = vunpack.c.l.b16 %v6692
    %v8149 = vunpack.c.l.b16 %v6694
    %v8150 = vunpack.c.l.b16 %v6695
    %v8151 = vunpack.c.l.b16 %v6697
    %v8152 = vunpack.c.l.b16 %v6698
    %v8153 = vunpack.c.l.b16 %v6700
    %v8154 = vunpack.c.l.b16 %v6701
    %v8155 = vunpack.c.l.b16 %v6703
    %v8156 = vunpack.c.l.b16 %v6704
    %v8157 = vunpack.c.l.b16 %v6706
    %v8158 = vunpack.c.l.b16 %v6707
    %v8159 = vunpack.c.l.b16 %v6709
    %v8160 = vunpack.c.l.b16 %v6710
    %v8161 = vunpack.c.l.b16 %v6712
    %v8162 = vunpack.c.l.b16 %v6713
    %v8163 = vunpack.c.l.b16 %v6715
    %v8164 = vunpack.c.l.b16 %v6716
    %v8165 = vunpack.c.l.b16 %v6718
    %v8166 = vunpack.c.l.b16 %v6719
    %v8167 = vunpack.c.l.b16 %v6721
    %v8168 = vunpack.c.l.b16 %v6722
    %v8169 = vunpack.c.l.b16 %v6724
    %v8170 = vunpack.c.l.b16 %v6725
    %v8171 = vunpack.c.l.b16 %v6727
    %v8172 = vunpack.c.l.b16 %v6728
    %v8173 = vunpack.c.l.b16 %v6730
    %v8174 = vunpack.c.l.b16 %v6731
    %v8175 = vunpack.c.l.b16 %v6733
    %v8176 = vunpack.c.l.b16 %v6734
    %v8177 = vunpack.c.l.b16 %v6736
    %v8178 = vunpack.c.l.b16 %v6737
    %v8179 = vunpack.c.l.b16 %v6739
    %v8180 = vunpack.c.l.b16 %v6740
    %v8181 = vpack.c.b16 %v8118, %v8117
    %v8182 = vpack.c.b16 %v8120, %v8119
    %v8183 = vpack.c.b16 %v8122, %v8121
    %v8184 = vpack.c.b16 %v8124, %v8123
    %v8185 = vpack.c.b16 %v8126, %v8125
    %v8186 = vpack.c.b16 %v8128, %v8127
    %v8187 = vpack.c.b16 %v8130, %v8129
    %v8188 = vpack.c.b16 %v8132, %v8131
    %v8189 = vpack.c.b16 %v8134, %v8133
    %v8190 = vpack.c.b16 %v8136, %v8135
    %v8191 = vpack.c.b16 %v8138, %v8137
    %v8192 = vpack.c.b16 %v8140, %v8139
    %v8193 = vpack.c.b16 %v8142, %v8141
    %v8194 = vpack.c.b16 %v8144, %v8143
    %v8195 = vpack.c.b16 %v8146, %v8145
    %v8196 = vpack.c.b16 %v8148, %v8147
    %v8197 = vpack.c.b16 %v8150, %v8149
    %v8198 = vpack.c.b16 %v8152, %v8151
    %v8199 = vpack.c.b16 %v8154, %v8153
    %v8200 = vpack.c.b16 %v8156, %v8155
    %v8201 = vpack.c.b16 %v8158, %v8157
    %v8202 = vpack.c.b16 %v8160, %v8159
    %v8203 = vpack.c.b16 %v8162, %v8161
    %v8204 = vpack.c.b16 %v8164, %v8163
    %v8205 = vpack.c.b16 %v8166, %v8165
    %v8206 = vpack.c.b16 %v8168, %v8167
    %v8207 = vpack.c.b16 %v8170, %v8169
    %v8208 = vpack.c.b16 %v8172, %v8171
    %v8209 = vpack.c.b16 %v8174, %v8173
    %v8210 = vpack.c.b16 %v8176, %v8175
    %v8211 = vpack.c.b16 %v8178, %v8177
    %v8212 = vpack.c.b16 %v8180, %v8179
    %v8245 = vunpack.c.l.b16 %v7482
    %v8246 = vunpack.c.l.b16 %v7490
    %v8247 = vunpack.c.l.b16 %v7496
    %v8248 = vunpack.c.l.b16 %v7504
    %v8249 = vunpack.c.l.b16 %v7510
    %v8250 = vunpack.c.l.b16 %v7518
    %v8251 = vunpack.c.l.b16 %v7524
    %v8252 = vunpack.c.l.b16 %v7532
    %v8253 = vunpack.c.l.b16 %v7538
    %v8254 = vunpack.c.l.b16 %v7546
    %v8255 = vunpack.c.l.b16 %v7552
    %v8256 = vunpack.c.l.b16 %v7560
    %v8257 = vunpack.c.l.b16 %v7566
    %v8258 = vunpack.c.l.b16 %v7574
    %v8259 = vunpack.c.l.b16 %v7580
    %v8260 = vunpack.c.l.b16 %v7588
    %v8261 = vunpack.c.l.b16 %v7594
    %v8262 = vunpack.c.l.b16 %v7602
    %v8263 = vunpack.c.l.b16 %v7608
    %v8264 = vunpack.c.l.b16 %v7616
    %v8265 = vunpack.c.l.b16 %v7622
    %v8266 = vunpack.c.l.b16 %v7630
    %v8267 = vunpack.c.l.b16 %v7636
    %v8268 = vunpack.c.l.b16 %v7644
    %v8269 = vunpack.c.l.b16 %v7650
    %v8270 = vunpack.c.l.b16 %v7658
    %v8271 = vunpack.c.l.b16 %v7664
    %v8272 = vunpack.c.l.b16 %v7672
    %v8273 = vunpack.c.l.b16 %v7678
    %v8274 = vunpack.c.l.b16 %v7686
    %v8275 = vunpack.c.l.b16 %v7692
    %v8276 = vunpack.c.l.b16 %v7700
    %v8277 = vunpack.c.l.b16 %v7706
    %v8278 = vunpack.c.l.b16 %v7714
    %v8279 = vunpack.c.l.b16 %v7720
    %v8280 = vunpack.c.l.b16 %v7728
    %v8281 = vunpack.c.l.b16 %v7734
    %v8282 = vunpack.c.l.b16 %v7742
    %v8283 = vunpack.c.l.b16 %v7748
    %v8284 = vunpack.c.l.b16 %v7756
    %v8285 = vunpack.c.l.b16 %v7762
    %v8286 = vunpack.c.l.b16 %v7770
    %v8287 = vunpack.c.l.b16 %v7776
    %v8288 = vunpack.c.l.b16 %v7784
    %v8289 = vunpack.c.l.b16 %v7790
    %v8290 = vunpack.c.l.b16 %v7798
    %v8291 = vunpack.c.l.b16 %v7804
    %v8292 = vunpack.c.l.b16 %v7812
    %v8293 = vunpack.c.l.b16 %v7818
    %v8294 = vunpack.c.l.b16 %v7826
    %v8295 = vunpack.c.l.b16 %v7832
    %v8296 = vunpack.c.l.b16 %v7840
    %v8297 = vunpack.c.l.b16 %v7846
    %v8298 = vunpack.c.l.b16 %v7854
    %v8299 = vunpack.c.l.b16 %v7860
    %v8300 = vunpack.c.l.b16 %v7868
    %v8301 = vunpack.c.l.b16 %v7874
    %v8302 = vunpack.c.l.b16 %v7882
    %v8303 = vunpack.c.l.b16 %v7888
    %v8304 = vunpack.c.l.b16 %v7896
    %v8305 = vunpack.c.l.b16 %v7902
    %v8306 = vunpack.c.l.b16 %v7910
    %v8307 = vunpack.c.l.b16 %v7916
    %v8308 = vunpack.c.l.b16 %v7924
    %v8309 = vpack.c.b16 %v8246, %v8245
    %v8310 = vpack.c.b16 %v8248, %v8247
    %v8311 = vpack.c.b16 %v8250, %v8249
    %v8312 = vpack.c.b16 %v8252, %v8251
    %v8313 = vpack.c.b16 %v8254, %v8253
    %v8314 = vpack.c.b16 %v8256, %v8255
    %v8315 = vpack.c.b16 %v8258, %v8257
    %v8316 = vpack.c.b16 %v8260, %v8259
    %v8317 = vpack.c.b16 %v8262, %v8261
    %v8318 = vpack.c.b16 %v8264, %v8263
    %v8319 = vpack.c.b16 %v8266, %v8265
    %v8320 = vpack.c.b16 %v8268, %v8267
    %v8321 = vpack.c.b16 %v8270, %v8269
    %v8322 = vpack.c.b16 %v8272, %v8271
    %v8323 = vpack.c.b16 %v8274, %v8273
    %v8324 = vpack.c.b16 %v8276, %v8275
    %v8325 = vpack.c.b16 %v8278, %v8277
    %v8326 = vpack.c.b16 %v8280, %v8279
    %v8327 = vpack.c.b16 %v8282, %v8281
    %v8328 = vpack.c.b16 %v8284, %v8283
    %v8329 = vpack.c.b16 %v8286, %v8285
    %v8330 = vpack.c.b16 %v8288, %v8287
    %v8331 = vpack.c.b16 %v8290, %v8289
    %v8332 = vpack.c.b16 %v8292, %v8291
    %v8333 = vpack.c.b16 %v8294, %v8293
    %v8334 = vpack.c.b16 %v8296, %v8295
    %v8335 = vpack.c.b16 %v8298, %v8297
    %v8336 = vpack.c.b16 %v8300, %v8299
    %v8337 = vpack.c.b16 %v8302, %v8301
    %v8338 = vpack.c.b16 %v8304, %v8303
    %v8339 = vpack.c.b16 %v8306, %v8305
    %v8340 = vpack.c.b16 %v8308, %v8307
    %v8421 = vunpack.c.l.b16 %v4818
    %v8422 = vunpack.c.l.b16 %v4819
    %v8423 = vunpack.c.l.b16 %v4820
    %v8424 = vunpack.c.l.b16 %v4821
    %v8425 = vunpack.c.l.b16 %v4822
    %v8426 = vunpack.c.l.b16 %v4823
    %v8427 = vunpack.c.l.b16 %v4824
    %v8428 = vunpack.c.l.b16 %v4825
    %v8429 = vunpack.c.l.b16 %v4826
    %v8430 = vunpack.c.l.b16 %v4827
    %v8431 = vunpack.c.l.b16 %v4828
    %v8432 = vunpack.c.l.b16 %v4829
    %v8433 = vunpack.c.l.b16 %v4830
    %v8434 = vunpack.c.l.b16 %v4831
    %v8435 = vunpack.c.l.b16 %v4832
    %v8436 = vunpack.c.l.b16 %v4833
    %v8437 = vunpack.c.l.b16 %v4834
    %v8438 = vunpack.c.l.b16 %v4835
    %v8439 = vunpack.c.l.b16 %v4836
    %v8440 = vunpack.c.l.b16 %v4837
    %v8441 = vunpack.c.l.b16 %v4838
    %v8442 = vunpack.c.l.b16 %v4839
    %v8443 = vunpack.c.l.b16 %v4840
    %v8444 = vunpack.c.l.b16 %v4841
    %v8445 = vunpack.c.l.b16 %v4842
    %v8446 = vunpack.c.l.b16 %v4843
    %v8447 = vunpack.c.l.b16 %v4844
    %v8448 = vunpack.c.l.b16 %v4845
    %v8449 = vunpack.c.l.b16 %v4846
    %v8450 = vunpack.c.l.b16 %v4847
    %v8451 = vunpack.c.l.b16 %v4848
    %v8452 = vunpack.c.l.b16 %v4849
    %v8453 = vunpack.c.l.b16 %v4850
    %v8454 = vunpack.c.l.b16 %v4851
    %v8455 = vunpack.c.l.b16 %v4852
    %v8456 = vunpack.c.l.b16 %v4853
    %v8457 = vunpack.c.l.b16 %v4854
    %v8458 = vunpack.c.l.b16 %v4855
    %v8459 = vunpack.c.l.b16 %v4856
    %v8460 = vunpack.c.l.b16 %v4857
    %v8461 = vunpack.c.l.b16 %v4858
    %v8462 = vunpack.c.l.b16 %v4859
    %v8463 = vunpack.c.l.b16 %v4860
    %v8464 = vunpack.c.l.b16 %v4861
    %v8465 = vunpack.c.l.b16 %v4862
    %v8466 = vunpack.c.l.b16 %v4863
    %v8467 = vunpack.c.l.b16 %v4864
    %v8468 = vunpack.c.l.b16 %v4865
    %v8469 = vpack.c.b16 %v8422, %v8421
    %v8470 = vpack.c.b16 %v8424, %v8423
    %v8471 = vpack.c.b16 %v8426, %v8425
    %v8472 = vpack.c.b16 %v8428, %v8427
    %v8473 = vpack.c.b16 %v8430, %v8429
    %v8474 = vpack.c.b16 %v8432, %v8431
    %v8475 = vpack.c.b16 %v8434, %v8433
    %v8476 = vpack.c.b16 %v8436, %v8435
    %v8477 = vpack.c.b16 %v8438, %v8437
    %v8478 = vpack.c.b16 %v8440, %v8439
    %v8479 = vpack.c.b16 %v8442, %v8441
    %v8480 = vpack.c.b16 %v8444, %v8443
    %v8481 = vpack.c.b16 %v8446, %v8445
    %v8482 = vpack.c.b16 %v8448, %v8447
    %v8483 = vpack.c.b16 %v8450, %v8449
    %v8484 = vpack.c.b16 %v8452, %v8451
    %v8485 = vpack.c.b16 %v8454, %v8453
    %v8486 = vpack.c.b16 %v8456, %v8455
    %v8487 = vpack.c.b16 %v8458, %v8457
    %v8488 = vpack.c.b16 %v8460, %v8459
    %v8489 = vpack.c.b16 %v8462, %v8461
    %v8490 = vpack.c.b16 %v8464, %v8463
    %v8491 = vpack.c.b16 %v8466, %v8465
    %v8492 = vpack.c.b16 %v8468, %v8467
    %8517 = vmatpush.bf16.msra.mxu0 %v8476
    %8518 = vmatpush.bf16.msra.mxu0 %v8475
    %8519 = vmatpush.bf16.msra.mxu0 %v8474
    %8520 = vmatpush.bf16.msra.mxu0 %v8473
    %8521 = vmatpush.bf16.msra.mxu0 %v8472
    %8522 = vmatpush.bf16.msra.mxu0 %v8471
    %8523 = vmatpush.bf16.msra.mxu0 %v8470
    %8524 = vmatpush.bf16.msra.mxu0 %v8469
    %8525 = vmatmul.bf16.gmra.mxu0 %v7989
    %v8526 = vpop.f32.mrf.mxu0
    %v8527 = vadd.f32 0.0, %v8526
    %v8528 = vpop.f32.mrf.mxu0
    %v8529 = vadd.f32 0.0, %v8528
    %8530 = vmatmul.bf16.gmra.mxu0 %v7990
    %v8531 = vpop.f32.mrf.mxu0
    %v8532 = vadd.f32 0.0, %v8531
    %v8533 = vpop.f32.mrf.mxu0
    %v8534 = vadd.f32 0.0, %v8533
    %8535 = vmatmul.bf16.gmra.mxu0 %v7991
    %v8536 = vpop.f32.mrf.mxu0
    %v8537 = vadd.f32 0.0, %v8536
    %v8538 = vpop.f32.mrf.mxu0
    %v8539 = vadd.f32 0.0, %v8538
    %8540 = vmatmul.bf16.gmra.mxu0 %v7992
    %v8541 = vpop.f32.mrf.mxu0
    %v8542 = vadd.f32 0.0, %v8541
    %v8543 = vpop.f32.mrf.mxu0
    %v8544 = vadd.f32 0.0, %v8543
    %8545 = vmatmul.bf16.gmra.mxu0 %v7993
    %v8546 = vpop.f32.mrf.mxu0
    %v8547 = vadd.f32 0.0, %v8546
    %v8548 = vpop.f32.mrf.mxu0
    %v8549 = vadd.f32 0.0, %v8548
    %8550 = vmatmul.bf16.gmra.mxu0 %v7994
    %v8551 = vpop.f32.mrf.mxu0
    %v8552 = vadd.f32 0.0, %v8551
    %v8553 = vpop.f32.mrf.mxu0
    %v8554 = vadd.f32 0.0, %v8553
    %8555 = vmatmul.bf16.gmra.mxu0 %v7995
    %v8556 = vpop.f32.mrf.mxu0
    %v8557 = vadd.f32 0.0, %v8556
    %v8558 = vpop.f32.mrf.mxu0
    %v8559 = vadd.f32 0.0, %v8558
    %8560 = vmatmul.bf16.gmra.mxu0 %v7996
    %v8561 = vpop.f32.mrf.mxu0
    %v8562 = vadd.f32 0.0, %v8561
    %v8563 = vpop.f32.mrf.mxu0
    %v8564 = vadd.f32 0.0, %v8563
    %8565 = vmatmul.bf16.gmra.mxu0 %v7997
    %v8566 = vpop.f32.mrf.mxu0
    %v8567 = vadd.f32 0.0, %v8566
    %v8568 = vpop.f32.mrf.mxu0
    %v8569 = vadd.f32 0.0, %v8568
    %8570 = vmatmul.bf16.gmra.mxu0 %v7998
    %v8571 = vpop.f32.mrf.mxu0
    %v8572 = vadd.f32 0.0, %v8571
    %v8573 = vpop.f32.mrf.mxu0
    %v8574 = vadd.f32 0.0, %v8573
    %8575 = vmatmul.bf16.gmra.mxu0 %v7999
    %v8576 = vpop.f32.mrf.mxu0
    %v8577 = vadd.f32 0.0, %v8576
    %v8578 = vpop.f32.mrf.mxu0
    %v8579 = vadd.f32 0.0, %v8578
    %8580 = vmatmul.bf16.gmra.mxu0 %v8000
    %v8581 = vpop.f32.mrf.mxu0
    %v8582 = vadd.f32 0.0, %v8581
    %v8583 = vpop.f32.mrf.mxu0
    %v8584 = vadd.f32 0.0, %v8583
    %8585 = vmatmul.bf16.gmra.mxu0 %v8001
    %v8586 = vpop.f32.mrf.mxu0
    %v8587 = vadd.f32 0.0, %v8586
    %v8588 = vpop.f32.mrf.mxu0
    %v8589 = vadd.f32 0.0, %v8588
    %8590 = vmatmul.bf16.gmra.mxu0 %v8002
    %v8591 = vpop.f32.mrf.mxu0
    %v8592 = vadd.f32 0.0, %v8591
    %v8593 = vpop.f32.mrf.mxu0
    %v8594 = vadd.f32 0.0, %v8593
    %8595 = vmatmul.bf16.gmra.mxu0 %v8003
    %v8596 = vpop.f32.mrf.mxu0
    %v8597 = vadd.f32 0.0, %v8596
    %v8598 = vpop.f32.mrf.mxu0
    %v8599 = vadd.f32 0.0, %v8598
    %8600 = vmatmul.bf16.gmra.mxu0 %v8004
    %v8601 = vpop.f32.mrf.mxu0
    %v8602 = vadd.f32 0.0, %v8601
    %v8603 = vpop.f32.mrf.mxu0
    %v8604 = vadd.f32 0.0, %v8603
    %8605 = vmatmul.bf16.gmra.mxu0 %v8005
    %v8606 = vpop.f32.mrf.mxu0
    %v8607 = vadd.f32 0.0, %v8606
    %v8608 = vpop.f32.mrf.mxu0
    %v8609 = vadd.f32 0.0, %v8608
    %8610 = vmatmul.bf16.gmra.mxu0 %v8006
    %v8611 = vpop.f32.mrf.mxu0
    %v8612 = vadd.f32 0.0, %v8611
    %v8613 = vpop.f32.mrf.mxu0
    %v8614 = vadd.f32 0.0, %v8613
    %8615 = vmatmul.bf16.gmra.mxu0 %v8007
    %v8616 = vpop.f32.mrf.mxu0
    %v8617 = vadd.f32 0.0, %v8616
    %v8618 = vpop.f32.mrf.mxu0
    %v8619 = vadd.f32 0.0, %v8618
    %8620 = vmatmul.bf16.gmra.mxu0 %v8008
    %v8621 = vpop.f32.mrf.mxu0
    %v8622 = vadd.f32 0.0, %v8621
    %v8623 = vpop.f32.mrf.mxu0
    %v8624 = vadd.f32 0.0, %v8623
    %8625 = vmatmul.bf16.gmra.mxu0 %v8009
    %v8626 = vpop.f32.mrf.mxu0
    %v8627 = vadd.f32 0.0, %v8626
    %v8628 = vpop.f32.mrf.mxu0
    %v8629 = vadd.f32 0.0, %v8628
    %8630 = vmatmul.bf16.gmra.mxu0 %v8010
    %v8631 = vpop.f32.mrf.mxu0
    %v8632 = vadd.f32 0.0, %v8631
    %v8633 = vpop.f32.mrf.mxu0
    %v8634 = vadd.f32 0.0, %v8633
    %8635 = vmatmul.bf16.gmra.mxu0 %v8011
    %v8636 = vpop.f32.mrf.mxu0
    %v8637 = vadd.f32 0.0, %v8636
    %v8638 = vpop.f32.mrf.mxu0
    %v8639 = vadd.f32 0.0, %v8638
    %8640 = vmatmul.bf16.gmra.mxu0 %v8012
    %v8641 = vpop.f32.mrf.mxu0
    %v8642 = vadd.f32 0.0, %v8641
    %v8643 = vpop.f32.mrf.mxu0
    %v8644 = vadd.f32 0.0, %v8643
    %8645 = vmatmul.bf16.gmra.mxu0 %v8013
    %v8646 = vpop.f32.mrf.mxu0
    %v8647 = vadd.f32 0.0, %v8646
    %v8648 = vpop.f32.mrf.mxu0
    %v8649 = vadd.f32 0.0, %v8648
    %8650 = vmatmul.bf16.gmra.mxu0 %v8014
    %v8651 = vpop.f32.mrf.mxu0
    %v8652 = vadd.f32 0.0, %v8651
    %v8653 = vpop.f32.mrf.mxu0
    %v8654 = vadd.f32 0.0, %v8653
    %8655 = vmatmul.bf16.gmra.mxu0 %v8015
    %v8656 = vpop.f32.mrf.mxu0
    %v8657 = vadd.f32 0.0, %v8656
    %v8658 = vpop.f32.mrf.mxu0
    %v8659 = vadd.f32 0.0, %v8658
    %8660 = vmatmul.bf16.gmra.mxu0 %v8016
    %v8661 = vpop.f32.mrf.mxu0
    %v8662 = vadd.f32 0.0, %v8661
    %v8663 = vpop.f32.mrf.mxu0
    %v8664 = vadd.f32 0.0, %v8663
    %8665 = vmatmul.bf16.gmra.mxu0 %v8017
    %v8666 = vpop.f32.mrf.mxu0
    %v8667 = vadd.f32 0.0, %v8666
    %v8668 = vpop.f32.mrf.mxu0
    %v8669 = vadd.f32 0.0, %v8668
    %8670 = vmatmul.bf16.gmra.mxu0 %v8018
    %v8671 = vpop.f32.mrf.mxu0
    %v8672 = vadd.f32 0.0, %v8671
    %v8673 = vpop.f32.mrf.mxu0
    %v8674 = vadd.f32 0.0, %v8673
    %8675 = vmatmul.bf16.gmra.mxu0 %v8019
    %v8676 = vpop.f32.mrf.mxu0
    %v8677 = vadd.f32 0.0, %v8676
    %v8678 = vpop.f32.mrf.mxu0
    %v8679 = vadd.f32 0.0, %v8678
    %8680 = vmatmul.bf16.gmra.mxu0 %v8020
    %v8681 = vpop.f32.mrf.mxu0
    %v8682 = vadd.f32 0.0, %v8681
    %v8683 = vpop.f32.mrf.mxu0
    %v8684 = vadd.f32 0.0, %v8683
    %8685 = vdwg.mxu0
    %8686 = vmatpush.bf16.msra.mxu0 %v8484
    %8687 = vmatpush.bf16.msra.mxu0 %v8483
    %8688 = vmatpush.bf16.msra.mxu0 %v8482
    %8689 = vmatpush.bf16.msra.mxu0 %v8481
    %8690 = vmatpush.bf16.msra.mxu0 %v8480
    %8691 = vmatpush.bf16.msra.mxu0 %v8479
    %8692 = vmatpush.bf16.msra.mxu0 %v8478
    %8693 = vmatpush.bf16.msra.mxu0 %v8477
    %8694 = vmatmul.bf16.gmra.mxu0 %v8181
    %v8695 = vpop.f32.mrf.mxu0
    %v8696 = vadd.f32 %v8527, %v8695
    %v8697 = vpop.f32.mrf.mxu0
    %v8698 = vadd.f32 %v8529, %v8697
    %8699 = vmatmul.bf16.gmra.mxu0 %v8182
    %v8700 = vpop.f32.mrf.mxu0
    %v8701 = vadd.f32 %v8532, %v8700
    %v8702 = vpop.f32.mrf.mxu0
    %v8703 = vadd.f32 %v8534, %v8702
    %8704 = vmatmul.bf16.gmra.mxu0 %v8183
    %v8705 = vpop.f32.mrf.mxu0
    %v8706 = vadd.f32 %v8537, %v8705
    %v8707 = vpop.f32.mrf.mxu0
    %v8708 = vadd.f32 %v8539, %v8707
    %8709 = vmatmul.bf16.gmra.mxu0 %v8184
    %v8710 = vpop.f32.mrf.mxu0
    %v8711 = vadd.f32 %v8542, %v8710
    %v8712 = vpop.f32.mrf.mxu0
    %v8713 = vadd.f32 %v8544, %v8712
    %8714 = vmatmul.bf16.gmra.mxu0 %v8185
    %v8715 = vpop.f32.mrf.mxu0
    %v8716 = vadd.f32 %v8547, %v8715
    %v8717 = vpop.f32.mrf.mxu0
    %v8718 = vadd.f32 %v8549, %v8717
    %8719 = vmatmul.bf16.gmra.mxu0 %v8186
    %v8720 = vpop.f32.mrf.mxu0
    %v8721 = vadd.f32 %v8552, %v8720
    %v8722 = vpop.f32.mrf.mxu0
    %v8723 = vadd.f32 %v8554, %v8722
    %8724 = vmatmul.bf16.gmra.mxu0 %v8187
    %v8725 = vpop.f32.mrf.mxu0
    %v8726 = vadd.f32 %v8557, %v8725
    %v8727 = vpop.f32.mrf.mxu0
    %v8728 = vadd.f32 %v8559, %v8727
    %8729 = vmatmul.bf16.gmra.mxu0 %v8188
    %v8730 = vpop.f32.mrf.mxu0
    %v8731 = vadd.f32 %v8562, %v8730
    %v8732 = vpop.f32.mrf.mxu0
    %v8733 = vadd.f32 %v8564, %v8732
    %8734 = vmatmul.bf16.gmra.mxu0 %v8189
    %v8735 = vpop.f32.mrf.mxu0
    %v8736 = vadd.f32 %v8567, %v8735
    %v8737 = vpop.f32.mrf.mxu0
    %v8738 = vadd.f32 %v8569, %v8737
    %8739 = vmatmul.bf16.gmra.mxu0 %v8190
    %v8740 = vpop.f32.mrf.mxu0
    %v8741 = vadd.f32 %v8572, %v8740
    %v8742 = vpop.f32.mrf.mxu0
    %v8743 = vadd.f32 %v8574, %v8742
    %8744 = vmatmul.bf16.gmra.mxu0 %v8191
    %v8745 = vpop.f32.mrf.mxu0
    %v8746 = vadd.f32 %v8577, %v8745
    %v8747 = vpop.f32.mrf.mxu0
    %v8748 = vadd.f32 %v8579, %v8747
    %8749 = vmatmul.bf16.gmra.mxu0 %v8192
    %v8750 = vpop.f32.mrf.mxu0
    %v8751 = vadd.f32 %v8582, %v8750
    %v8752 = vpop.f32.mrf.mxu0
    %v8753 = vadd.f32 %v8584, %v8752
    %8754 = vmatmul.bf16.gmra.mxu0 %v8193
    %v8755 = vpop.f32.mrf.mxu0
    %v8756 = vadd.f32 %v8587, %v8755
    %v8757 = vpop.f32.mrf.mxu0
    %v8758 = vadd.f32 %v8589, %v8757
    %8759 = vmatmul.bf16.gmra.mxu0 %v8194
    %v8760 = vpop.f32.mrf.mxu0
    %v8761 = vadd.f32 %v8592, %v8760
    %v8762 = vpop.f32.mrf.mxu0
    %v8763 = vadd.f32 %v8594, %v8762
    %8764 = vmatmul.bf16.gmra.mxu0 %v8195
    %v8765 = vpop.f32.mrf.mxu0
    %v8766 = vadd.f32 %v8597, %v8765
    %v8767 = vpop.f32.mrf.mxu0
    %v8768 = vadd.f32 %v8599, %v8767
    %8769 = vmatmul.bf16.gmra.mxu0 %v8196
    %v8770 = vpop.f32.mrf.mxu0
    %v8771 = vadd.f32 %v8602, %v8770
    %v8772 = vpop.f32.mrf.mxu0
    %v8773 = vadd.f32 %v8604, %v8772
    %8774 = vmatmul.bf16.gmra.mxu0 %v8197
    %v8775 = vpop.f32.mrf.mxu0
    %v8776 = vadd.f32 %v8607, %v8775
    %v8777 = vpop.f32.mrf.mxu0
    %v8778 = vadd.f32 %v8609, %v8777
    %8779 = vmatmul.bf16.gmra.mxu0 %v8198
    %v8780 = vpop.f32.mrf.mxu0
    %v8781 = vadd.f32 %v8612, %v8780
    %v8782 = vpop.f32.mrf.mxu0
    %v8783 = vadd.f32 %v8614, %v8782
    %8784 = vmatmul.bf16.gmra.mxu0 %v8199
    %v8785 = vpop.f32.mrf.mxu0
    %v8786 = vadd.f32 %v8617, %v8785
    %v8787 = vpop.f32.mrf.mxu0
    %v8788 = vadd.f32 %v8619, %v8787
    %8789 = vmatmul.bf16.gmra.mxu0 %v8200
    %v8790 = vpop.f32.mrf.mxu0
    %v8791 = vadd.f32 %v8622, %v8790
    %v8792 = vpop.f32.mrf.mxu0
    %v8793 = vadd.f32 %v8624, %v8792
    %8794 = vmatmul.bf16.gmra.mxu0 %v8201
    %v8795 = vpop.f32.mrf.mxu0
    %v8796 = vadd.f32 %v8627, %v8795
    %v8797 = vpop.f32.mrf.mxu0
    %v8798 = vadd.f32 %v8629, %v8797
    %8799 = vmatmul.bf16.gmra.mxu0 %v8202
    %v8800 = vpop.f32.mrf.mxu0
    %v8801 = vadd.f32 %v8632, %v8800
    %v8802 = vpop.f32.mrf.mxu0
    %v8803 = vadd.f32 %v8634, %v8802
    %8804 = vmatmul.bf16.gmra.mxu0 %v8203
    %v8805 = vpop.f32.mrf.mxu0
    %v8806 = vadd.f32 %v8637, %v8805
    %v8807 = vpop.f32.mrf.mxu0
    %v8808 = vadd.f32 %v8639, %v8807
    %8809 = vmatmul.bf16.gmra.mxu0 %v8204
    %v8810 = vpop.f32.mrf.mxu0
    %v8811 = vadd.f32 %v8642, %v8810
    %v8812 = vpop.f32.mrf.mxu0
    %v8813 = vadd.f32 %v8644, %v8812
    %8814 = vmatmul.bf16.gmra.mxu0 %v8205
    %v8815 = vpop.f32.mrf.mxu0
    %v8816 = vadd.f32 %v8647, %v8815
    %v8817 = vpop.f32.mrf.mxu0
    %v8818 = vadd.f32 %v8649, %v8817
    %8819 = vmatmul.bf16.gmra.mxu0 %v8206
    %v8820 = vpop.f32.mrf.mxu0
    %v8821 = vadd.f32 %v8652, %v8820
    %v8822 = vpop.f32.mrf.mxu0
    %v8823 = vadd.f32 %v8654, %v8822
    %8824 = vmatmul.bf16.gmra.mxu0 %v8207
    %v8825 = vpop.f32.mrf.mxu0
    %v8826 = vadd.f32 %v8657, %v8825
    %v8827 = vpop.f32.mrf.mxu0
    %v8828 = vadd.f32 %v8659, %v8827
    %8829 = vmatmul.bf16.gmra.mxu0 %v8208
    %v8830 = vpop.f32.mrf.mxu0
    %v8831 = vadd.f32 %v8662, %v8830
    %v8832 = vpop.f32.mrf.mxu0
    %v8833 = vadd.f32 %v8664, %v8832
    %8834 = vmatmul.bf16.gmra.mxu0 %v8209
    %v8835 = vpop.f32.mrf.mxu0
    %v8836 = vadd.f32 %v8667, %v8835
    %v8837 = vpop.f32.mrf.mxu0
    %v8838 = vadd.f32 %v8669, %v8837
    %8839 = vmatmul.bf16.gmra.mxu0 %v8210
    %v8840 = vpop.f32.mrf.mxu0
    %v8841 = vadd.f32 %v8672, %v8840
    %v8842 = vpop.f32.mrf.mxu0
    %v8843 = vadd.f32 %v8674, %v8842
    %8844 = vmatmul.bf16.gmra.mxu0 %v8211
    %v8845 = vpop.f32.mrf.mxu0
    %v8846 = vadd.f32 %v8677, %v8845
    %v8847 = vpop.f32.mrf.mxu0
    %v8848 = vadd.f32 %v8679, %v8847
    %8849 = vmatmul.bf16.gmra.mxu0 %v8212
    %v8850 = vpop.f32.mrf.mxu0
    %v8851 = vadd.f32 %v8682, %v8850
    %v8852 = vpop.f32.mrf.mxu0
    %v8853 = vadd.f32 %v8684, %v8852
    %8854 = vdwg.mxu0
    %8855 = vmatpush.bf16.msra.mxu0 %v8492
    %8856 = vmatpush.bf16.msra.mxu0 %v8491
    %8857 = vmatpush.bf16.msra.mxu0 %v8490
    %8858 = vmatpush.bf16.msra.mxu0 %v8489
    %8859 = vmatpush.bf16.msra.mxu0 %v8488
    %8860 = vmatpush.bf16.msra.mxu0 %v8487
    %8861 = vmatpush.bf16.msra.mxu0 %v8486
    %8862 = vmatpush.bf16.msra.mxu0 %v8485
    %8863 = vmatmul.bf16.gmra.mxu0 %v8309
    %v8864 = vpop.f32.mrf.mxu0
    %v8865 = vadd.f32 %v8696, %v8864
    %v8866 = vpop.f32.mrf.mxu0
    %v8867 = vadd.f32 %v8698, %v8866
    %8868 = vmatmul.bf16.gmra.mxu0 %v8310
    %v8869 = vpop.f32.mrf.mxu0
    %v8870 = vadd.f32 %v8701, %v8869
    %v8871 = vpop.f32.mrf.mxu0
    %v8872 = vadd.f32 %v8703, %v8871
    %8873 = vmatmul.bf16.gmra.mxu0 %v8311
    %v8874 = vpop.f32.mrf.mxu0
    %v8875 = vadd.f32 %v8706, %v8874
    %v8876 = vpop.f32.mrf.mxu0
    %v8877 = vadd.f32 %v8708, %v8876
    %8878 = vmatmul.bf16.gmra.mxu0 %v8312
    %v8879 = vpop.f32.mrf.mxu0
    %v8880 = vadd.f32 %v8711, %v8879
    %v8881 = vpop.f32.mrf.mxu0
    %v8882 = vadd.f32 %v8713, %v8881
    %8883 = vmatmul.bf16.gmra.mxu0 %v8313
    %v8884 = vpop.f32.mrf.mxu0
    %v8885 = vadd.f32 %v8716, %v8884
    %v8886 = vpop.f32.mrf.mxu0
    %v8887 = vadd.f32 %v8718, %v8886
    %8888 = vmatmul.bf16.gmra.mxu0 %v8314
    %v8889 = vpop.f32.mrf.mxu0
    %v8890 = vadd.f32 %v8721, %v8889
    %v8891 = vpop.f32.mrf.mxu0
    %v8892 = vadd.f32 %v8723, %v8891
    %8893 = vmatmul.bf16.gmra.mxu0 %v8315
    %v8894 = vpop.f32.mrf.mxu0
    %v8895 = vadd.f32 %v8726, %v8894
    %v8896 = vpop.f32.mrf.mxu0
    %v8897 = vadd.f32 %v8728, %v8896
    %8898 = vmatmul.bf16.gmra.mxu0 %v8316
    %v8899 = vpop.f32.mrf.mxu0
    %v8900 = vadd.f32 %v8731, %v8899
    %v8901 = vpop.f32.mrf.mxu0
    %v8902 = vadd.f32 %v8733, %v8901
    %8903 = vmatmul.bf16.gmra.mxu0 %v8317
    %v8904 = vpop.f32.mrf.mxu0
    %v8905 = vadd.f32 %v8736, %v8904
    %v8906 = vpop.f32.mrf.mxu0
    %v8907 = vadd.f32 %v8738, %v8906
    %8908 = vmatmul.bf16.gmra.mxu0 %v8318
    %v8909 = vpop.f32.mrf.mxu0
    %v8910 = vadd.f32 %v8741, %v8909
    %v8911 = vpop.f32.mrf.mxu0
    %v8912 = vadd.f32 %v8743, %v8911
    %8913 = vmatmul.bf16.gmra.mxu0 %v8319
    %v8914 = vpop.f32.mrf.mxu0
    %v8915 = vadd.f32 %v8746, %v8914
    %v8916 = vpop.f32.mrf.mxu0
    %v8917 = vadd.f32 %v8748, %v8916
    %8918 = vmatmul.bf16.gmra.mxu0 %v8320
    %v8919 = vpop.f32.mrf.mxu0
    %v8920 = vadd.f32 %v8751, %v8919
    %v8921 = vpop.f32.mrf.mxu0
    %v8922 = vadd.f32 %v8753, %v8921
    %8923 = vmatmul.bf16.gmra.mxu0 %v8321
    %v8924 = vpop.f32.mrf.mxu0
    %v8925 = vadd.f32 %v8756, %v8924
    %v8926 = vpop.f32.mrf.mxu0
    %v8927 = vadd.f32 %v8758, %v8926
    %8928 = vmatmul.bf16.gmra.mxu0 %v8322
    %v8929 = vpop.f32.mrf.mxu0
    %v8930 = vadd.f32 %v8761, %v8929
    %v8931 = vpop.f32.mrf.mxu0
    %v8932 = vadd.f32 %v8763, %v8931
    %8933 = vmatmul.bf16.gmra.mxu0 %v8323
    %v8934 = vpop.f32.mrf.mxu0
    %v8935 = vadd.f32 %v8766, %v8934
    %v8936 = vpop.f32.mrf.mxu0
    %v8937 = vadd.f32 %v8768, %v8936
    %8938 = vmatmul.bf16.gmra.mxu0 %v8324
    %v8939 = vpop.f32.mrf.mxu0
    %v8940 = vadd.f32 %v8771, %v8939
    %v8941 = vpop.f32.mrf.mxu0
    %v8942 = vadd.f32 %v8773, %v8941
    %8943 = vmatmul.bf16.gmra.mxu0 %v8325
    %v8944 = vpop.f32.mrf.mxu0
    %v8945 = vadd.f32 %v8776, %v8944
    %v8946 = vpop.f32.mrf.mxu0
    %v8947 = vadd.f32 %v8778, %v8946
    %8948 = vmatmul.bf16.gmra.mxu0 %v8326
    %v8949 = vpop.f32.mrf.mxu0
    %v8950 = vadd.f32 %v8781, %v8949
    %v8951 = vpop.f32.mrf.mxu0
    %v8952 = vadd.f32 %v8783, %v8951
    %8953 = vmatmul.bf16.gmra.mxu0 %v8327
    %v8954 = vpop.f32.mrf.mxu0
    %v8955 = vadd.f32 %v8786, %v8954
    %v8956 = vpop.f32.mrf.mxu0
    %v8957 = vadd.f32 %v8788, %v8956
    %8958 = vmatmul.bf16.gmra.mxu0 %v8328
    %v8959 = vpop.f32.mrf.mxu0
    %v8960 = vadd.f32 %v8791, %v8959
    %v8961 = vpop.f32.mrf.mxu0
    %v8962 = vadd.f32 %v8793, %v8961
    %8963 = vmatmul.bf16.gmra.mxu0 %v8329
    %v8964 = vpop.f32.mrf.mxu0
    %v8965 = vadd.f32 %v8796, %v8964
    %v8966 = vpop.f32.mrf.mxu0
    %v8967 = vadd.f32 %v8798, %v8966
    %8968 = vmatmul.bf16.gmra.mxu0 %v8330
    %v8969 = vpop.f32.mrf.mxu0
    %v8970 = vadd.f32 %v8801, %v8969
    %v8971 = vpop.f32.mrf.mxu0
    %v8972 = vadd.f32 %v8803, %v8971
    %8973 = vmatmul.bf16.gmra.mxu0 %v8331
    %v8974 = vpop.f32.mrf.mxu0
    %v8975 = vadd.f32 %v8806, %v8974
    %v8976 = vpop.f32.mrf.mxu0
    %v8977 = vadd.f32 %v8808, %v8976
    %8978 = vmatmul.bf16.gmra.mxu0 %v8332
    %v8979 = vpop.f32.mrf.mxu0
    %v8980 = vadd.f32 %v8811, %v8979
    %v8981 = vpop.f32.mrf.mxu0
    %v8982 = vadd.f32 %v8813, %v8981
    %8983 = vmatmul.bf16.gmra.mxu0 %v8333
    %v8984 = vpop.f32.mrf.mxu0
    %v8985 = vadd.f32 %v8816, %v8984
    %v8986 = vpop.f32.mrf.mxu0
    %v8987 = vadd.f32 %v8818, %v8986
    %8988 = vmatmul.bf16.gmra.mxu0 %v8334
    %v8989 = vpop.f32.mrf.mxu0
    %v8990 = vadd.f32 %v8821, %v8989
    %v8991 = vpop.f32.mrf.mxu0
    %v8992 = vadd.f32 %v8823, %v8991
    %8993 = vmatmul.bf16.gmra.mxu0 %v8335
    %v8994 = vpop.f32.mrf.mxu0
    %v8995 = vadd.f32 %v8826, %v8994
    %v8996 = vpop.f32.mrf.mxu0
    %v8997 = vadd.f32 %v8828, %v8996
    %8998 = vmatmul.bf16.gmra.mxu0 %v8336
    %v8999 = vpop.f32.mrf.mxu0
    %v9000 = vadd.f32 %v8831, %v8999
    %v9001 = vpop.f32.mrf.mxu0
    %v9002 = vadd.f32 %v8833, %v9001
    %9003 = vmatmul.bf16.gmra.mxu0 %v8337
    %v9004 = vpop.f32.mrf.mxu0
    %v9005 = vadd.f32 %v8836, %v9004
    %v9006 = vpop.f32.mrf.mxu0
    %v9007 = vadd.f32 %v8838, %v9006
    %9008 = vmatmul.bf16.gmra.mxu0 %v8338
    %v9009 = vpop.f32.mrf.mxu0
    %v9010 = vadd.f32 %v8841, %v9009
    %v9011 = vpop.f32.mrf.mxu0
    %v9012 = vadd.f32 %v8843, %v9011
    %9013 = vmatmul.bf16.gmra.mxu0 %v8339
    %v9014 = vpop.f32.mrf.mxu0
    %v9015 = vadd.f32 %v8846, %v9014
    %v9016 = vpop.f32.mrf.mxu0
    %v9017 = vadd.f32 %v8848, %v9016
    %9018 = vmatmul.bf16.gmra.mxu0 %v8340
    %v9019 = vpop.f32.mrf.mxu0
    %v9020 = vadd.f32 %v8851, %v9019
    %v9021 = vpop.f32.mrf.mxu0
    %v9022 = vadd.f32 %v8853, %v9021
    %9023 = vdwg.mxu0
    %v9072 = vunpack.c.l.b16 %v4770
    %v9073 = vunpack.c.l.b16 %v4771
    %v9074 = vunpack.c.l.b16 %v4772
    %v9075 = vunpack.c.l.b16 %v4773
    %v9076 = vunpack.c.l.b16 %v4774
    %v9077 = vunpack.c.l.b16 %v4775
    %v9078 = vunpack.c.l.b16 %v4776
    %v9079 = vunpack.c.l.b16 %v4777
    %v9080 = vunpack.c.l.b16 %v4778
    %v9081 = vunpack.c.l.b16 %v4779
    %v9082 = vunpack.c.l.b16 %v4780
    %v9083 = vunpack.c.l.b16 %v4781
    %v9084 = vunpack.c.l.b16 %v4782
    %v9085 = vunpack.c.l.b16 %v4783
    %v9086 = vunpack.c.l.b16 %v4784
    %v9087 = vunpack.c.l.b16 %v4785
    %v9088 = vunpack.c.l.b16 %v4786
    %v9089 = vunpack.c.l.b16 %v4787
    %v9090 = vunpack.c.l.b16 %v4788
    %v9091 = vunpack.c.l.b16 %v4789
    %v9092 = vunpack.c.l.b16 %v4790
    %v9093 = vunpack.c.l.b16 %v4791
    %v9094 = vunpack.c.l.b16 %v4792
    %v9095 = vunpack.c.l.b16 %v4793
    %v9096 = vunpack.c.l.b16 %v4794
    %v9097 = vunpack.c.l.b16 %v4795
    %v9098 = vunpack.c.l.b16 %v4796
    %v9099 = vunpack.c.l.b16 %v4797
    %v9100 = vunpack.c.l.b16 %v4798
    %v9101 = vunpack.c.l.b16 %v4799
    %v9102 = vunpack.c.l.b16 %v4800
    %v9103 = vunpack.c.l.b16 %v4801
    %v9104 = vunpack.c.l.b16 %v4802
    %v9105 = vunpack.c.l.b16 %v4803
    %v9106 = vunpack.c.l.b16 %v4804
    %v9107 = vunpack.c.l.b16 %v4805
    %v9108 = vunpack.c.l.b16 %v4806
    %v9109 = vunpack.c.l.b16 %v4807
    %v9110 = vunpack.c.l.b16 %v4808
    %v9111 = vunpack.c.l.b16 %v4809
    %v9112 = vunpack.c.l.b16 %v4810
    %v9113 = vunpack.c.l.b16 %v4811
    %v9114 = vunpack.c.l.b16 %v4812
    %v9115 = vunpack.c.l.b16 %v4813
    %v9116 = vunpack.c.l.b16 %v4814
    %v9117 = vunpack.c.l.b16 %v4815
    %v9118 = vunpack.c.l.b16 %v4816
    %v9119 = vunpack.c.l.b16 %v4817
    %v9120 = vpack.c.b16 %v9073, %v9072
    %v9121 = vpack.c.b16 %v9075, %v9074
    %v9122 = vpack.c.b16 %v9077, %v9076
    %v9123 = vpack.c.b16 %v9079, %v9078
    %v9124 = vpack.c.b16 %v9081, %v9080
    %v9125 = vpack.c.b16 %v9083, %v9082
    %v9126 = vpack.c.b16 %v9085, %v9084
    %v9127 = vpack.c.b16 %v9087, %v9086
    %v9128 = vpack.c.b16 %v9089, %v9088
    %v9129 = vpack.c.b16 %v9091, %v9090
    %v9130 = vpack.c.b16 %v9093, %v9092
    %v9131 = vpack.c.b16 %v9095, %v9094
    %v9132 = vpack.c.b16 %v9097, %v9096
    %v9133 = vpack.c.b16 %v9099, %v9098
    %v9134 = vpack.c.b16 %v9101, %v9100
    %v9135 = vpack.c.b16 %v9103, %v9102
    %v9136 = vpack.c.b16 %v9105, %v9104
    %v9137 = vpack.c.b16 %v9107, %v9106
    %v9138 = vpack.c.b16 %v9109, %v9108
    %v9139 = vpack.c.b16 %v9111, %v9110
    %v9140 = vpack.c.b16 %v9113, %v9112
    %v9141 = vpack.c.b16 %v9115, %v9114
    %v9142 = vpack.c.b16 %v9117, %v9116
    %v9143 = vpack.c.b16 %v9119, %v9118
    %9168 = vmatpush.bf16.msra.mxu0 %v9127
    %9169 = vmatpush.bf16.msra.mxu0 %v9126
    %9170 = vmatpush.bf16.msra.mxu0 %v9125
    %9171 = vmatpush.bf16.msra.mxu0 %v9124
    %9172 = vmatpush.bf16.msra.mxu0 %v9123
    %9173 = vmatpush.bf16.msra.mxu0 %v9122
    %9174 = vmatpush.bf16.msra.mxu0 %v9121
    %9175 = vmatpush.bf16.msra.mxu0 %v9120
    %9176 = vmatmul.bf16.gmra.mxu0 %v6261
    %v9177 = vpop.f32.mrf.mxu0
    %v9178 = vadd.f32 %v8865, %v9177
    %v9179 = vpop.f32.mrf.mxu0
    %v9180 = vadd.f32 %v8867, %v9179
    %9181 = vmatmul.bf16.gmra.mxu0 %v6262
    %v9182 = vpop.f32.mrf.mxu0
    %v9183 = vadd.f32 %v8870, %v9182
    %v9184 = vpop.f32.mrf.mxu0
    %v9185 = vadd.f32 %v8872, %v9184
    %9186 = vmatmul.bf16.gmra.mxu0 %v6263
    %v9187 = vpop.f32.mrf.mxu0
    %v9188 = vadd.f32 %v8875, %v9187
    %v9189 = vpop.f32.mrf.mxu0
    %v9190 = vadd.f32 %v8877, %v9189
    %9191 = vmatmul.bf16.gmra.mxu0 %v6264
    %v9192 = vpop.f32.mrf.mxu0
    %v9193 = vadd.f32 %v8880, %v9192
    %v9194 = vpop.f32.mrf.mxu0
    %v9195 = vadd.f32 %v8882, %v9194
    %9196 = vmatmul.bf16.gmra.mxu0 %v6265
    %v9197 = vpop.f32.mrf.mxu0
    %v9198 = vadd.f32 %v8885, %v9197
    %v9199 = vpop.f32.mrf.mxu0
    %v9200 = vadd.f32 %v8887, %v9199
    %9201 = vmatmul.bf16.gmra.mxu0 %v6266
    %v9202 = vpop.f32.mrf.mxu0
    %v9203 = vadd.f32 %v8890, %v9202
    %v9204 = vpop.f32.mrf.mxu0
    %v9205 = vadd.f32 %v8892, %v9204
    %9206 = vmatmul.bf16.gmra.mxu0 %v6267
    %v9207 = vpop.f32.mrf.mxu0
    %v9208 = vadd.f32 %v8895, %v9207
    %v9209 = vpop.f32.mrf.mxu0
    %v9210 = vadd.f32 %v8897, %v9209
    %9211 = vmatmul.bf16.gmra.mxu0 %v6268
    %v9212 = vpop.f32.mrf.mxu0
    %v9213 = vadd.f32 %v8900, %v9212
    %v9214 = vpop.f32.mrf.mxu0
    %v9215 = vadd.f32 %v8902, %v9214
    %9216 = vmatmul.bf16.gmra.mxu0 %v6269
    %v9217 = vpop.f32.mrf.mxu0
    %v9218 = vadd.f32 %v8905, %v9217
    %v9219 = vpop.f32.mrf.mxu0
    %v9220 = vadd.f32 %v8907, %v9219
    %9221 = vmatmul.bf16.gmra.mxu0 %v6270
    %v9222 = vpop.f32.mrf.mxu0
    %v9223 = vadd.f32 %v8910, %v9222
    %v9224 = vpop.f32.mrf.mxu0
    %v9225 = vadd.f32 %v8912, %v9224
    %9226 = vmatmul.bf16.gmra.mxu0 %v6271
    %v9227 = vpop.f32.mrf.mxu0
    %v9228 = vadd.f32 %v8915, %v9227
    %v9229 = vpop.f32.mrf.mxu0
    %v9230 = vadd.f32 %v8917, %v9229
    %9231 = vmatmul.bf16.gmra.mxu0 %v6272
    %v9232 = vpop.f32.mrf.mxu0
    %v9233 = vadd.f32 %v8920, %v9232
    %v9234 = vpop.f32.mrf.mxu0
    %v9235 = vadd.f32 %v8922, %v9234
    %9236 = vmatmul.bf16.gmra.mxu0 %v6273
    %v9237 = vpop.f32.mrf.mxu0
    %v9238 = vadd.f32 %v8925, %v9237
    %v9239 = vpop.f32.mrf.mxu0
    %v9240 = vadd.f32 %v8927, %v9239
    %9241 = vmatmul.bf16.gmra.mxu0 %v6274
    %v9242 = vpop.f32.mrf.mxu0
    %v9243 = vadd.f32 %v8930, %v9242
    %v9244 = vpop.f32.mrf.mxu0
    %v9245 = vadd.f32 %v8932, %v9244
    %9246 = vmatmul.bf16.gmra.mxu0 %v6275
    %v9247 = vpop.f32.mrf.mxu0
    %v9248 = vadd.f32 %v8935, %v9247
    %v9249 = vpop.f32.mrf.mxu0
    %v9250 = vadd.f32 %v8937, %v9249
    %9251 = vmatmul.bf16.gmra.mxu0 %v6276
    %v9252 = vpop.f32.mrf.mxu0
    %v9253 = vadd.f32 %v8940, %v9252
    %v9254 = vpop.f32.mrf.mxu0
    %v9255 = vadd.f32 %v8942, %v9254
    %9256 = vmatmul.bf16.gmra.mxu0 %v6277
    %v9257 = vpop.f32.mrf.mxu0
    %v9258 = vadd.f32 %v8945, %v9257
    %v9259 = vpop.f32.mrf.mxu0
    %v9260 = vadd.f32 %v8947, %v9259
    %9261 = vmatmul.bf16.gmra.mxu0 %v6278
    %v9262 = vpop.f32.mrf.mxu0
    %v9263 = vadd.f32 %v8950, %v9262
    %v9264 = vpop.f32.mrf.mxu0
    %v9265 = vadd.f32 %v8952, %v9264
    %9266 = vmatmul.bf16.gmra.mxu0 %v6279
    %v9267 = vpop.f32.mrf.mxu0
    %v9268 = vadd.f32 %v8955, %v9267
    %v9269 = vpop.f32.mrf.mxu0
    %v9270 = vadd.f32 %v8957, %v9269
    %9271 = vmatmul.bf16.gmra.mxu0 %v6280
    %v9272 = vpop.f32.mrf.mxu0
    %v9273 = vadd.f32 %v8960, %v9272
    %v9274 = vpop.f32.mrf.mxu0
    %v9275 = vadd.f32 %v8962, %v9274
    %9276 = vmatmul.bf16.gmra.mxu0 %v6281
    %v9277 = vpop.f32.mrf.mxu0
    %v9278 = vadd.f32 %v8965, %v9277
    %v9279 = vpop.f32.mrf.mxu0
    %v9280 = vadd.f32 %v8967, %v9279
    %9281 = vmatmul.bf16.gmra.mxu0 %v6282
    %v9282 = vpop.f32.mrf.mxu0
    %v9283 = vadd.f32 %v8970, %v9282
    %v9284 = vpop.f32.mrf.mxu0
    %v9285 = vadd.f32 %v8972, %v9284
    %9286 = vmatmul.bf16.gmra.mxu0 %v6283
    %v9287 = vpop.f32.mrf.mxu0
    %v9288 = vadd.f32 %v8975, %v9287
    %v9289 = vpop.f32.mrf.mxu0
    %v9290 = vadd.f32 %v8977, %v9289
    %9291 = vmatmul.bf16.gmra.mxu0 %v6284
    %v9292 = vpop.f32.mrf.mxu0
    %v9293 = vadd.f32 %v8980, %v9292
    %v9294 = vpop.f32.mrf.mxu0
    %v9295 = vadd.f32 %v8982, %v9294
    %9296 = vmatmul.bf16.gmra.mxu0 %v6285
    %v9297 = vpop.f32.mrf.mxu0
    %v9298 = vadd.f32 %v8985, %v9297
    %v9299 = vpop.f32.mrf.mxu0
    %v9300 = vadd.f32 %v8987, %v9299
    %9301 = vmatmul.bf16.gmra.mxu0 %v6286
    %v9302 = vpop.f32.mrf.mxu0
    %v9303 = vadd.f32 %v8990, %v9302
    %v9304 = vpop.f32.mrf.mxu0
    %v9305 = vadd.f32 %v8992, %v9304
    %9306 = vmatmul.bf16.gmra.mxu0 %v6287
    %v9307 = vpop.f32.mrf.mxu0
    %v9308 = vadd.f32 %v8995, %v9307
    %v9309 = vpop.f32.mrf.mxu0
    %v9310 = vadd.f32 %v8997, %v9309
    %9311 = vmatmul.bf16.gmra.mxu0 %v6288
    %v9312 = vpop.f32.mrf.mxu0
    %v9313 = vadd.f32 %v9000, %v9312
    %v9314 = vpop.f32.mrf.mxu0
    %v9315 = vadd.f32 %v9002, %v9314
    %9316 = vmatmul.bf16.gmra.mxu0 %v6289
    %v9317 = vpop.f32.mrf.mxu0
    %v9318 = vadd.f32 %v9005, %v9317
    %v9319 = vpop.f32.mrf.mxu0
    %v9320 = vadd.f32 %v9007, %v9319
    %9321 = vmatmul.bf16.gmra.mxu0 %v6290
    %v9322 = vpop.f32.mrf.mxu0
    %v9323 = vadd.f32 %v9010, %v9322
    %v9324 = vpop.f32.mrf.mxu0
    %v9325 = vadd.f32 %v9012, %v9324
    %9326 = vmatmul.bf16.gmra.mxu0 %v6291
    %v9327 = vpop.f32.mrf.mxu0
    %v9328 = vadd.f32 %v9015, %v9327
    %v9329 = vpop.f32.mrf.mxu0
    %v9330 = vadd.f32 %v9017, %v9329
    %9331 = vmatmul.bf16.gmra.mxu0 %v6292
    %v9332 = vpop.f32.mrf.mxu0
    %v9333 = vadd.f32 %v9020, %v9332
    %v9334 = vpop.f32.mrf.mxu0
    %v9335 = vadd.f32 %v9022, %v9334
    %9336 = vdwg.mxu0
    %9337 = vmatpush.bf16.msra.mxu0 %v9135
    %9338 = vmatpush.bf16.msra.mxu0 %v9134
    %9339 = vmatpush.bf16.msra.mxu0 %v9133
    %9340 = vmatpush.bf16.msra.mxu0 %v9132
    %9341 = vmatpush.bf16.msra.mxu0 %v9131
    %9342 = vmatpush.bf16.msra.mxu0 %v9130
    %9343 = vmatpush.bf16.msra.mxu0 %v9129
    %9344 = vmatpush.bf16.msra.mxu0 %v9128
    %9345 = vmatmul.bf16.gmra.mxu0 %v6453
    %v9346 = vpop.f32.mrf.mxu0
    %v9347 = vadd.f32 %v9178, %v9346
    %v9348 = vpop.f32.mrf.mxu0
    %v9349 = vadd.f32 %v9180, %v9348
    %9350 = vmatmul.bf16.gmra.mxu0 %v6454
    %v9351 = vpop.f32.mrf.mxu0
    %v9352 = vadd.f32 %v9183, %v9351
    %v9353 = vpop.f32.mrf.mxu0
    %v9354 = vadd.f32 %v9185, %v9353
    %9355 = vmatmul.bf16.gmra.mxu0 %v6455
    %v9356 = vpop.f32.mrf.mxu0
    %v9357 = vadd.f32 %v9188, %v9356
    %v9358 = vpop.f32.mrf.mxu0
    %v9359 = vadd.f32 %v9190, %v9358
    %9360 = vmatmul.bf16.gmra.mxu0 %v6456
    %v9361 = vpop.f32.mrf.mxu0
    %v9362 = vadd.f32 %v9193, %v9361
    %v9363 = vpop.f32.mrf.mxu0
    %v9364 = vadd.f32 %v9195, %v9363
    %9365 = vmatmul.bf16.gmra.mxu0 %v6457
    %v9366 = vpop.f32.mrf.mxu0
    %v9367 = vadd.f32 %v9198, %v9366
    %v9368 = vpop.f32.mrf.mxu0
    %v9369 = vadd.f32 %v9200, %v9368
    %9370 = vmatmul.bf16.gmra.mxu0 %v6458
    %v9371 = vpop.f32.mrf.mxu0
    %v9372 = vadd.f32 %v9203, %v9371
    %v9373 = vpop.f32.mrf.mxu0
    %v9374 = vadd.f32 %v9205, %v9373
    %9375 = vmatmul.bf16.gmra.mxu0 %v6459
    %v9376 = vpop.f32.mrf.mxu0
    %v9377 = vadd.f32 %v9208, %v9376
    %v9378 = vpop.f32.mrf.mxu0
    %v9379 = vadd.f32 %v9210, %v9378
    %9380 = vmatmul.bf16.gmra.mxu0 %v6460
    %v9381 = vpop.f32.mrf.mxu0
    %v9382 = vadd.f32 %v9213, %v9381
    %v9383 = vpop.f32.mrf.mxu0
    %v9384 = vadd.f32 %v9215, %v9383
    %9385 = vmatmul.bf16.gmra.mxu0 %v6461
    %v9386 = vpop.f32.mrf.mxu0
    %v9387 = vadd.f32 %v9218, %v9386
    %v9388 = vpop.f32.mrf.mxu0
    %v9389 = vadd.f32 %v9220, %v9388
    %9390 = vmatmul.bf16.gmra.mxu0 %v6462
    %v9391 = vpop.f32.mrf.mxu0
    %v9392 = vadd.f32 %v9223, %v9391
    %v9393 = vpop.f32.mrf.mxu0
    %v9394 = vadd.f32 %v9225, %v9393
    %9395 = vmatmul.bf16.gmra.mxu0 %v6463
    %v9396 = vpop.f32.mrf.mxu0
    %v9397 = vadd.f32 %v9228, %v9396
    %v9398 = vpop.f32.mrf.mxu0
    %v9399 = vadd.f32 %v9230, %v9398
    %9400 = vmatmul.bf16.gmra.mxu0 %v6464
    %v9401 = vpop.f32.mrf.mxu0
    %v9402 = vadd.f32 %v9233, %v9401
    %v9403 = vpop.f32.mrf.mxu0
    %v9404 = vadd.f32 %v9235, %v9403
    %9405 = vmatmul.bf16.gmra.mxu0 %v6465
    %v9406 = vpop.f32.mrf.mxu0
    %v9407 = vadd.f32 %v9238, %v9406
    %v9408 = vpop.f32.mrf.mxu0
    %v9409 = vadd.f32 %v9240, %v9408
    %9410 = vmatmul.bf16.gmra.mxu0 %v6466
    %v9411 = vpop.f32.mrf.mxu0
    %v9412 = vadd.f32 %v9243, %v9411
    %v9413 = vpop.f32.mrf.mxu0
    %v9414 = vadd.f32 %v9245, %v9413
    %9415 = vmatmul.bf16.gmra.mxu0 %v6467
    %v9416 = vpop.f32.mrf.mxu0
    %v9417 = vadd.f32 %v9248, %v9416
    %v9418 = vpop.f32.mrf.mxu0
    %v9419 = vadd.f32 %v9250, %v9418
    %9420 = vmatmul.bf16.gmra.mxu0 %v6468
    %v9421 = vpop.f32.mrf.mxu0
    %v9422 = vadd.f32 %v9253, %v9421
    %v9423 = vpop.f32.mrf.mxu0
    %v9424 = vadd.f32 %v9255, %v9423
    %9425 = vmatmul.bf16.gmra.mxu0 %v6469
    %v9426 = vpop.f32.mrf.mxu0
    %v9427 = vadd.f32 %v9258, %v9426
    %v9428 = vpop.f32.mrf.mxu0
    %v9429 = vadd.f32 %v9260, %v9428
    %9430 = vmatmul.bf16.gmra.mxu0 %v6470
    %v9431 = vpop.f32.mrf.mxu0
    %v9432 = vadd.f32 %v9263, %v9431
    %v9433 = vpop.f32.mrf.mxu0
    %v9434 = vadd.f32 %v9265, %v9433
    %9435 = vmatmul.bf16.gmra.mxu0 %v6471
    %v9436 = vpop.f32.mrf.mxu0
    %v9437 = vadd.f32 %v9268, %v9436
    %v9438 = vpop.f32.mrf.mxu0
    %v9439 = vadd.f32 %v9270, %v9438
    %9440 = vmatmul.bf16.gmra.mxu0 %v6472
    %v9441 = vpop.f32.mrf.mxu0
    %v9442 = vadd.f32 %v9273, %v9441
    %v9443 = vpop.f32.mrf.mxu0
    %v9444 = vadd.f32 %v9275, %v9443
    %9445 = vmatmul.bf16.gmra.mxu0 %v6473
    %v9446 = vpop.f32.mrf.mxu0
    %v9447 = vadd.f32 %v9278, %v9446
    %v9448 = vpop.f32.mrf.mxu0
    %v9449 = vadd.f32 %v9280, %v9448
    %9450 = vmatmul.bf16.gmra.mxu0 %v6474
    %v9451 = vpop.f32.mrf.mxu0
    %v9452 = vadd.f32 %v9283, %v9451
    %v9453 = vpop.f32.mrf.mxu0
    %v9454 = vadd.f32 %v9285, %v9453
    %9455 = vmatmul.bf16.gmra.mxu0 %v6475
    %v9456 = vpop.f32.mrf.mxu0
    %v9457 = vadd.f32 %v9288, %v9456
    %v9458 = vpop.f32.mrf.mxu0
    %v9459 = vadd.f32 %v9290, %v9458
    %9460 = vmatmul.bf16.gmra.mxu0 %v6476
    %v9461 = vpop.f32.mrf.mxu0
    %v9462 = vadd.f32 %v9293, %v9461
    %v9463 = vpop.f32.mrf.mxu0
    %v9464 = vadd.f32 %v9295, %v9463
    %9465 = vmatmul.bf16.gmra.mxu0 %v6477
    %v9466 = vpop.f32.mrf.mxu0
    %v9467 = vadd.f32 %v9298, %v9466
    %v9468 = vpop.f32.mrf.mxu0
    %v9469 = vadd.f32 %v9300, %v9468
    %9470 = vmatmul.bf16.gmra.mxu0 %v6478
    %v9471 = vpop.f32.mrf.mxu0
    %v9472 = vadd.f32 %v9303, %v9471
    %v9473 = vpop.f32.mrf.mxu0
    %v9474 = vadd.f32 %v9305, %v9473
    %9475 = vmatmul.bf16.gmra.mxu0 %v6479
    %v9476 = vpop.f32.mrf.mxu0
    %v9477 = vadd.f32 %v9308, %v9476
    %v9478 = vpop.f32.mrf.mxu0
    %v9479 = vadd.f32 %v9310, %v9478
    %9480 = vmatmul.bf16.gmra.mxu0 %v6480
    %v9481 = vpop.f32.mrf.mxu0
    %v9482 = vadd.f32 %v9313, %v9481
    %v9483 = vpop.f32.mrf.mxu0
    %v9484 = vadd.f32 %v9315, %v9483
    %9485 = vmatmul.bf16.gmra.mxu0 %v6481
    %v9486 = vpop.f32.mrf.mxu0
    %v9487 = vadd.f32 %v9318, %v9486
    %v9488 = vpop.f32.mrf.mxu0
    %v9489 = vadd.f32 %v9320, %v9488
    %9490 = vmatmul.bf16.gmra.mxu0 %v6482
    %v9491 = vpop.f32.mrf.mxu0
    %v9492 = vadd.f32 %v9323, %v9491
    %v9493 = vpop.f32.mrf.mxu0
    %v9494 = vadd.f32 %v9325, %v9493
    %9495 = vmatmul.bf16.gmra.mxu0 %v6483
    %v9496 = vpop.f32.mrf.mxu0
    %v9497 = vadd.f32 %v9328, %v9496
    %v9498 = vpop.f32.mrf.mxu0
    %v9499 = vadd.f32 %v9330, %v9498
    %9500 = vmatmul.bf16.gmra.mxu0 %v6484
    %v9501 = vpop.f32.mrf.mxu0
    %v9502 = vadd.f32 %v9333, %v9501
    %v9503 = vpop.f32.mrf.mxu0
    %v9504 = vadd.f32 %v9335, %v9503
    %9505 = vdwg.mxu0
    %9506 = vmatpush.bf16.msra.mxu0 %v9143
    %9507 = vmatpush.bf16.msra.mxu0 %v9142
    %9508 = vmatpush.bf16.msra.mxu0 %v9141
    %9509 = vmatpush.bf16.msra.mxu0 %v9140
    %9510 = vmatpush.bf16.msra.mxu0 %v9139
    %9511 = vmatpush.bf16.msra.mxu0 %v9138
    %9512 = vmatpush.bf16.msra.mxu0 %v9137
    %9513 = vmatpush.bf16.msra.mxu0 %v9136
    %9514 = vmatmul.bf16.gmra.mxu0 %v6581
    %v9515 = vpop.f32.mrf.mxu0
    %v9516 = vadd.f32 %v9347, %v9515
    %v9517 = vpop.f32.mrf.mxu0
    %v9518 = vadd.f32 %v9349, %v9517
    %9519 = vmatmul.bf16.gmra.mxu0 %v6582
    %v9520 = vpop.f32.mrf.mxu0
    %v9521 = vadd.f32 %v9352, %v9520
    %v9522 = vpop.f32.mrf.mxu0
    %v9523 = vadd.f32 %v9354, %v9522
    %9524 = vmatmul.bf16.gmra.mxu0 %v6583
    %v9525 = vpop.f32.mrf.mxu0
    %v9526 = vadd.f32 %v9357, %v9525
    %v9527 = vpop.f32.mrf.mxu0
    %v9528 = vadd.f32 %v9359, %v9527
    %9529 = vmatmul.bf16.gmra.mxu0 %v6584
    %v9530 = vpop.f32.mrf.mxu0
    %v9531 = vadd.f32 %v9362, %v9530
    %v9532 = vpop.f32.mrf.mxu0
    %v9533 = vadd.f32 %v9364, %v9532
    %9534 = vmatmul.bf16.gmra.mxu0 %v6585
    %v9535 = vpop.f32.mrf.mxu0
    %v9536 = vadd.f32 %v9367, %v9535
    %v9537 = vpop.f32.mrf.mxu0
    %v9538 = vadd.f32 %v9369, %v9537
    %9539 = vmatmul.bf16.gmra.mxu0 %v6586
    %v9540 = vpop.f32.mrf.mxu0
    %v9541 = vadd.f32 %v9372, %v9540
    %v9542 = vpop.f32.mrf.mxu0
    %v9543 = vadd.f32 %v9374, %v9542
    %9544 = vmatmul.bf16.gmra.mxu0 %v6587
    %v9545 = vpop.f32.mrf.mxu0
    %v9546 = vadd.f32 %v9377, %v9545
    %v9547 = vpop.f32.mrf.mxu0
    %v9548 = vadd.f32 %v9379, %v9547
    %9549 = vmatmul.bf16.gmra.mxu0 %v6588
    %v9550 = vpop.f32.mrf.mxu0
    %v9551 = vadd.f32 %v9382, %v9550
    %v9552 = vpop.f32.mrf.mxu0
    %v9553 = vadd.f32 %v9384, %v9552
    %9554 = vmatmul.bf16.gmra.mxu0 %v6589
    %v9555 = vpop.f32.mrf.mxu0
    %v9556 = vadd.f32 %v9387, %v9555
    %v9557 = vpop.f32.mrf.mxu0
    %v9558 = vadd.f32 %v9389, %v9557
    %9559 = vmatmul.bf16.gmra.mxu0 %v6590
    %v9560 = vpop.f32.mrf.mxu0
    %v9561 = vadd.f32 %v9392, %v9560
    %v9562 = vpop.f32.mrf.mxu0
    %v9563 = vadd.f32 %v9394, %v9562
    %9564 = vmatmul.bf16.gmra.mxu0 %v6591
    %v9565 = vpop.f32.mrf.mxu0
    %v9566 = vadd.f32 %v9397, %v9565
    %v9567 = vpop.f32.mrf.mxu0
    %v9568 = vadd.f32 %v9399, %v9567
    %9569 = vmatmul.bf16.gmra.mxu0 %v6592
    %v9570 = vpop.f32.mrf.mxu0
    %v9571 = vadd.f32 %v9402, %v9570
    %v9572 = vpop.f32.mrf.mxu0
    %v9573 = vadd.f32 %v9404, %v9572
    %9574 = vmatmul.bf16.gmra.mxu0 %v6593
    %v9575 = vpop.f32.mrf.mxu0
    %v9576 = vadd.f32 %v9407, %v9575
    %v9577 = vpop.f32.mrf.mxu0
    %v9578 = vadd.f32 %v9409, %v9577
    %9579 = vmatmul.bf16.gmra.mxu0 %v6594
    %v9580 = vpop.f32.mrf.mxu0
    %v9581 = vadd.f32 %v9412, %v9580
    %v9582 = vpop.f32.mrf.mxu0
    %v9583 = vadd.f32 %v9414, %v9582
    %9584 = vmatmul.bf16.gmra.mxu0 %v6595
    %v9585 = vpop.f32.mrf.mxu0
    %v9586 = vadd.f32 %v9417, %v9585
    %v9587 = vpop.f32.mrf.mxu0
    %v9588 = vadd.f32 %v9419, %v9587
    %9589 = vmatmul.bf16.gmra.mxu0 %v6596
    %v9590 = vpop.f32.mrf.mxu0
    %v9591 = vadd.f32 %v9422, %v9590
    %v9592 = vpop.f32.mrf.mxu0
    %v9593 = vadd.f32 %v9424, %v9592
    %9594 = vmatmul.bf16.gmra.mxu0 %v6597
    %v9595 = vpop.f32.mrf.mxu0
    %v9596 = vadd.f32 %v9427, %v9595
    %v9597 = vpop.f32.mrf.mxu0
    %v9598 = vadd.f32 %v9429, %v9597
    %9599 = vmatmul.bf16.gmra.mxu0 %v6598
    %v9600 = vpop.f32.mrf.mxu0
    %v9601 = vadd.f32 %v9432, %v9600
    %v9602 = vpop.f32.mrf.mxu0
    %v9603 = vadd.f32 %v9434, %v9602
    %9604 = vmatmul.bf16.gmra.mxu0 %v6599
    %v9605 = vpop.f32.mrf.mxu0
    %v9606 = vadd.f32 %v9437, %v9605
    %v9607 = vpop.f32.mrf.mxu0
    %v9608 = vadd.f32 %v9439, %v9607
    %9609 = vmatmul.bf16.gmra.mxu0 %v6600
    %v9610 = vpop.f32.mrf.mxu0
    %v9611 = vadd.f32 %v9442, %v9610
    %v9612 = vpop.f32.mrf.mxu0
    %v9613 = vadd.f32 %v9444, %v9612
    %9614 = vmatmul.bf16.gmra.mxu0 %v6601
    %v9615 = vpop.f32.mrf.mxu0
    %v9616 = vadd.f32 %v9447, %v9615
    %v9617 = vpop.f32.mrf.mxu0
    %v9618 = vadd.f32 %v9449, %v9617
    %9619 = vmatmul.bf16.gmra.mxu0 %v6602
    %v9620 = vpop.f32.mrf.mxu0
    %v9621 = vadd.f32 %v9452, %v9620
    %v9622 = vpop.f32.mrf.mxu0
    %v9623 = vadd.f32 %v9454, %v9622
    %9624 = vmatmul.bf16.gmra.mxu0 %v6603
    %v9625 = vpop.f32.mrf.mxu0
    %v9626 = vadd.f32 %v9457, %v9625
    %v9627 = vpop.f32.mrf.mxu0
    %v9628 = vadd.f32 %v9459, %v9627
    %9629 = vmatmul.bf16.gmra.mxu0 %v6604
    %v9630 = vpop.f32.mrf.mxu0
    %v9631 = vadd.f32 %v9462, %v9630
    %v9632 = vpop.f32.mrf.mxu0
    %v9633 = vadd.f32 %v9464, %v9632
    %9634 = vmatmul.bf16.gmra.mxu0 %v6605
    %v9635 = vpop.f32.mrf.mxu0
    %v9636 = vadd.f32 %v9467, %v9635
    %v9637 = vpop.f32.mrf.mxu0
    %v9638 = vadd.f32 %v9469, %v9637
    %9639 = vmatmul.bf16.gmra.mxu0 %v6606
    %v9640 = vpop.f32.mrf.mxu0
    %v9641 = vadd.f32 %v9472, %v9640
    %v9642 = vpop.f32.mrf.mxu0
    %v9643 = vadd.f32 %v9474, %v9642
    %9644 = vmatmul.bf16.gmra.mxu0 %v6607
    %v9645 = vpop.f32.mrf.mxu0
    %v9646 = vadd.f32 %v9477, %v9645
    %v9647 = vpop.f32.mrf.mxu0
    %v9648 = vadd.f32 %v9479, %v9647
    %9649 = vmatmul.bf16.gmra.mxu0 %v6608
    %v9650 = vpop.f32.mrf.mxu0
    %v9651 = vadd.f32 %v9482, %v9650
    %v9652 = vpop.f32.mrf.mxu0
    %v9653 = vadd.f32 %v9484, %v9652
    %9654 = vmatmul.bf16.gmra.mxu0 %v6609
    %v9655 = vpop.f32.mrf.mxu0
    %v9656 = vadd.f32 %v9487, %v9655
    %v9657 = vpop.f32.mrf.mxu0
    %v9658 = vadd.f32 %v9489, %v9657
    %9659 = vmatmul.bf16.gmra.mxu0 %v6610
    %v9660 = vpop.f32.mrf.mxu0
    %v9661 = vadd.f32 %v9492, %v9660
    %v9662 = vpop.f32.mrf.mxu0
    %v9663 = vadd.f32 %v9494, %v9662
    %9664 = vmatmul.bf16.gmra.mxu0 %v6611
    %v9665 = vpop.f32.mrf.mxu0
    %v9666 = vadd.f32 %v9497, %v9665
    %v9667 = vpop.f32.mrf.mxu0
    %v9668 = vadd.f32 %v9499, %v9667
    %9669 = vmatmul.bf16.gmra.mxu0 %v6612
    %v9670 = vpop.f32.mrf.mxu0
    %v9671 = vadd.f32 %v9502, %v9670
    %v9672 = vpop.f32.mrf.mxu0
    %v9673 = vadd.f32 %v9504, %v9672
    %9674 = vdwg.mxu0
    %s9675 = scalar_lea.vmem [#allocation2], 32
    %v9676 = vld [vmem:[%s9675] sm:$0x8]
    %v9677 = vld [vmem:[%s9675 + $0x4] sm:$0xf]
    %v9678 = vld [vmem:[%s9675 + $0x8] sm:$0xf]
    %v9679 = vld [vmem:[%s9675 + $0x10] sm:$0x8]
    %v9680 = vld [vmem:[%s9675 + $0x14] sm:$0xf]
    %v9681 = vld [vmem:[%s9675 + $0x18] sm:$0xf]
    %v9682 = vld [vmem:[%s9675 + $0x20] sm:$0x8]
    %v9683 = vld [vmem:[%s9675 + $0x24] sm:$0xf]
    %v9684 = vld [vmem:[%s9675 + $0x28] sm:$0xf]
    %v9685 = vld [vmem:[%s9675 + $0x30] sm:$0x8]
    %v9686 = vld [vmem:[%s9675 + $0x34] sm:$0xf]
    %v9687 = vld [vmem:[%s9675 + $0x38] sm:$0xf]
    %v9688 = vld [vmem:[%s9675 + $0x40] sm:$0x8]
    %v9689 = vld [vmem:[%s9675 + $0x44] sm:$0xf]
    %v9690 = vld [vmem:[%s9675 + $0x48] sm:$0xf]
    %v9691 = vld [vmem:[%s9675 + $0x50] sm:$0x8]
    %v9692 = vld [vmem:[%s9675 + $0x54] sm:$0xf]
    %v9693 = vld [vmem:[%s9675 + $0x58] sm:$0xf]
    %v9694 = vld [vmem:[%s9675 + $0x60] sm:$0x8]
    %v9695 = vld [vmem:[%s9675 + $0x64] sm:$0xf]
    %v9696 = vld [vmem:[%s9675 + $0x68] sm:$0xf]
    %v9697 = vld [vmem:[%s9675 + $0x70] sm:$0x8]
    %v9698 = vld [vmem:[%s9675 + $0x74] sm:$0xf]
    %v9699 = vld [vmem:[%s9675 + $0x78] sm:$0xf]
    %v9700 = vld [vmem:[%s9675 + $0x80] sm:$0x8]
    %v9701 = vld [vmem:[%s9675 + $0x84] sm:$0xf]
    %v9702 = vld [vmem:[%s9675 + $0x88] sm:$0xf]
    %v9703 = vld [vmem:[%s9675 + $0x90] sm:$0x8]
    %v9704 = vld [vmem:[%s9675 + $0x94] sm:$0xf]
    %v9705 = vld [vmem:[%s9675 + $0x98] sm:$0xf]
    %v9706 = vld [vmem:[%s9675 + $0xa0] sm:$0x8]
    %v9707 = vld [vmem:[%s9675 + $0xa4] sm:$0xf]
    %v9708 = vld [vmem:[%s9675 + $0xa8] sm:$0xf]
    %v9709 = vld [vmem:[%s9675 + $0xb0] sm:$0x8]
    %v9710 = vld [vmem:[%s9675 + $0xb4] sm:$0xf]
    %v9711 = vld [vmem:[%s9675 + $0xb8] sm:$0xf]
    %v9712 = vld [vmem:[%s9675 + $0xc0] sm:$0x8]
    %v9713 = vld [vmem:[%s9675 + $0xc4] sm:$0xf]
    %v9714 = vld [vmem:[%s9675 + $0xc8] sm:$0xf]
    %v9715 = vld [vmem:[%s9675 + $0xd0] sm:$0x8]
    %v9716 = vld [vmem:[%s9675 + $0xd4] sm:$0xf]
    %v9717 = vld [vmem:[%s9675 + $0xd8] sm:$0xf]
    %v9718 = vld [vmem:[%s9675 + $0xe0] sm:$0x8]
    %v9719 = vld [vmem:[%s9675 + $0xe4] sm:$0xf]
    %v9720 = vld [vmem:[%s9675 + $0xe8] sm:$0xf]
    %v9721 = vld [vmem:[%s9675 + $0xf0] sm:$0x8]
    %v9722 = vld [vmem:[%s9675 + $0xf4] sm:$0xf]
    %v9723 = vld [vmem:[%s9675 + $0xf8] sm:$0xf]
    %v9724 = vld [vmem:[%s9675 + $0x120] sm:$0x8]
    %v9725 = vld [vmem:[%s9675 + $0x124] sm:$0xf]
    %v9726 = vld [vmem:[%s9675 + $0x128] sm:$0xf]
    %v9727 = vld [vmem:[%s9675 + $0x130] sm:$0x8]
    %v9728 = vld [vmem:[%s9675 + $0x134] sm:$0xf]
    %v9729 = vld [vmem:[%s9675 + $0x138] sm:$0xf]
    %v9730 = vld [vmem:[%s9675 + $0x140] sm:$0x8]
    %v9731 = vld [vmem:[%s9675 + $0x144] sm:$0xf]
    %v9732 = vld [vmem:[%s9675 + $0x148] sm:$0xf]
    %v9733 = vld [vmem:[%s9675 + $0x150] sm:$0x8]
    %v9734 = vld [vmem:[%s9675 + $0x154] sm:$0xf]
    %v9735 = vld [vmem:[%s9675 + $0x158] sm:$0xf]
    %v9736 = vld [vmem:[%s9675 + $0x160] sm:$0x8]
    %v9737 = vld [vmem:[%s9675 + $0x164] sm:$0xf]
    %v9738 = vld [vmem:[%s9675 + $0x168] sm:$0xf]
    %v9739 = vld [vmem:[%s9675 + $0x170] sm:$0x8]
    %v9740 = vld [vmem:[%s9675 + $0x174] sm:$0xf]
    %v9741 = vld [vmem:[%s9675 + $0x178] sm:$0xf]
    %v9742 = vld [vmem:[%s9675 + $0x180] sm:$0x8]
    %v9743 = vld [vmem:[%s9675 + $0x184] sm:$0xf]
    %v9744 = vld [vmem:[%s9675 + $0x188] sm:$0xf]
    %v9745 = vld [vmem:[%s9675 + $0x190] sm:$0x8]
    %v9746 = vld [vmem:[%s9675 + $0x194] sm:$0xf]
    %v9747 = vld [vmem:[%s9675 + $0x198] sm:$0xf]
    %v9748 = vld [vmem:[%s9675 + $0x1a0] sm:$0x8]
    %v9749 = vld [vmem:[%s9675 + $0x1a4] sm:$0xf]
    %v9750 = vld [vmem:[%s9675 + $0x1a8] sm:$0xf]
    %v9751 = vld [vmem:[%s9675 + $0x1b0] sm:$0x8]
    %v9752 = vld [vmem:[%s9675 + $0x1b4] sm:$0xf]
    %v9753 = vld [vmem:[%s9675 + $0x1b8] sm:$0xf]
    %v9754 = vld [vmem:[%s9675 + $0x1c0] sm:$0x8]
    %v9755 = vld [vmem:[%s9675 + $0x1c4] sm:$0xf]
    %v9756 = vld [vmem:[%s9675 + $0x1c8] sm:$0xf]
    %v9757 = vld [vmem:[%s9675 + $0x1d0] sm:$0x8]
    %v9758 = vld [vmem:[%s9675 + $0x1d4] sm:$0xf]
    %v9759 = vld [vmem:[%s9675 + $0x1d8] sm:$0xf]
    %v9760 = vld [vmem:[%s9675 + $0x1e0] sm:$0x8]
    %v9761 = vld [vmem:[%s9675 + $0x1e4] sm:$0xf]
    %v9762 = vld [vmem:[%s9675 + $0x1e8] sm:$0xf]
    %v9763 = vld [vmem:[%s9675 + $0x1f0] sm:$0x8]
    %v9764 = vld [vmem:[%s9675 + $0x1f4] sm:$0xf]
    %v9765 = vld [vmem:[%s9675 + $0x1f8] sm:$0xf]
    %v9766 = vld [vmem:[%s9675 + $0x200] sm:$0x8]
    %v9767 = vld [vmem:[%s9675 + $0x204] sm:$0xf]
    %v9768 = vld [vmem:[%s9675 + $0x208] sm:$0xf]
    %v9769 = vld [vmem:[%s9675 + $0x210] sm:$0x8]
    %v9770 = vld [vmem:[%s9675 + $0x214] sm:$0xf]
    %v9771 = vld [vmem:[%s9675 + $0x218] sm:$0xf]
    %v9773 = vshrl.u32 %v9676, 16
    %v9775 = vrot.slane %v9773, 7
    %v9776 = vrot.slane %v9775, 4
    %v9778 = vshrl.u32 %v9677, 16
    %v9780 = vrot.slane %v9778, 7
    %v9781 = vshll.u32 %v9677, 16
    %v9783 = vor.u32 %v9780, %v9781
    %v9784 = vsel %vm5012, %v9776, %v9783
    %v9785 = vrot.slane %v9780, 4
    %v9787 = vshrl.u32 %v9678, 16
    %v9789 = vrot.slane %v9787, 7
    %v9790 = vshll.u32 %v9678, 16
    %v9792 = vor.u32 %v9789, %v9790
    %v9793 = vsel %vm5012, %v9785, %v9792
    %v9795 = vshrl.u32 %v9679, 16
    %v9797 = vrot.slane %v9795, 7
    %v9798 = vrot.slane %v9797, 4
    %v9800 = vshrl.u32 %v9680, 16
    %v9802 = vrot.slane %v9800, 7
    %v9803 = vshll.u32 %v9680, 16
    %v9805 = vor.u32 %v9802, %v9803
    %v9806 = vsel %vm5012, %v9798, %v9805
    %v9807 = vrot.slane %v9802, 4
    %v9809 = vshrl.u32 %v9681, 16
    %v9811 = vrot.slane %v9809, 7
    %v9812 = vshll.u32 %v9681, 16
    %v9814 = vor.u32 %v9811, %v9812
    %v9815 = vsel %vm5012, %v9807, %v9814
    %v9817 = vshrl.u32 %v9682, 16
    %v9819 = vrot.slane %v9817, 7
    %v9820 = vrot.slane %v9819, 4
    %v9822 = vshrl.u32 %v9683, 16
    %v9824 = vrot.slane %v9822, 7
    %v9825 = vshll.u32 %v9683, 16
    %v9827 = vor.u32 %v9824, %v9825
    %v9828 = vsel %vm5012, %v9820, %v9827
    %v9829 = vrot.slane %v9824, 4
    %v9831 = vshrl.u32 %v9684, 16
    %v9833 = vrot.slane %v9831, 7
    %v9834 = vshll.u32 %v9684, 16
    %v9836 = vor.u32 %v9833, %v9834
    %v9837 = vsel %vm5012, %v9829, %v9836
    %v9839 = vshrl.u32 %v9685, 16
    %v9841 = vrot.slane %v9839, 7
    %v9842 = vrot.slane %v9841, 4
    %v9844 = vshrl.u32 %v9686, 16
    %v9846 = vrot.slane %v9844, 7
    %v9847 = vshll.u32 %v9686, 16
    %v9849 = vor.u32 %v9846, %v9847
    %v9850 = vsel %vm5012, %v9842, %v9849
    %v9851 = vrot.slane %v9846, 4
    %v9853 = vshrl.u32 %v9687, 16
    %v9855 = vrot.slane %v9853, 7
    %v9856 = vshll.u32 %v9687, 16
    %v9858 = vor.u32 %v9855, %v9856
    %v9859 = vsel %vm5012, %v9851, %v9858
    %v9861 = vshrl.u32 %v9688, 16
    %v9863 = vrot.slane %v9861, 7
    %v9864 = vrot.slane %v9863, 4
    %v9866 = vshrl.u32 %v9689, 16
    %v9868 = vrot.slane %v9866, 7
    %v9869 = vshll.u32 %v9689, 16
    %v9871 = vor.u32 %v9868, %v9869
    %v9872 = vsel %vm5012, %v9864, %v9871
    %v9873 = vrot.slane %v9868, 4
    %v9875 = vshrl.u32 %v9690, 16
    %v9877 = vrot.slane %v9875, 7
    %v9878 = vshll.u32 %v9690, 16
    %v9880 = vor.u32 %v9877, %v9878
    %v9881 = vsel %vm5012, %v9873, %v9880
    %v9883 = vshrl.u32 %v9691, 16
    %v9885 = vrot.slane %v9883, 7
    %v9886 = vrot.slane %v9885, 4
    %v9888 = vshrl.u32 %v9692, 16
    %v9890 = vrot.slane %v9888, 7
    %v9891 = vshll.u32 %v9692, 16
    %v9893 = vor.u32 %v9890, %v9891
    %v9894 = vsel %vm5012, %v9886, %v9893
    %v9895 = vrot.slane %v9890, 4
    %v9897 = vshrl.u32 %v9693, 16
    %v9899 = vrot.slane %v9897, 7
    %v9900 = vshll.u32 %v9693, 16
    %v9902 = vor.u32 %v9899, %v9900
    %v9903 = vsel %vm5012, %v9895, %v9902
    %v9905 = vshrl.u32 %v9694, 16
    %v9907 = vrot.slane %v9905, 7
    %v9908 = vrot.slane %v9907, 4
    %v9910 = vshrl.u32 %v9695, 16
    %v9912 = vrot.slane %v9910, 7
    %v9913 = vshll.u32 %v9695, 16
    %v9915 = vor.u32 %v9912, %v9913
    %v9916 = vsel %vm5012, %v9908, %v9915
    %v9917 = vrot.slane %v9912, 4
    %v9919 = vshrl.u32 %v9696, 16
    %v9921 = vrot.slane %v9919, 7
    %v9922 = vshll.u32 %v9696, 16
    %v9924 = vor.u32 %v9921, %v9922
    %v9925 = vsel %vm5012, %v9917, %v9924
    %v9927 = vshrl.u32 %v9697, 16
    %v9929 = vrot.slane %v9927, 7
    %v9930 = vrot.slane %v9929, 4
    %v9932 = vshrl.u32 %v9698, 16
    %v9934 = vrot.slane %v9932, 7
    %v9935 = vshll.u32 %v9698, 16
    %v9937 = vor.u32 %v9934, %v9935
    %v9938 = vsel %vm5012, %v9930, %v9937
    %v9939 = vrot.slane %v9934, 4
    %v9941 = vshrl.u32 %v9699, 16
    %v9943 = vrot.slane %v9941, 7
    %v9944 = vshll.u32 %v9699, 16
    %v9946 = vor.u32 %v9943, %v9944
    %v9947 = vsel %vm5012, %v9939, %v9946
    %v9949 = vshrl.u32 %v9700, 16
    %v9951 = vrot.slane %v9949, 7
    %v9952 = vrot.slane %v9951, 4
    %v9954 = vshrl.u32 %v9701, 16
    %v9956 = vrot.slane %v9954, 7
    %v9957 = vshll.u32 %v9701, 16
    %v9959 = vor.u32 %v9956, %v9957
    %v9960 = vsel %vm5012, %v9952, %v9959
    %v9961 = vrot.slane %v9956, 4
    %v9963 = vshrl.u32 %v9702, 16
    %v9965 = vrot.slane %v9963, 7
    %v9966 = vshll.u32 %v9702, 16
    %v9968 = vor.u32 %v9965, %v9966
    %v9969 = vsel %vm5012, %v9961, %v9968
    %v9971 = vshrl.u32 %v9703, 16
    %v9973 = vrot.slane %v9971, 7
    %v9974 = vrot.slane %v9973, 4
    %v9976 = vshrl.u32 %v9704, 16
    %v9978 = vrot.slane %v9976, 7
    %v9979 = vshll.u32 %v9704, 16
    %v9981 = vor.u32 %v9978, %v9979
    %v9982 = vsel %vm5012, %v9974, %v9981
    %v9983 = vrot.slane %v9978, 4
    %v9985 = vshrl.u32 %v9705, 16
    %v9987 = vrot.slane %v9985, 7
    %v9988 = vshll.u32 %v9705, 16
    %v9990 = vor.u32 %v9987, %v9988
    %v9991 = vsel %vm5012, %v9983, %v9990
    %v9993 = vshrl.u32 %v9706, 16
    %v9995 = vrot.slane %v9993, 7
    %v9996 = vrot.slane %v9995, 4
    %v9998 = vshrl.u32 %v9707, 16
    %v10000 = vrot.slane %v9998, 7
    %v10001 = vshll.u32 %v9707, 16
    %v10003 = vor.u32 %v10000, %v10001
    %v10004 = vsel %vm5012, %v9996, %v10003
    %v10005 = vrot.slane %v10000, 4
    %v10007 = vshrl.u32 %v9708, 16
    %v10009 = vrot.slane %v10007, 7
    %v10010 = vshll.u32 %v9708, 16
    %v10012 = vor.u32 %v10009, %v10010
    %v10013 = vsel %vm5012, %v10005, %v10012
    %v10015 = vshrl.u32 %v9709, 16
    %v10017 = vrot.slane %v10015, 7
    %v10018 = vrot.slane %v10017, 4
    %v10020 = vshrl.u32 %v9710, 16
    %v10022 = vrot.slane %v10020, 7
    %v10023 = vshll.u32 %v9710, 16
    %v10025 = vor.u32 %v10022, %v10023
    %v10026 = vsel %vm5012, %v10018, %v10025
    %v10027 = vrot.slane %v10022, 4
    %v10029 = vshrl.u32 %v9711, 16
    %v10031 = vrot.slane %v10029, 7
    %v10032 = vshll.u32 %v9711, 16
    %v10034 = vor.u32 %v10031, %v10032
    %v10035 = vsel %vm5012, %v10027, %v10034
    %v10037 = vshrl.u32 %v9712, 16
    %v10039 = vrot.slane %v10037, 7
    %v10040 = vrot.slane %v10039, 4
    %v10042 = vshrl.u32 %v9713, 16
    %v10044 = vrot.slane %v10042, 7
    %v10045 = vshll.u32 %v9713, 16
    %v10047 = vor.u32 %v10044, %v10045
    %v10048 = vsel %vm5012, %v10040, %v10047
    %v10049 = vrot.slane %v10044, 4
    %v10051 = vshrl.u32 %v9714, 16
    %v10053 = vrot.slane %v10051, 7
    %v10054 = vshll.u32 %v9714, 16
    %v10056 = vor.u32 %v10053, %v10054
    %v10057 = vsel %vm5012, %v10049, %v10056
    %v10059 = vshrl.u32 %v9715, 16
    %v10061 = vrot.slane %v10059, 7
    %v10062 = vrot.slane %v10061, 4
    %v10064 = vshrl.u32 %v9716, 16
    %v10066 = vrot.slane %v10064, 7
    %v10067 = vshll.u32 %v9716, 16
    %v10069 = vor.u32 %v10066, %v10067
    %v10070 = vsel %vm5012, %v10062, %v10069
    %v10071 = vrot.slane %v10066, 4
    %v10073 = vshrl.u32 %v9717, 16
    %v10075 = vrot.slane %v10073, 7
    %v10076 = vshll.u32 %v9717, 16
    %v10078 = vor.u32 %v10075, %v10076
    %v10079 = vsel %vm5012, %v10071, %v10078
    %v10081 = vshrl.u32 %v9718, 16
    %v10083 = vrot.slane %v10081, 7
    %v10084 = vrot.slane %v10083, 4
    %v10086 = vshrl.u32 %v9719, 16
    %v10088 = vrot.slane %v10086, 7
    %v10089 = vshll.u32 %v9719, 16
    %v10091 = vor.u32 %v10088, %v10089
    %v10092 = vsel %vm5012, %v10084, %v10091
    %v10093 = vrot.slane %v10088, 4
    %v10095 = vshrl.u32 %v9720, 16
    %v10097 = vrot.slane %v10095, 7
    %v10098 = vshll.u32 %v9720, 16
    %v10100 = vor.u32 %v10097, %v10098
    %v10101 = vsel %vm5012, %v10093, %v10100
    %v10103 = vshrl.u32 %v9721, 16
    %v10105 = vrot.slane %v10103, 7
    %v10106 = vrot.slane %v10105, 4
    %v10108 = vshrl.u32 %v9722, 16
    %v10110 = vrot.slane %v10108, 7
    %v10111 = vshll.u32 %v9722, 16
    %v10113 = vor.u32 %v10110, %v10111
    %v10114 = vsel %vm5012, %v10106, %v10113
    %v10115 = vrot.slane %v10110, 4
    %v10117 = vshrl.u32 %v9723, 16
    %v10119 = vrot.slane %v10117, 7
    %v10120 = vshll.u32 %v9723, 16
    %v10122 = vor.u32 %v10119, %v10120
    %v10123 = vsel %vm5012, %v10115, %v10122
    %v10125 = vshrl.u32 %v9724, 16
    %v10127 = vrot.slane %v10125, 7
    %v10128 = vrot.slane %v10127, 4
    %v10130 = vshrl.u32 %v9725, 16
    %v10132 = vrot.slane %v10130, 7
    %v10133 = vshll.u32 %v9725, 16
    %v10135 = vor.u32 %v10132, %v10133
    %v10136 = vsel %vm5012, %v10128, %v10135
    %v10137 = vrot.slane %v10132, 4
    %v10139 = vshrl.u32 %v9726, 16
    %v10141 = vrot.slane %v10139, 7
    %v10142 = vshll.u32 %v9726, 16
    %v10144 = vor.u32 %v10141, %v10142
    %v10145 = vsel %vm5012, %v10137, %v10144
    %v10147 = vshrl.u32 %v9727, 16
    %v10149 = vrot.slane %v10147, 7
    %v10150 = vrot.slane %v10149, 4
    %v10152 = vshrl.u32 %v9728, 16
    %v10154 = vrot.slane %v10152, 7
    %v10155 = vshll.u32 %v9728, 16
    %v10157 = vor.u32 %v10154, %v10155
    %v10158 = vsel %vm5012, %v10150, %v10157
    %v10159 = vrot.slane %v10154, 4
    %v10161 = vshrl.u32 %v9729, 16
    %v10163 = vrot.slane %v10161, 7
    %v10164 = vshll.u32 %v9729, 16
    %v10166 = vor.u32 %v10163, %v10164
    %v10167 = vsel %vm5012, %v10159, %v10166
    %v10169 = vshrl.u32 %v9730, 16
    %v10171 = vrot.slane %v10169, 7
    %v10172 = vrot.slane %v10171, 4
    %v10174 = vshrl.u32 %v9731, 16
    %v10176 = vrot.slane %v10174, 7
    %v10177 = vshll.u32 %v9731, 16
    %v10179 = vor.u32 %v10176, %v10177
    %v10180 = vsel %vm5012, %v10172, %v10179
    %v10181 = vrot.slane %v10176, 4
    %v10183 = vshrl.u32 %v9732, 16
    %v10185 = vrot.slane %v10183, 7
    %v10186 = vshll.u32 %v9732, 16
    %v10188 = vor.u32 %v10185, %v10186
    %v10189 = vsel %vm5012, %v10181, %v10188
    %v10191 = vshrl.u32 %v9733, 16
    %v10193 = vrot.slane %v10191, 7
    %v10194 = vrot.slane %v10193, 4
    %v10196 = vshrl.u32 %v9734, 16
    %v10198 = vrot.slane %v10196, 7
    %v10199 = vshll.u32 %v9734, 16
    %v10201 = vor.u32 %v10198, %v10199
    %v10202 = vsel %vm5012, %v10194, %v10201
    %v10203 = vrot.slane %v10198, 4
    %v10205 = vshrl.u32 %v9735, 16
    %v10207 = vrot.slane %v10205, 7
    %v10208 = vshll.u32 %v9735, 16
    %v10210 = vor.u32 %v10207, %v10208
    %v10211 = vsel %vm5012, %v10203, %v10210
    %v10213 = vshrl.u32 %v9736, 16
    %v10215 = vrot.slane %v10213, 7
    %v10216 = vrot.slane %v10215, 4
    %v10218 = vshrl.u32 %v9737, 16
    %v10220 = vrot.slane %v10218, 7
    %v10221 = vshll.u32 %v9737, 16
    %v10223 = vor.u32 %v10220, %v10221
    %v10224 = vsel %vm5012, %v10216, %v10223
    %v10225 = vrot.slane %v10220, 4
    %v10227 = vshrl.u32 %v9738, 16
    %v10229 = vrot.slane %v10227, 7
    %v10230 = vshll.u32 %v9738, 16
    %v10232 = vor.u32 %v10229, %v10230
    %v10233 = vsel %vm5012, %v10225, %v10232
    %v10235 = vshrl.u32 %v9739, 16
    %v10237 = vrot.slane %v10235, 7
    %v10238 = vrot.slane %v10237, 4
    %v10240 = vshrl.u32 %v9740, 16
    %v10242 = vrot.slane %v10240, 7
    %v10243 = vshll.u32 %v9740, 16
    %v10245 = vor.u32 %v10242, %v10243
    %v10246 = vsel %vm5012, %v10238, %v10245
    %v10247 = vrot.slane %v10242, 4
    %v10249 = vshrl.u32 %v9741, 16
    %v10251 = vrot.slane %v10249, 7
    %v10252 = vshll.u32 %v9741, 16
    %v10254 = vor.u32 %v10251, %v10252
    %v10255 = vsel %vm5012, %v10247, %v10254
    %v10257 = vshrl.u32 %v9742, 16
    %v10259 = vrot.slane %v10257, 7
    %v10260 = vrot.slane %v10259, 4
    %v10262 = vshrl.u32 %v9743, 16
    %v10264 = vrot.slane %v10262, 7
    %v10265 = vshll.u32 %v9743, 16
    %v10267 = vor.u32 %v10264, %v10265
    %v10268 = vsel %vm5012, %v10260, %v10267
    %v10269 = vrot.slane %v10264, 4
    %v10271 = vshrl.u32 %v9744, 16
    %v10273 = vrot.slane %v10271, 7
    %v10274 = vshll.u32 %v9744, 16
    %v10276 = vor.u32 %v10273, %v10274
    %v10277 = vsel %vm5012, %v10269, %v10276
    %v10279 = vshrl.u32 %v9745, 16
    %v10281 = vrot.slane %v10279, 7
    %v10282 = vrot.slane %v10281, 4
    %v10284 = vshrl.u32 %v9746, 16
    %v10286 = vrot.slane %v10284, 7
    %v10287 = vshll.u32 %v9746, 16
    %v10289 = vor.u32 %v10286, %v10287
    %v10290 = vsel %vm5012, %v10282, %v10289
    %v10291 = vrot.slane %v10286, 4
    %v10293 = vshrl.u32 %v9747, 16
    %v10295 = vrot.slane %v10293, 7
    %v10296 = vshll.u32 %v9747, 16
    %v10298 = vor.u32 %v10295, %v10296
    %v10299 = vsel %vm5012, %v10291, %v10298
    %v10301 = vshrl.u32 %v9748, 16
    %v10303 = vrot.slane %v10301, 7
    %v10304 = vrot.slane %v10303, 4
    %v10306 = vshrl.u32 %v9749, 16
    %v10308 = vrot.slane %v10306, 7
    %v10309 = vshll.u32 %v9749, 16
    %v10311 = vor.u32 %v10308, %v10309
    %v10312 = vsel %vm5012, %v10304, %v10311
    %v10313 = vrot.slane %v10308, 4
    %v10315 = vshrl.u32 %v9750, 16
    %v10317 = vrot.slane %v10315, 7
    %v10318 = vshll.u32 %v9750, 16
    %v10320 = vor.u32 %v10317, %v10318
    %v10321 = vsel %vm5012, %v10313, %v10320
    %v10323 = vshrl.u32 %v9751, 16
    %v10325 = vrot.slane %v10323, 7
    %v10326 = vrot.slane %v10325, 4
    %v10328 = vshrl.u32 %v9752, 16
    %v10330 = vrot.slane %v10328, 7
    %v10331 = vshll.u32 %v9752, 16
    %v10333 = vor.u32 %v10330, %v10331
    %v10334 = vsel %vm5012, %v10326, %v10333
    %v10335 = vrot.slane %v10330, 4
    %v10337 = vshrl.u32 %v9753, 16
    %v10339 = vrot.slane %v10337, 7
    %v10340 = vshll.u32 %v9753, 16
    %v10342 = vor.u32 %v10339, %v10340
    %v10343 = vsel %vm5012, %v10335, %v10342
    %v10345 = vshrl.u32 %v9754, 16
    %v10347 = vrot.slane %v10345, 7
    %v10348 = vrot.slane %v10347, 4
    %v10350 = vshrl.u32 %v9755, 16
    %v10352 = vrot.slane %v10350, 7
    %v10353 = vshll.u32 %v9755, 16
    %v10355 = vor.u32 %v10352, %v10353
    %v10356 = vsel %vm5012, %v10348, %v10355
    %v10357 = vrot.slane %v10352, 4
    %v10359 = vshrl.u32 %v9756, 16
    %v10361 = vrot.slane %v10359, 7
    %v10362 = vshll.u32 %v9756, 16
    %v10364 = vor.u32 %v10361, %v10362
    %v10365 = vsel %vm5012, %v10357, %v10364
    %v10367 = vshrl.u32 %v9757, 16
    %v10369 = vrot.slane %v10367, 7
    %v10370 = vrot.slane %v10369, 4
    %v10372 = vshrl.u32 %v9758, 16
    %v10374 = vrot.slane %v10372, 7
    %v10375 = vshll.u32 %v9758, 16
    %v10377 = vor.u32 %v10374, %v10375
    %v10378 = vsel %vm5012, %v10370, %v10377
    %v10379 = vrot.slane %v10374, 4
    %v10381 = vshrl.u32 %v9759, 16
    %v10383 = vrot.slane %v10381, 7
    %v10384 = vshll.u32 %v9759, 16
    %v10386 = vor.u32 %v10383, %v10384
    %v10387 = vsel %vm5012, %v10379, %v10386
    %v10389 = vshrl.u32 %v9760, 16
    %v10391 = vrot.slane %v10389, 7
    %v10392 = vrot.slane %v10391, 4
    %v10394 = vshrl.u32 %v9761, 16
    %v10396 = vrot.slane %v10394, 7
    %v10397 = vshll.u32 %v9761, 16
    %v10399 = vor.u32 %v10396, %v10397
    %v10400 = vsel %vm5012, %v10392, %v10399
    %v10401 = vrot.slane %v10396, 4
    %v10403 = vshrl.u32 %v9762, 16
    %v10405 = vrot.slane %v10403, 7
    %v10406 = vshll.u32 %v9762, 16
    %v10408 = vor.u32 %v10405, %v10406
    %v10409 = vsel %vm5012, %v10401, %v10408
    %v10411 = vshrl.u32 %v9763, 16
    %v10413 = vrot.slane %v10411, 7
    %v10414 = vrot.slane %v10413, 4
    %v10416 = vshrl.u32 %v9764, 16
    %v10418 = vrot.slane %v10416, 7
    %v10419 = vshll.u32 %v9764, 16
    %v10421 = vor.u32 %v10418, %v10419
    %v10422 = vsel %vm5012, %v10414, %v10421
    %v10423 = vrot.slane %v10418, 4
    %v10425 = vshrl.u32 %v9765, 16
    %v10427 = vrot.slane %v10425, 7
    %v10428 = vshll.u32 %v9765, 16
    %v10430 = vor.u32 %v10427, %v10428
    %v10431 = vsel %vm5012, %v10423, %v10430
    %v10433 = vshrl.u32 %v9766, 16
    %v10435 = vrot.slane %v10433, 7
    %v10436 = vrot.slane %v10435, 4
    %v10438 = vshrl.u32 %v9767, 16
    %v10440 = vrot.slane %v10438, 7
    %v10441 = vshll.u32 %v9767, 16
    %v10443 = vor.u32 %v10440, %v10441
    %v10444 = vsel %vm5012, %v10436, %v10443
    %v10445 = vrot.slane %v10440, 4
    %v10447 = vshrl.u32 %v9768, 16
    %v10449 = vrot.slane %v10447, 7
    %v10450 = vshll.u32 %v9768, 16
    %v10452 = vor.u32 %v10449, %v10450
    %v10453 = vsel %vm5012, %v10445, %v10452
    %v10455 = vshrl.u32 %v9769, 16
    %v10457 = vrot.slane %v10455, 7
    %v10458 = vrot.slane %v10457, 4
    %v10460 = vshrl.u32 %v9770, 16
    %v10462 = vrot.slane %v10460, 7
    %v10463 = vshll.u32 %v9770, 16
    %v10465 = vor.u32 %v10462, %v10463
    %v10466 = vsel %vm5012, %v10458, %v10465
    %v10467 = vrot.slane %v10462, 4
    %v10469 = vshrl.u32 %v9771, 16
    %v10471 = vrot.slane %v10469, 7
    %v10472 = vshll.u32 %v9771, 16
    %v10474 = vor.u32 %v10471, %v10472
    %v10475 = vsel %vm5012, %v10467, %v10474
    %v10476 = vld [vmem:[%s9675 + $0xc] sm:$0x1]
    %v10477 = vld [vmem:[%s9675 + $0x1c] sm:$0x1]
    %v10478 = vld [vmem:[%s9675 + $0x2c] sm:$0x1]
    %v10479 = vld [vmem:[%s9675 + $0x3c] sm:$0x1]
    %v10480 = vld [vmem:[%s9675 + $0x4c] sm:$0x1]
    %v10481 = vld [vmem:[%s9675 + $0x5c] sm:$0x1]
    %v10482 = vld [vmem:[%s9675 + $0x6c] sm:$0x1]
    %v10483 = vld [vmem:[%s9675 + $0x7c] sm:$0x1]
    %v10484 = vld [vmem:[%s9675 + $0x8c] sm:$0x1]
    %v10485 = vld [vmem:[%s9675 + $0x9c] sm:$0x1]
    %v10486 = vld [vmem:[%s9675 + $0xac] sm:$0x1]
    %v10487 = vld [vmem:[%s9675 + $0xbc] sm:$0x1]
    %v10488 = vld [vmem:[%s9675 + $0xcc] sm:$0x1]
    %v10489 = vld [vmem:[%s9675 + $0xdc] sm:$0x1]
    %v10490 = vld [vmem:[%s9675 + $0xec] sm:$0x1]
    %v10491 = vld [vmem:[%s9675 + $0xfc] sm:$0x1]
    %v10492 = vld [vmem:[%s9675 + $0x12c] sm:$0x1]
    %v10493 = vld [vmem:[%s9675 + $0x13c] sm:$0x1]
    %v10494 = vld [vmem:[%s9675 + $0x14c] sm:$0x1]
    %v10495 = vld [vmem:[%s9675 + $0x15c] sm:$0x1]
    %v10496 = vld [vmem:[%s9675 + $0x16c] sm:$0x1]
    %v10497 = vld [vmem:[%s9675 + $0x17c] sm:$0x1]
    %v10498 = vld [vmem:[%s9675 + $0x18c] sm:$0x1]
    %v10499 = vld [vmem:[%s9675 + $0x19c] sm:$0x1]
    %v10500 = vld [vmem:[%s9675 + $0x1ac] sm:$0x1]
    %v10501 = vld [vmem:[%s9675 + $0x1bc] sm:$0x1]
    %v10502 = vld [vmem:[%s9675 + $0x1cc] sm:$0x1]
    %v10503 = vld [vmem:[%s9675 + $0x1dc] sm:$0x1]
    %v10504 = vld [vmem:[%s9675 + $0x1ec] sm:$0x1]
    %v10505 = vld [vmem:[%s9675 + $0x1fc] sm:$0x1]
    %v10506 = vld [vmem:[%s9675 + $0x20c] sm:$0x1]
    %v10507 = vld [vmem:[%s9675 + $0x21c] sm:$0x1]
    %v10508 = vrot.slane %v9778, 4
    %v10509 = vrot.slane %v9781, 5
    %v10510 = vor.u32 %v10508, %v10509
    %v10511 = vrot.slane %v10510, 4
    %v10512 = vrot.slane %v9790, 5
    %v10513 = vsel %vm399, %v10511, %v10512
    %v10514 = vrot.slane %v9787, 4
    %v10515 = vor.u32 %v10514, %v10512
    %v10516 = vrot.slane %v10515, 4
    %v10518 = vshll.u32 %v10476, 16
    %v10520 = vrot.slane %v10518, 5
    %v10521 = vsel %vm399, %v10516, %v10520
    %v10522 = vrot.slane %v9800, 4
    %v10523 = vrot.slane %v9803, 5
    %v10524 = vor.u32 %v10522, %v10523
    %v10525 = vrot.slane %v10524, 4
    %v10526 = vrot.slane %v9812, 5
    %v10527 = vsel %vm399, %v10525, %v10526
    %v10528 = vrot.slane %v9809, 4
    %v10529 = vor.u32 %v10528, %v10526
    %v10530 = vrot.slane %v10529, 4
    %v10532 = vshll.u32 %v10477, 16
    %v10534 = vrot.slane %v10532, 5
    %v10535 = vsel %vm399, %v10530, %v10534
    %v10536 = vrot.slane %v9822, 4
    %v10537 = vrot.slane %v9825, 5
    %v10538 = vor.u32 %v10536, %v10537
    %v10539 = vrot.slane %v10538, 4
    %v10540 = vrot.slane %v9834, 5
    %v10541 = vsel %vm399, %v10539, %v10540
    %v10542 = vrot.slane %v9831, 4
    %v10543 = vor.u32 %v10542, %v10540
    %v10544 = vrot.slane %v10543, 4
    %v10546 = vshll.u32 %v10478, 16
    %v10548 = vrot.slane %v10546, 5
    %v10549 = vsel %vm399, %v10544, %v10548
    %v10550 = vrot.slane %v9844, 4
    %v10551 = vrot.slane %v9847, 5
    %v10552 = vor.u32 %v10550, %v10551
    %v10553 = vrot.slane %v10552, 4
    %v10554 = vrot.slane %v9856, 5
    %v10555 = vsel %vm399, %v10553, %v10554
    %v10556 = vrot.slane %v9853, 4
    %v10557 = vor.u32 %v10556, %v10554
    %v10558 = vrot.slane %v10557, 4
    %v10560 = vshll.u32 %v10479, 16
    %v10562 = vrot.slane %v10560, 5
    %v10563 = vsel %vm399, %v10558, %v10562
    %v10564 = vrot.slane %v9866, 4
    %v10565 = vrot.slane %v9869, 5
    %v10566 = vor.u32 %v10564, %v10565
    %v10567 = vrot.slane %v10566, 4
    %v10568 = vrot.slane %v9878, 5
    %v10569 = vsel %vm399, %v10567, %v10568
    %v10570 = vrot.slane %v9875, 4
    %v10571 = vor.u32 %v10570, %v10568
    %v10572 = vrot.slane %v10571, 4
    %v10574 = vshll.u32 %v10480, 16
    %v10576 = vrot.slane %v10574, 5
    %v10577 = vsel %vm399, %v10572, %v10576
    %v10578 = vrot.slane %v9888, 4
    %v10579 = vrot.slane %v9891, 5
    %v10580 = vor.u32 %v10578, %v10579
    %v10581 = vrot.slane %v10580, 4
    %v10582 = vrot.slane %v9900, 5
    %v10583 = vsel %vm399, %v10581, %v10582
    %v10584 = vrot.slane %v9897, 4
    %v10585 = vor.u32 %v10584, %v10582
    %v10586 = vrot.slane %v10585, 4
    %v10588 = vshll.u32 %v10481, 16
    %v10590 = vrot.slane %v10588, 5
    %v10591 = vsel %vm399, %v10586, %v10590
    %v10592 = vrot.slane %v9910, 4
    %v10593 = vrot.slane %v9913, 5
    %v10594 = vor.u32 %v10592, %v10593
    %v10595 = vrot.slane %v10594, 4
    %v10596 = vrot.slane %v9922, 5
    %v10597 = vsel %vm399, %v10595, %v10596
    %v10598 = vrot.slane %v9919, 4
    %v10599 = vor.u32 %v10598, %v10596
    %v10600 = vrot.slane %v10599, 4
    %v10602 = vshll.u32 %v10482, 16
    %v10604 = vrot.slane %v10602, 5
    %v10605 = vsel %vm399, %v10600, %v10604
    %v10606 = vrot.slane %v9932, 4
    %v10607 = vrot.slane %v9935, 5
    %v10608 = vor.u32 %v10606, %v10607
    %v10609 = vrot.slane %v10608, 4
    %v10610 = vrot.slane %v9944, 5
    %v10611 = vsel %vm399, %v10609, %v10610
    %v10612 = vrot.slane %v9941, 4
    %v10613 = vor.u32 %v10612, %v10610
    %v10614 = vrot.slane %v10613, 4
    %v10616 = vshll.u32 %v10483, 16
    %v10618 = vrot.slane %v10616, 5
    %v10619 = vsel %vm399, %v10614, %v10618
    %v10620 = vrot.slane %v9954, 4
    %v10621 = vrot.slane %v9957, 5
    %v10622 = vor.u32 %v10620, %v10621
    %v10623 = vrot.slane %v10622, 4
    %v10624 = vrot.slane %v9966, 5
    %v10625 = vsel %vm399, %v10623, %v10624
    %v10626 = vrot.slane %v9963, 4
    %v10627 = vor.u32 %v10626, %v10624
    %v10628 = vrot.slane %v10627, 4
    %v10630 = vshll.u32 %v10484, 16
    %v10632 = vrot.slane %v10630, 5
    %v10633 = vsel %vm399, %v10628, %v10632
    %v10634 = vrot.slane %v9976, 4
    %v10635 = vrot.slane %v9979, 5
    %v10636 = vor.u32 %v10634, %v10635
    %v10637 = vrot.slane %v10636, 4
    %v10638 = vrot.slane %v9988, 5
    %v10639 = vsel %vm399, %v10637, %v10638
    %v10640 = vrot.slane %v9985, 4
    %v10641 = vor.u32 %v10640, %v10638
    %v10642 = vrot.slane %v10641, 4
    %v10644 = vshll.u32 %v10485, 16
    %v10646 = vrot.slane %v10644, 5
    %v10647 = vsel %vm399, %v10642, %v10646
    %v10648 = vrot.slane %v9998, 4
    %v10649 = vrot.slane %v10001, 5
    %v10650 = vor.u32 %v10648, %v10649
    %v10651 = vrot.slane %v10650, 4
    %v10652 = vrot.slane %v10010, 5
    %v10653 = vsel %vm399, %v10651, %v10652
    %v10654 = vrot.slane %v10007, 4
    %v10655 = vor.u32 %v10654, %v10652
    %v10656 = vrot.slane %v10655, 4
    %v10658 = vshll.u32 %v10486, 16
    %v10660 = vrot.slane %v10658, 5
    %v10661 = vsel %vm399, %v10656, %v10660
    %v10662 = vrot.slane %v10020, 4
    %v10663 = vrot.slane %v10023, 5
    %v10664 = vor.u32 %v10662, %v10663
    %v10665 = vrot.slane %v10664, 4
    %v10666 = vrot.slane %v10032, 5
    %v10667 = vsel %vm399, %v10665, %v10666
    %v10668 = vrot.slane %v10029, 4
    %v10669 = vor.u32 %v10668, %v10666
    %v10670 = vrot.slane %v10669, 4
    %v10672 = vshll.u32 %v10487, 16
    %v10674 = vrot.slane %v10672, 5
    %v10675 = vsel %vm399, %v10670, %v10674
    %v10676 = vrot.slane %v10042, 4
    %v10677 = vrot.slane %v10045, 5
    %v10678 = vor.u32 %v10676, %v10677
    %v10679 = vrot.slane %v10678, 4
    %v10680 = vrot.slane %v10054, 5
    %v10681 = vsel %vm399, %v10679, %v10680
    %v10682 = vrot.slane %v10051, 4
    %v10683 = vor.u32 %v10682, %v10680
    %v10684 = vrot.slane %v10683, 4
    %v10686 = vshll.u32 %v10488, 16
    %v10688 = vrot.slane %v10686, 5
    %v10689 = vsel %vm399, %v10684, %v10688
    %v10690 = vrot.slane %v10064, 4
    %v10691 = vrot.slane %v10067, 5
    %v10692 = vor.u32 %v10690, %v10691
    %v10693 = vrot.slane %v10692, 4
    %v10694 = vrot.slane %v10076, 5
    %v10695 = vsel %vm399, %v10693, %v10694
    %v10696 = vrot.slane %v10073, 4
    %v10697 = vor.u32 %v10696, %v10694
    %v10698 = vrot.slane %v10697, 4
    %v10700 = vshll.u32 %v10489, 16
    %v10702 = vrot.slane %v10700, 5
    %v10703 = vsel %vm399, %v10698, %v10702
    %v10704 = vrot.slane %v10086, 4
    %v10705 = vrot.slane %v10089, 5
    %v10706 = vor.u32 %v10704, %v10705
    %v10707 = vrot.slane %v10706, 4
    %v10708 = vrot.slane %v10098, 5
    %v10709 = vsel %vm399, %v10707, %v10708
    %v10710 = vrot.slane %v10095, 4
    %v10711 = vor.u32 %v10710, %v10708
    %v10712 = vrot.slane %v10711, 4
    %v10714 = vshll.u32 %v10490, 16
    %v10716 = vrot.slane %v10714, 5
    %v10717 = vsel %vm399, %v10712, %v10716
    %v10718 = vrot.slane %v10108, 4
    %v10719 = vrot.slane %v10111, 5
    %v10720 = vor.u32 %v10718, %v10719
    %v10721 = vrot.slane %v10720, 4
    %v10722 = vrot.slane %v10120, 5
    %v10723 = vsel %vm399, %v10721, %v10722
    %v10724 = vrot.slane %v10117, 4
    %v10725 = vor.u32 %v10724, %v10722
    %v10726 = vrot.slane %v10725, 4
    %v10728 = vshll.u32 %v10491, 16
    %v10730 = vrot.slane %v10728, 5
    %v10731 = vsel %vm399, %v10726, %v10730
    %v10732 = vrot.slane %v10130, 4
    %v10733 = vrot.slane %v10133, 5
    %v10734 = vor.u32 %v10732, %v10733
    %v10735 = vrot.slane %v10734, 4
    %v10736 = vrot.slane %v10142, 5
    %v10737 = vsel %vm399, %v10735, %v10736
    %v10738 = vrot.slane %v10139, 4
    %v10739 = vor.u32 %v10738, %v10736
    %v10740 = vrot.slane %v10739, 4
    %v10742 = vshll.u32 %v10492, 16
    %v10744 = vrot.slane %v10742, 5
    %v10745 = vsel %vm399, %v10740, %v10744
    %v10746 = vrot.slane %v10152, 4
    %v10747 = vrot.slane %v10155, 5
    %v10748 = vor.u32 %v10746, %v10747
    %v10749 = vrot.slane %v10748, 4
    %v10750 = vrot.slane %v10164, 5
    %v10751 = vsel %vm399, %v10749, %v10750
    %v10752 = vrot.slane %v10161, 4
    %v10753 = vor.u32 %v10752, %v10750
    %v10754 = vrot.slane %v10753, 4
    %v10756 = vshll.u32 %v10493, 16
    %v10758 = vrot.slane %v10756, 5
    %v10759 = vsel %vm399, %v10754, %v10758
    %v10760 = vrot.slane %v10174, 4
    %v10761 = vrot.slane %v10177, 5
    %v10762 = vor.u32 %v10760, %v10761
    %v10763 = vrot.slane %v10762, 4
    %v10764 = vrot.slane %v10186, 5
    %v10765 = vsel %vm399, %v10763, %v10764
    %v10766 = vrot.slane %v10183, 4
    %v10767 = vor.u32 %v10766, %v10764
    %v10768 = vrot.slane %v10767, 4
    %v10770 = vshll.u32 %v10494, 16
    %v10772 = vrot.slane %v10770, 5
    %v10773 = vsel %vm399, %v10768, %v10772
    %v10774 = vrot.slane %v10196, 4
    %v10775 = vrot.slane %v10199, 5
    %v10776 = vor.u32 %v10774, %v10775
    %v10777 = vrot.slane %v10776, 4
    %v10778 = vrot.slane %v10208, 5
    %v10779 = vsel %vm399, %v10777, %v10778
    %v10780 = vrot.slane %v10205, 4
    %v10781 = vor.u32 %v10780, %v10778
    %v10782 = vrot.slane %v10781, 4
    %v10784 = vshll.u32 %v10495, 16
    %v10786 = vrot.slane %v10784, 5
    %v10787 = vsel %vm399, %v10782, %v10786
    %v10788 = vrot.slane %v10218, 4
    %v10789 = vrot.slane %v10221, 5
    %v10790 = vor.u32 %v10788, %v10789
    %v10791 = vrot.slane %v10790, 4
    %v10792 = vrot.slane %v10230, 5
    %v10793 = vsel %vm399, %v10791, %v10792
    %v10794 = vrot.slane %v10227, 4
    %v10795 = vor.u32 %v10794, %v10792
    %v10796 = vrot.slane %v10795, 4
    %v10798 = vshll.u32 %v10496, 16
    %v10800 = vrot.slane %v10798, 5
    %v10801 = vsel %vm399, %v10796, %v10800
    %v10802 = vrot.slane %v10240, 4
    %v10803 = vrot.slane %v10243, 5
    %v10804 = vor.u32 %v10802, %v10803
    %v10805 = vrot.slane %v10804, 4
    %v10806 = vrot.slane %v10252, 5
    %v10807 = vsel %vm399, %v10805, %v10806
    %v10808 = vrot.slane %v10249, 4
    %v10809 = vor.u32 %v10808, %v10806
    %v10810 = vrot.slane %v10809, 4
    %v10812 = vshll.u32 %v10497, 16
    %v10814 = vrot.slane %v10812, 5
    %v10815 = vsel %vm399, %v10810, %v10814
    %v10816 = vrot.slane %v10262, 4
    %v10817 = vrot.slane %v10265, 5
    %v10818 = vor.u32 %v10816, %v10817
    %v10819 = vrot.slane %v10818, 4
    %v10820 = vrot.slane %v10274, 5
    %v10821 = vsel %vm399, %v10819, %v10820
    %v10822 = vrot.slane %v10271, 4
    %v10823 = vor.u32 %v10822, %v10820
    %v10824 = vrot.slane %v10823, 4
    %v10826 = vshll.u32 %v10498, 16
    %v10828 = vrot.slane %v10826, 5
    %v10829 = vsel %vm399, %v10824, %v10828
    %v10830 = vrot.slane %v10284, 4
    %v10831 = vrot.slane %v10287, 5
    %v10832 = vor.u32 %v10830, %v10831
    %v10833 = vrot.slane %v10832, 4
    %v10834 = vrot.slane %v10296, 5
    %v10835 = vsel %vm399, %v10833, %v10834
    %v10836 = vrot.slane %v10293, 4
    %v10837 = vor.u32 %v10836, %v10834
    %v10838 = vrot.slane %v10837, 4
    %v10840 = vshll.u32 %v10499, 16
    %v10842 = vrot.slane %v10840, 5
    %v10843 = vsel %vm399, %v10838, %v10842
    %v10844 = vrot.slane %v10306, 4
    %v10845 = vrot.slane %v10309, 5
    %v10846 = vor.u32 %v10844, %v10845
    %v10847 = vrot.slane %v10846, 4
    %v10848 = vrot.slane %v10318, 5
    %v10849 = vsel %vm399, %v10847, %v10848
    %v10850 = vrot.slane %v10315, 4
    %v10851 = vor.u32 %v10850, %v10848
    %v10852 = vrot.slane %v10851, 4
    %v10854 = vshll.u32 %v10500, 16
    %v10856 = vrot.slane %v10854, 5
    %v10857 = vsel %vm399, %v10852, %v10856
    %v10858 = vrot.slane %v10328, 4
    %v10859 = vrot.slane %v10331, 5
    %v10860 = vor.u32 %v10858, %v10859
    %v10861 = vrot.slane %v10860, 4
    %v10862 = vrot.slane %v10340, 5
    %v10863 = vsel %vm399, %v10861, %v10862
    %v10864 = vrot.slane %v10337, 4
    %v10865 = vor.u32 %v10864, %v10862
    %v10866 = vrot.slane %v10865, 4
    %v10868 = vshll.u32 %v10501, 16
    %v10870 = vrot.slane %v10868, 5
    %v10871 = vsel %vm399, %v10866, %v10870
    %v10872 = vrot.slane %v10350, 4
    %v10873 = vrot.slane %v10353, 5
    %v10874 = vor.u32 %v10872, %v10873
    %v10875 = vrot.slane %v10874, 4
    %v10876 = vrot.slane %v10362, 5
    %v10877 = vsel %vm399, %v10875, %v10876
    %v10878 = vrot.slane %v10359, 4
    %v10879 = vor.u32 %v10878, %v10876
    %v10880 = vrot.slane %v10879, 4
    %v10882 = vshll.u32 %v10502, 16
    %v10884 = vrot.slane %v10882, 5
    %v10885 = vsel %vm399, %v10880, %v10884
    %v10886 = vrot.slane %v10372, 4
    %v10887 = vrot.slane %v10375, 5
    %v10888 = vor.u32 %v10886, %v10887
    %v10889 = vrot.slane %v10888, 4
    %v10890 = vrot.slane %v10384, 5
    %v10891 = vsel %vm399, %v10889, %v10890
    %v10892 = vrot.slane %v10381, 4
    %v10893 = vor.u32 %v10892, %v10890
    %v10894 = vrot.slane %v10893, 4
    %v10896 = vshll.u32 %v10503, 16
    %v10898 = vrot.slane %v10896, 5
    %v10899 = vsel %vm399, %v10894, %v10898
    %v10900 = vrot.slane %v10394, 4
    %v10901 = vrot.slane %v10397, 5
    %v10902 = vor.u32 %v10900, %v10901
    %v10903 = vrot.slane %v10902, 4
    %v10904 = vrot.slane %v10406, 5
    %v10905 = vsel %vm399, %v10903, %v10904
    %v10906 = vrot.slane %v10403, 4
    %v10907 = vor.u32 %v10906, %v10904
    %v10908 = vrot.slane %v10907, 4
    %v10910 = vshll.u32 %v10504, 16
    %v10912 = vrot.slane %v10910, 5
    %v10913 = vsel %vm399, %v10908, %v10912
    %v10914 = vrot.slane %v10416, 4
    %v10915 = vrot.slane %v10419, 5
    %v10916 = vor.u32 %v10914, %v10915
    %v10917 = vrot.slane %v10916, 4
    %v10918 = vrot.slane %v10428, 5
    %v10919 = vsel %vm399, %v10917, %v10918
    %v10920 = vrot.slane %v10425, 4
    %v10921 = vor.u32 %v10920, %v10918
    %v10922 = vrot.slane %v10921, 4
    %v10924 = vshll.u32 %v10505, 16
    %v10926 = vrot.slane %v10924, 5
    %v10927 = vsel %vm399, %v10922, %v10926
    %v10928 = vrot.slane %v10438, 4
    %v10929 = vrot.slane %v10441, 5
    %v10930 = vor.u32 %v10928, %v10929
    %v10931 = vrot.slane %v10930, 4
    %v10932 = vrot.slane %v10450, 5
    %v10933 = vsel %vm399, %v10931, %v10932
    %v10934 = vrot.slane %v10447, 4
    %v10935 = vor.u32 %v10934, %v10932
    %v10936 = vrot.slane %v10935, 4
    %v10938 = vshll.u32 %v10506, 16
    %v10940 = vrot.slane %v10938, 5
    %v10941 = vsel %vm399, %v10936, %v10940
    %v10942 = vrot.slane %v10460, 4
    %v10943 = vrot.slane %v10463, 5
    %v10944 = vor.u32 %v10942, %v10943
    %v10945 = vrot.slane %v10944, 4
    %v10946 = vrot.slane %v10472, 5
    %v10947 = vsel %vm399, %v10945, %v10946
    %v10948 = vrot.slane %v10469, 4
    %v10949 = vor.u32 %v10948, %v10946
    %v10950 = vrot.slane %v10949, 4
    %v10952 = vshll.u32 %v10507, 16
    %v10954 = vrot.slane %v10952, 5
    %v10955 = vsel %vm399, %v10950, %v10954
    %v10956 = vunpack.c.l.b16 %v9784
    %v10957 = vunpack.c.l.b16 %v9793
    %v10958 = vunpack.c.l.b16 %v9806
    %v10959 = vunpack.c.l.b16 %v9815
    %v10960 = vunpack.c.l.b16 %v9828
    %v10961 = vunpack.c.l.b16 %v9837
    %v10962 = vunpack.c.l.b16 %v9850
    %v10963 = vunpack.c.l.b16 %v9859
    %v10964 = vunpack.c.l.b16 %v9872
    %v10965 = vunpack.c.l.b16 %v9881
    %v10966 = vunpack.c.l.b16 %v9894
    %v10967 = vunpack.c.l.b16 %v9903
    %v10968 = vunpack.c.l.b16 %v9916
    %v10969 = vunpack.c.l.b16 %v9925
    %v10970 = vunpack.c.l.b16 %v9938
    %v10971 = vunpack.c.l.b16 %v9947
    %v10972 = vunpack.c.l.b16 %v9960
    %v10973 = vunpack.c.l.b16 %v9969
    %v10974 = vunpack.c.l.b16 %v9982
    %v10975 = vunpack.c.l.b16 %v9991
    %v10976 = vunpack.c.l.b16 %v10004
    %v10977 = vunpack.c.l.b16 %v10013
    %v10978 = vunpack.c.l.b16 %v10026
    %v10979 = vunpack.c.l.b16 %v10035
    %v10980 = vunpack.c.l.b16 %v10048
    %v10981 = vunpack.c.l.b16 %v10057
    %v10982 = vunpack.c.l.b16 %v10070
    %v10983 = vunpack.c.l.b16 %v10079
    %v10984 = vunpack.c.l.b16 %v10092
    %v10985 = vunpack.c.l.b16 %v10101
    %v10986 = vunpack.c.l.b16 %v10114
    %v10987 = vunpack.c.l.b16 %v10123
    %v10988 = vunpack.c.l.b16 %v10136
    %v10989 = vunpack.c.l.b16 %v10145
    %v10990 = vunpack.c.l.b16 %v10158
    %v10991 = vunpack.c.l.b16 %v10167
    %v10992 = vunpack.c.l.b16 %v10180
    %v10993 = vunpack.c.l.b16 %v10189
    %v10994 = vunpack.c.l.b16 %v10202
    %v10995 = vunpack.c.l.b16 %v10211
    %v10996 = vunpack.c.l.b16 %v10224
    %v10997 = vunpack.c.l.b16 %v10233
    %v10998 = vunpack.c.l.b16 %v10246
    %v10999 = vunpack.c.l.b16 %v10255
    %v11000 = vunpack.c.l.b16 %v10268
    %v11001 = vunpack.c.l.b16 %v10277
    %v11002 = vunpack.c.l.b16 %v10290
    %v11003 = vunpack.c.l.b16 %v10299
    %v11004 = vunpack.c.l.b16 %v10312
    %v11005 = vunpack.c.l.b16 %v10321
    %v11006 = vunpack.c.l.b16 %v10334
    %v11007 = vunpack.c.l.b16 %v10343
    %v11008 = vunpack.c.l.b16 %v10356
    %v11009 = vunpack.c.l.b16 %v10365
    %v11010 = vunpack.c.l.b16 %v10378
    %v11011 = vunpack.c.l.b16 %v10387
    %v11012 = vunpack.c.l.b16 %v10400
    %v11013 = vunpack.c.l.b16 %v10409
    %v11014 = vunpack.c.l.b16 %v10422
    %v11015 = vunpack.c.l.b16 %v10431
    %v11016 = vunpack.c.l.b16 %v10444
    %v11017 = vunpack.c.l.b16 %v10453
    %v11018 = vunpack.c.l.b16 %v10466
    %v11019 = vunpack.c.l.b16 %v10475
    %v11020 = vpack.c.b16 %v10957, %v10956
    %v11021 = vpack.c.b16 %v10959, %v10958
    %v11022 = vpack.c.b16 %v10961, %v10960
    %v11023 = vpack.c.b16 %v10963, %v10962
    %v11024 = vpack.c.b16 %v10965, %v10964
    %v11025 = vpack.c.b16 %v10967, %v10966
    %v11026 = vpack.c.b16 %v10969, %v10968
    %v11027 = vpack.c.b16 %v10971, %v10970
    %v11028 = vpack.c.b16 %v10973, %v10972
    %v11029 = vpack.c.b16 %v10975, %v10974
    %v11030 = vpack.c.b16 %v10977, %v10976
    %v11031 = vpack.c.b16 %v10979, %v10978
    %v11032 = vpack.c.b16 %v10981, %v10980
    %v11033 = vpack.c.b16 %v10983, %v10982
    %v11034 = vpack.c.b16 %v10985, %v10984
    %v11035 = vpack.c.b16 %v10987, %v10986
    %v11036 = vpack.c.b16 %v10989, %v10988
    %v11037 = vpack.c.b16 %v10991, %v10990
    %v11038 = vpack.c.b16 %v10993, %v10992
    %v11039 = vpack.c.b16 %v10995, %v10994
    %v11040 = vpack.c.b16 %v10997, %v10996
    %v11041 = vpack.c.b16 %v10999, %v10998
    %v11042 = vpack.c.b16 %v11001, %v11000
    %v11043 = vpack.c.b16 %v11003, %v11002
    %v11044 = vpack.c.b16 %v11005, %v11004
    %v11045 = vpack.c.b16 %v11007, %v11006
    %v11046 = vpack.c.b16 %v11009, %v11008
    %v11047 = vpack.c.b16 %v11011, %v11010
    %v11048 = vpack.c.b16 %v11013, %v11012
    %v11049 = vpack.c.b16 %v11015, %v11014
    %v11050 = vpack.c.b16 %v11017, %v11016
    %v11051 = vpack.c.b16 %v11019, %v11018
    %v11148 = vunpack.c.l.b16 %v9677
    %v11149 = vunpack.c.l.b16 %v9678
    %v11150 = vunpack.c.l.b16 %v9680
    %v11151 = vunpack.c.l.b16 %v9681
    %v11152 = vunpack.c.l.b16 %v9683
    %v11153 = vunpack.c.l.b16 %v9684
    %v11154 = vunpack.c.l.b16 %v9686
    %v11155 = vunpack.c.l.b16 %v9687
    %v11156 = vunpack.c.l.b16 %v9689
    %v11157 = vunpack.c.l.b16 %v9690
    %v11158 = vunpack.c.l.b16 %v9692
    %v11159 = vunpack.c.l.b16 %v9693
    %v11160 = vunpack.c.l.b16 %v9695
    %v11161 = vunpack.c.l.b16 %v9696
    %v11162 = vunpack.c.l.b16 %v9698
    %v11163 = vunpack.c.l.b16 %v9699
    %v11164 = vunpack.c.l.b16 %v9701
    %v11165 = vunpack.c.l.b16 %v9702
    %v11166 = vunpack.c.l.b16 %v9704
    %v11167 = vunpack.c.l.b16 %v9705
    %v11168 = vunpack.c.l.b16 %v9707
    %v11169 = vunpack.c.l.b16 %v9708
    %v11170 = vunpack.c.l.b16 %v9710
    %v11171 = vunpack.c.l.b16 %v9711
    %v11172 = vunpack.c.l.b16 %v9713
    %v11173 = vunpack.c.l.b16 %v9714
    %v11174 = vunpack.c.l.b16 %v9716
    %v11175 = vunpack.c.l.b16 %v9717
    %v11176 = vunpack.c.l.b16 %v9719
    %v11177 = vunpack.c.l.b16 %v9720
    %v11178 = vunpack.c.l.b16 %v9722
    %v11179 = vunpack.c.l.b16 %v9723
    %v11180 = vunpack.c.l.b16 %v9725
    %v11181 = vunpack.c.l.b16 %v9726
    %v11182 = vunpack.c.l.b16 %v9728
    %v11183 = vunpack.c.l.b16 %v9729
    %v11184 = vunpack.c.l.b16 %v9731
    %v11185 = vunpack.c.l.b16 %v9732
    %v11186 = vunpack.c.l.b16 %v9734
    %v11187 = vunpack.c.l.b16 %v9735
    %v11188 = vunpack.c.l.b16 %v9737
    %v11189 = vunpack.c.l.b16 %v9738
    %v11190 = vunpack.c.l.b16 %v9740
    %v11191 = vunpack.c.l.b16 %v9741
    %v11192 = vunpack.c.l.b16 %v9743
    %v11193 = vunpack.c.l.b16 %v9744
    %v11194 = vunpack.c.l.b16 %v9746
    %v11195 = vunpack.c.l.b16 %v9747
    %v11196 = vunpack.c.l.b16 %v9749
    %v11197 = vunpack.c.l.b16 %v9750
    %v11198 = vunpack.c.l.b16 %v9752
    %v11199 = vunpack.c.l.b16 %v9753
    %v11200 = vunpack.c.l.b16 %v9755
    %v11201 = vunpack.c.l.b16 %v9756
    %v11202 = vunpack.c.l.b16 %v9758
    %v11203 = vunpack.c.l.b16 %v9759
    %v11204 = vunpack.c.l.b16 %v9761
    %v11205 = vunpack.c.l.b16 %v9762
    %v11206 = vunpack.c.l.b16 %v9764
    %v11207 = vunpack.c.l.b16 %v9765
    %v11208 = vunpack.c.l.b16 %v9767
    %v11209 = vunpack.c.l.b16 %v9768
    %v11210 = vunpack.c.l.b16 %v9770
    %v11211 = vunpack.c.l.b16 %v9771
    %v11212 = vpack.c.b16 %v11149, %v11148
    %v11213 = vpack.c.b16 %v11151, %v11150
    %v11214 = vpack.c.b16 %v11153, %v11152
    %v11215 = vpack.c.b16 %v11155, %v11154
    %v11216 = vpack.c.b16 %v11157, %v11156
    %v11217 = vpack.c.b16 %v11159, %v11158
    %v11218 = vpack.c.b16 %v11161, %v11160
    %v11219 = vpack.c.b16 %v11163, %v11162
    %v11220 = vpack.c.b16 %v11165, %v11164
    %v11221 = vpack.c.b16 %v11167, %v11166
    %v11222 = vpack.c.b16 %v11169, %v11168
    %v11223 = vpack.c.b16 %v11171, %v11170
    %v11224 = vpack.c.b16 %v11173, %v11172
    %v11225 = vpack.c.b16 %v11175, %v11174
    %v11226 = vpack.c.b16 %v11177, %v11176
    %v11227 = vpack.c.b16 %v11179, %v11178
    %v11228 = vpack.c.b16 %v11181, %v11180
    %v11229 = vpack.c.b16 %v11183, %v11182
    %v11230 = vpack.c.b16 %v11185, %v11184
    %v11231 = vpack.c.b16 %v11187, %v11186
    %v11232 = vpack.c.b16 %v11189, %v11188
    %v11233 = vpack.c.b16 %v11191, %v11190
    %v11234 = vpack.c.b16 %v11193, %v11192
    %v11235 = vpack.c.b16 %v11195, %v11194
    %v11236 = vpack.c.b16 %v11197, %v11196
    %v11237 = vpack.c.b16 %v11199, %v11198
    %v11238 = vpack.c.b16 %v11201, %v11200
    %v11239 = vpack.c.b16 %v11203, %v11202
    %v11240 = vpack.c.b16 %v11205, %v11204
    %v11241 = vpack.c.b16 %v11207, %v11206
    %v11242 = vpack.c.b16 %v11209, %v11208
    %v11243 = vpack.c.b16 %v11211, %v11210
    %v11276 = vunpack.c.l.b16 %v10513
    %v11277 = vunpack.c.l.b16 %v10521
    %v11278 = vunpack.c.l.b16 %v10527
    %v11279 = vunpack.c.l.b16 %v10535
    %v11280 = vunpack.c.l.b16 %v10541
    %v11281 = vunpack.c.l.b16 %v10549
    %v11282 = vunpack.c.l.b16 %v10555
    %v11283 = vunpack.c.l.b16 %v10563
    %v11284 = vunpack.c.l.b16 %v10569
    %v11285 = vunpack.c.l.b16 %v10577
    %v11286 = vunpack.c.l.b16 %v10583
    %v11287 = vunpack.c.l.b16 %v10591
    %v11288 = vunpack.c.l.b16 %v10597
    %v11289 = vunpack.c.l.b16 %v10605
    %v11290 = vunpack.c.l.b16 %v10611
    %v11291 = vunpack.c.l.b16 %v10619
    %v11292 = vunpack.c.l.b16 %v10625
    %v11293 = vunpack.c.l.b16 %v10633
    %v11294 = vunpack.c.l.b16 %v10639
    %v11295 = vunpack.c.l.b16 %v10647
    %v11296 = vunpack.c.l.b16 %v10653
    %v11297 = vunpack.c.l.b16 %v10661
    %v11298 = vunpack.c.l.b16 %v10667
    %v11299 = vunpack.c.l.b16 %v10675
    %v11300 = vunpack.c.l.b16 %v10681
    %v11301 = vunpack.c.l.b16 %v10689
    %v11302 = vunpack.c.l.b16 %v10695
    %v11303 = vunpack.c.l.b16 %v10703
    %v11304 = vunpack.c.l.b16 %v10709
    %v11305 = vunpack.c.l.b16 %v10717
    %v11306 = vunpack.c.l.b16 %v10723
    %v11307 = vunpack.c.l.b16 %v10731
    %v11308 = vunpack.c.l.b16 %v10737
    %v11309 = vunpack.c.l.b16 %v10745
    %v11310 = vunpack.c.l.b16 %v10751
    %v11311 = vunpack.c.l.b16 %v10759
    %v11312 = vunpack.c.l.b16 %v10765
    %v11313 = vunpack.c.l.b16 %v10773
    %v11314 = vunpack.c.l.b16 %v10779
    %v11315 = vunpack.c.l.b16 %v10787
    %v11316 = vunpack.c.l.b16 %v10793
    %v11317 = vunpack.c.l.b16 %v10801
    %v11318 = vunpack.c.l.b16 %v10807
    %v11319 = vunpack.c.l.b16 %v10815
    %v11320 = vunpack.c.l.b16 %v10821
    %v11321 = vunpack.c.l.b16 %v10829
    %v11322 = vunpack.c.l.b16 %v10835
    %v11323 = vunpack.c.l.b16 %v10843
    %v11324 = vunpack.c.l.b16 %v10849
    %v11325 = vunpack.c.l.b16 %v10857
    %v11326 = vunpack.c.l.b16 %v10863
    %v11327 = vunpack.c.l.b16 %v10871
    %v11328 = vunpack.c.l.b16 %v10877
    %v11329 = vunpack.c.l.b16 %v10885
    %v11330 = vunpack.c.l.b16 %v10891
    %v11331 = vunpack.c.l.b16 %v10899
    %v11332 = vunpack.c.l.b16 %v10905
    %v11333 = vunpack.c.l.b16 %v10913
    %v11334 = vunpack.c.l.b16 %v10919
    %v11335 = vunpack.c.l.b16 %v10927
    %v11336 = vunpack.c.l.b16 %v10933
    %v11337 = vunpack.c.l.b16 %v10941
    %v11338 = vunpack.c.l.b16 %v10947
    %v11339 = vunpack.c.l.b16 %v10955
    %v11340 = vpack.c.b16 %v11277, %v11276
    %v11341 = vpack.c.b16 %v11279, %v11278
    %v11342 = vpack.c.b16 %v11281, %v11280
    %v11343 = vpack.c.b16 %v11283, %v11282
    %v11344 = vpack.c.b16 %v11285, %v11284
    %v11345 = vpack.c.b16 %v11287, %v11286
    %v11346 = vpack.c.b16 %v11289, %v11288
    %v11347 = vpack.c.b16 %v11291, %v11290
    %v11348 = vpack.c.b16 %v11293, %v11292
    %v11349 = vpack.c.b16 %v11295, %v11294
    %v11350 = vpack.c.b16 %v11297, %v11296
    %v11351 = vpack.c.b16 %v11299, %v11298
    %v11352 = vpack.c.b16 %v11301, %v11300
    %v11353 = vpack.c.b16 %v11303, %v11302
    %v11354 = vpack.c.b16 %v11305, %v11304
    %v11355 = vpack.c.b16 %v11307, %v11306
    %v11356 = vpack.c.b16 %v11309, %v11308
    %v11357 = vpack.c.b16 %v11311, %v11310
    %v11358 = vpack.c.b16 %v11313, %v11312
    %v11359 = vpack.c.b16 %v11315, %v11314
    %v11360 = vpack.c.b16 %v11317, %v11316
    %v11361 = vpack.c.b16 %v11319, %v11318
    %v11362 = vpack.c.b16 %v11321, %v11320
    %v11363 = vpack.c.b16 %v11323, %v11322
    %v11364 = vpack.c.b16 %v11325, %v11324
    %v11365 = vpack.c.b16 %v11327, %v11326
    %v11366 = vpack.c.b16 %v11329, %v11328
    %v11367 = vpack.c.b16 %v11331, %v11330
    %v11368 = vpack.c.b16 %v11333, %v11332
    %v11369 = vpack.c.b16 %v11335, %v11334
    %v11370 = vpack.c.b16 %v11337, %v11336
    %v11371 = vpack.c.b16 %v11339, %v11338
    %v11452 = vunpack.c.l.b16 %v4866
    %v11453 = vunpack.c.l.b16 %v4867
    %v11454 = vunpack.c.l.b16 %v4868
    %v11455 = vunpack.c.l.b16 %v4869
    %v11456 = vunpack.c.l.b16 %v4870
    %v11457 = vunpack.c.l.b16 %v4871
    %v11458 = vunpack.c.l.b16 %v4872
    %v11459 = vunpack.c.l.b16 %v4873
    %v11460 = vunpack.c.l.b16 %v4874
    %v11461 = vunpack.c.l.b16 %v4875
    %v11462 = vunpack.c.l.b16 %v4876
    %v11463 = vunpack.c.l.b16 %v4877
    %v11464 = vunpack.c.l.b16 %v4878
    %v11465 = vunpack.c.l.b16 %v4879
    %v11466 = vunpack.c.l.b16 %v4880
    %v11467 = vunpack.c.l.b16 %v4881
    %v11468 = vunpack.c.l.b16 %v4882
    %v11469 = vunpack.c.l.b16 %v4883
    %v11470 = vunpack.c.l.b16 %v4884
    %v11471 = vunpack.c.l.b16 %v4885
    %v11472 = vunpack.c.l.b16 %v4886
    %v11473 = vunpack.c.l.b16 %v4887
    %v11474 = vunpack.c.l.b16 %v4888
    %v11475 = vunpack.c.l.b16 %v4889
    %v11476 = vunpack.c.l.b16 %v4890
    %v11477 = vunpack.c.l.b16 %v4891
    %v11478 = vunpack.c.l.b16 %v4892
    %v11479 = vunpack.c.l.b16 %v4893
    %v11480 = vunpack.c.l.b16 %v4894
    %v11481 = vunpack.c.l.b16 %v4895
    %v11482 = vunpack.c.l.b16 %v4896
    %v11483 = vunpack.c.l.b16 %v4897
    %v11484 = vunpack.c.l.b16 %v4898
    %v11485 = vunpack.c.l.b16 %v4899
    %v11486 = vunpack.c.l.b16 %v4900
    %v11487 = vunpack.c.l.b16 %v4901
    %v11488 = vunpack.c.l.b16 %v4902
    %v11489 = vunpack.c.l.b16 %v4903
    %v11490 = vunpack.c.l.b16 %v4904
    %v11491 = vunpack.c.l.b16 %v4905
    %v11492 = vunpack.c.l.b16 %v4906
    %v11493 = vunpack.c.l.b16 %v4907
    %v11494 = vunpack.c.l.b16 %v4908
    %v11495 = vunpack.c.l.b16 %v4909
    %v11496 = vunpack.c.l.b16 %v4910
    %v11497 = vunpack.c.l.b16 %v4911
    %v11498 = vunpack.c.l.b16 %v4912
    %v11499 = vunpack.c.l.b16 %v4913
    %v11500 = vpack.c.b16 %v11453, %v11452
    %v11501 = vpack.c.b16 %v11455, %v11454
    %v11502 = vpack.c.b16 %v11457, %v11456
    %v11503 = vpack.c.b16 %v11459, %v11458
    %v11504 = vpack.c.b16 %v11461, %v11460
    %v11505 = vpack.c.b16 %v11463, %v11462
    %v11506 = vpack.c.b16 %v11465, %v11464
    %v11507 = vpack.c.b16 %v11467, %v11466
    %v11508 = vpack.c.b16 %v11469, %v11468
    %v11509 = vpack.c.b16 %v11471, %v11470
    %v11510 = vpack.c.b16 %v11473, %v11472
    %v11511 = vpack.c.b16 %v11475, %v11474
    %v11512 = vpack.c.b16 %v11477, %v11476
    %v11513 = vpack.c.b16 %v11479, %v11478
    %v11514 = vpack.c.b16 %v11481, %v11480
    %v11515 = vpack.c.b16 %v11483, %v11482
    %v11516 = vpack.c.b16 %v11485, %v11484
    %v11517 = vpack.c.b16 %v11487, %v11486
    %v11518 = vpack.c.b16 %v11489, %v11488
    %v11519 = vpack.c.b16 %v11491, %v11490
    %v11520 = vpack.c.b16 %v11493, %v11492
    %v11521 = vpack.c.b16 %v11495, %v11494
    %v11522 = vpack.c.b16 %v11497, %v11496
    %v11523 = vpack.c.b16 %v11499, %v11498
    %11548 = vmatpush.bf16.msra.mxu0 %v11507
    %11549 = vmatpush.bf16.msra.mxu0 %v11506
    %11550 = vmatpush.bf16.msra.mxu0 %v11505
    %11551 = vmatpush.bf16.msra.mxu0 %v11504
    %11552 = vmatpush.bf16.msra.mxu0 %v11503
    %11553 = vmatpush.bf16.msra.mxu0 %v11502
    %11554 = vmatpush.bf16.msra.mxu0 %v11501
    %11555 = vmatpush.bf16.msra.mxu0 %v11500
    %11556 = vmatmul.bf16.gmra.mxu0 %v11020
    %v11557 = vpop.f32.mrf.mxu0
    %v11558 = vadd.f32 0.0, %v11557
    %v11559 = vpop.f32.mrf.mxu0
    %v11560 = vadd.f32 0.0, %v11559
    %11561 = vmatmul.bf16.gmra.mxu0 %v11021
    %v11562 = vpop.f32.mrf.mxu0
    %v11563 = vadd.f32 0.0, %v11562
    %v11564 = vpop.f32.mrf.mxu0
    %v11565 = vadd.f32 0.0, %v11564
    %11566 = vmatmul.bf16.gmra.mxu0 %v11022
    %v11567 = vpop.f32.mrf.mxu0
    %v11568 = vadd.f32 0.0, %v11567
    %v11569 = vpop.f32.mrf.mxu0
    %v11570 = vadd.f32 0.0, %v11569
    %11571 = vmatmul.bf16.gmra.mxu0 %v11023
    %v11572 = vpop.f32.mrf.mxu0
    %v11573 = vadd.f32 0.0, %v11572
    %v11574 = vpop.f32.mrf.mxu0
    %v11575 = vadd.f32 0.0, %v11574
    %11576 = vmatmul.bf16.gmra.mxu0 %v11024
    %v11577 = vpop.f32.mrf.mxu0
    %v11578 = vadd.f32 0.0, %v11577
    %v11579 = vpop.f32.mrf.mxu0
    %v11580 = vadd.f32 0.0, %v11579
    %11581 = vmatmul.bf16.gmra.mxu0 %v11025
    %v11582 = vpop.f32.mrf.mxu0
    %v11583 = vadd.f32 0.0, %v11582
    %v11584 = vpop.f32.mrf.mxu0
    %v11585 = vadd.f32 0.0, %v11584
    %11586 = vmatmul.bf16.gmra.mxu0 %v11026
    %v11587 = vpop.f32.mrf.mxu0
    %v11588 = vadd.f32 0.0, %v11587
    %v11589 = vpop.f32.mrf.mxu0
    %v11590 = vadd.f32 0.0, %v11589
    %11591 = vmatmul.bf16.gmra.mxu0 %v11027
    %v11592 = vpop.f32.mrf.mxu0
    %v11593 = vadd.f32 0.0, %v11592
    %v11594 = vpop.f32.mrf.mxu0
    %v11595 = vadd.f32 0.0, %v11594
    %11596 = vmatmul.bf16.gmra.mxu0 %v11028
    %v11597 = vpop.f32.mrf.mxu0
    %v11598 = vadd.f32 0.0, %v11597
    %v11599 = vpop.f32.mrf.mxu0
    %v11600 = vadd.f32 0.0, %v11599
    %11601 = vmatmul.bf16.gmra.mxu0 %v11029
    %v11602 = vpop.f32.mrf.mxu0
    %v11603 = vadd.f32 0.0, %v11602
    %v11604 = vpop.f32.mrf.mxu0
    %v11605 = vadd.f32 0.0, %v11604
    %11606 = vmatmul.bf16.gmra.mxu0 %v11030
    %v11607 = vpop.f32.mrf.mxu0
    %v11608 = vadd.f32 0.0, %v11607
    %v11609 = vpop.f32.mrf.mxu0
    %v11610 = vadd.f32 0.0, %v11609
    %11611 = vmatmul.bf16.gmra.mxu0 %v11031
    %v11612 = vpop.f32.mrf.mxu0
    %v11613 = vadd.f32 0.0, %v11612
    %v11614 = vpop.f32.mrf.mxu0
    %v11615 = vadd.f32 0.0, %v11614
    %11616 = vmatmul.bf16.gmra.mxu0 %v11032
    %v11617 = vpop.f32.mrf.mxu0
    %v11618 = vadd.f32 0.0, %v11617
    %v11619 = vpop.f32.mrf.mxu0
    %v11620 = vadd.f32 0.0, %v11619
    %11621 = vmatmul.bf16.gmra.mxu0 %v11033
    %v11622 = vpop.f32.mrf.mxu0
    %v11623 = vadd.f32 0.0, %v11622
    %v11624 = vpop.f32.mrf.mxu0
    %v11625 = vadd.f32 0.0, %v11624
    %11626 = vmatmul.bf16.gmra.mxu0 %v11034
    %v11627 = vpop.f32.mrf.mxu0
    %v11628 = vadd.f32 0.0, %v11627
    %v11629 = vpop.f32.mrf.mxu0
    %v11630 = vadd.f32 0.0, %v11629
    %11631 = vmatmul.bf16.gmra.mxu0 %v11035
    %v11632 = vpop.f32.mrf.mxu0
    %v11633 = vadd.f32 0.0, %v11632
    %v11634 = vpop.f32.mrf.mxu0
    %v11635 = vadd.f32 0.0, %v11634
    %11636 = vmatmul.bf16.gmra.mxu0 %v11036
    %v11637 = vpop.f32.mrf.mxu0
    %v11638 = vadd.f32 0.0, %v11637
    %v11639 = vpop.f32.mrf.mxu0
    %v11640 = vadd.f32 0.0, %v11639
    %11641 = vmatmul.bf16.gmra.mxu0 %v11037
    %v11642 = vpop.f32.mrf.mxu0
    %v11643 = vadd.f32 0.0, %v11642
    %v11644 = vpop.f32.mrf.mxu0
    %v11645 = vadd.f32 0.0, %v11644
    %11646 = vmatmul.bf16.gmra.mxu0 %v11038
    %v11647 = vpop.f32.mrf.mxu0
    %v11648 = vadd.f32 0.0, %v11647
    %v11649 = vpop.f32.mrf.mxu0
    %v11650 = vadd.f32 0.0, %v11649
    %11651 = vmatmul.bf16.gmra.mxu0 %v11039
    %v11652 = vpop.f32.mrf.mxu0
    %v11653 = vadd.f32 0.0, %v11652
    %v11654 = vpop.f32.mrf.mxu0
    %v11655 = vadd.f32 0.0, %v11654
    %11656 = vmatmul.bf16.gmra.mxu0 %v11040
    %v11657 = vpop.f32.mrf.mxu0
    %v11658 = vadd.f32 0.0, %v11657
    %v11659 = vpop.f32.mrf.mxu0
    %v11660 = vadd.f32 0.0, %v11659
    %11661 = vmatmul.bf16.gmra.mxu0 %v11041
    %v11662 = vpop.f32.mrf.mxu0
    %v11663 = vadd.f32 0.0, %v11662
    %v11664 = vpop.f32.mrf.mxu0
    %v11665 = vadd.f32 0.0, %v11664
    %11666 = vmatmul.bf16.gmra.mxu0 %v11042
    %v11667 = vpop.f32.mrf.mxu0
    %v11668 = vadd.f32 0.0, %v11667
    %v11669 = vpop.f32.mrf.mxu0
    %v11670 = vadd.f32 0.0, %v11669
    %11671 = vmatmul.bf16.gmra.mxu0 %v11043
    %v11672 = vpop.f32.mrf.mxu0
    %v11673 = vadd.f32 0.0, %v11672
    %v11674 = vpop.f32.mrf.mxu0
    %v11675 = vadd.f32 0.0, %v11674
    %11676 = vmatmul.bf16.gmra.mxu0 %v11044
    %v11677 = vpop.f32.mrf.mxu0
    %v11678 = vadd.f32 0.0, %v11677
    %v11679 = vpop.f32.mrf.mxu0
    %v11680 = vadd.f32 0.0, %v11679
    %11681 = vmatmul.bf16.gmra.mxu0 %v11045
    %v11682 = vpop.f32.mrf.mxu0
    %v11683 = vadd.f32 0.0, %v11682
    %v11684 = vpop.f32.mrf.mxu0
    %v11685 = vadd.f32 0.0, %v11684
    %11686 = vmatmul.bf16.gmra.mxu0 %v11046
    %v11687 = vpop.f32.mrf.mxu0
    %v11688 = vadd.f32 0.0, %v11687
    %v11689 = vpop.f32.mrf.mxu0
    %v11690 = vadd.f32 0.0, %v11689
    %11691 = vmatmul.bf16.gmra.mxu0 %v11047
    %v11692 = vpop.f32.mrf.mxu0
    %v11693 = vadd.f32 0.0, %v11692
    %v11694 = vpop.f32.mrf.mxu0
    %v11695 = vadd.f32 0.0, %v11694
    %11696 = vmatmul.bf16.gmra.mxu0 %v11048
    %v11697 = vpop.f32.mrf.mxu0
    %v11698 = vadd.f32 0.0, %v11697
    %v11699 = vpop.f32.mrf.mxu0
    %v11700 = vadd.f32 0.0, %v11699
    %11701 = vmatmul.bf16.gmra.mxu0 %v11049
    %v11702 = vpop.f32.mrf.mxu0
    %v11703 = vadd.f32 0.0, %v11702
    %v11704 = vpop.f32.mrf.mxu0
    %v11705 = vadd.f32 0.0, %v11704
    %11706 = vmatmul.bf16.gmra.mxu0 %v11050
    %v11707 = vpop.f32.mrf.mxu0
    %v11708 = vadd.f32 0.0, %v11707
    %v11709 = vpop.f32.mrf.mxu0
    %v11710 = vadd.f32 0.0, %v11709
    %11711 = vmatmul.bf16.gmra.mxu0 %v11051
    %v11712 = vpop.f32.mrf.mxu0
    %v11713 = vadd.f32 0.0, %v11712
    %v11714 = vpop.f32.mrf.mxu0
    %v11715 = vadd.f32 0.0, %v11714
    %11716 = vdwg.mxu0
    %11717 = vmatpush.bf16.msra.mxu0 %v11515
    %11718 = vmatpush.bf16.msra.mxu0 %v11514
    %11719 = vmatpush.bf16.msra.mxu0 %v11513
    %11720 = vmatpush.bf16.msra.mxu0 %v11512
    %11721 = vmatpush.bf16.msra.mxu0 %v11511
    %11722 = vmatpush.bf16.msra.mxu0 %v11510
    %11723 = vmatpush.bf16.msra.mxu0 %v11509
    %11724 = vmatpush.bf16.msra.mxu0 %v11508
    %11725 = vmatmul.bf16.gmra.mxu0 %v11212
    %v11726 = vpop.f32.mrf.mxu0
    %v11727 = vadd.f32 %v11558, %v11726
    %v11728 = vpop.f32.mrf.mxu0
    %v11729 = vadd.f32 %v11560, %v11728
    %11730 = vmatmul.bf16.gmra.mxu0 %v11213
    %v11731 = vpop.f32.mrf.mxu0
    %v11732 = vadd.f32 %v11563, %v11731
    %v11733 = vpop.f32.mrf.mxu0
    %v11734 = vadd.f32 %v11565, %v11733
    %11735 = vmatmul.bf16.gmra.mxu0 %v11214
    %v11736 = vpop.f32.mrf.mxu0
    %v11737 = vadd.f32 %v11568, %v11736
    %v11738 = vpop.f32.mrf.mxu0
    %v11739 = vadd.f32 %v11570, %v11738
    %11740 = vmatmul.bf16.gmra.mxu0 %v11215
    %v11741 = vpop.f32.mrf.mxu0
    %v11742 = vadd.f32 %v11573, %v11741
    %v11743 = vpop.f32.mrf.mxu0
    %v11744 = vadd.f32 %v11575, %v11743
    %11745 = vmatmul.bf16.gmra.mxu0 %v11216
    %v11746 = vpop.f32.mrf.mxu0
    %v11747 = vadd.f32 %v11578, %v11746
    %v11748 = vpop.f32.mrf.mxu0
    %v11749 = vadd.f32 %v11580, %v11748
    %11750 = vmatmul.bf16.gmra.mxu0 %v11217
    %v11751 = vpop.f32.mrf.mxu0
    %v11752 = vadd.f32 %v11583, %v11751
    %v11753 = vpop.f32.mrf.mxu0
    %v11754 = vadd.f32 %v11585, %v11753
    %11755 = vmatmul.bf16.gmra.mxu0 %v11218
    %v11756 = vpop.f32.mrf.mxu0
    %v11757 = vadd.f32 %v11588, %v11756
    %v11758 = vpop.f32.mrf.mxu0
    %v11759 = vadd.f32 %v11590, %v11758
    %11760 = vmatmul.bf16.gmra.mxu0 %v11219
    %v11761 = vpop.f32.mrf.mxu0
    %v11762 = vadd.f32 %v11593, %v11761
    %v11763 = vpop.f32.mrf.mxu0
    %v11764 = vadd.f32 %v11595, %v11763
    %11765 = vmatmul.bf16.gmra.mxu0 %v11220
    %v11766 = vpop.f32.mrf.mxu0
    %v11767 = vadd.f32 %v11598, %v11766
    %v11768 = vpop.f32.mrf.mxu0
    %v11769 = vadd.f32 %v11600, %v11768
    %11770 = vmatmul.bf16.gmra.mxu0 %v11221
    %v11771 = vpop.f32.mrf.mxu0
    %v11772 = vadd.f32 %v11603, %v11771
    %v11773 = vpop.f32.mrf.mxu0
    %v11774 = vadd.f32 %v11605, %v11773
    %11775 = vmatmul.bf16.gmra.mxu0 %v11222
    %v11776 = vpop.f32.mrf.mxu0
    %v11777 = vadd.f32 %v11608, %v11776
    %v11778 = vpop.f32.mrf.mxu0
    %v11779 = vadd.f32 %v11610, %v11778
    %11780 = vmatmul.bf16.gmra.mxu0 %v11223
    %v11781 = vpop.f32.mrf.mxu0
    %v11782 = vadd.f32 %v11613, %v11781
    %v11783 = vpop.f32.mrf.mxu0
    %v11784 = vadd.f32 %v11615, %v11783
    %11785 = vmatmul.bf16.gmra.mxu0 %v11224
    %v11786 = vpop.f32.mrf.mxu0
    %v11787 = vadd.f32 %v11618, %v11786
    %v11788 = vpop.f32.mrf.mxu0
    %v11789 = vadd.f32 %v11620, %v11788
    %11790 = vmatmul.bf16.gmra.mxu0 %v11225
    %v11791 = vpop.f32.mrf.mxu0
    %v11792 = vadd.f32 %v11623, %v11791
    %v11793 = vpop.f32.mrf.mxu0
    %v11794 = vadd.f32 %v11625, %v11793
    %11795 = vmatmul.bf16.gmra.mxu0 %v11226
    %v11796 = vpop.f32.mrf.mxu0
    %v11797 = vadd.f32 %v11628, %v11796
    %v11798 = vpop.f32.mrf.mxu0
    %v11799 = vadd.f32 %v11630, %v11798
    %11800 = vmatmul.bf16.gmra.mxu0 %v11227
    %v11801 = vpop.f32.mrf.mxu0
    %v11802 = vadd.f32 %v11633, %v11801
    %v11803 = vpop.f32.mrf.mxu0
    %v11804 = vadd.f32 %v11635, %v11803
    %11805 = vmatmul.bf16.gmra.mxu0 %v11228
    %v11806 = vpop.f32.mrf.mxu0
    %v11807 = vadd.f32 %v11638, %v11806
    %v11808 = vpop.f32.mrf.mxu0
    %v11809 = vadd.f32 %v11640, %v11808
    %11810 = vmatmul.bf16.gmra.mxu0 %v11229
    %v11811 = vpop.f32.mrf.mxu0
    %v11812 = vadd.f32 %v11643, %v11811
    %v11813 = vpop.f32.mrf.mxu0
    %v11814 = vadd.f32 %v11645, %v11813
    %11815 = vmatmul.bf16.gmra.mxu0 %v11230
    %v11816 = vpop.f32.mrf.mxu0
    %v11817 = vadd.f32 %v11648, %v11816
    %v11818 = vpop.f32.mrf.mxu0
    %v11819 = vadd.f32 %v11650, %v11818
    %11820 = vmatmul.bf16.gmra.mxu0 %v11231
    %v11821 = vpop.f32.mrf.mxu0
    %v11822 = vadd.f32 %v11653, %v11821
    %v11823 = vpop.f32.mrf.mxu0
    %v11824 = vadd.f32 %v11655, %v11823
    %11825 = vmatmul.bf16.gmra.mxu0 %v11232
    %v11826 = vpop.f32.mrf.mxu0
    %v11827 = vadd.f32 %v11658, %v11826
    %v11828 = vpop.f32.mrf.mxu0
    %v11829 = vadd.f32 %v11660, %v11828
    %11830 = vmatmul.bf16.gmra.mxu0 %v11233
    %v11831 = vpop.f32.mrf.mxu0
    %v11832 = vadd.f32 %v11663, %v11831
    %v11833 = vpop.f32.mrf.mxu0
    %v11834 = vadd.f32 %v11665, %v11833
    %11835 = vmatmul.bf16.gmra.mxu0 %v11234
    %v11836 = vpop.f32.mrf.mxu0
    %v11837 = vadd.f32 %v11668, %v11836
    %v11838 = vpop.f32.mrf.mxu0
    %v11839 = vadd.f32 %v11670, %v11838
    %11840 = vmatmul.bf16.gmra.mxu0 %v11235
    %v11841 = vpop.f32.mrf.mxu0
    %v11842 = vadd.f32 %v11673, %v11841
    %v11843 = vpop.f32.mrf.mxu0
    %v11844 = vadd.f32 %v11675, %v11843
    %11845 = vmatmul.bf16.gmra.mxu0 %v11236
    %v11846 = vpop.f32.mrf.mxu0
    %v11847 = vadd.f32 %v11678, %v11846
    %v11848 = vpop.f32.mrf.mxu0
    %v11849 = vadd.f32 %v11680, %v11848
    %11850 = vmatmul.bf16.gmra.mxu0 %v11237
    %v11851 = vpop.f32.mrf.mxu0
    %v11852 = vadd.f32 %v11683, %v11851
    %v11853 = vpop.f32.mrf.mxu0
    %v11854 = vadd.f32 %v11685, %v11853
    %11855 = vmatmul.bf16.gmra.mxu0 %v11238
    %v11856 = vpop.f32.mrf.mxu0
    %v11857 = vadd.f32 %v11688, %v11856
    %v11858 = vpop.f32.mrf.mxu0
    %v11859 = vadd.f32 %v11690, %v11858
    %11860 = vmatmul.bf16.gmra.mxu0 %v11239
    %v11861 = vpop.f32.mrf.mxu0
    %v11862 = vadd.f32 %v11693, %v11861
    %v11863 = vpop.f32.mrf.mxu0
    %v11864 = vadd.f32 %v11695, %v11863
    %11865 = vmatmul.bf16.gmra.mxu0 %v11240
    %v11866 = vpop.f32.mrf.mxu0
    %v11867 = vadd.f32 %v11698, %v11866
    %v11868 = vpop.f32.mrf.mxu0
    %v11869 = vadd.f32 %v11700, %v11868
    %11870 = vmatmul.bf16.gmra.mxu0 %v11241
    %v11871 = vpop.f32.mrf.mxu0
    %v11872 = vadd.f32 %v11703, %v11871
    %v11873 = vpop.f32.mrf.mxu0
    %v11874 = vadd.f32 %v11705, %v11873
    %11875 = vmatmul.bf16.gmra.mxu0 %v11242
    %v11876 = vpop.f32.mrf.mxu0
    %v11877 = vadd.f32 %v11708, %v11876
    %v11878 = vpop.f32.mrf.mxu0
    %v11879 = vadd.f32 %v11710, %v11878
    %11880 = vmatmul.bf16.gmra.mxu0 %v11243
    %v11881 = vpop.f32.mrf.mxu0
    %v11882 = vadd.f32 %v11713, %v11881
    %v11883 = vpop.f32.mrf.mxu0
    %v11884 = vadd.f32 %v11715, %v11883
    %11885 = vdwg.mxu0
    %11886 = vmatpush.bf16.msra.mxu0 %v11523
    %11887 = vmatpush.bf16.msra.mxu0 %v11522
    %11888 = vmatpush.bf16.msra.mxu0 %v11521
    %11889 = vmatpush.bf16.msra.mxu0 %v11520
    %11890 = vmatpush.bf16.msra.mxu0 %v11519
    %11891 = vmatpush.bf16.msra.mxu0 %v11518
    %11892 = vmatpush.bf16.msra.mxu0 %v11517
    %11893 = vmatpush.bf16.msra.mxu0 %v11516
    %11894 = vmatmul.bf16.gmra.mxu0 %v11340
    %v11895 = vpop.f32.mrf.mxu0
    %v11896 = vadd.f32 %v11727, %v11895
    %v11897 = vpop.f32.mrf.mxu0
    %v11898 = vadd.f32 %v11729, %v11897
    %11899 = vmatmul.bf16.gmra.mxu0 %v11341
    %v11900 = vpop.f32.mrf.mxu0
    %v11901 = vadd.f32 %v11732, %v11900
    %v11902 = vpop.f32.mrf.mxu0
    %v11903 = vadd.f32 %v11734, %v11902
    %11904 = vmatmul.bf16.gmra.mxu0 %v11342
    %v11905 = vpop.f32.mrf.mxu0
    %v11906 = vadd.f32 %v11737, %v11905
    %v11907 = vpop.f32.mrf.mxu0
    %v11908 = vadd.f32 %v11739, %v11907
    %11909 = vmatmul.bf16.gmra.mxu0 %v11343
    %v11910 = vpop.f32.mrf.mxu0
    %v11911 = vadd.f32 %v11742, %v11910
    %v11912 = vpop.f32.mrf.mxu0
    %v11913 = vadd.f32 %v11744, %v11912
    %11914 = vmatmul.bf16.gmra.mxu0 %v11344
    %v11915 = vpop.f32.mrf.mxu0
    %v11916 = vadd.f32 %v11747, %v11915
    %v11917 = vpop.f32.mrf.mxu0
    %v11918 = vadd.f32 %v11749, %v11917
    %11919 = vmatmul.bf16.gmra.mxu0 %v11345
    %v11920 = vpop.f32.mrf.mxu0
    %v11921 = vadd.f32 %v11752, %v11920
    %v11922 = vpop.f32.mrf.mxu0
    %v11923 = vadd.f32 %v11754, %v11922
    %11924 = vmatmul.bf16.gmra.mxu0 %v11346
    %v11925 = vpop.f32.mrf.mxu0
    %v11926 = vadd.f32 %v11757, %v11925
    %v11927 = vpop.f32.mrf.mxu0
    %v11928 = vadd.f32 %v11759, %v11927
    %11929 = vmatmul.bf16.gmra.mxu0 %v11347
    %v11930 = vpop.f32.mrf.mxu0
    %v11931 = vadd.f32 %v11762, %v11930
    %v11932 = vpop.f32.mrf.mxu0
    %v11933 = vadd.f32 %v11764, %v11932
    %11934 = vmatmul.bf16.gmra.mxu0 %v11348
    %v11935 = vpop.f32.mrf.mxu0
    %v11936 = vadd.f32 %v11767, %v11935
    %v11937 = vpop.f32.mrf.mxu0
    %v11938 = vadd.f32 %v11769, %v11937
    %11939 = vmatmul.bf16.gmra.mxu0 %v11349
    %v11940 = vpop.f32.mrf.mxu0
    %v11941 = vadd.f32 %v11772, %v11940
    %v11942 = vpop.f32.mrf.mxu0
    %v11943 = vadd.f32 %v11774, %v11942
    %11944 = vmatmul.bf16.gmra.mxu0 %v11350
    %v11945 = vpop.f32.mrf.mxu0
    %v11946 = vadd.f32 %v11777, %v11945
    %v11947 = vpop.f32.mrf.mxu0
    %v11948 = vadd.f32 %v11779, %v11947
    %11949 = vmatmul.bf16.gmra.mxu0 %v11351
    %v11950 = vpop.f32.mrf.mxu0
    %v11951 = vadd.f32 %v11782, %v11950
    %v11952 = vpop.f32.mrf.mxu0
    %v11953 = vadd.f32 %v11784, %v11952
    %11954 = vmatmul.bf16.gmra.mxu0 %v11352
    %v11955 = vpop.f32.mrf.mxu0
    %v11956 = vadd.f32 %v11787, %v11955
    %v11957 = vpop.f32.mrf.mxu0
    %v11958 = vadd.f32 %v11789, %v11957
    %11959 = vmatmul.bf16.gmra.mxu0 %v11353
    %v11960 = vpop.f32.mrf.mxu0
    %v11961 = vadd.f32 %v11792, %v11960
    %v11962 = vpop.f32.mrf.mxu0
    %v11963 = vadd.f32 %v11794, %v11962
    %11964 = vmatmul.bf16.gmra.mxu0 %v11354
    %v11965 = vpop.f32.mrf.mxu0
    %v11966 = vadd.f32 %v11797, %v11965
    %v11967 = vpop.f32.mrf.mxu0
    %v11968 = vadd.f32 %v11799, %v11967
    %11969 = vmatmul.bf16.gmra.mxu0 %v11355
    %v11970 = vpop.f32.mrf.mxu0
    %v11971 = vadd.f32 %v11802, %v11970
    %v11972 = vpop.f32.mrf.mxu0
    %v11973 = vadd.f32 %v11804, %v11972
    %11974 = vmatmul.bf16.gmra.mxu0 %v11356
    %v11975 = vpop.f32.mrf.mxu0
    %v11976 = vadd.f32 %v11807, %v11975
    %v11977 = vpop.f32.mrf.mxu0
    %v11978 = vadd.f32 %v11809, %v11977
    %11979 = vmatmul.bf16.gmra.mxu0 %v11357
    %v11980 = vpop.f32.mrf.mxu0
    %v11981 = vadd.f32 %v11812, %v11980
    %v11982 = vpop.f32.mrf.mxu0
    %v11983 = vadd.f32 %v11814, %v11982
    %11984 = vmatmul.bf16.gmra.mxu0 %v11358
    %v11985 = vpop.f32.mrf.mxu0
    %v11986 = vadd.f32 %v11817, %v11985
    %v11987 = vpop.f32.mrf.mxu0
    %v11988 = vadd.f32 %v11819, %v11987
    %11989 = vmatmul.bf16.gmra.mxu0 %v11359
    %v11990 = vpop.f32.mrf.mxu0
    %v11991 = vadd.f32 %v11822, %v11990
    %v11992 = vpop.f32.mrf.mxu0
    %v11993 = vadd.f32 %v11824, %v11992
    %11994 = vmatmul.bf16.gmra.mxu0 %v11360
    %v11995 = vpop.f32.mrf.mxu0
    %v11996 = vadd.f32 %v11827, %v11995
    %v11997 = vpop.f32.mrf.mxu0
    %v11998 = vadd.f32 %v11829, %v11997
    %11999 = vmatmul.bf16.gmra.mxu0 %v11361
    %v12000 = vpop.f32.mrf.mxu0
    %v12001 = vadd.f32 %v11832, %v12000
    %v12002 = vpop.f32.mrf.mxu0
    %v12003 = vadd.f32 %v11834, %v12002
    %12004 = vmatmul.bf16.gmra.mxu0 %v11362
    %v12005 = vpop.f32.mrf.mxu0
    %v12006 = vadd.f32 %v11837, %v12005
    %v12007 = vpop.f32.mrf.mxu0
    %v12008 = vadd.f32 %v11839, %v12007
    %12009 = vmatmul.bf16.gmra.mxu0 %v11363
    %v12010 = vpop.f32.mrf.mxu0
    %v12011 = vadd.f32 %v11842, %v12010
    %v12012 = vpop.f32.mrf.mxu0
    %v12013 = vadd.f32 %v11844, %v12012
    %12014 = vmatmul.bf16.gmra.mxu0 %v11364
    %v12015 = vpop.f32.mrf.mxu0
    %v12016 = vadd.f32 %v11847, %v12015
    %v12017 = vpop.f32.mrf.mxu0
    %v12018 = vadd.f32 %v11849, %v12017
    %12019 = vmatmul.bf16.gmra.mxu0 %v11365
    %v12020 = vpop.f32.mrf.mxu0
    %v12021 = vadd.f32 %v11852, %v12020
    %v12022 = vpop.f32.mrf.mxu0
    %v12023 = vadd.f32 %v11854, %v12022
    %12024 = vmatmul.bf16.gmra.mxu0 %v11366
    %v12025 = vpop.f32.mrf.mxu0
    %v12026 = vadd.f32 %v11857, %v12025
    %v12027 = vpop.f32.mrf.mxu0
    %v12028 = vadd.f32 %v11859, %v12027
    %12029 = vmatmul.bf16.gmra.mxu0 %v11367
    %v12030 = vpop.f32.mrf.mxu0
    %v12031 = vadd.f32 %v11862, %v12030
    %v12032 = vpop.f32.mrf.mxu0
    %v12033 = vadd.f32 %v11864, %v12032
    %12034 = vmatmul.bf16.gmra.mxu0 %v11368
    %v12035 = vpop.f32.mrf.mxu0
    %v12036 = vadd.f32 %v11867, %v12035
    %v12037 = vpop.f32.mrf.mxu0
    %v12038 = vadd.f32 %v11869, %v12037
    %12039 = vmatmul.bf16.gmra.mxu0 %v11369
    %v12040 = vpop.f32.mrf.mxu0
    %v12041 = vadd.f32 %v11872, %v12040
    %v12042 = vpop.f32.mrf.mxu0
    %v12043 = vadd.f32 %v11874, %v12042
    %12044 = vmatmul.bf16.gmra.mxu0 %v11370
    %v12045 = vpop.f32.mrf.mxu0
    %v12046 = vadd.f32 %v11877, %v12045
    %v12047 = vpop.f32.mrf.mxu0
    %v12048 = vadd.f32 %v11879, %v12047
    %12049 = vmatmul.bf16.gmra.mxu0 %v11371
    %v12050 = vpop.f32.mrf.mxu0
    %v12051 = vadd.f32 %v11882, %v12050
    %v12052 = vpop.f32.mrf.mxu0
    %v12053 = vadd.f32 %v11884, %v12052
    %12054 = vdwg.mxu0
    %v12055 = vadd.f32 %v9516, %v11896
    %v12056 = vadd.f32 %v9518, %v11898
    %v12057 = vadd.f32 %v9521, %v11901
    %v12058 = vadd.f32 %v9523, %v11903
    %v12059 = vadd.f32 %v9526, %v11906
    %v12060 = vadd.f32 %v9528, %v11908
    %v12061 = vadd.f32 %v9531, %v11911
    %v12062 = vadd.f32 %v9533, %v11913
    %v12063 = vadd.f32 %v9536, %v11916
    %v12064 = vadd.f32 %v9538, %v11918
    %v12065 = vadd.f32 %v9541, %v11921
    %v12066 = vadd.f32 %v9543, %v11923
    %v12067 = vadd.f32 %v9546, %v11926
    %v12068 = vadd.f32 %v9548, %v11928
    %v12069 = vadd.f32 %v9551, %v11931
    %v12070 = vadd.f32 %v9553, %v11933
    %v12071 = vadd.f32 %v9556, %v11936
    %v12072 = vadd.f32 %v9558, %v11938
    %v12073 = vadd.f32 %v9561, %v11941
    %v12074 = vadd.f32 %v9563, %v11943
    %v12075 = vadd.f32 %v9566, %v11946
    %v12076 = vadd.f32 %v9568, %v11948
    %v12077 = vadd.f32 %v9571, %v11951
    %v12078 = vadd.f32 %v9573, %v11953
    %v12079 = vadd.f32 %v9576, %v11956
    %v12080 = vadd.f32 %v9578, %v11958
    %v12081 = vadd.f32 %v9581, %v11961
    %v12082 = vadd.f32 %v9583, %v11963
    %v12083 = vadd.f32 %v9586, %v11966
    %v12084 = vadd.f32 %v9588, %v11968
    %v12085 = vadd.f32 %v9591, %v11971
    %v12086 = vadd.f32 %v9593, %v11973
    %v12087 = vadd.f32 %v9596, %v11976
    %v12088 = vadd.f32 %v9598, %v11978
    %v12089 = vadd.f32 %v9601, %v11981
    %v12090 = vadd.f32 %v9603, %v11983
    %v12091 = vadd.f32 %v9606, %v11986
    %v12092 = vadd.f32 %v9608, %v11988
    %v12093 = vadd.f32 %v9611, %v11991
    %v12094 = vadd.f32 %v9613, %v11993
    %v12095 = vadd.f32 %v9616, %v11996
    %v12096 = vadd.f32 %v9618, %v11998
    %v12097 = vadd.f32 %v9621, %v12001
    %v12098 = vadd.f32 %v9623, %v12003
    %v12099 = vadd.f32 %v9626, %v12006
    %v12100 = vadd.f32 %v9628, %v12008
    %v12101 = vadd.f32 %v9631, %v12011
    %v12102 = vadd.f32 %v9633, %v12013
    %v12103 = vadd.f32 %v9636, %v12016
    %v12104 = vadd.f32 %v9638, %v12018
    %v12105 = vadd.f32 %v9641, %v12021
    %v12106 = vadd.f32 %v9643, %v12023
    %v12107 = vadd.f32 %v9646, %v12026
    %v12108 = vadd.f32 %v9648, %v12028
    %v12109 = vadd.f32 %v9651, %v12031
    %v12110 = vadd.f32 %v9653, %v12033
    %v12111 = vadd.f32 %v9656, %v12036
    %v12112 = vadd.f32 %v9658, %v12038
    %v12113 = vadd.f32 %v9661, %v12041
    %v12114 = vadd.f32 %v9663, %v12043
    %v12115 = vadd.f32 %v9666, %v12046
    %v12116 = vadd.f32 %v9668, %v12048
    %v12117 = vadd.f32 %v9671, %v12051
    %v12118 = vadd.f32 %v9673, %v12053
    %v12119 = vld [vmem:[%s6] sm:$0x1]
    %v12120 = vld [vmem:[%s7] sm:$0x1]
    %v12121 = vadd.f32 %v12055, %v12056
    %v12122 = vadd.f32 %v12121, %v12057
    %v12123 = vadd.f32 %v12122, %v12058
    %v12124 = vadd.f32 %v12123, %v12059
    %v12125 = vadd.f32 %v12124, %v12060
    %v12126 = vadd.f32 %v12125, %v12061
    %v12127 = vadd.f32 %v12126, %v12062
    %v12128 = vadd.f32 %v12127, %v12063
    %v12129 = vadd.f32 %v12128, %v12064
    %v12130 = vadd.f32 %v12129, %v12065
    %v12131 = vadd.f32 %v12130, %v12066
    %v12132 = vadd.f32 %v12131, %v12067
    %v12133 = vadd.f32 %v12132, %v12068
    %v12134 = vadd.f32 %v12133, %v12069
    %v12135 = vadd.f32 %v12134, %v12070
    %v12136 = vadd.f32 %v12135, %v12071
    %v12137 = vadd.f32 %v12136, %v12072
    %v12138 = vadd.f32 %v12137, %v12073
    %v12139 = vadd.f32 %v12138, %v12074
    %v12140 = vadd.f32 %v12139, %v12075
    %v12141 = vadd.f32 %v12140, %v12076
    %v12142 = vadd.f32 %v12141, %v12077
    %v12143 = vadd.f32 %v12142, %v12078
    %v12144 = vadd.f32 %v12143, %v12079
    %v12145 = vadd.f32 %v12144, %v12080
    %v12146 = vadd.f32 %v12145, %v12081
    %v12147 = vadd.f32 %v12146, %v12082
    %v12148 = vadd.f32 %v12147, %v12083
    %v12149 = vadd.f32 %v12148, %v12084
    %v12150 = vadd.f32 %v12149, %v12085
    %v12151 = vadd.f32 %v12150, %v12086
    %v12152 = vadd.f32 %v12151, %v12087
    %v12153 = vadd.f32 %v12152, %v12088
    %v12154 = vadd.f32 %v12153, %v12089
    %v12155 = vadd.f32 %v12154, %v12090
    %v12156 = vadd.f32 %v12155, %v12091
    %v12157 = vadd.f32 %v12156, %v12092
    %v12158 = vadd.f32 %v12157, %v12093
    %v12159 = vadd.f32 %v12158, %v12094
    %v12160 = vadd.f32 %v12159, %v12095
    %v12161 = vadd.f32 %v12160, %v12096
    %v12162 = vadd.f32 %v12161, %v12097
    %v12163 = vadd.f32 %v12162, %v12098
    %v12164 = vadd.f32 %v12163, %v12099
    %v12165 = vadd.f32 %v12164, %v12100
    %v12166 = vadd.f32 %v12165, %v12101
    %v12167 = vadd.f32 %v12166, %v12102
    %v12168 = vadd.f32 %v12167, %v12103
    %v12169 = vadd.f32 %v12168, %v12104
    %v12170 = vadd.f32 %v12169, %v12105
    %v12171 = vadd.f32 %v12170, %v12106
    %v12172 = vadd.f32 %v12171, %v12107
    %v12173 = vadd.f32 %v12172, %v12108
    %v12174 = vadd.f32 %v12173, %v12109
    %v12175 = vadd.f32 %v12174, %v12110
    %v12176 = vadd.f32 %v12175, %v12111
    %v12177 = vadd.f32 %v12176, %v12112
    %v12178 = vadd.f32 %v12177, %v12113
    %v12179 = vadd.f32 %v12178, %v12114
    %v12180 = vadd.f32 %v12179, %v12115
    %v12181 = vadd.f32 %v12180, %v12116
    %v12182 = vadd.f32 %v12181, %v12117
    %v12183 = vadd.f32 %v12182, %v12118
    %v12184 = vrot.slane %v12183, 4
    %v12185 = vadd.f32 %v12183, %v12184
    %v12186 = vrot.slane %v12185, 2
    %v12187 = vadd.f32 %v12185, %v12186
    %v12188 = vrot.slane %v12187, 1
    %v12189 = vadd.f32 %v12187, %v12188
    %v12190 = vmul.f32 %v12189, 0.001953125
    %v12191 = vmul.f32 %v12055, %v12055
    %v12192 = vmul.f32 %v12056, %v12056
    %v12193 = vmul.f32 %v12057, %v12057
    %v12194 = vmul.f32 %v12058, %v12058
    %v12195 = vmul.f32 %v12059, %v12059
    %v12196 = vmul.f32 %v12060, %v12060
    %v12197 = vmul.f32 %v12061, %v12061
    %v12198 = vmul.f32 %v12062, %v12062
    %v12199 = vmul.f32 %v12063, %v12063
    %v12200 = vmul.f32 %v12064, %v12064
    %v12201 = vmul.f32 %v12065, %v12065
    %v12202 = vmul.f32 %v12066, %v12066
    %v12203 = vmul.f32 %v12067, %v12067
    %v12204 = vmul.f32 %v12068, %v12068
    %v12205 = vmul.f32 %v12069, %v12069
    %v12206 = vmul.f32 %v12070, %v12070
    %v12207 = vmul.f32 %v12071, %v12071
    %v12208 = vmul.f32 %v12072, %v12072
    %v12209 = vmul.f32 %v12073, %v12073
    %v12210 = vmul.f32 %v12074, %v12074
    %v12211 = vmul.f32 %v12075, %v12075
    %v12212 = vmul.f32 %v12076, %v12076
    %v12213 = vmul.f32 %v12077, %v12077
    %v12214 = vmul.f32 %v12078, %v12078
    %v12215 = vmul.f32 %v12079, %v12079
    %v12216 = vmul.f32 %v12080, %v12080
    %v12217 = vmul.f32 %v12081, %v12081
    %v12218 = vmul.f32 %v12082, %v12082
    %v12219 = vmul.f32 %v12083, %v12083
    %v12220 = vmul.f32 %v12084, %v12084
    %v12221 = vmul.f32 %v12085, %v12085
    %v12222 = vmul.f32 %v12086, %v12086
    %v12223 = vmul.f32 %v12087, %v12087
    %v12224 = vmul.f32 %v12088, %v12088
    %v12225 = vmul.f32 %v12089, %v12089
    %v12226 = vmul.f32 %v12090, %v12090
    %v12227 = vmul.f32 %v12091, %v12091
    %v12228 = vmul.f32 %v12092, %v12092
    %v12229 = vmul.f32 %v12093, %v12093
    %v12230 = vmul.f32 %v12094, %v12094
    %v12231 = vmul.f32 %v12095, %v12095
    %v12232 = vmul.f32 %v12096, %v12096
    %v12233 = vmul.f32 %v12097, %v12097
    %v12234 = vmul.f32 %v12098, %v12098
    %v12235 = vmul.f32 %v12099, %v12099
    %v12236 = vmul.f32 %v12100, %v12100
    %v12237 = vmul.f32 %v12101, %v12101
    %v12238 = vmul.f32 %v12102, %v12102
    %v12239 = vmul.f32 %v12103, %v12103
    %v12240 = vmul.f32 %v12104, %v12104
    %v12241 = vmul.f32 %v12105, %v12105
    %v12242 = vmul.f32 %v12106, %v12106
    %v12243 = vmul.f32 %v12107, %v12107
    %v12244 = vmul.f32 %v12108, %v12108
    %v12245 = vmul.f32 %v12109, %v12109
    %v12246 = vmul.f32 %v12110, %v12110
    %v12247 = vmul.f32 %v12111, %v12111
    %v12248 = vmul.f32 %v12112, %v12112
    %v12249 = vmul.f32 %v12113, %v12113
    %v12250 = vmul.f32 %v12114, %v12114
    %v12251 = vmul.f32 %v12115, %v12115
    %v12252 = vmul.f32 %v12116, %v12116
    %v12253 = vmul.f32 %v12117, %v12117
    %v12254 = vmul.f32 %v12118, %v12118
    %v12255 = vadd.f32 %v12191, %v12192
    %v12256 = vadd.f32 %v12255, %v12193
    %v12257 = vadd.f32 %v12256, %v12194
    %v12258 = vadd.f32 %v12257, %v12195
    %v12259 = vadd.f32 %v12258, %v12196
    %v12260 = vadd.f32 %v12259, %v12197
    %v12261 = vadd.f32 %v12260, %v12198
    %v12262 = vadd.f32 %v12261, %v12199
    %v12263 = vadd.f32 %v12262, %v12200
    %v12264 = vadd.f32 %v12263, %v12201
    %v12265 = vadd.f32 %v12264, %v12202
    %v12266 = vadd.f32 %v12265, %v12203
    %v12267 = vadd.f32 %v12266, %v12204
    %v12268 = vadd.f32 %v12267, %v12205
    %v12269 = vadd.f32 %v12268, %v12206
    %v12270 = vadd.f32 %v12269, %v12207
    %v12271 = vadd.f32 %v12270, %v12208
    %v12272 = vadd.f32 %v12271, %v12209
    %v12273 = vadd.f32 %v12272, %v12210
    %v12274 = vadd.f32 %v12273, %v12211
    %v12275 = vadd.f32 %v12274, %v12212
    %v12276 = vadd.f32 %v12275, %v12213
    %v12277 = vadd.f32 %v12276, %v12214
    %v12278 = vadd.f32 %v12277, %v12215
    %v12279 = vadd.f32 %v12278, %v12216
    %v12280 = vadd.f32 %v12279, %v12217
    %v12281 = vadd.f32 %v12280, %v12218
    %v12282 = vadd.f32 %v12281, %v12219
    %v12283 = vadd.f32 %v12282, %v12220
    %v12284 = vadd.f32 %v12283, %v12221
    %v12285 = vadd.f32 %v12284, %v12222
    %v12286 = vadd.f32 %v12285, %v12223
    %v12287 = vadd.f32 %v12286, %v12224
    %v12288 = vadd.f32 %v12287, %v12225
    %v12289 = vadd.f32 %v12288, %v12226
    %v12290 = vadd.f32 %v12289, %v12227
    %v12291 = vadd.f32 %v12290, %v12228
    %v12292 = vadd.f32 %v12291, %v12229
    %v12293 = vadd.f32 %v12292, %v12230
    %v12294 = vadd.f32 %v12293, %v12231
    %v12295 = vadd.f32 %v12294, %v12232
    %v12296 = vadd.f32 %v12295, %v12233
    %v12297 = vadd.f32 %v12296, %v12234
    %v12298 = vadd.f32 %v12297, %v12235
    %v12299 = vadd.f32 %v12298, %v12236
    %v12300 = vadd.f32 %v12299, %v12237
    %v12301 = vadd.f32 %v12300, %v12238
    %v12302 = vadd.f32 %v12301, %v12239
    %v12303 = vadd.f32 %v12302, %v12240
    %v12304 = vadd.f32 %v12303, %v12241
    %v12305 = vadd.f32 %v12304, %v12242
    %v12306 = vadd.f32 %v12305, %v12243
    %v12307 = vadd.f32 %v12306, %v12244
    %v12308 = vadd.f32 %v12307, %v12245
    %v12309 = vadd.f32 %v12308, %v12246
    %v12310 = vadd.f32 %v12309, %v12247
    %v12311 = vadd.f32 %v12310, %v12248
    %v12312 = vadd.f32 %v12311, %v12249
    %v12313 = vadd.f32 %v12312, %v12250
    %v12314 = vadd.f32 %v12313, %v12251
    %v12315 = vadd.f32 %v12314, %v12252
    %v12316 = vadd.f32 %v12315, %v12253
    %v12317 = vadd.f32 %v12316, %v12254
    %v12318 = vrot.slane %v12317, 4
    %v12319 = vadd.f32 %v12317, %v12318
    %v12320 = vrot.slane %v12319, 2
    %v12321 = vadd.f32 %v12319, %v12320
    %v12322 = vrot.slane %v12321, 1
    %v12323 = vadd.f32 %v12321, %v12322
    %v12324 = vmul.f32 %v12323, 0.001953125
    %v12325 = vmul.f32 %v12190, %v12190
    %v12326 = vsub.f32 %v12324, %v12325
    %v12327 = vmax.f32 %v12326, 0.0
    %v12328 = vadd.f32 %v12327, 1e-05
    %v12329 = vrsqrt.pop %v12328
    %v12330 = vmul.f32 %v12329, %v12328
    %v12331 = vmul.f32 %v12330, %v12329
    %v12332 = vmul.f32 0.5, %v12331
    %v12333 = vsub.f32 1.5, %v12332
    %v12334 = vmul.f32 %v12329, %v12333
    %vm12335 = vweird.f32 %v12328
    %vm12336 = vweird.f32 %v12329
    %vm12337 = vmor %vm12335, %vm12336
    %v12338 = vsel %vm12337, %v12329, %v12334
    %v12339 = vmul.f32 %v12119, %v12338
    %v12340 = vmul.f32 %v12190, %v12339
    %v12341 = vsub.f32 %v12120, %v12340
    %v12342 = vld [vmem:[%s3] sm:$0xf]
    %v12343 = vld [vmem:[%s3 + $0x4] sm:$0xf]
    %v12344 = vld [vmem:[%s3 + $0x8] sm:$0xf]
    %v12345 = vld [vmem:[%s3 + $0xc] sm:$0xf]
    %v12346 = vld [vmem:[%s3 + $0x10] sm:$0xf]
    %v12347 = vld [vmem:[%s3 + $0x14] sm:$0xf]
    %v12348 = vld [vmem:[%s3 + $0x18] sm:$0xf]
    %v12349 = vld [vmem:[%s3 + $0x1c] sm:$0xf]
    %v12350 = vld [vmem:[%s3 + $0x20] sm:$0xf]
    %v12351 = vld [vmem:[%s3 + $0x24] sm:$0xf]
    %v12352 = vld [vmem:[%s3 + $0x28] sm:$0xf]
    %v12353 = vld [vmem:[%s3 + $0x2c] sm:$0xf]
    %v12354 = vld [vmem:[%s3 + $0x30] sm:$0xf]
    %v12355 = vld [vmem:[%s3 + $0x34] sm:$0xf]
    %v12356 = vld [vmem:[%s3 + $0x38] sm:$0xf]
    %v12357 = vld [vmem:[%s3 + $0x3c] sm:$0xf]
    %v12374 = vunpack.c.l.b16 %v12342
    %v12375 = vunpack.c.l.b16 %v12343
    %v12376 = vunpack.c.l.b16 %v12344
    %v12377 = vunpack.c.l.b16 %v12345
    %v12378 = vunpack.c.l.b16 %v12346
    %v12379 = vunpack.c.l.b16 %v12347
    %v12380 = vunpack.c.l.b16 %v12348
    %v12381 = vunpack.c.l.b16 %v12349
    %v12382 = vunpack.c.l.b16 %v12350
    %v12383 = vunpack.c.l.b16 %v12351
    %v12384 = vunpack.c.l.b16 %v12352
    %v12385 = vunpack.c.l.b16 %v12353
    %v12386 = vunpack.c.l.b16 %v12354
    %v12387 = vunpack.c.l.b16 %v12355
    %v12388 = vunpack.c.l.b16 %v12356
    %v12389 = vunpack.c.l.b16 %v12357
    %v12390 = vpack.c.b16 %v12375, %v12374
    %v12391 = vpack.c.b16 %v12377, %v12376
    %v12392 = vpack.c.b16 %v12379, %v12378
    %v12393 = vpack.c.b16 %v12381, %v12380
    %v12394 = vpack.c.b16 %v12383, %v12382
    %v12395 = vpack.c.b16 %v12385, %v12384
    %v12396 = vpack.c.b16 %v12387, %v12386
    %v12397 = vpack.c.b16 %v12389, %v12388
    %12406 = vmatpush.bf16.msra.mxu0 %v12397
    %12407 = vmatpush.bf16.msra.mxu0 %v12396
    %12408 = vmatpush.bf16.msra.mxu0 %v12395
    %12409 = vmatpush.bf16.msra.mxu0 %v12394
    %12410 = vmatpush.bf16.msra.mxu0 %v12393
    %12411 = vmatpush.bf16.msra.mxu0 %v12392
    %12412 = vmatpush.bf16.msra.mxu0 %v12391
    %12413 = vmatpush.bf16.msra.mxu0 %v12390
    %12414 = vmatmul.bf16.gmra.mxu0 %v1684
    %v12415 = vpop.f32.mrf.mxu0
    %v12416 = vadd.f32 0.0, %v12415
    %v12417 = vpop.f32.mrf.mxu0
    %v12418 = vadd.f32 0.0, %v12417
    %12419 = vmatmul.bf16.gmra.mxu0 %v1685
    %v12420 = vpop.f32.mrf.mxu0
    %v12421 = vadd.f32 0.0, %v12420
    %v12422 = vpop.f32.mrf.mxu0
    %v12423 = vadd.f32 0.0, %v12422
    %12424 = vmatmul.bf16.gmra.mxu0 %v1686
    %v12425 = vpop.f32.mrf.mxu0
    %v12426 = vadd.f32 0.0, %v12425
    %v12427 = vpop.f32.mrf.mxu0
    %v12428 = vadd.f32 0.0, %v12427
    %12429 = vmatmul.bf16.gmra.mxu0 %v1687
    %v12430 = vpop.f32.mrf.mxu0
    %v12431 = vadd.f32 0.0, %v12430
    %v12432 = vpop.f32.mrf.mxu0
    %v12433 = vadd.f32 0.0, %v12432
    %12434 = vmatmul.bf16.gmra.mxu0 %v1688
    %v12435 = vpop.f32.mrf.mxu0
    %v12436 = vadd.f32 0.0, %v12435
    %v12437 = vpop.f32.mrf.mxu0
    %v12438 = vadd.f32 0.0, %v12437
    %12439 = vmatmul.bf16.gmra.mxu0 %v1689
    %v12440 = vpop.f32.mrf.mxu0
    %v12441 = vadd.f32 0.0, %v12440
    %v12442 = vpop.f32.mrf.mxu0
    %v12443 = vadd.f32 0.0, %v12442
    %12444 = vmatmul.bf16.gmra.mxu0 %v1690
    %v12445 = vpop.f32.mrf.mxu0
    %v12446 = vadd.f32 0.0, %v12445
    %v12447 = vpop.f32.mrf.mxu0
    %v12448 = vadd.f32 0.0, %v12447
    %12449 = vmatmul.bf16.gmra.mxu0 %v1691
    %v12450 = vpop.f32.mrf.mxu0
    %v12451 = vadd.f32 0.0, %v12450
    %v12452 = vpop.f32.mrf.mxu0
    %v12453 = vadd.f32 0.0, %v12452
    %12454 = vmatmul.bf16.gmra.mxu0 %v1692
    %v12455 = vpop.f32.mrf.mxu0
    %v12456 = vadd.f32 0.0, %v12455
    %v12457 = vpop.f32.mrf.mxu0
    %v12458 = vadd.f32 0.0, %v12457
    %12459 = vmatmul.bf16.gmra.mxu0 %v1693
    %v12460 = vpop.f32.mrf.mxu0
    %v12461 = vadd.f32 0.0, %v12460
    %v12462 = vpop.f32.mrf.mxu0
    %v12463 = vadd.f32 0.0, %v12462
    %12464 = vmatmul.bf16.gmra.mxu0 %v1694
    %v12465 = vpop.f32.mrf.mxu0
    %v12466 = vadd.f32 0.0, %v12465
    %v12467 = vpop.f32.mrf.mxu0
    %v12468 = vadd.f32 0.0, %v12467
    %12469 = vmatmul.bf16.gmra.mxu0 %v1695
    %v12470 = vpop.f32.mrf.mxu0
    %v12471 = vadd.f32 0.0, %v12470
    %v12472 = vpop.f32.mrf.mxu0
    %v12473 = vadd.f32 0.0, %v12472
    %12474 = vmatmul.bf16.gmra.mxu0 %v1696
    %v12475 = vpop.f32.mrf.mxu0
    %v12476 = vadd.f32 0.0, %v12475
    %v12477 = vpop.f32.mrf.mxu0
    %v12478 = vadd.f32 0.0, %v12477
    %12479 = vmatmul.bf16.gmra.mxu0 %v1697
    %v12480 = vpop.f32.mrf.mxu0
    %v12481 = vadd.f32 0.0, %v12480
    %v12482 = vpop.f32.mrf.mxu0
    %v12483 = vadd.f32 0.0, %v12482
    %12484 = vmatmul.bf16.gmra.mxu0 %v1698
    %v12485 = vpop.f32.mrf.mxu0
    %v12486 = vadd.f32 0.0, %v12485
    %v12487 = vpop.f32.mrf.mxu0
    %v12488 = vadd.f32 0.0, %v12487
    %12489 = vmatmul.bf16.gmra.mxu0 %v1955
    %v12490 = vpop.f32.mrf.mxu0
    %v12491 = vadd.f32 0.0, %v12490
    %v12492 = vpop.f32.mrf.mxu0
    %v12493 = vadd.f32 0.0, %v12492
    %12494 = vmatmul.bf16.gmra.mxu0 %v1700
    %v12495 = vpop.f32.mrf.mxu0
    %v12496 = vadd.f32 0.0, %v12495
    %v12497 = vpop.f32.mrf.mxu0
    %v12498 = vadd.f32 0.0, %v12497
    %12499 = vmatmul.bf16.gmra.mxu0 %v1701
    %v12500 = vpop.f32.mrf.mxu0
    %v12501 = vadd.f32 0.0, %v12500
    %v12502 = vpop.f32.mrf.mxu0
    %v12503 = vadd.f32 0.0, %v12502
    %12504 = vmatmul.bf16.gmra.mxu0 %v1702
    %v12505 = vpop.f32.mrf.mxu0
    %v12506 = vadd.f32 0.0, %v12505
    %v12507 = vpop.f32.mrf.mxu0
    %v12508 = vadd.f32 0.0, %v12507
    %12509 = vmatmul.bf16.gmra.mxu0 %v1703
    %v12510 = vpop.f32.mrf.mxu0
    %v12511 = vadd.f32 0.0, %v12510
    %v12512 = vpop.f32.mrf.mxu0
    %v12513 = vadd.f32 0.0, %v12512
    %12514 = vmatmul.bf16.gmra.mxu0 %v1704
    %v12515 = vpop.f32.mrf.mxu0
    %v12516 = vadd.f32 0.0, %v12515
    %v12517 = vpop.f32.mrf.mxu0
    %v12518 = vadd.f32 0.0, %v12517
    %12519 = vmatmul.bf16.gmra.mxu0 %v1705
    %v12520 = vpop.f32.mrf.mxu0
    %v12521 = vadd.f32 0.0, %v12520
    %v12522 = vpop.f32.mrf.mxu0
    %v12523 = vadd.f32 0.0, %v12522
    %12524 = vmatmul.bf16.gmra.mxu0 %v1706
    %v12525 = vpop.f32.mrf.mxu0
    %v12526 = vadd.f32 0.0, %v12525
    %v12527 = vpop.f32.mrf.mxu0
    %v12528 = vadd.f32 0.0, %v12527
    %12529 = vmatmul.bf16.gmra.mxu0 %v1707
    %v12530 = vpop.f32.mrf.mxu0
    %v12531 = vadd.f32 0.0, %v12530
    %v12532 = vpop.f32.mrf.mxu0
    %v12533 = vadd.f32 0.0, %v12532
    %12534 = vmatmul.bf16.gmra.mxu0 %v1708
    %v12535 = vpop.f32.mrf.mxu0
    %v12536 = vadd.f32 0.0, %v12535
    %v12537 = vpop.f32.mrf.mxu0
    %v12538 = vadd.f32 0.0, %v12537
    %12539 = vmatmul.bf16.gmra.mxu0 %v1709
    %v12540 = vpop.f32.mrf.mxu0
    %v12541 = vadd.f32 0.0, %v12540
    %v12542 = vpop.f32.mrf.mxu0
    %v12543 = vadd.f32 0.0, %v12542
    %12544 = vmatmul.bf16.gmra.mxu0 %v1710
    %v12545 = vpop.f32.mrf.mxu0
    %v12546 = vadd.f32 0.0, %v12545
    %v12547 = vpop.f32.mrf.mxu0
    %v12548 = vadd.f32 0.0, %v12547
    %12549 = vmatmul.bf16.gmra.mxu0 %v1711
    %v12550 = vpop.f32.mrf.mxu0
    %v12551 = vadd.f32 0.0, %v12550
    %v12552 = vpop.f32.mrf.mxu0
    %v12553 = vadd.f32 0.0, %v12552
    %12554 = vmatmul.bf16.gmra.mxu0 %v1712
    %v12555 = vpop.f32.mrf.mxu0
    %v12556 = vadd.f32 0.0, %v12555
    %v12557 = vpop.f32.mrf.mxu0
    %v12558 = vadd.f32 0.0, %v12557
    %12559 = vmatmul.bf16.gmra.mxu0 %v1713
    %v12560 = vpop.f32.mrf.mxu0
    %v12561 = vadd.f32 0.0, %v12560
    %v12562 = vpop.f32.mrf.mxu0
    %v12563 = vadd.f32 0.0, %v12562
    %12564 = vmatmul.bf16.gmra.mxu0 %v1714
    %v12565 = vpop.f32.mrf.mxu0
    %v12566 = vadd.f32 0.0, %v12565
    %v12567 = vpop.f32.mrf.mxu0
    %v12568 = vadd.f32 0.0, %v12567
    %12569 = vmatmul.bf16.gmra.mxu0 %v1956
    %v12570 = vpop.f32.mrf.mxu0
    %v12571 = vadd.f32 0.0, %v12570
    %v12572 = vpop.f32.mrf.mxu0
    %v12573 = vadd.f32 0.0, %v12572
    %12574 = vdwg.mxu0
    %v12575 = vld [vmem:[%s8] sm:$0x1]
    %v12576 = vld [vmem:[%s9] sm:$0x1]
    %v12577 = vadd.f32 %v12416, %v12418
    %v12578 = vadd.f32 %v12577, %v12421
    %v12579 = vadd.f32 %v12578, %v12423
    %v12580 = vadd.f32 %v12579, %v12426
    %v12581 = vadd.f32 %v12580, %v12428
    %v12582 = vadd.f32 %v12581, %v12431
    %v12583 = vadd.f32 %v12582, %v12433
    %v12584 = vadd.f32 %v12583, %v12436
    %v12585 = vadd.f32 %v12584, %v12438
    %v12586 = vadd.f32 %v12585, %v12441
    %v12587 = vadd.f32 %v12586, %v12443
    %v12588 = vadd.f32 %v12587, %v12446
    %v12589 = vadd.f32 %v12588, %v12448
    %v12590 = vadd.f32 %v12589, %v12451
    %v12591 = vadd.f32 %v12590, %v12453
    %v12592 = vadd.f32 %v12591, %v12456
    %v12593 = vadd.f32 %v12592, %v12458
    %v12594 = vadd.f32 %v12593, %v12461
    %v12595 = vadd.f32 %v12594, %v12463
    %v12596 = vadd.f32 %v12595, %v12466
    %v12597 = vadd.f32 %v12596, %v12468
    %v12598 = vadd.f32 %v12597, %v12471
    %v12599 = vadd.f32 %v12598, %v12473
    %v12600 = vadd.f32 %v12599, %v12476
    %v12601 = vadd.f32 %v12600, %v12478
    %v12602 = vadd.f32 %v12601, %v12481
    %v12603 = vadd.f32 %v12602, %v12483
    %v12604 = vadd.f32 %v12603, %v12486
    %v12605 = vadd.f32 %v12604, %v12488
    %v12606 = vadd.f32 %v12605, %v12491
    %v12607 = vadd.f32 %v12606, %v12493
    %v12608 = vadd.f32 %v12607, %v12496
    %v12609 = vadd.f32 %v12608, %v12498
    %v12610 = vadd.f32 %v12609, %v12501
    %v12611 = vadd.f32 %v12610, %v12503
    %v12612 = vadd.f32 %v12611, %v12506
    %v12613 = vadd.f32 %v12612, %v12508
    %v12614 = vadd.f32 %v12613, %v12511
    %v12615 = vadd.f32 %v12614, %v12513
    %v12616 = vadd.f32 %v12615, %v12516
    %v12617 = vadd.f32 %v12616, %v12518
    %v12618 = vadd.f32 %v12617, %v12521
    %v12619 = vadd.f32 %v12618, %v12523
    %v12620 = vadd.f32 %v12619, %v12526
    %v12621 = vadd.f32 %v12620, %v12528
    %v12622 = vadd.f32 %v12621, %v12531
    %v12623 = vadd.f32 %v12622, %v12533
    %v12624 = vadd.f32 %v12623, %v12536
    %v12625 = vadd.f32 %v12624, %v12538
    %v12626 = vadd.f32 %v12625, %v12541
    %v12627 = vadd.f32 %v12626, %v12543
    %v12628 = vadd.f32 %v12627, %v12546
    %v12629 = vadd.f32 %v12628, %v12548
    %v12630 = vadd.f32 %v12629, %v12551
    %v12631 = vadd.f32 %v12630, %v12553
    %v12632 = vadd.f32 %v12631, %v12556
    %v12633 = vadd.f32 %v12632, %v12558
    %v12634 = vadd.f32 %v12633, %v12561
    %v12635 = vadd.f32 %v12634, %v12563
    %v12636 = vadd.f32 %v12635, %v12566
    %v12637 = vadd.f32 %v12636, %v12568
    %v12638 = vadd.f32 %v12637, %v12571
    %v12639 = vadd.f32 %v12638, %v12573
    %v12640 = vrot.slane %v12639, 4
    %v12641 = vadd.f32 %v12639, %v12640
    %v12642 = vrot.slane %v12641, 2
    %v12643 = vadd.f32 %v12641, %v12642
    %v12644 = vrot.slane %v12643, 1
    %v12645 = vadd.f32 %v12643, %v12644
    %v12646 = vmul.f32 %v12645, 0.001953125
    %v12647 = vmul.f32 %v12416, %v12416
    %v12648 = vmul.f32 %v12418, %v12418
    %v12649 = vmul.f32 %v12421, %v12421
    %v12650 = vmul.f32 %v12423, %v12423
    %v12651 = vmul.f32 %v12426, %v12426
    %v12652 = vmul.f32 %v12428, %v12428
    %v12653 = vmul.f32 %v12431, %v12431
    %v12654 = vmul.f32 %v12433, %v12433
    %v12655 = vmul.f32 %v12436, %v12436
    %v12656 = vmul.f32 %v12438, %v12438
    %v12657 = vmul.f32 %v12441, %v12441
    %v12658 = vmul.f32 %v12443, %v12443
    %v12659 = vmul.f32 %v12446, %v12446
    %v12660 = vmul.f32 %v12448, %v12448
    %v12661 = vmul.f32 %v12451, %v12451
    %v12662 = vmul.f32 %v12453, %v12453
    %v12663 = vmul.f32 %v12456, %v12456
    %v12664 = vmul.f32 %v12458, %v12458
    %v12665 = vmul.f32 %v12461, %v12461
    %v12666 = vmul.f32 %v12463, %v12463
    %v12667 = vmul.f32 %v12466, %v12466
    %v12668 = vmul.f32 %v12468, %v12468
    %v12669 = vmul.f32 %v12471, %v12471
    %v12670 = vmul.f32 %v12473, %v12473
    %v12671 = vmul.f32 %v12476, %v12476
    %v12672 = vmul.f32 %v12478, %v12478
    %v12673 = vmul.f32 %v12481, %v12481
    %v12674 = vmul.f32 %v12483, %v12483
    %v12675 = vmul.f32 %v12486, %v12486
    %v12676 = vmul.f32 %v12488, %v12488
    %v12677 = vmul.f32 %v12491, %v12491
    %v12678 = vmul.f32 %v12493, %v12493
    %v12679 = vmul.f32 %v12496, %v12496
    %v12680 = vmul.f32 %v12498, %v12498
    %v12681 = vmul.f32 %v12501, %v12501
    %v12682 = vmul.f32 %v12503, %v12503
    %v12683 = vmul.f32 %v12506, %v12506
    %v12684 = vmul.f32 %v12508, %v12508
    %v12685 = vmul.f32 %v12511, %v12511
    %v12686 = vmul.f32 %v12513, %v12513
    %v12687 = vmul.f32 %v12516, %v12516
    %v12688 = vmul.f32 %v12518, %v12518
    %v12689 = vmul.f32 %v12521, %v12521
    %v12690 = vmul.f32 %v12523, %v12523
    %v12691 = vmul.f32 %v12526, %v12526
    %v12692 = vmul.f32 %v12528, %v12528
    %v12693 = vmul.f32 %v12531, %v12531
    %v12694 = vmul.f32 %v12533, %v12533
    %v12695 = vmul.f32 %v12536, %v12536
    %v12696 = vmul.f32 %v12538, %v12538
    %v12697 = vmul.f32 %v12541, %v12541
    %v12698 = vmul.f32 %v12543, %v12543
    %v12699 = vmul.f32 %v12546, %v12546
    %v12700 = vmul.f32 %v12548, %v12548
    %v12701 = vmul.f32 %v12551, %v12551
    %v12702 = vmul.f32 %v12553, %v12553
    %v12703 = vmul.f32 %v12556, %v12556
    %v12704 = vmul.f32 %v12558, %v12558
    %v12705 = vmul.f32 %v12561, %v12561
    %v12706 = vmul.f32 %v12563, %v12563
    %v12707 = vmul.f32 %v12566, %v12566
    %v12708 = vmul.f32 %v12568, %v12568
    %v12709 = vmul.f32 %v12571, %v12571
    %v12710 = vmul.f32 %v12573, %v12573
    %v12711 = vadd.f32 %v12647, %v12648
    %v12712 = vadd.f32 %v12711, %v12649
    %v12713 = vadd.f32 %v12712, %v12650
    %v12714 = vadd.f32 %v12713, %v12651
    %v12715 = vadd.f32 %v12714, %v12652
    %v12716 = vadd.f32 %v12715, %v12653
    %v12717 = vadd.f32 %v12716, %v12654
    %v12718 = vadd.f32 %v12717, %v12655
    %v12719 = vadd.f32 %v12718, %v12656
    %v12720 = vadd.f32 %v12719, %v12657
    %v12721 = vadd.f32 %v12720, %v12658
    %v12722 = vadd.f32 %v12721, %v12659
    %v12723 = vadd.f32 %v12722, %v12660
    %v12724 = vadd.f32 %v12723, %v12661
    %v12725 = vadd.f32 %v12724, %v12662
    %v12726 = vadd.f32 %v12725, %v12663
    %v12727 = vadd.f32 %v12726, %v12664
    %v12728 = vadd.f32 %v12727, %v12665
    %v12729 = vadd.f32 %v12728, %v12666
    %v12730 = vadd.f32 %v12729, %v12667
    %v12731 = vadd.f32 %v12730, %v12668
    %v12732 = vadd.f32 %v12731, %v12669
    %v12733 = vadd.f32 %v12732, %v12670
    %v12734 = vadd.f32 %v12733, %v12671
    %v12735 = vadd.f32 %v12734, %v12672
    %v12736 = vadd.f32 %v12735, %v12673
    %v12737 = vadd.f32 %v12736, %v12674
    %v12738 = vadd.f32 %v12737, %v12675
    %v12739 = vadd.f32 %v12738, %v12676
    %v12740 = vadd.f32 %v12739, %v12677
    %v12741 = vadd.f32 %v12740, %v12678
    %v12742 = vadd.f32 %v12741, %v12679
    %v12743 = vadd.f32 %v12742, %v12680
    %v12744 = vadd.f32 %v12743, %v12681
    %v12745 = vadd.f32 %v12744, %v12682
    %v12746 = vadd.f32 %v12745, %v12683
    %v12747 = vadd.f32 %v12746, %v12684
    %v12748 = vadd.f32 %v12747, %v12685
    %v12749 = vadd.f32 %v12748, %v12686
    %v12750 = vadd.f32 %v12749, %v12687
    %v12751 = vadd.f32 %v12750, %v12688
    %v12752 = vadd.f32 %v12751, %v12689
    %v12753 = vadd.f32 %v12752, %v12690
    %v12754 = vadd.f32 %v12753, %v12691
    %v12755 = vadd.f32 %v12754, %v12692
    %v12756 = vadd.f32 %v12755, %v12693
    %v12757 = vadd.f32 %v12756, %v12694
    %v12758 = vadd.f32 %v12757, %v12695
    %v12759 = vadd.f32 %v12758, %v12696
    %v12760 = vadd.f32 %v12759, %v12697
    %v12761 = vadd.f32 %v12760, %v12698
    %v12762 = vadd.f32 %v12761, %v12699
    %v12763 = vadd.f32 %v12762, %v12700
    %v12764 = vadd.f32 %v12763, %v12701
    %v12765 = vadd.f32 %v12764, %v12702
    %v12766 = vadd.f32 %v12765, %v12703
    %v12767 = vadd.f32 %v12766, %v12704
    %v12768 = vadd.f32 %v12767, %v12705
    %v12769 = vadd.f32 %v12768, %v12706
    %v12770 = vadd.f32 %v12769, %v12707
    %v12771 = vadd.f32 %v12770, %v12708
    %v12772 = vadd.f32 %v12771, %v12709
    %v12773 = vadd.f32 %v12772, %v12710
    %v12774 = vrot.slane %v12773, 4
    %v12775 = vadd.f32 %v12773, %v12774
    %v12776 = vrot.slane %v12775, 2
    %v12777 = vadd.f32 %v12775, %v12776
    %v12778 = vrot.slane %v12777, 1
    %v12779 = vadd.f32 %v12777, %v12778
    %v12780 = vmul.f32 %v12779, 0.001953125
    %v12781 = vmul.f32 %v12646, %v12646
    %v12782 = vsub.f32 %v12780, %v12781
    %v12783 = vmax.f32 %v12782, 0.0
    %v12784 = vadd.f32 %v12783, 1e-05
    %v12785 = vrsqrt.pop %v12784
    %v12786 = vmul.f32 %v12785, %v12784
    %v12787 = vmul.f32 %v12786, %v12785
    %v12788 = vmul.f32 0.5, %v12787
    %v12789 = vsub.f32 1.5, %v12788
    %v12790 = vmul.f32 %v12785, %v12789
    %vm12791 = vweird.f32 %v12784
    %vm12792 = vweird.f32 %v12785
    %vm12793 = vmor %vm12791, %vm12792
    %v12794 = vsel %vm12793, %v12785, %v12790
    %v12795 = vmul.f32 %v12575, %v12794
    %v12796 = vmul.f32 %v12646, %v12795
    %v12797 = vsub.f32 %v12576, %v12796
    %v12799 = vperm.slane %v12795, 0
    %v12801 = vmul.f32 %v12416, %v12799
    %v12802 = vmul.f32 %v12418, %v12799
    %v12803 = vmul.f32 %v12421, %v12799
    %v12804 = vmul.f32 %v12423, %v12799
    %v12805 = vmul.f32 %v12426, %v12799
    %v12806 = vmul.f32 %v12428, %v12799
    %v12807 = vmul.f32 %v12431, %v12799
    %v12808 = vmul.f32 %v12433, %v12799
    %v12809 = vmul.f32 %v12436, %v12799
    %v12810 = vmul.f32 %v12438, %v12799
    %v12811 = vmul.f32 %v12441, %v12799
    %v12812 = vmul.f32 %v12443, %v12799
    %v12813 = vmul.f32 %v12446, %v12799
    %v12814 = vmul.f32 %v12448, %v12799
    %v12815 = vmul.f32 %v12451, %v12799
    %v12816 = vmul.f32 %v12453, %v12799
    %v12817 = vmul.f32 %v12456, %v12799
    %v12818 = vmul.f32 %v12458, %v12799
    %v12819 = vmul.f32 %v12461, %v12799
    %v12820 = vmul.f32 %v12463, %v12799
    %v12821 = vmul.f32 %v12466, %v12799
    %v12822 = vmul.f32 %v12468, %v12799
    %v12823 = vmul.f32 %v12471, %v12799
    %v12824 = vmul.f32 %v12473, %v12799
    %v12825 = vmul.f32 %v12476, %v12799
    %v12826 = vmul.f32 %v12478, %v12799
    %v12827 = vmul.f32 %v12481, %v12799
    %v12828 = vmul.f32 %v12483, %v12799
    %v12829 = vmul.f32 %v12486, %v12799
    %v12830 = vmul.f32 %v12488, %v12799
    %v12831 = vmul.f32 %v12491, %v12799
    %v12832 = vmul.f32 %v12493, %v12799
    %v12833 = vmul.f32 %v12496, %v12799
    %v12834 = vmul.f32 %v12498, %v12799
    %v12835 = vmul.f32 %v12501, %v12799
    %v12836 = vmul.f32 %v12503, %v12799
    %v12837 = vmul.f32 %v12506, %v12799
    %v12838 = vmul.f32 %v12508, %v12799
    %v12839 = vmul.f32 %v12511, %v12799
    %v12840 = vmul.f32 %v12513, %v12799
    %v12841 = vmul.f32 %v12516, %v12799
    %v12842 = vmul.f32 %v12518, %v12799
    %v12843 = vmul.f32 %v12521, %v12799
    %v12844 = vmul.f32 %v12523, %v12799
    %v12845 = vmul.f32 %v12526, %v12799
    %v12846 = vmul.f32 %v12528, %v12799
    %v12847 = vmul.f32 %v12531, %v12799
    %v12848 = vmul.f32 %v12533, %v12799
    %v12849 = vmul.f32 %v12536, %v12799
    %v12850 = vmul.f32 %v12538, %v12799
    %v12851 = vmul.f32 %v12541, %v12799
    %v12852 = vmul.f32 %v12543, %v12799
    %v12853 = vmul.f32 %v12546, %v12799
    %v12854 = vmul.f32 %v12548, %v12799
    %v12855 = vmul.f32 %v12551, %v12799
    %v12856 = vmul.f32 %v12553, %v12799
    %v12857 = vmul.f32 %v12556, %v12799
    %v12858 = vmul.f32 %v12558, %v12799
    %v12859 = vmul.f32 %v12561, %v12799
    %v12860 = vmul.f32 %v12563, %v12799
    %v12861 = vmul.f32 %v12566, %v12799
    %v12862 = vmul.f32 %v12568, %v12799
    %v12863 = vmul.f32 %v12571, %v12799
    %v12864 = vmul.f32 %v12573, %v12799
    %v12866 = vperm.slane %v12797, 0
    %v12868 = vadd.f32 %v12801, %v12866
    %v12869 = vadd.f32 %v12802, %v12866
    %v12870 = vadd.f32 %v12803, %v12866
    %v12871 = vadd.f32 %v12804, %v12866
    %v12872 = vadd.f32 %v12805, %v12866
    %v12873 = vadd.f32 %v12806, %v12866
    %v12874 = vadd.f32 %v12807, %v12866
    %v12875 = vadd.f32 %v12808, %v12866
    %v12876 = vadd.f32 %v12809, %v12866
    %v12877 = vadd.f32 %v12810, %v12866
    %v12878 = vadd.f32 %v12811, %v12866
    %v12879 = vadd.f32 %v12812, %v12866
    %v12880 = vadd.f32 %v12813, %v12866
    %v12881 = vadd.f32 %v12814, %v12866
    %v12882 = vadd.f32 %v12815, %v12866
    %v12883 = vadd.f32 %v12816, %v12866
    %v12884 = vadd.f32 %v12817, %v12866
    %v12885 = vadd.f32 %v12818, %v12866
    %v12886 = vadd.f32 %v12819, %v12866
    %v12887 = vadd.f32 %v12820, %v12866
    %v12888 = vadd.f32 %v12821, %v12866
    %v12889 = vadd.f32 %v12822, %v12866
    %v12890 = vadd.f32 %v12823, %v12866
    %v12891 = vadd.f32 %v12824, %v12866
    %v12892 = vadd.f32 %v12825, %v12866
    %v12893 = vadd.f32 %v12826, %v12866
    %v12894 = vadd.f32 %v12827, %v12866
    %v12895 = vadd.f32 %v12828, %v12866
    %v12896 = vadd.f32 %v12829, %v12866
    %v12897 = vadd.f32 %v12830, %v12866
    %v12898 = vadd.f32 %v12831, %v12866
    %v12899 = vadd.f32 %v12832, %v12866
    %v12900 = vadd.f32 %v12833, %v12866
    %v12901 = vadd.f32 %v12834, %v12866
    %v12902 = vadd.f32 %v12835, %v12866
    %v12903 = vadd.f32 %v12836, %v12866
    %v12904 = vadd.f32 %v12837, %v12866
    %v12905 = vadd.f32 %v12838, %v12866
    %v12906 = vadd.f32 %v12839, %v12866
    %v12907 = vadd.f32 %v12840, %v12866
    %v12908 = vadd.f32 %v12841, %v12866
    %v12909 = vadd.f32 %v12842, %v12866
    %v12910 = vadd.f32 %v12843, %v12866
    %v12911 = vadd.f32 %v12844, %v12866
    %v12912 = vadd.f32 %v12845, %v12866
    %v12913 = vadd.f32 %v12846, %v12866
    %v12914 = vadd.f32 %v12847, %v12866
    %v12915 = vadd.f32 %v12848, %v12866
    %v12916 = vadd.f32 %v12849, %v12866
    %v12917 = vadd.f32 %v12850, %v12866
    %v12918 = vadd.f32 %v12851, %v12866
    %v12919 = vadd.f32 %v12852, %v12866
    %v12920 = vadd.f32 %v12853, %v12866
    %v12921 = vadd.f32 %v12854, %v12866
    %v12922 = vadd.f32 %v12855, %v12866
    %v12923 = vadd.f32 %v12856, %v12866
    %v12924 = vadd.f32 %v12857, %v12866
    %v12925 = vadd.f32 %v12858, %v12866
    %v12926 = vadd.f32 %v12859, %v12866
    %v12927 = vadd.f32 %v12860, %v12866
    %v12928 = vadd.f32 %v12861, %v12866
    %v12929 = vadd.f32 %v12862, %v12866
    %v12930 = vadd.f32 %v12863, %v12866
    %v12931 = vadd.f32 %v12864, %v12866
    %v12933 = vperm.slane %v12339, 0
    %v12935 = vmul.f32 %v12055, %v12933
    %v12936 = vmul.f32 %v12056, %v12933
    %v12937 = vmul.f32 %v12057, %v12933
    %v12938 = vmul.f32 %v12058, %v12933
    %v12939 = vmul.f32 %v12059, %v12933
    %v12940 = vmul.f32 %v12060, %v12933
    %v12941 = vmul.f32 %v12061, %v12933
    %v12942 = vmul.f32 %v12062, %v12933
    %v12943 = vmul.f32 %v12063, %v12933
    %v12944 = vmul.f32 %v12064, %v12933
    %v12945 = vmul.f32 %v12065, %v12933
    %v12946 = vmul.f32 %v12066, %v12933
    %v12947 = vmul.f32 %v12067, %v12933
    %v12948 = vmul.f32 %v12068, %v12933
    %v12949 = vmul.f32 %v12069, %v12933
    %v12950 = vmul.f32 %v12070, %v12933
    %v12951 = vmul.f32 %v12071, %v12933
    %v12952 = vmul.f32 %v12072, %v12933
    %v12953 = vmul.f32 %v12073, %v12933
    %v12954 = vmul.f32 %v12074, %v12933
    %v12955 = vmul.f32 %v12075, %v12933
    %v12956 = vmul.f32 %v12076, %v12933
    %v12957 = vmul.f32 %v12077, %v12933
    %v12958 = vmul.f32 %v12078, %v12933
    %v12959 = vmul.f32 %v12079, %v12933
    %v12960 = vmul.f32 %v12080, %v12933
    %v12961 = vmul.f32 %v12081, %v12933
    %v12962 = vmul.f32 %v12082, %v12933
    %v12963 = vmul.f32 %v12083, %v12933
    %v12964 = vmul.f32 %v12084, %v12933
    %v12965 = vmul.f32 %v12085, %v12933
    %v12966 = vmul.f32 %v12086, %v12933
    %v12967 = vmul.f32 %v12087, %v12933
    %v12968 = vmul.f32 %v12088, %v12933
    %v12969 = vmul.f32 %v12089, %v12933
    %v12970 = vmul.f32 %v12090, %v12933
    %v12971 = vmul.f32 %v12091, %v12933
    %v12972 = vmul.f32 %v12092, %v12933
    %v12973 = vmul.f32 %v12093, %v12933
    %v12974 = vmul.f32 %v12094, %v12933
    %v12975 = vmul.f32 %v12095, %v12933
    %v12976 = vmul.f32 %v12096, %v12933
    %v12977 = vmul.f32 %v12097, %v12933
    %v12978 = vmul.f32 %v12098, %v12933
    %v12979 = vmul.f32 %v12099, %v12933
    %v12980 = vmul.f32 %v12100, %v12933
    %v12981 = vmul.f32 %v12101, %v12933
    %v12982 = vmul.f32 %v12102, %v12933
    %v12983 = vmul.f32 %v12103, %v12933
    %v12984 = vmul.f32 %v12104, %v12933
    %v12985 = vmul.f32 %v12105, %v12933
    %v12986 = vmul.f32 %v12106, %v12933
    %v12987 = vmul.f32 %v12107, %v12933
    %v12988 = vmul.f32 %v12108, %v12933
    %v12989 = vmul.f32 %v12109, %v12933
    %v12990 = vmul.f32 %v12110, %v12933
    %v12991 = vmul.f32 %v12111, %v12933
    %v12992 = vmul.f32 %v12112, %v12933
    %v12993 = vmul.f32 %v12113, %v12933
    %v12994 = vmul.f32 %v12114, %v12933
    %v12995 = vmul.f32 %v12115, %v12933
    %v12996 = vmul.f32 %v12116, %v12933
    %v12997 = vmul.f32 %v12117, %v12933
    %v12998 = vmul.f32 %v12118, %v12933
    %v13000 = vperm.slane %v12341, 0
    %v13002 = vadd.f32 %v12935, %v13000
    %v13003 = vadd.f32 %v12936, %v13000
    %v13004 = vadd.f32 %v12937, %v13000
    %v13005 = vadd.f32 %v12938, %v13000
    %v13006 = vadd.f32 %v12939, %v13000
    %v13007 = vadd.f32 %v12940, %v13000
    %v13008 = vadd.f32 %v12941, %v13000
    %v13009 = vadd.f32 %v12942, %v13000
    %v13010 = vadd.f32 %v12943, %v13000
    %v13011 = vadd.f32 %v12944, %v13000
    %v13012 = vadd.f32 %v12945, %v13000
    %v13013 = vadd.f32 %v12946, %v13000
    %v13014 = vadd.f32 %v12947, %v13000
    %v13015 = vadd.f32 %v12948, %v13000
    %v13016 = vadd.f32 %v12949, %v13000
    %v13017 = vadd.f32 %v12950, %v13000
    %v13018 = vadd.f32 %v12951, %v13000
    %v13019 = vadd.f32 %v12952, %v13000
    %v13020 = vadd.f32 %v12953, %v13000
    %v13021 = vadd.f32 %v12954, %v13000
    %v13022 = vadd.f32 %v12955, %v13000
    %v13023 = vadd.f32 %v12956, %v13000
    %v13024 = vadd.f32 %v12957, %v13000
    %v13025 = vadd.f32 %v12958, %v13000
    %v13026 = vadd.f32 %v12959, %v13000
    %v13027 = vadd.f32 %v12960, %v13000
    %v13028 = vadd.f32 %v12961, %v13000
    %v13029 = vadd.f32 %v12962, %v13000
    %v13030 = vadd.f32 %v12963, %v13000
    %v13031 = vadd.f32 %v12964, %v13000
    %v13032 = vadd.f32 %v12965, %v13000
    %v13033 = vadd.f32 %v12966, %v13000
    %v13034 = vadd.f32 %v12967, %v13000
    %v13035 = vadd.f32 %v12968, %v13000
    %v13036 = vadd.f32 %v12969, %v13000
    %v13037 = vadd.f32 %v12970, %v13000
    %v13038 = vadd.f32 %v12971, %v13000
    %v13039 = vadd.f32 %v12972, %v13000
    %v13040 = vadd.f32 %v12973, %v13000
    %v13041 = vadd.f32 %v12974, %v13000
    %v13042 = vadd.f32 %v12975, %v13000
    %v13043 = vadd.f32 %v12976, %v13000
    %v13044 = vadd.f32 %v12977, %v13000
    %v13045 = vadd.f32 %v12978, %v13000
    %v13046 = vadd.f32 %v12979, %v13000
    %v13047 = vadd.f32 %v12980, %v13000
    %v13048 = vadd.f32 %v12981, %v13000
    %v13049 = vadd.f32 %v12982, %v13000
    %v13050 = vadd.f32 %v12983, %v13000
    %v13051 = vadd.f32 %v12984, %v13000
    %v13052 = vadd.f32 %v12985, %v13000
    %v13053 = vadd.f32 %v12986, %v13000
    %v13054 = vadd.f32 %v12987, %v13000
    %v13055 = vadd.f32 %v12988, %v13000
    %v13056 = vadd.f32 %v12989, %v13000
    %v13057 = vadd.f32 %v12990, %v13000
    %v13058 = vadd.f32 %v12991, %v13000
    %v13059 = vadd.f32 %v12992, %v13000
    %v13060 = vadd.f32 %v12993, %v13000
    %v13061 = vadd.f32 %v12994, %v13000
    %v13062 = vadd.f32 %v12995, %v13000
    %v13063 = vadd.f32 %v12996, %v13000
    %v13064 = vadd.f32 %v12997, %v13000
    %v13065 = vadd.f32 %v12998, %v13000
    %v13066 = vadd.f32 %v13002, %v12868
    %v13067 = vadd.f32 %v13003, %v12869
    %v13068 = vadd.f32 %v13004, %v12870
    %v13069 = vadd.f32 %v13005, %v12871
    %v13070 = vadd.f32 %v13006, %v12872
    %v13071 = vadd.f32 %v13007, %v12873
    %v13072 = vadd.f32 %v13008, %v12874
    %v13073 = vadd.f32 %v13009, %v12875
    %v13074 = vadd.f32 %v13010, %v12876
    %v13075 = vadd.f32 %v13011, %v12877
    %v13076 = vadd.f32 %v13012, %v12878
    %v13077 = vadd.f32 %v13013, %v12879
    %v13078 = vadd.f32 %v13014, %v12880
    %v13079 = vadd.f32 %v13015, %v12881
    %v13080 = vadd.f32 %v13016, %v12882
    %v13081 = vadd.f32 %v13017, %v12883
    %v13082 = vadd.f32 %v13018, %v12884
    %v13083 = vadd.f32 %v13019, %v12885
    %v13084 = vadd.f32 %v13020, %v12886
    %v13085 = vadd.f32 %v13021, %v12887
    %v13086 = vadd.f32 %v13022, %v12888
    %v13087 = vadd.f32 %v13023, %v12889
    %v13088 = vadd.f32 %v13024, %v12890
    %v13089 = vadd.f32 %v13025, %v12891
    %v13090 = vadd.f32 %v13026, %v12892
    %v13091 = vadd.f32 %v13027, %v12893
    %v13092 = vadd.f32 %v13028, %v12894
    %v13093 = vadd.f32 %v13029, %v12895
    %v13094 = vadd.f32 %v13030, %v12896
    %v13095 = vadd.f32 %v13031, %v12897
    %v13096 = vadd.f32 %v13032, %v12898
    %v13097 = vadd.f32 %v13033, %v12899
    %v13098 = vadd.f32 %v13034, %v12900
    %v13099 = vadd.f32 %v13035, %v12901
    %v13100 = vadd.f32 %v13036, %v12902
    %v13101 = vadd.f32 %v13037, %v12903
    %v13102 = vadd.f32 %v13038, %v12904
    %v13103 = vadd.f32 %v13039, %v12905
    %v13104 = vadd.f32 %v13040, %v12906
    %v13105 = vadd.f32 %v13041, %v12907
    %v13106 = vadd.f32 %v13042, %v12908
    %v13107 = vadd.f32 %v13043, %v12909
    %v13108 = vadd.f32 %v13044, %v12910
    %v13109 = vadd.f32 %v13045, %v12911
    %v13110 = vadd.f32 %v13046, %v12912
    %v13111 = vadd.f32 %v13047, %v12913
    %v13112 = vadd.f32 %v13048, %v12914
    %v13113 = vadd.f32 %v13049, %v12915
    %v13114 = vadd.f32 %v13050, %v12916
    %v13115 = vadd.f32 %v13051, %v12917
    %v13116 = vadd.f32 %v13052, %v12918
    %v13117 = vadd.f32 %v13053, %v12919
    %v13118 = vadd.f32 %v13054, %v12920
    %v13119 = vadd.f32 %v13055, %v12921
    %v13120 = vadd.f32 %v13056, %v12922
    %v13121 = vadd.f32 %v13057, %v12923
    %v13122 = vadd.f32 %v13058, %v12924
    %v13123 = vadd.f32 %v13059, %v12925
    %v13124 = vadd.f32 %v13060, %v12926
    %v13125 = vadd.f32 %v13061, %v12927
    %v13126 = vadd.f32 %v13062, %v12928
    %v13127 = vadd.f32 %v13063, %v12929
    %v13128 = vadd.f32 %v13064, %v12930
    %v13129 = vadd.f32 %v13065, %v12931
    %v13130 = vmax.f32 %v13066, 0.0
    %v13131 = vmax.f32 %v13067, 0.0
    %v13132 = vmax.f32 %v13068, 0.0
    %v13133 = vmax.f32 %v13069, 0.0
    %v13134 = vmax.f32 %v13070, 0.0
    %v13135 = vmax.f32 %v13071, 0.0
    %v13136 = vmax.f32 %v13072, 0.0
    %v13137 = vmax.f32 %v13073, 0.0
    %v13138 = vmax.f32 %v13074, 0.0
    %v13139 = vmax.f32 %v13075, 0.0
    %v13140 = vmax.f32 %v13076, 0.0
    %v13141 = vmax.f32 %v13077, 0.0
    %v13142 = vmax.f32 %v13078, 0.0
    %v13143 = vmax.f32 %v13079, 0.0
    %v13144 = vmax.f32 %v13080, 0.0
    %v13145 = vmax.f32 %v13081, 0.0
    %v13146 = vmax.f32 %v13082, 0.0
    %v13147 = vmax.f32 %v13083, 0.0
    %v13148 = vmax.f32 %v13084, 0.0
    %v13149 = vmax.f32 %v13085, 0.0
    %v13150 = vmax.f32 %v13086, 0.0
    %v13151 = vmax.f32 %v13087, 0.0
    %v13152 = vmax.f32 %v13088, 0.0
    %v13153 = vmax.f32 %v13089, 0.0
    %v13154 = vmax.f32 %v13090, 0.0
    %v13155 = vmax.f32 %v13091, 0.0
    %v13156 = vmax.f32 %v13092, 0.0
    %v13157 = vmax.f32 %v13093, 0.0
    %v13158 = vmax.f32 %v13094, 0.0
    %v13159 = vmax.f32 %v13095, 0.0
    %v13160 = vmax.f32 %v13096, 0.0
    %v13161 = vmax.f32 %v13097, 0.0
    %v13162 = vmax.f32 %v13098, 0.0
    %v13163 = vmax.f32 %v13099, 0.0
    %v13164 = vmax.f32 %v13100, 0.0
    %v13165 = vmax.f32 %v13101, 0.0
    %v13166 = vmax.f32 %v13102, 0.0
    %v13167 = vmax.f32 %v13103, 0.0
    %v13168 = vmax.f32 %v13104, 0.0
    %v13169 = vmax.f32 %v13105, 0.0
    %v13170 = vmax.f32 %v13106, 0.0
    %v13171 = vmax.f32 %v13107, 0.0
    %v13172 = vmax.f32 %v13108, 0.0
    %v13173 = vmax.f32 %v13109, 0.0
    %v13174 = vmax.f32 %v13110, 0.0
    %v13175 = vmax.f32 %v13111, 0.0
    %v13176 = vmax.f32 %v13112, 0.0
    %v13177 = vmax.f32 %v13113, 0.0
    %v13178 = vmax.f32 %v13114, 0.0
    %v13179 = vmax.f32 %v13115, 0.0
    %v13180 = vmax.f32 %v13116, 0.0
    %v13181 = vmax.f32 %v13117, 0.0
    %v13182 = vmax.f32 %v13118, 0.0
    %v13183 = vmax.f32 %v13119, 0.0
    %v13184 = vmax.f32 %v13120, 0.0
    %v13185 = vmax.f32 %v13121, 0.0
    %v13186 = vmax.f32 %v13122, 0.0
    %v13187 = vmax.f32 %v13123, 0.0
    %v13188 = vmax.f32 %v13124, 0.0
    %v13189 = vmax.f32 %v13125, 0.0
    %v13190 = vmax.f32 %v13126, 0.0
    %v13191 = vmax.f32 %v13127, 0.0
    %v13192 = vmax.f32 %v13128, 0.0
    %v13193 = vmax.f32 %v13129, 0.0
    %13194 = vst [vmem:[#allocation3] sm:$0xff] %v13130
    %13195 = vst [vmem:[#allocation3 + $0x8] sm:$0xff] %v13131
    %13196 = vst [vmem:[#allocation3 + $0x10] sm:$0xff] %v13132
    %13197 = vst [vmem:[#allocation3 + $0x18] sm:$0xff] %v13133
    %13198 = vst [vmem:[#allocation3 + $0x20] sm:$0xff] %v13134
    %13199 = vst [vmem:[#allocation3 + $0x28] sm:$0xff] %v13135
    %13200 = vst [vmem:[#allocation3 + $0x30] sm:$0xff] %v13136
    %13201 = vst [vmem:[#allocation3 + $0x38] sm:$0xff] %v13137
    %13202 = vst [vmem:[#allocation3 + $0x40] sm:$0xff] %v13138
    %13203 = vst [vmem:[#allocation3 + $0x48] sm:$0xff] %v13139
    %13204 = vst [vmem:[#allocation3 + $0x50] sm:$0xff] %v13140
    %13205 = vst [vmem:[#allocation3 + $0x58] sm:$0xff] %v13141
    %13206 = vst [vmem:[#allocation3 + $0x60] sm:$0xff] %v13142
    %13207 = vst [vmem:[#allocation3 + $0x68] sm:$0xff] %v13143
    %13208 = vst [vmem:[#allocation3 + $0x70] sm:$0xff] %v13144
    %13209 = vst [vmem:[#allocation3 + $0x78] sm:$0xff] %v13145
    %13210 = vst [vmem:[#allocation3 + $0x80] sm:$0xff] %v13146
    %13211 = vst [vmem:[#allocation3 + $0x88] sm:$0xff] %v13147
    %13212 = vst [vmem:[#allocation3 + $0x90] sm:$0xff] %v13148
    %13213 = vst [vmem:[#allocation3 + $0x98] sm:$0xff] %v13149
    %13214 = vst [vmem:[#allocation3 + $0xa0] sm:$0xff] %v13150
    %13215 = vst [vmem:[#allocation3 + $0xa8] sm:$0xff] %v13151
    %13216 = vst [vmem:[#allocation3 + $0xb0] sm:$0xff] %v13152
    %13217 = vst [vmem:[#allocation3 + $0xb8] sm:$0xff] %v13153
    %13218 = vst [vmem:[#allocation3 + $0xc0] sm:$0xff] %v13154
    %13219 = vst [vmem:[#allocation3 + $0xc8] sm:$0xff] %v13155
    %13220 = vst [vmem:[#allocation3 + $0xd0] sm:$0xff] %v13156
    %13221 = vst [vmem:[#allocation3 + $0xd8] sm:$0xff] %v13157
    %13222 = vst [vmem:[#allocation3 + $0xe0] sm:$0xff] %v13158
    %13223 = vst [vmem:[#allocation3 + $0xe8] sm:$0xff] %v13159
    %13224 = vst [vmem:[#allocation3 + $0xf0] sm:$0xff] %v13160
    %13225 = vst [vmem:[#allocation3 + $0xf8] sm:$0xff] %v13161
    %13226 = vst [vmem:[#allocation3 + $0x100] sm:$0xff] %v13162
    %13227 = vst [vmem:[#allocation3 + $0x108] sm:$0xff] %v13163
    %13228 = vst [vmem:[#allocation3 + $0x110] sm:$0xff] %v13164
    %13229 = vst [vmem:[#allocation3 + $0x118] sm:$0xff] %v13165
    %13230 = vst [vmem:[#allocation3 + $0x120] sm:$0xff] %v13166
    %13231 = vst [vmem:[#allocation3 + $0x128] sm:$0xff] %v13167
    %13232 = vst [vmem:[#allocation3 + $0x130] sm:$0xff] %v13168
    %13233 = vst [vmem:[#allocation3 + $0x138] sm:$0xff] %v13169
    %13234 = vst [vmem:[#allocation3 + $0x140] sm:$0xff] %v13170
    %13235 = vst [vmem:[#allocation3 + $0x148] sm:$0xff] %v13171
    %13236 = vst [vmem:[#allocation3 + $0x150] sm:$0xff] %v13172
    %13237 = vst [vmem:[#allocation3 + $0x158] sm:$0xff] %v13173
    %13238 = vst [vmem:[#allocation3 + $0x160] sm:$0xff] %v13174
    %13239 = vst [vmem:[#allocation3 + $0x168] sm:$0xff] %v13175
    %13240 = vst [vmem:[#allocation3 + $0x170] sm:$0xff] %v13176
    %13241 = vst [vmem:[#allocation3 + $0x178] sm:$0xff] %v13177
    %13242 = vst [vmem:[#allocation3 + $0x180] sm:$0xff] %v13178
    %13243 = vst [vmem:[#allocation3 + $0x188] sm:$0xff] %v13179
    %13244 = vst [vmem:[#allocation3 + $0x190] sm:$0xff] %v13180
    %13245 = vst [vmem:[#allocation3 + $0x198] sm:$0xff] %v13181
    %13246 = vst [vmem:[#allocation3 + $0x1a0] sm:$0xff] %v13182
    %13247 = vst [vmem:[#allocation3 + $0x1a8] sm:$0xff] %v13183
    %13248 = vst [vmem:[#allocation3 + $0x1b0] sm:$0xff] %v13184
    %13249 = vst [vmem:[#allocation3 + $0x1b8] sm:$0xff] %v13185
    %13250 = vst [vmem:[#allocation3 + $0x1c0] sm:$0xff] %v13186
    %13251 = vst [vmem:[#allocation3 + $0x1c8] sm:$0xff] %v13187
    %13252 = vst [vmem:[#allocation3 + $0x1d0] sm:$0xff] %v13188
    %13253 = vst [vmem:[#allocation3 + $0x1d8] sm:$0xff] %v13189
    %13254 = vst [vmem:[#allocation3 + $0x1e0] sm:$0xff] %v13190
    %13255 = vst [vmem:[#allocation3 + $0x1e8] sm:$0xff] %v13191
    %13256 = vst [vmem:[#allocation3 + $0x1f0] sm:$0xff] %v13192
    %13257 = vst [vmem:[#allocation3 + $0x1f8] sm:$0xff] %v13193
    // Predicated region
    $region42: #{tpu_custom_call.1} parent=1 // pred_check
      _
    $region43: #{tpu_custom_call.1} parent=1 // pred_check_branch
      %13259 = sbr.rel (0) target = $region45
    $region44: #{tpu_custom_call.1} parent=1 // pred_region
      %13261 = vsyncadd [#allocation4], 0
      %s13262 = sshll.u32 [#allocation3], 4
      %s13263 = int_to_ptr.vmem [resolvable:$true] %s13262
      %s13264 = sshll.u32 %s10, 4
      %s13265 = int_to_ptr.hbm [resolvable:$true] %s13264
      %13270 = dma.vmem_to_hbm [thread:$0]  %s13263, 8192, %s13265, [#allocation4], 128, 128, 8
    $region45: #{tpu_custom_call.1} parent=1 // pred_fallthru
      _
    // Predicated region
    $region46: #{tpu_custom_call.1} parent=1 // pred_check
      _
    $region47: #{tpu_custom_call.1} parent=1 // pred_check_branch
      %13272 = sbr.rel (0) target = $region49
    $region48: #{tpu_custom_call.1} parent=1 // pred_region
      %13274 = dma.done [#allocation4], 8192
    $region49: #{tpu_custom_call.1} parent=1 // pred_fallthru
      _
    %13275 = vsyncpa [#allocation4], 1

</llo_original>
